<compile_context>
chip_gen: v5e
topology: v5e:2x2
jax: 0.10.0
libtpu: 0.0.40
codegen_flags: <defaults>
</compile_context>

<pallas_src>
import jax
import jax.numpy as jnp
from jax.experimental import pallas as pl
from jax.experimental.pallas import tpu as pltpu

# ---------------- configuration (small, consistent with the module) ----------------
B = 2
INPUT_DIM = 8       # input_dim
SKIP_DIM = 4        # skip_dim
OUT_DIM = 16        # output_dim
H = W = 8           # x spatial; skip is (2H, 2W)
DEPTH = 2
WIN = 4             # window size for SwinBlock attention
NUM_HEADS = 2
HEAD_DIM = OUT_DIM // NUM_HEADS
MLP_HIDDEN = 4 * OUT_DIM
LN_EPS = 1e-5

HH, WW = 2 * H, 2 * W
T_WIN = WIN * WIN                         # tokens per window
NW_PER_B = (HH // WIN) * (WW // WIN)      # windows per image
NTOK_B = NW_PER_B * T_WIN                 # tokens per image

assert HH % WIN == 0 and WW % WIN == 0, "spatial dims must be divisible by window size"
assert OUT_DIM == NUM_HEADS * HEAD_DIM


# ---------------------------------------------------------------------------
# Fused Pallas kernel: one grid step == one image (all windows, all blocks)
# ---------------------------------------------------------------------------
def fused_decoder_kernel(xw_ref, sk_ref, wx_ref, wsk_ref, pb_ref,
                         ln1g_ref, ln1b_ref, wqkv_ref, bqkv_ref, wo_ref, bo_ref,
                         ln2g_ref, ln2b_ref, w1_ref, b1_ref, w2_ref, b2_ref,
                         o_ref):
    """Whole DecoderStage (post-upsample) for one image, activation resident in VMEM.

    xw_ref : (1, NTOK_B, INPUT_DIM)  upsampled-input tokens (window-token order)
    sk_ref : (1, NTOK_B, SKIP_DIM)   skip tokens            (window-token order)
    o_ref  : (1, NTOK_B, OUT_DIM)
    Stacked per-block weights carry a leading DEPTH axis; indexed with a static int.
    """
    ntok = xw_ref.shape[1]
    t = WIN * WIN
    nw = ntok // t
    c = OUT_DIM

    # ---- fused 1x1 input/skip projections + add (1x1 conv == token-row matmul) ----
    xu = xw_ref[0].astype(jnp.bfloat16)
    sk = sk_ref[0].astype(jnp.bfloat16)
    y = jnp.dot(xu, wx_ref[...], preferred_element_type=jnp.float32)
    y = y + jnp.dot(sk, wsk_ref[...], preferred_element_type=jnp.float32)
    y = y + pb_ref[...]                                   # (1, C) fused conv biases

    scale = 1.0 / float(HEAD_DIM) ** 0.5

    for d in range(DEPTH):                                # unrolled: DEPTH == 2
        # -------------------- window MHSA, pre-LN, residual --------------------
        wqkv_d, bqkv_d = wqkv_ref[d], bqkv_ref[d]
        wo_d, bo_d = wo_ref[d], bo_ref[d]

        mu = jnp.mean(y, axis=-1, keepdims=True)
        var = jnp.mean(jnp.square(y - mu), axis=-1, keepdims=True)
        xn = (y - mu) * jax.lax.rsqrt(var + LN_EPS) * ln1g_ref[d] + ln1b_ref[d]

        qkv = jnp.dot(xn.astype(jnp.bfloat16), wqkv_d,
                      preferred_element_type=jnp.float32) + bqkv_d      # (ntok, 3C)
        qkv = qkv.reshape(nw, t, 3 * c)                                 # leading-dim split
        q = qkv[..., 0 * c:1 * c].astype(jnp.bfloat16)
        k = qkv[..., 1 * c:2 * c].astype(jnp.bfloat16)
        v = qkv[..., 2 * c:3 * c].astype(jnp.bfloat16)

        proj = jnp.zeros((ntok, c), jnp.float32)
        # NUM_HEADS == 2: tiny unrolled loop; head output is folded directly into the
        # matching row-slice of W_o (== concat + single matmul, without the lane-concat).
        for h in range(NUM_HEADS):
            lo, hi = h * HEAD_DIM, (h + 1) * HEAD_DIM
            s = jnp.einsum('wtd,wsd->wts', q[..., lo:hi], k[..., lo:hi],
                           preferred_element_type=jnp.float32) * scale
            s = s - jnp.max(s, axis=-1, keepdims=True)
            p = jnp.exp(s)
            inv = pl.reciprocal(jnp.sum(p, axis=-1, keepdims=True), approx=True)
            oh = jnp.einsum('wts,wsd->wtd', p.astype(jnp.bfloat16), v[..., lo:hi],
                            preferred_element_type=jnp.float32) * inv
            proj = proj + jnp.dot(oh.reshape(ntok, HEAD_DIM).astype(jnp.bfloat16),
                                  wo_d[lo:hi, :], preferred_element_type=jnp.float32)
        y = y + proj + bo_d

        # -------------------- MLP, pre-LN, residual --------------------
        mu = jnp.mean(y, axis=-1, keepdims=True)
        var = jnp.mean(jnp.square(y - mu), axis=-1, keepdims=True)
        zn = (y - mu) * jax.lax.rsqrt(var + LN_EPS) * ln2g_ref[d] + ln2b_ref[d]
        hid = jnp.dot(zn.astype(jnp.bfloat16), w1_ref[d],
                      preferred_element_type=jnp.float32) + b1_ref[d]
        # TODO(synk): PyTorch nn.GELU defaults to exact erf; tanh approximation used here.
        hid = jax.nn.gelu(hid, approximate=True)
        y = y + jnp.dot(hid.astype(jnp.bfloat16), w2_ref[d],
                        preferred_element_type=jnp.float32) + b2_ref[d]

    o_ref[0] = y.astype(o_ref.dtype)


def fused_decoder_stage(xw, skw, params):
    b, ntok_b, cin = xw.shape
    cs = skw.shape[-1]
    c = OUT_DIM

    def batch_spec(last):
        return pl.BlockSpec((1, ntok_b, last), lambda i: (i, 0, 0))

    def const_spec(arr):
        nd = arr.ndim
        return pl.BlockSpec(arr.shape, lambda i, _nd=nd: (0,) * _nd)

    weight_args = (
        params["wx"], params["wsk"], params["proj_bias"],
        params["ln1_g"], params["ln1_b"], params["wqkv"], params["bqkv"],
        params["wo"], params["bo"], params["ln2_g"], params["ln2_b"],
        params["w1"], params["b1"], params["w2"], params["b2"],
    )

    return pl.pallas_call(
        fused_decoder_kernel,
        out_shape=jax.ShapeDtypeStruct((b, ntok_b, c), jnp.float32),
        grid=(b,),
        in_specs=[batch_spec(cin), batch_spec(cs)]
                 + [const_spec(a) for a in weight_args],
        out_specs=batch_spec(c),
        compiler_params=pltpu.CompilerParams(
            dimension_semantics=("parallel",),       # megacore: one image per TC on v7x
            vmem_limit_bytes=32 * 1024 * 1024,       # explicit headroom (need < 1 MiB)
        ),
    )(xw, skw, *weight_args)


# ---------------------------------------------------------------------------
# plain-JAX glue: bilinear x2 upsample (align_corners=False), window (un)tokenize
# ---------------------------------------------------------------------------
def _interp_idx(n_in, n_out):
    src = (jnp.arange(n_out, dtype=jnp.float32) + 0.5) / 2.0 - 0.5
    src = jnp.clip(src, 0.0, None)
    i0 = jnp.minimum(jnp.floor(src).astype(jnp.int32), n_in - 1)
    i1 = jnp.minimum(i0 + 1, n_in - 1)
    w1 = src - i0.astype(jnp.float32)
    return i0, i1, 1.0 - w1, w1


def bilinear_upsample_x2(x):  # x: (B, H, W, C) NHWC
    b, h, w, c = x.shape
    i0, i1, a0, a1 = _interp_idx(h, 2 * h)
    xh = x[:, i0] * a0[None, :, None, None] + x[:, i1] * a1[None, :, None, None]
    j0, j1, b0, b1 = _interp_idx(w, 2 * w)
    xw = xh[:, :, j0] * b0[None, None, :, None] + xh[:, :, j1] * b1[None, None, :, None]
    return xw


def window_tokens(x, ws):  # (B, H, W, C) -> (B, NW_B*ws*ws, C), window-major token order
    b, h, w, c = x.shape
    x = x.reshape(b, h // ws, ws, w // ws, ws, c)
    x = jnp.transpose(x, (0, 1, 3, 2, 4, 5))
    return x.reshape(b, (h // ws) * (w // ws) * ws * ws, c)


def window_untokens(xw, ws, b, h, w, c):  # inverse of window_tokens
    x = xw.reshape(b, h // ws, w // ws, ws, ws, c)
    x = jnp.transpose(x, (0, 1, 3, 2, 4, 5))
    return x.reshape(b, h, w, c)


# ---------------------------------------------------------------------------
# parameters (deterministic, in-script); per-block weights stacked along DEPTH
# ---------------------------------------------------------------------------
def init_params(key):
    keys = jax.random.split(key, 4 + DEPTH)
    wx = 0.05 * jax.random.normal(keys[0], (INPUT_DIM, OUT_DIM), jnp.float32)
    bx = 0.01 * jax.random.normal(keys[1], (1, OUT_DIM), jnp.float32)
    wsk = 0.05 * jax.random.normal(keys[2], (SKIP_DIM, OUT_DIM), jnp.float32)
    bsk = 0.01 * jax.random.normal(keys[3], (1, OUT_DIM), jnp.float32)

    ln1_g, ln1_b, wqkv, bqkv, wo, bo = [], [], [], [], [], []
    ln2_g, ln2_b, w1, b1, w2, b2 = [], [], [], [], [], []
    for d in range(DEPTH):
        bk = jax.random.split(keys[4 + d], 4)
        ln1_g.append(jnp.ones((1, OUT_DIM), jnp.float32))
        ln1_b.append(jnp.zeros((1, OUT_DIM), jnp.float32))
        wqkv.append(0.05 * jax.random.normal(bk[0], (OUT_DIM, 3 * OUT_DIM), jnp.float32))
        bqkv.append(jnp.zeros((1, 3 * OUT_DIM), jnp.float32))
        wo.append(0.05 * jax.random.normal(bk[1], (OUT_DIM, OUT_DIM), jnp.float32))
        bo.append(jnp.zeros((1, OUT_DIM), jnp.float32))
        ln2_g.append(jnp.ones((1, OUT_DIM), jnp.float32))
        ln2_b.append(jnp.zeros((1, OUT_DIM), jnp.float32))
        w1.append(0.05 * jax.random.normal(bk[2], (OUT_DIM, MLP_HIDDEN), jnp.float32))
        b1.append(jnp.zeros((1, MLP_HIDDEN), jnp.float32))
        w2.append(0.05 * jax.random.normal(bk[3], (MLP_HIDDEN, OUT_DIM), jnp.float32))
        b2.append(jnp.zeros((1, OUT_DIM), jnp.float32))

    stack = lambda xs: jnp.stack(xs, axis=0)
    return {
        # matmul weights in bf16 (MXU-native everywhere); LN params / biases in f32
        "wx": wx.astype(jnp.bfloat16),
        "wsk": wsk.astype(jnp.bfloat16),
        "proj_bias": bx + bsk,                    # fused 1x1-conv biases (f32)
        "ln1_g": stack(ln1_g), "ln1_b": stack(ln1_b),
        "wqkv": stack(wqkv).astype(jnp.bfloat16), "bqkv": stack(bqkv),
        "wo": stack(wo).astype(jnp.bfloat16), "bo": stack(bo),
        "ln2_g": stack(ln2_g), "ln2_b": stack(ln2_b),
        "w1": stack(w1).astype(jnp.bfloat16), "b1": stack(b1),
        "w2": stack(w2).astype(jnp.bfloat16), "b2": stack(b2),
    }


# ---------------------------------------------------------------------------
# DecoderStage forward
# ---------------------------------------------------------------------------
@jax.jit
def decoder_stage_forward(x_nchw, skip_nchw, params):
    # NCHW -> NHWC
    x = jnp.transpose(x_nchw, (0, 2, 3, 1)).astype(jnp.float32)
    skip = jnp.transpose(skip_nchw, (0, 2, 3, 1)).astype(jnp.float32)

    x = bilinear_upsample_x2(x)                    # (B, 2H, 2W, Cin)
    b, hh, ww, _ = x.shape
    # TODO(synk): F.interpolate fallback for mismatched skip spatial size not implemented
    # (shapes always match here by construction).
    assert (hh, ww) == tuple(skip.shape[1:3])

    # Window-tokenize ONCE on the tiny inputs; the whole stage runs in this layout.
    xw = window_tokens(x, WIN)                     # (B, NTOK_B, Cin)
    skw = window_tokens(skip, WIN)                 # (B, NTOK_B, Cskip)

    yw = fused_decoder_stage(xw, skw, params)      # (B, NTOK_B, OUT_DIM)

    y = window_untokens(yw, WIN, b, hh, ww, OUT_DIM)
    # NHWC -> NCHW (match PyTorch output convention)
    return jnp.transpose(y, (0, 3, 1, 2))


if __name__ == "__main__":
    key = jax.random.PRNGKey(0)
    kx, ks, kp = jax.random.split(key, 3)
    x = jax.random.normal(kx, (B, INPUT_DIM, H, W), jnp.float32)
    skip = jax.random.normal(ks, (B, SKIP_DIM, 2 * H, 2 * W), jnp.float32)
    params = init_params(kp)

    out = decoder_stage_forward(x, skip, params)
    out = jax.block_until_ready(out)
    assert out.shape == (B, OUT_DIM, 2 * H, 2 * W), out.shape
    assert bool(jnp.all(jnp.isfinite(out)))
    print("KERNEL_OK")
</pallas_src>

<mosaic_0001>
module attributes {stable_mosaic.version = 11 : i64} {
  func.func @fused_decoder_kernel(%arg0: i32, %arg1: memref<1x256x8xf32, #tpu.memory_space<vmem>>, %arg2: memref<1x256x4xf32, #tpu.memory_space<vmem>>, %arg3: memref<8x16xbf16, #tpu.memory_space<vmem>>, %arg4: memref<4x16xbf16, #tpu.memory_space<vmem>>, %arg5: memref<1x16xf32, #tpu.memory_space<vmem>>, %arg6: memref<2x1x16xf32, #tpu.memory_space<vmem>>, %arg7: memref<2x1x16xf32, #tpu.memory_space<vmem>>, %arg8: memref<2x16x48xbf16, #tpu.memory_space<vmem>>, %arg9: memref<2x1x48xf32, #tpu.memory_space<vmem>>, %arg10: memref<2x16x16xbf16, #tpu.memory_space<vmem>>, %arg11: memref<2x1x16xf32, #tpu.memory_space<vmem>>, %arg12: memref<2x1x16xf32, #tpu.memory_space<vmem>>, %arg13: memref<2x1x16xf32, #tpu.memory_space<vmem>>, %arg14: memref<2x16x64xbf16, #tpu.memory_space<vmem>>, %arg15: memref<2x1x64xf32, #tpu.memory_space<vmem>>, %arg16: memref<2x64x16xbf16, #tpu.memory_space<vmem>>, %arg17: memref<2x1x16xf32, #tpu.memory_space<vmem>>, %arg18: memref<1x256x16xf32, #tpu.memory_space<vmem>>) attributes {dimension_semantics = [#tpu.dimension_semantics<parallel>], iteration_bounds = array<i64: 2>, scalar_prefetch = 0 : i64, scratch_operands = 0 : i64, tpu.core_type = #tpu.core_type<tc>, window_params = [{transform_indices = @transform_0, window_bounds = array<i64: 1, 256, 8>}, {transform_indices = @transform_1, window_bounds = array<i64: 1, 256, 4>}, {pipeline_mode = #tpu.pipeline_mode<synchronous>, transform_indices = @transform_2, window_bounds = array<i64: 8, 16>}, {pipeline_mode = #tpu.pipeline_mode<synchronous>, transform_indices = @transform_3, window_bounds = array<i64: 4, 16>}, {pipeline_mode = #tpu.pipeline_mode<synchronous>, transform_indices = @transform_4, window_bounds = array<i64: 1, 16>}, {pipeline_mode = #tpu.pipeline_mode<synchronous>, transform_indices = @transform_5, window_bounds = array<i64: 2, 1, 16>}, {pipeline_mode = #tpu.pipeline_mode<synchronous>, transform_indices = @transform_6, window_bounds = array<i64: 2, 1, 16>}, {pipeline_mode = #tpu.pipeline_mode<synchronous>, transform_indices = @transform_7, window_bounds = array<i64: 2, 16, 48>}, {pipeline_mode = #tpu.pipeline_mode<synchronous>, transform_indices = @transform_8, window_bounds = array<i64: 2, 1, 48>}, {pipeline_mode = #tpu.pipeline_mode<synchronous>, transform_indices = @transform_9, window_bounds = array<i64: 2, 16, 16>}, {pipeline_mode = #tpu.pipeline_mode<synchronous>, transform_indices = @transform_10, window_bounds = array<i64: 2, 1, 16>}, {pipeline_mode = #tpu.pipeline_mode<synchronous>, transform_indices = @transform_11, window_bounds = array<i64: 2, 1, 16>}, {pipeline_mode = #tpu.pipeline_mode<synchronous>, transform_indices = @transform_12, window_bounds = array<i64: 2, 1, 16>}, {pipeline_mode = #tpu.pipeline_mode<synchronous>, transform_indices = @transform_13, window_bounds = array<i64: 2, 16, 64>}, {pipeline_mode = #tpu.pipeline_mode<synchronous>, transform_indices = @transform_14, window_bounds = array<i64: 2, 1, 64>}, {pipeline_mode = #tpu.pipeline_mode<synchronous>, transform_indices = @transform_15, window_bounds = array<i64: 2, 64, 16>}, {pipeline_mode = #tpu.pipeline_mode<synchronous>, transform_indices = @transform_16, window_bounds = array<i64: 2, 1, 16>}, {transform_indices = @transform_17, window_bounds = array<i64: 1, 256, 16>}]} {
    %c0 = arith.constant 0 : index
    %c0_0 = arith.constant 0 : index
    %c0_1 = arith.constant 0 : index
    %0 = vector.load %arg1[%c0, %c0_0, %c0_1] : memref<1x256x8xf32, #tpu.memory_space<vmem>>, vector<1x256x8xf32>
    %1 = vector.shape_cast %0 : vector<1x256x8xf32> to vector<256x8xf32>
    %2 = arith.truncf %1 : vector<256x8xf32> to vector<256x8xbf16>
    %c0_2 = arith.constant 0 : index
    %c0_3 = arith.constant 0 : index
    %c0_4 = arith.constant 0 : index
    %3 = vector.load %arg2[%c0_2, %c0_3, %c0_4] : memref<1x256x4xf32, #tpu.memory_space<vmem>>, vector<1x256x4xf32>
    %4 = vector.shape_cast %3 : vector<1x256x4xf32> to vector<256x4xf32>
    %5 = arith.truncf %4 : vector<256x4xf32> to vector<256x4xbf16>
    %c0_5 = arith.constant 0 : index
    %c0_6 = arith.constant 0 : index
    %6 = vector.load %arg3[%c0_5, %c0_6] : memref<8x16xbf16, #tpu.memory_space<vmem>>, vector<8x16xbf16>
    %cst = arith.constant dense<0.000000e+00> : vector<256x16xf32>
    %7 = tpu.matmul %2, %6, %cst {dimension_numbers = #tpu.dot_dimension_numbers<[1], [0], [0], [1], [0, 0, 1, 1], [], []>} : vector<256x8xbf16>, vector<8x16xbf16>, vector<256x16xf32> -> vector<256x16xf32>
    %c0_7 = arith.constant 0 : index
    %c0_8 = arith.constant 0 : index
    %8 = vector.load %arg4[%c0_7, %c0_8] : memref<4x16xbf16, #tpu.memory_space<vmem>>, vector<4x16xbf16>
    %cst_9 = arith.constant dense<0.000000e+00> : vector<256x16xf32>
    %9 = tpu.matmul %5, %8, %cst_9 {dimension_numbers = #tpu.dot_dimension_numbers<[1], [0], [0], [1], [0, 0, 1, 1], [], []>} : vector<256x4xbf16>, vector<4x16xbf16>, vector<256x16xf32> -> vector<256x16xf32>
    %10 = arith.addf %7, %9 : vector<256x16xf32>
    %c0_10 = arith.constant 0 : index
    %c0_11 = arith.constant 0 : index
    %11 = vector.load %arg5[%c0_10, %c0_11] : memref<1x16xf32, #tpu.memory_space<vmem>>, vector<1x16xf32>
    %12 = vector.broadcast %11 : vector<1x16xf32> to vector<256x16xf32>
    %13 = arith.addf %10, %12 : vector<256x16xf32>
    %c0_12 = arith.constant 0 : index
    %c0_13 = arith.constant 0 : index
    %c0_14 = arith.constant 0 : index
    %14 = vector.load %arg8[%c0_12, %c0_13, %c0_14] : memref<2x16x48xbf16, #tpu.memory_space<vmem>>, vector<1x16x48xbf16>
    %15 = vector.shape_cast %14 : vector<1x16x48xbf16> to vector<16x48xbf16>
    %c0_15 = arith.constant 0 : index
    %c0_16 = arith.constant 0 : index
    %c0_17 = arith.constant 0 : index
    %16 = vector.load %arg9[%c0_15, %c0_16, %c0_17] : memref<2x1x48xf32, #tpu.memory_space<vmem>>, vector<1x1x48xf32>
    %17 = vector.shape_cast %16 : vector<1x1x48xf32> to vector<1x48xf32>
    %c0_18 = arith.constant 0 : index
    %c0_19 = arith.constant 0 : index
    %c0_20 = arith.constant 0 : index
    %18 = vector.load %arg10[%c0_18, %c0_19, %c0_20] : memref<2x16x16xbf16, #tpu.memory_space<vmem>>, vector<1x16x16xbf16>
    %19 = vector.shape_cast %18 : vector<1x16x16xbf16> to vector<16x16xbf16>
    %c0_21 = arith.constant 0 : index
    %c0_22 = arith.constant 0 : index
    %c0_23 = arith.constant 0 : index
    %20 = vector.load %arg11[%c0_21, %c0_22, %c0_23] : memref<2x1x16xf32, #tpu.memory_space<vmem>>, vector<1x1x16xf32>
    %21 = vector.shape_cast %20 : vector<1x1x16xf32> to vector<1x16xf32>
    %cst_24 = arith.constant dense<0.000000e+00> : vector<256xf32>
    %22 = vector.multi_reduction <add>, %13, %cst_24 [1] : vector<256x16xf32> to vector<256xf32>
    %23 = vector.shape_cast %22 : vector<256xf32> to vector<256x1xf32>
    %cst_25 = arith.constant 1.600000e+01 : f32
    %24 = vector.broadcast %cst_25 : f32 to vector<256x1xf32>
    %25 = arith.divf %23, %24 : vector<256x1xf32>
    %26 = vector.broadcast %25 : vector<256x1xf32> to vector<256x16xf32>
    %27 = arith.subf %13, %26 : vector<256x16xf32>
    %28 = arith.mulf %27, %27 : vector<256x16xf32>
    %cst_26 = arith.constant dense<0.000000e+00> : vector<256xf32>
    %29 = vector.multi_reduction <add>, %28, %cst_26 [1] : vector<256x16xf32> to vector<256xf32>
    %30 = vector.shape_cast %29 : vector<256xf32> to vector<256x1xf32>
    %cst_27 = arith.constant 1.600000e+01 : f32
    %31 = vector.broadcast %cst_27 : f32 to vector<256x1xf32>
    %32 = arith.divf %30, %31 : vector<256x1xf32>
    %33 = vector.broadcast %25 : vector<256x1xf32> to vector<256x16xf32>
    %34 = arith.subf %13, %33 : vector<256x16xf32>
    %cst_28 = arith.constant 9.99999974E-6 : f32
    %35 = vector.broadcast %cst_28 : f32 to vector<256x1xf32>
    %36 = arith.addf %32, %35 : vector<256x1xf32>
    %37 = math.rsqrt %36 : vector<256x1xf32>
    %38 = vector.broadcast %37 : vector<256x1xf32> to vector<256x16xf32>
    %39 = arith.mulf %34, %38 : vector<256x16xf32>
    %c0_29 = arith.constant 0 : index
    %c0_30 = arith.constant 0 : index
    %c0_31 = arith.constant 0 : index
    %40 = vector.load %arg6[%c0_29, %c0_30, %c0_31] : memref<2x1x16xf32, #tpu.memory_space<vmem>>, vector<1x1x16xf32>
    %41 = vector.shape_cast %40 : vector<1x1x16xf32> to vector<1x16xf32>
    %42 = vector.broadcast %41 : vector<1x16xf32> to vector<256x16xf32>
    %43 = arith.mulf %39, %42 : vector<256x16xf32>
    %c0_32 = arith.constant 0 : index
    %c0_33 = arith.constant 0 : index
    %c0_34 = arith.constant 0 : index
    %44 = vector.load %arg7[%c0_32, %c0_33, %c0_34] : memref<2x1x16xf32, #tpu.memory_space<vmem>>, vector<1x1x16xf32>
    %45 = vector.shape_cast %44 : vector<1x1x16xf32> to vector<1x16xf32>
    %46 = vector.broadcast %45 : vector<1x16xf32> to vector<256x16xf32>
    %47 = arith.addf %43, %46 : vector<256x16xf32>
    %48 = arith.truncf %47 : vector<256x16xf32> to vector<256x16xbf16>
    %cst_35 = arith.constant dense<0.000000e+00> : vector<256x48xf32>
    %49 = tpu.matmul %48, %15, %cst_35 {dimension_numbers = #tpu.dot_dimension_numbers<[1], [0], [0], [1], [0, 0, 1, 1], [], []>} : vector<256x16xbf16>, vector<16x48xbf16>, vector<256x48xf32> -> vector<256x48xf32>
    %50 = vector.broadcast %17 : vector<1x48xf32> to vector<256x48xf32>
    %51 = arith.addf %49, %50 : vector<256x48xf32>
    %52 = vector.shape_cast %51 : vector<256x48xf32> to vector<16x16x48xf32>
    %53 = vector.extract_strided_slice %52 {offsets = [0, 0, 0], sizes = [16, 16, 16], strides = [1, 1, 1]} : vector<16x16x48xf32> to vector<16x16x16xf32>
    %54 = arith.truncf %53 : vector<16x16x16xf32> to vector<16x16x16xbf16>
    %55 = vector.extract_strided_slice %52 {offsets = [0, 0, 16], sizes = [16, 16, 16], strides = [1, 1, 1]} : vector<16x16x48xf32> to vector<16x16x16xf32>
    %56 = arith.truncf %55 : vector<16x16x16xf32> to vector<16x16x16xbf16>
    %57 = vector.extract_strided_slice %52 {offsets = [0, 0, 32], sizes = [16, 16, 16], strides = [1, 1, 1]} : vector<16x16x48xf32> to vector<16x16x16xf32>
    %58 = arith.truncf %57 : vector<16x16x16xf32> to vector<16x16x16xbf16>
    %cst_36 = arith.constant 0.000000e+00 : f32
    %59 = vector.broadcast %cst_36 : f32 to vector<256x16xf32>
    %60 = vector.extract_strided_slice %54 {offsets = [0, 0, 0], sizes = [16, 16, 8], strides = [1, 1, 1]} : vector<16x16x16xbf16> to vector<16x16x8xbf16>
    %61 = vector.extract_strided_slice %56 {offsets = [0, 0, 0], sizes = [16, 16, 8], strides = [1, 1, 1]} : vector<16x16x16xbf16> to vector<16x16x8xbf16>
    "tpu.trace_start"() <{level = 10 : i32, message = "wtd,wsd->wts"}> : () -> ()
    %cst_37 = arith.constant dense<0.000000e+00> : vector<16x16x16xf32>
    %62 = tpu.matmul %60, %61, %cst_37 {dimension_numbers = #tpu.dot_dimension_numbers<[2], [2], [1], [1], [0, 0, 0, 1, 1, 1], [0], [0]>} : vector<16x16x8xbf16>, vector<16x16x8xbf16>, vector<16x16x16xf32> -> vector<16x16x16xf32>
    "tpu.trace_stop"() : () -> ()
    %cst_38 = arith.constant 0.353553385 : f32
    %63 = vector.broadcast %cst_38 : f32 to vector<16x16x16xf32>
    %64 = arith.mulf %62, %63 : vector<16x16x16xf32>
    %cst_39 = arith.constant dense<0xFF800000> : vector<16x16xf32>
    %65 = vector.multi_reduction <maximumf>, %64, %cst_39 [2] : vector<16x16x16xf32> to vector<16x16xf32>
    %66 = vector.shape_cast %65 : vector<16x16xf32> to vector<16x16x1xf32>
    %67 = vector.broadcast %66 : vector<16x16x1xf32> to vector<16x16x16xf32>
    %68 = arith.subf %64, %67 : vector<16x16x16xf32>
    %69 = math.exp %68 : vector<16x16x16xf32>
    %cst_40 = arith.constant dense<0.000000e+00> : vector<16x16xf32>
    %70 = vector.multi_reduction <add>, %69, %cst_40 [2] : vector<16x16x16xf32> to vector<16x16xf32>
    %71 = vector.shape_cast %70 : vector<16x16xf32> to vector<16x16x1xf32>
    %72 = tpu.reciprocal %71 {approx = true} : vector<16x16x1xf32> -> vector<16x16x1xf32>
    %73 = arith.truncf %69 : vector<16x16x16xf32> to vector<16x16x16xbf16>
    %74 = vector.extract_strided_slice %58 {offsets = [0, 0, 0], sizes = [16, 16, 8], strides = [1, 1, 1]} : vector<16x16x16xbf16> to vector<16x16x8xbf16>
    "tpu.trace_start"() <{level = 10 : i32, message = "wts,wsd->wtd"}> : () -> ()
    %cst_41 = arith.constant dense<0.000000e+00> : vector<16x16x8xf32>
    %75 = tpu.matmul %73, %74, %cst_41 {dimension_numbers = #tpu.dot_dimension_numbers<[2], [1], [1], [2], [0, 0, 0, 1, 1, 2], [0], [0]>} : vector<16x16x16xbf16>, vector<16x16x8xbf16>, vector<16x16x8xf32> -> vector<16x16x8xf32>
    "tpu.trace_stop"() : () -> ()
    %76 = vector.broadcast %72 : vector<16x16x1xf32> to vector<16x16x8xf32>
    %77 = arith.mulf %75, %76 : vector<16x16x8xf32>
    %78 = vector.shape_cast %77 : vector<16x16x8xf32> to vector<256x8xf32>
    %79 = arith.truncf %78 : vector<256x8xf32> to vector<256x8xbf16>
    %80 = vector.extract_strided_slice %19 {offsets = [0, 0], sizes = [8, 16], strides = [1, 1]} : vector<16x16xbf16> to vector<8x16xbf16>
    %cst_42 = arith.constant dense<0.000000e+00> : vector<256x16xf32>
    %81 = tpu.matmul %79, %80, %cst_42 {dimension_numbers = #tpu.dot_dimension_numbers<[1], [0], [0], [1], [0, 0, 1, 1], [], []>} : vector<256x8xbf16>, vector<8x16xbf16>, vector<256x16xf32> -> vector<256x16xf32>
    %82 = arith.addf %59, %81 : vector<256x16xf32>
    %83 = vector.extract_strided_slice %54 {offsets = [0, 0, 8], sizes = [16, 16, 8], strides = [1, 1, 1]} : vector<16x16x16xbf16> to vector<16x16x8xbf16>
    %84 = vector.extract_strided_slice %56 {offsets = [0, 0, 8], sizes = [16, 16, 8], strides = [1, 1, 1]} : vector<16x16x16xbf16> to vector<16x16x8xbf16>
    "tpu.trace_start"() <{level = 10 : i32, message = "wtd,wsd->wts"}> : () -> ()
    %cst_43 = arith.constant dense<0.000000e+00> : vector<16x16x16xf32>
    %85 = tpu.matmul %83, %84, %cst_43 {dimension_numbers = #tpu.dot_dimension_numbers<[2], [2], [1], [1], [0, 0, 0, 1, 1, 1], [0], [0]>} : vector<16x16x8xbf16>, vector<16x16x8xbf16>, vector<16x16x16xf32> -> vector<16x16x16xf32>
    "tpu.trace_stop"() : () -> ()
    %cst_44 = arith.constant 0.353553385 : f32
    %86 = vector.broadcast %cst_44 : f32 to vector<16x16x16xf32>
    %87 = arith.mulf %85, %86 : vector<16x16x16xf32>
    %cst_45 = arith.constant dense<0xFF800000> : vector<16x16xf32>
    %88 = vector.multi_reduction <maximumf>, %87, %cst_45 [2] : vector<16x16x16xf32> to vector<16x16xf32>
    %89 = vector.shape_cast %88 : vector<16x16xf32> to vector<16x16x1xf32>
    %90 = vector.broadcast %89 : vector<16x16x1xf32> to vector<16x16x16xf32>
    %91 = arith.subf %87, %90 : vector<16x16x16xf32>
    %92 = math.exp %91 : vector<16x16x16xf32>
    %cst_46 = arith.constant dense<0.000000e+00> : vector<16x16xf32>
    %93 = vector.multi_reduction <add>, %92, %cst_46 [2] : vector<16x16x16xf32> to vector<16x16xf32>
    %94 = vector.shape_cast %93 : vector<16x16xf32> to vector<16x16x1xf32>
    %95 = tpu.reciprocal %94 {approx = true} : vector<16x16x1xf32> -> vector<16x16x1xf32>
    %96 = arith.truncf %92 : vector<16x16x16xf32> to vector<16x16x16xbf16>
    %97 = vector.extract_strided_slice %58 {offsets = [0, 0, 8], sizes = [16, 16, 8], strides = [1, 1, 1]} : vector<16x16x16xbf16> to vector<16x16x8xbf16>
    "tpu.trace_start"() <{level = 10 : i32, message = "wts,wsd->wtd"}> : () -> ()
    %cst_47 = arith.constant dense<0.000000e+00> : vector<16x16x8xf32>
    %98 = tpu.matmul %96, %97, %cst_47 {dimension_numbers = #tpu.dot_dimension_numbers<[2], [1], [1], [2], [0, 0, 0, 1, 1, 2], [0], [0]>} : vector<16x16x16xbf16>, vector<16x16x8xbf16>, vector<16x16x8xf32> -> vector<16x16x8xf32>
    "tpu.trace_stop"() : () -> ()
    %99 = vector.broadcast %95 : vector<16x16x1xf32> to vector<16x16x8xf32>
    %100 = arith.mulf %98, %99 : vector<16x16x8xf32>
    %101 = vector.shape_cast %100 : vector<16x16x8xf32> to vector<256x8xf32>
    %102 = arith.truncf %101 : vector<256x8xf32> to vector<256x8xbf16>
    %103 = vector.extract_strided_slice %19 {offsets = [8, 0], sizes = [8, 16], strides = [1, 1]} : vector<16x16xbf16> to vector<8x16xbf16>
    %cst_48 = arith.constant dense<0.000000e+00> : vector<256x16xf32>
    %104 = tpu.matmul %102, %103, %cst_48 {dimension_numbers = #tpu.dot_dimension_numbers<[1], [0], [0], [1], [0, 0, 1, 1], [], []>} : vector<256x8xbf16>, vector<8x16xbf16>, vector<256x16xf32> -> vector<256x16xf32>
    %105 = arith.addf %82, %104 : vector<256x16xf32>
    %106 = arith.addf %13, %105 : vector<256x16xf32>
    %107 = vector.broadcast %21 : vector<1x16xf32> to vector<256x16xf32>
    %108 = arith.addf %106, %107 : vector<256x16xf32>
    %cst_49 = arith.constant dense<0.000000e+00> : vector<256xf32>
    %109 = vector.multi_reduction <add>, %108, %cst_49 [1] : vector<256x16xf32> to vector<256xf32>
    %110 = vector.shape_cast %109 : vector<256xf32> to vector<256x1xf32>
    %cst_50 = arith.constant 1.600000e+01 : f32
    %111 = vector.broadcast %cst_50 : f32 to vector<256x1xf32>
    %112 = arith.divf %110, %111 : vector<256x1xf32>
    %113 = vector.broadcast %112 : vector<256x1xf32> to vector<256x16xf32>
    %114 = arith.subf %108, %113 : vector<256x16xf32>
    %115 = arith.mulf %114, %114 : vector<256x16xf32>
    %cst_51 = arith.constant dense<0.000000e+00> : vector<256xf32>
    %116 = vector.multi_reduction <add>, %115, %cst_51 [1] : vector<256x16xf32> to vector<256xf32>
    %117 = vector.shape_cast %116 : vector<256xf32> to vector<256x1xf32>
    %cst_52 = arith.constant 1.600000e+01 : f32
    %118 = vector.broadcast %cst_52 : f32 to vector<256x1xf32>
    %119 = arith.divf %117, %118 : vector<256x1xf32>
    %120 = vector.broadcast %112 : vector<256x1xf32> to vector<256x16xf32>
    %121 = arith.subf %108, %120 : vector<256x16xf32>
    %cst_53 = arith.constant 9.99999974E-6 : f32
    %122 = vector.broadcast %cst_53 : f32 to vector<256x1xf32>
    %123 = arith.addf %119, %122 : vector<256x1xf32>
    %124 = math.rsqrt %123 : vector<256x1xf32>
    %125 = vector.broadcast %124 : vector<256x1xf32> to vector<256x16xf32>
    %126 = arith.mulf %121, %125 : vector<256x16xf32>
    %c0_54 = arith.constant 0 : index
    %c0_55 = arith.constant 0 : index
    %c0_56 = arith.constant 0 : index
    %127 = vector.load %arg12[%c0_54, %c0_55, %c0_56] : memref<2x1x16xf32, #tpu.memory_space<vmem>>, vector<1x1x16xf32>
    %128 = vector.shape_cast %127 : vector<1x1x16xf32> to vector<1x16xf32>
    %129 = vector.broadcast %128 : vector<1x16xf32> to vector<256x16xf32>
    %130 = arith.mulf %126, %129 : vector<256x16xf32>
    %c0_57 = arith.constant 0 : index
    %c0_58 = arith.constant 0 : index
    %c0_59 = arith.constant 0 : index
    %131 = vector.load %arg13[%c0_57, %c0_58, %c0_59] : memref<2x1x16xf32, #tpu.memory_space<vmem>>, vector<1x1x16xf32>
    %132 = vector.shape_cast %131 : vector<1x1x16xf32> to vector<1x16xf32>
    %133 = vector.broadcast %132 : vector<1x16xf32> to vector<256x16xf32>
    %134 = arith.addf %130, %133 : vector<256x16xf32>
    %135 = arith.truncf %134 : vector<256x16xf32> to vector<256x16xbf16>
    %c0_60 = arith.constant 0 : index
    %c0_61 = arith.constant 0 : index
    %c0_62 = arith.constant 0 : index
    %136 = vector.load %arg14[%c0_60, %c0_61, %c0_62] : memref<2x16x64xbf16, #tpu.memory_space<vmem>>, vector<1x16x64xbf16>
    %137 = vector.shape_cast %136 : vector<1x16x64xbf16> to vector<16x64xbf16>
    %cst_63 = arith.constant dense<0.000000e+00> : vector<256x64xf32>
    %138 = tpu.matmul %135, %137, %cst_63 {dimension_numbers = #tpu.dot_dimension_numbers<[1], [0], [0], [1], [0, 0, 1, 1], [], []>} : vector<256x16xbf16>, vector<16x64xbf16>, vector<256x64xf32> -> vector<256x64xf32>
    %c0_64 = arith.constant 0 : index
    %c0_65 = arith.constant 0 : index
    %c0_66 = arith.constant 0 : index
    %139 = vector.load %arg15[%c0_64, %c0_65, %c0_66] : memref<2x1x64xf32, #tpu.memory_space<vmem>>, vector<1x1x64xf32>
    %140 = vector.shape_cast %139 : vector<1x1x64xf32> to vector<1x64xf32>
    %141 = vector.broadcast %140 : vector<1x64xf32> to vector<256x64xf32>
    %142 = arith.addf %138, %141 : vector<256x64xf32>
    %143 = arith.mulf %142, %142 : vector<256x64xf32>
    %144 = arith.mulf %142, %143 : vector<256x64xf32>
    %cst_67 = arith.constant 4.471500e-02 : f32
    %145 = vector.broadcast %cst_67 : f32 to vector<256x64xf32>
    %146 = arith.mulf %145, %144 : vector<256x64xf32>
    %147 = arith.addf %142, %146 : vector<256x64xf32>
    %cst_68 = arith.constant 0.797884583 : f32
    %148 = vector.broadcast %cst_68 : f32 to vector<256x64xf32>
    %149 = arith.mulf %148, %147 : vector<256x64xf32>
    %150 = math.tanh %149 : vector<256x64xf32>
    %cst_69 = arith.constant 1.000000e+00 : f32
    %151 = vector.broadcast %cst_69 : f32 to vector<256x64xf32>
    %152 = arith.addf %151, %150 : vector<256x64xf32>
    %cst_70 = arith.constant 5.000000e-01 : f32
    %153 = vector.broadcast %cst_70 : f32 to vector<256x64xf32>
    %154 = arith.mulf %153, %152 : vector<256x64xf32>
    %155 = arith.mulf %142, %154 : vector<256x64xf32>
    %156 = arith.truncf %155 : vector<256x64xf32> to vector<256x64xbf16>
    %c0_71 = arith.constant 0 : index
    %c0_72 = arith.constant 0 : index
    %c0_73 = arith.constant 0 : index
    %157 = vector.load %arg16[%c0_71, %c0_72, %c0_73] : memref<2x64x16xbf16, #tpu.memory_space<vmem>>, vector<1x64x16xbf16>
    %158 = vector.shape_cast %157 : vector<1x64x16xbf16> to vector<64x16xbf16>
    %cst_74 = arith.constant dense<0.000000e+00> : vector<256x16xf32>
    %159 = tpu.matmul %156, %158, %cst_74 {dimension_numbers = #tpu.dot_dimension_numbers<[1], [0], [0], [1], [0, 0, 1, 1], [], []>} : vector<256x64xbf16>, vector<64x16xbf16>, vector<256x16xf32> -> vector<256x16xf32>
    %160 = arith.addf %108, %159 : vector<256x16xf32>
    %c0_75 = arith.constant 0 : index
    %c0_76 = arith.constant 0 : index
    %c0_77 = arith.constant 0 : index
    %161 = vector.load %arg17[%c0_75, %c0_76, %c0_77] : memref<2x1x16xf32, #tpu.memory_space<vmem>>, vector<1x1x16xf32>
    %162 = vector.shape_cast %161 : vector<1x1x16xf32> to vector<1x16xf32>
    %163 = vector.broadcast %162 : vector<1x16xf32> to vector<256x16xf32>
    %164 = arith.addf %160, %163 : vector<256x16xf32>
    %c1 = arith.constant 1 : index
    %c0_78 = arith.constant 0 : index
    %c0_79 = arith.constant 0 : index
    %165 = vector.load %arg8[%c1, %c0_78, %c0_79] : memref<2x16x48xbf16, #tpu.memory_space<vmem>>, vector<1x16x48xbf16>
    %166 = vector.shape_cast %165 : vector<1x16x48xbf16> to vector<16x48xbf16>
    %c1_80 = arith.constant 1 : index
    %c0_81 = arith.constant 0 : index
    %c0_82 = arith.constant 0 : index
    %167 = vector.load %arg9[%c1_80, %c0_81, %c0_82] : memref<2x1x48xf32, #tpu.memory_space<vmem>>, vector<1x1x48xf32>
    %168 = vector.shape_cast %167 : vector<1x1x48xf32> to vector<1x48xf32>
    %c1_83 = arith.constant 1 : index
    %c0_84 = arith.constant 0 : index
    %c0_85 = arith.constant 0 : index
    %169 = vector.load %arg10[%c1_83, %c0_84, %c0_85] : memref<2x16x16xbf16, #tpu.memory_space<vmem>>, vector<1x16x16xbf16>
    %170 = vector.shape_cast %169 : vector<1x16x16xbf16> to vector<16x16xbf16>
    %c1_86 = arith.constant 1 : index
    %c0_87 = arith.constant 0 : index
    %c0_88 = arith.constant 0 : index
    %171 = vector.load %arg11[%c1_86, %c0_87, %c0_88] : memref<2x1x16xf32, #tpu.memory_space<vmem>>, vector<1x1x16xf32>
    %172 = vector.shape_cast %171 : vector<1x1x16xf32> to vector<1x16xf32>
    %cst_89 = arith.constant dense<0.000000e+00> : vector<256xf32>
    %173 = vector.multi_reduction <add>, %164, %cst_89 [1] : vector<256x16xf32> to vector<256xf32>
    %174 = vector.shape_cast %173 : vector<256xf32> to vector<256x1xf32>
    %cst_90 = arith.constant 1.600000e+01 : f32
    %175 = vector.broadcast %cst_90 : f32 to vector<256x1xf32>
    %176 = arith.divf %174, %175 : vector<256x1xf32>
    %177 = vector.broadcast %176 : vector<256x1xf32> to vector<256x16xf32>
    %178 = arith.subf %164, %177 : vector<256x16xf32>
    %179 = arith.mulf %178, %178 : vector<256x16xf32>
    %cst_91 = arith.constant dense<0.000000e+00> : vector<256xf32>
    %180 = vector.multi_reduction <add>, %179, %cst_91 [1] : vector<256x16xf32> to vector<256xf32>
    %181 = vector.shape_cast %180 : vector<256xf32> to vector<256x1xf32>
    %cst_92 = arith.constant 1.600000e+01 : f32
    %182 = vector.broadcast %cst_92 : f32 to vector<256x1xf32>
    %183 = arith.divf %181, %182 : vector<256x1xf32>
    %184 = vector.broadcast %176 : vector<256x1xf32> to vector<256x16xf32>
    %185 = arith.subf %164, %184 : vector<256x16xf32>
    %cst_93 = arith.constant 9.99999974E-6 : f32
    %186 = vector.broadcast %cst_93 : f32 to vector<256x1xf32>
    %187 = arith.addf %183, %186 : vector<256x1xf32>
    %188 = math.rsqrt %187 : vector<256x1xf32>
    %189 = vector.broadcast %188 : vector<256x1xf32> to vector<256x16xf32>
    %190 = arith.mulf %185, %189 : vector<256x16xf32>
    %c1_94 = arith.constant 1 : index
    %c0_95 = arith.constant 0 : index
    %c0_96 = arith.constant 0 : index
    %191 = vector.load %arg6[%c1_94, %c0_95, %c0_96] : memref<2x1x16xf32, #tpu.memory_space<vmem>>, vector<1x1x16xf32>
    %192 = vector.shape_cast %191 : vector<1x1x16xf32> to vector<1x16xf32>
    %193 = vector.broadcast %192 : vector<1x16xf32> to vector<256x16xf32>
    %194 = arith.mulf %190, %193 : vector<256x16xf32>
    %c1_97 = arith.constant 1 : index
    %c0_98 = arith.constant 0 : index
    %c0_99 = arith.constant 0 : index
    %195 = vector.load %arg7[%c1_97, %c0_98, %c0_99] : memref<2x1x16xf32, #tpu.memory_space<vmem>>, vector<1x1x16xf32>
    %196 = vector.shape_cast %195 : vector<1x1x16xf32> to vector<1x16xf32>
    %197 = vector.broadcast %196 : vector<1x16xf32> to vector<256x16xf32>
    %198 = arith.addf %194, %197 : vector<256x16xf32>
    %199 = arith.truncf %198 : vector<256x16xf32> to vector<256x16xbf16>
    %cst_100 = arith.constant dense<0.000000e+00> : vector<256x48xf32>
    %200 = tpu.matmul %199, %166, %cst_100 {dimension_numbers = #tpu.dot_dimension_numbers<[1], [0], [0], [1], [0, 0, 1, 1], [], []>} : vector<256x16xbf16>, vector<16x48xbf16>, vector<256x48xf32> -> vector<256x48xf32>
    %201 = vector.broadcast %168 : vector<1x48xf32> to vector<256x48xf32>
    %202 = arith.addf %200, %201 : vector<256x48xf32>
    %203 = vector.shape_cast %202 : vector<256x48xf32> to vector<16x16x48xf32>
    %204 = vector.extract_strided_slice %203 {offsets = [0, 0, 0], sizes = [16, 16, 16], strides = [1, 1, 1]} : vector<16x16x48xf32> to vector<16x16x16xf32>
    %205 = arith.truncf %204 : vector<16x16x16xf32> to vector<16x16x16xbf16>
    %206 = vector.extract_strided_slice %203 {offsets = [0, 0, 16], sizes = [16, 16, 16], strides = [1, 1, 1]} : vector<16x16x48xf32> to vector<16x16x16xf32>
    %207 = arith.truncf %206 : vector<16x16x16xf32> to vector<16x16x16xbf16>
    %208 = vector.extract_strided_slice %203 {offsets = [0, 0, 32], sizes = [16, 16, 16], strides = [1, 1, 1]} : vector<16x16x48xf32> to vector<16x16x16xf32>
    %209 = arith.truncf %208 : vector<16x16x16xf32> to vector<16x16x16xbf16>
    %cst_101 = arith.constant 0.000000e+00 : f32
    %210 = vector.broadcast %cst_101 : f32 to vector<256x16xf32>
    %211 = vector.extract_strided_slice %205 {offsets = [0, 0, 0], sizes = [16, 16, 8], strides = [1, 1, 1]} : vector<16x16x16xbf16> to vector<16x16x8xbf16>
    %212 = vector.extract_strided_slice %207 {offsets = [0, 0, 0], sizes = [16, 16, 8], strides = [1, 1, 1]} : vector<16x16x16xbf16> to vector<16x16x8xbf16>
    "tpu.trace_start"() <{level = 10 : i32, message = "wtd,wsd->wts"}> : () -> ()
    %cst_102 = arith.constant dense<0.000000e+00> : vector<16x16x16xf32>
    %213 = tpu.matmul %211, %212, %cst_102 {dimension_numbers = #tpu.dot_dimension_numbers<[2], [2], [1], [1], [0, 0, 0, 1, 1, 1], [0], [0]>} : vector<16x16x8xbf16>, vector<16x16x8xbf16>, vector<16x16x16xf32> -> vector<16x16x16xf32>
    "tpu.trace_stop"() : () -> ()
    %cst_103 = arith.constant 0.353553385 : f32
    %214 = vector.broadcast %cst_103 : f32 to vector<16x16x16xf32>
    %215 = arith.mulf %213, %214 : vector<16x16x16xf32>
    %cst_104 = arith.constant dense<0xFF800000> : vector<16x16xf32>
    %216 = vector.multi_reduction <maximumf>, %215, %cst_104 [2] : vector<16x16x16xf32> to vector<16x16xf32>
    %217 = vector.shape_cast %216 : vector<16x16xf32> to vector<16x16x1xf32>
    %218 = vector.broadcast %217 : vector<16x16x1xf32> to vector<16x16x16xf32>
    %219 = arith.subf %215, %218 : vector<16x16x16xf32>
    %220 = math.exp %219 : vector<16x16x16xf32>
    %cst_105 = arith.constant dense<0.000000e+00> : vector<16x16xf32>
    %221 = vector.multi_reduction <add>, %220, %cst_105 [2] : vector<16x16x16xf32> to vector<16x16xf32>
    %222 = vector.shape_cast %221 : vector<16x16xf32> to vector<16x16x1xf32>
    %223 = tpu.reciprocal %222 {approx = true} : vector<16x16x1xf32> -> vector<16x16x1xf32>
    %224 = arith.truncf %220 : vector<16x16x16xf32> to vector<16x16x16xbf16>
    %225 = vector.extract_strided_slice %209 {offsets = [0, 0, 0], sizes = [16, 16, 8], strides = [1, 1, 1]} : vector<16x16x16xbf16> to vector<16x16x8xbf16>
    "tpu.trace_start"() <{level = 10 : i32, message = "wts,wsd->wtd"}> : () -> ()
    %cst_106 = arith.constant dense<0.000000e+00> : vector<16x16x8xf32>
    %226 = tpu.matmul %224, %225, %cst_106 {dimension_numbers = #tpu.dot_dimension_numbers<[2], [1], [1], [2], [0, 0, 0, 1, 1, 2], [0], [0]>} : vector<16x16x16xbf16>, vector<16x16x8xbf16>, vector<16x16x8xf32> -> vector<16x16x8xf32>
    "tpu.trace_stop"() : () -> ()
    %227 = vector.broadcast %223 : vector<16x16x1xf32> to vector<16x16x8xf32>
    %228 = arith.mulf %226, %227 : vector<16x16x8xf32>
    %229 = vector.shape_cast %228 : vector<16x16x8xf32> to vector<256x8xf32>
    %230 = arith.truncf %229 : vector<256x8xf32> to vector<256x8xbf16>
    %231 = vector.extract_strided_slice %170 {offsets = [0, 0], sizes = [8, 16], strides = [1, 1]} : vector<16x16xbf16> to vector<8x16xbf16>
    %cst_107 = arith.constant dense<0.000000e+00> : vector<256x16xf32>
    %232 = tpu.matmul %230, %231, %cst_107 {dimension_numbers = #tpu.dot_dimension_numbers<[1], [0], [0], [1], [0, 0, 1, 1], [], []>} : vector<256x8xbf16>, vector<8x16xbf16>, vector<256x16xf32> -> vector<256x16xf32>
    %233 = arith.addf %210, %232 : vector<256x16xf32>
    %234 = vector.extract_strided_slice %205 {offsets = [0, 0, 8], sizes = [16, 16, 8], strides = [1, 1, 1]} : vector<16x16x16xbf16> to vector<16x16x8xbf16>
    %235 = vector.extract_strided_slice %207 {offsets = [0, 0, 8], sizes = [16, 16, 8], strides = [1, 1, 1]} : vector<16x16x16xbf16> to vector<16x16x8xbf16>
    "tpu.trace_start"() <{level = 10 : i32, message = "wtd,wsd->wts"}> : () -> ()
    %cst_108 = arith.constant dense<0.000000e+00> : vector<16x16x16xf32>
    %236 = tpu.matmul %234, %235, %cst_108 {dimension_numbers = #tpu.dot_dimension_numbers<[2], [2], [1], [1], [0, 0, 0, 1, 1, 1], [0], [0]>} : vector<16x16x8xbf16>, vector<16x16x8xbf16>, vector<16x16x16xf32> -> vector<16x16x16xf32>
    "tpu.trace_stop"() : () -> ()
    %cst_109 = arith.constant 0.353553385 : f32
    %237 = vector.broadcast %cst_109 : f32 to vector<16x16x16xf32>
    %238 = arith.mulf %236, %237 : vector<16x16x16xf32>
    %cst_110 = arith.constant dense<0xFF800000> : vector<16x16xf32>
    %239 = vector.multi_reduction <maximumf>, %238, %cst_110 [2] : vector<16x16x16xf32> to vector<16x16xf32>
    %240 = vector.shape_cast %239 : vector<16x16xf32> to vector<16x16x1xf32>
    %241 = vector.broadcast %240 : vector<16x16x1xf32> to vector<16x16x16xf32>
    %242 = arith.subf %238, %241 : vector<16x16x16xf32>
    %243 = math.exp %242 : vector<16x16x16xf32>
    %cst_111 = arith.constant dense<0.000000e+00> : vector<16x16xf32>
    %244 = vector.multi_reduction <add>, %243, %cst_111 [2] : vector<16x16x16xf32> to vector<16x16xf32>
    %245 = vector.shape_cast %244 : vector<16x16xf32> to vector<16x16x1xf32>
    %246 = tpu.reciprocal %245 {approx = true} : vector<16x16x1xf32> -> vector<16x16x1xf32>
    %247 = arith.truncf %243 : vector<16x16x16xf32> to vector<16x16x16xbf16>
    %248 = vector.extract_strided_slice %209 {offsets = [0, 0, 8], sizes = [16, 16, 8], strides = [1, 1, 1]} : vector<16x16x16xbf16> to vector<16x16x8xbf16>
    "tpu.trace_start"() <{level = 10 : i32, message = "wts,wsd->wtd"}> : () -> ()
    %cst_112 = arith.constant dense<0.000000e+00> : vector<16x16x8xf32>
    %249 = tpu.matmul %247, %248, %cst_112 {dimension_numbers = #tpu.dot_dimension_numbers<[2], [1], [1], [2], [0, 0, 0, 1, 1, 2], [0], [0]>} : vector<16x16x16xbf16>, vector<16x16x8xbf16>, vector<16x16x8xf32> -> vector<16x16x8xf32>
    "tpu.trace_stop"() : () -> ()
    %250 = vector.broadcast %246 : vector<16x16x1xf32> to vector<16x16x8xf32>
    %251 = arith.mulf %249, %250 : vector<16x16x8xf32>
    %252 = vector.shape_cast %251 : vector<16x16x8xf32> to vector<256x8xf32>
    %253 = arith.truncf %252 : vector<256x8xf32> to vector<256x8xbf16>
    %254 = vector.extract_strided_slice %170 {offsets = [8, 0], sizes = [8, 16], strides = [1, 1]} : vector<16x16xbf16> to vector<8x16xbf16>
    %cst_113 = arith.constant dense<0.000000e+00> : vector<256x16xf32>
    %255 = tpu.matmul %253, %254, %cst_113 {dimension_numbers = #tpu.dot_dimension_numbers<[1], [0], [0], [1], [0, 0, 1, 1], [], []>} : vector<256x8xbf16>, vector<8x16xbf16>, vector<256x16xf32> -> vector<256x16xf32>
    %256 = arith.addf %233, %255 : vector<256x16xf32>
    %257 = arith.addf %164, %256 : vector<256x16xf32>
    %258 = vector.broadcast %172 : vector<1x16xf32> to vector<256x16xf32>
    %259 = arith.addf %257, %258 : vector<256x16xf32>
    %cst_114 = arith.constant dense<0.000000e+00> : vector<256xf32>
    %260 = vector.multi_reduction <add>, %259, %cst_114 [1] : vector<256x16xf32> to vector<256xf32>
    %261 = vector.shape_cast %260 : vector<256xf32> to vector<256x1xf32>
    %cst_115 = arith.constant 1.600000e+01 : f32
    %262 = vector.broadcast %cst_115 : f32 to vector<256x1xf32>
    %263 = arith.divf %261, %262 : vector<256x1xf32>
    %264 = vector.broadcast %263 : vector<256x1xf32> to vector<256x16xf32>
    %265 = arith.subf %259, %264 : vector<256x16xf32>
    %266 = arith.mulf %265, %265 : vector<256x16xf32>
    %cst_116 = arith.constant dense<0.000000e+00> : vector<256xf32>
    %267 = vector.multi_reduction <add>, %266, %cst_116 [1] : vector<256x16xf32> to vector<256xf32>
    %268 = vector.shape_cast %267 : vector<256xf32> to vector<256x1xf32>
    %cst_117 = arith.constant 1.600000e+01 : f32
    %269 = vector.broadcast %cst_117 : f32 to vector<256x1xf32>
    %270 = arith.divf %268, %269 : vector<256x1xf32>
    %271 = vector.broadcast %263 : vector<256x1xf32> to vector<256x16xf32>
    %272 = arith.subf %259, %271 : vector<256x16xf32>
    %cst_118 = arith.constant 9.99999974E-6 : f32
    %273 = vector.broadcast %cst_118 : f32 to vector<256x1xf32>
    %274 = arith.addf %270, %273 : vector<256x1xf32>
    %275 = math.rsqrt %274 : vector<256x1xf32>
    %276 = vector.broadcast %275 : vector<256x1xf32> to vector<256x16xf32>
    %277 = arith.mulf %272, %276 : vector<256x16xf32>
    %c1_119 = arith.constant 1 : index
    %c0_120 = arith.constant 0 : index
    %c0_121 = arith.constant 0 : index
    %278 = vector.load %arg12[%c1_119, %c0_120, %c0_121] : memref<2x1x16xf32, #tpu.memory_space<vmem>>, vector<1x1x16xf32>
    %279 = vector.shape_cast %278 : vector<1x1x16xf32> to vector<1x16xf32>
    %280 = vector.broadcast %279 : vector<1x16xf32> to vector<256x16xf32>
    %281 = arith.mulf %277, %280 : vector<256x16xf32>
    %c1_122 = arith.constant 1 : index
    %c0_123 = arith.constant 0 : index
    %c0_124 = arith.constant 0 : index
    %282 = vector.load %arg13[%c1_122, %c0_123, %c0_124] : memref<2x1x16xf32, #tpu.memory_space<vmem>>, vector<1x1x16xf32>
    %283 = vector.shape_cast %282 : vector<1x1x16xf32> to vector<1x16xf32>
    %284 = vector.broadcast %283 : vector<1x16xf32> to vector<256x16xf32>
    %285 = arith.addf %281, %284 : vector<256x16xf32>
    %286 = arith.truncf %285 : vector<256x16xf32> to vector<256x16xbf16>
    %c1_125 = arith.constant 1 : index
    %c0_126 = arith.constant 0 : index
    %c0_127 = arith.constant 0 : index
    %287 = vector.load %arg14[%c1_125, %c0_126, %c0_127] : memref<2x16x64xbf16, #tpu.memory_space<vmem>>, vector<1x16x64xbf16>
    %288 = vector.shape_cast %287 : vector<1x16x64xbf16> to vector<16x64xbf16>
    %cst_128 = arith.constant dense<0.000000e+00> : vector<256x64xf32>
    %289 = tpu.matmul %286, %288, %cst_128 {dimension_numbers = #tpu.dot_dimension_numbers<[1], [0], [0], [1], [0, 0, 1, 1], [], []>} : vector<256x16xbf16>, vector<16x64xbf16>, vector<256x64xf32> -> vector<256x64xf32>
    %c1_129 = arith.constant 1 : index
    %c0_130 = arith.constant 0 : index
    %c0_131 = arith.constant 0 : index
    %290 = vector.load %arg15[%c1_129, %c0_130, %c0_131] : memref<2x1x64xf32, #tpu.memory_space<vmem>>, vector<1x1x64xf32>
    %291 = vector.shape_cast %290 : vector<1x1x64xf32> to vector<1x64xf32>
    %292 = vector.broadcast %291 : vector<1x64xf32> to vector<256x64xf32>
    %293 = arith.addf %289, %292 : vector<256x64xf32>
    %294 = arith.mulf %293, %293 : vector<256x64xf32>
    %295 = arith.mulf %293, %294 : vector<256x64xf32>
    %cst_132 = arith.constant 4.471500e-02 : f32
    %296 = vector.broadcast %cst_132 : f32 to vector<256x64xf32>
    %297 = arith.mulf %296, %295 : vector<256x64xf32>
    %298 = arith.addf %293, %297 : vector<256x64xf32>
    %cst_133 = arith.constant 0.797884583 : f32
    %299 = vector.broadcast %cst_133 : f32 to vector<256x64xf32>
    %300 = arith.mulf %299, %298 : vector<256x64xf32>
    %301 = math.tanh %300 : vector<256x64xf32>
    %cst_134 = arith.constant 1.000000e+00 : f32
    %302 = vector.broadcast %cst_134 : f32 to vector<256x64xf32>
    %303 = arith.addf %302, %301 : vector<256x64xf32>
    %cst_135 = arith.constant 5.000000e-01 : f32
    %304 = vector.broadcast %cst_135 : f32 to vector<256x64xf32>
    %305 = arith.mulf %304, %303 : vector<256x64xf32>
    %306 = arith.mulf %293, %305 : vector<256x64xf32>
    %307 = arith.truncf %306 : vector<256x64xf32> to vector<256x64xbf16>
    %c1_136 = arith.constant 1 : index
    %c0_137 = arith.constant 0 : index
    %c0_138 = arith.constant 0 : index
    %308 = vector.load %arg16[%c1_136, %c0_137, %c0_138] : memref<2x64x16xbf16, #tpu.memory_space<vmem>>, vector<1x64x16xbf16>
    %309 = vector.shape_cast %308 : vector<1x64x16xbf16> to vector<64x16xbf16>
    %cst_139 = arith.constant dense<0.000000e+00> : vector<256x16xf32>
    %310 = tpu.matmul %307, %309, %cst_139 {dimension_numbers = #tpu.dot_dimension_numbers<[1], [0], [0], [1], [0, 0, 1, 1], [], []>} : vector<256x64xbf16>, vector<64x16xbf16>, vector<256x16xf32> -> vector<256x16xf32>
    %311 = arith.addf %259, %310 : vector<256x16xf32>
    %c1_140 = arith.constant 1 : index
    %c0_141 = arith.constant 0 : index
    %c0_142 = arith.constant 0 : index
    %312 = vector.load %arg17[%c1_140, %c0_141, %c0_142] : memref<2x1x16xf32, #tpu.memory_space<vmem>>, vector<1x1x16xf32>
    %313 = vector.shape_cast %312 : vector<1x1x16xf32> to vector<1x16xf32>
    %314 = vector.broadcast %313 : vector<1x16xf32> to vector<256x16xf32>
    %315 = arith.addf %311, %314 : vector<256x16xf32>
    %c0_143 = arith.constant 0 : index
    %c0_144 = arith.constant 0 : index
    %c0_145 = arith.constant 0 : index
    %316 = vector.load %arg18[%c0_143, %c0_144, %c0_145] : memref<1x256x16xf32, #tpu.memory_space<vmem>>, vector<1x256x16xf32>
    %317 = vector.shape_cast %316 : vector<1x256x16xf32> to vector<256x16xf32>
    %318 = vector.shape_cast %315 : vector<256x16xf32> to vector<1x256x16xf32>
    tpu.vector_store %arg18[%c0_143, %c0_144, %c0_145], %318 {strides = array<i32>} : memref<1x256x16xf32, #tpu.memory_space<vmem>>, vector<1x256x16xf32>,
    return
  }
  func.func @transform_0(%arg0: i32) -> (i32, i32, i32) {
    %c0_i32 = arith.constant 0 : i32
    %c0_i32_0 = arith.constant 0 : i32
    %c0_i32_1 = arith.constant 0 : i32
    return %arg0, %c0_i32, %c0_i32_0 : i32, i32, i32
  }
  func.func @transform_1(%arg0: i32) -> (i32, i32, i32) {
    %c0_i32 = arith.constant 0 : i32
    %c0_i32_0 = arith.constant 0 : i32
    %c0_i32_1 = arith.constant 0 : i32
    return %arg0, %c0_i32, %c0_i32_0 : i32, i32, i32
  }
  func.func @transform_2(%arg0: i32) -> (i32, i32) {
    %c0_i32 = arith.constant 0 : i32
    %c0_i32_0 = arith.constant 0 : i32
    %c0_i32_1 = arith.constant 0 : i32
    return %c0_i32, %c0_i32_0 : i32, i32
  }
  func.func @transform_3(%arg0: i32) -> (i32, i32) {
    %c0_i32 = arith.constant 0 : i32
    %c0_i32_0 = arith.constant 0 : i32
    %c0_i32_1 = arith.constant 0 : i32
    return %c0_i32, %c0_i32_0 : i32, i32
  }
  func.func @transform_4(%arg0: i32) -> (i32, i32) {
    %c0_i32 = arith.constant 0 : i32
    %c0_i32_0 = arith.constant 0 : i32
    %c0_i32_1 = arith.constant 0 : i32
    return %c0_i32, %c0_i32_0 : i32, i32
  }
  func.func @transform_5(%arg0: i32) -> (i32, i32, i32) {
    %c0_i32 = arith.constant 0 : i32
    %c0_i32_0 = arith.constant 0 : i32
    %c0_i32_1 = arith.constant 0 : i32
    %c0_i32_2 = arith.constant 0 : i32
    return %c0_i32, %c0_i32_0, %c0_i32_1 : i32, i32, i32
  }
  func.func @transform_6(%arg0: i32) -> (i32, i32, i32) {
    %c0_i32 = arith.constant 0 : i32
    %c0_i32_0 = arith.constant 0 : i32
    %c0_i32_1 = arith.constant 0 : i32
    %c0_i32_2 = arith.constant 0 : i32
    return %c0_i32, %c0_i32_0, %c0_i32_1 : i32, i32, i32
  }
  func.func @transform_7(%arg0: i32) -> (i32, i32, i32) {
    %c0_i32 = arith.constant 0 : i32
    %c0_i32_0 = arith.constant 0 : i32
    %c0_i32_1 = arith.constant 0 : i32
    %c0_i32_2 = arith.constant 0 : i32
    return %c0_i32, %c0_i32_0, %c0_i32_1 : i32, i32, i32
  }
  func.func @transform_8(%arg0: i32) -> (i32, i32, i32) {
    %c0_i32 = arith.constant 0 : i32
    %c0_i32_0 = arith.constant 0 : i32
    %c0_i32_1 = arith.constant 0 : i32
    %c0_i32_2 = arith.constant 0 : i32
    return %c0_i32, %c0_i32_0, %c0_i32_1 : i32, i32, i32
  }
  func.func @transform_9(%arg0: i32) -> (i32, i32, i32) {
    %c0_i32 = arith.constant 0 : i32
    %c0_i32_0 = arith.constant 0 : i32
    %c0_i32_1 = arith.constant 0 : i32
    %c0_i32_2 = arith.constant 0 : i32
    return %c0_i32, %c0_i32_0, %c0_i32_1 : i32, i32, i32
  }
  func.func @transform_10(%arg0: i32) -> (i32, i32, i32) {
    %c0_i32 = arith.constant 0 : i32
    %c0_i32_0 = arith.constant 0 : i32
    %c0_i32_1 = arith.constant 0 : i32
    %c0_i32_2 = arith.constant 0 : i32
    return %c0_i32, %c0_i32_0, %c0_i32_1 : i32, i32, i32
  }
  func.func @transform_11(%arg0: i32) -> (i32, i32, i32) {
    %c0_i32 = arith.constant 0 : i32
    %c0_i32_0 = arith.constant 0 : i32
    %c0_i32_1 = arith.constant 0 : i32
    %c0_i32_2 = arith.constant 0 : i32
    return %c0_i32, %c0_i32_0, %c0_i32_1 : i32, i32, i32
  }
  func.func @transform_12(%arg0: i32) -> (i32, i32, i32) {
    %c0_i32 = arith.constant 0 : i32
    %c0_i32_0 = arith.constant 0 : i32
    %c0_i32_1 = arith.constant 0 : i32
    %c0_i32_2 = arith.constant 0 : i32
    return %c0_i32, %c0_i32_0, %c0_i32_1 : i32, i32, i32
  }
  func.func @transform_13(%arg0: i32) -> (i32, i32, i32) {
    %c0_i32 = arith.constant 0 : i32
    %c0_i32_0 = arith.constant 0 : i32
    %c0_i32_1 = arith.constant 0 : i32
    %c0_i32_2 = arith.constant 0 : i32
    return %c0_i32, %c0_i32_0, %c0_i32_1 : i32, i32, i32
  }
  func.func @transform_14(%arg0: i32) -> (i32, i32, i32) {
    %c0_i32 = arith.constant 0 : i32
    %c0_i32_0 = arith.constant 0 : i32
    %c0_i32_1 = arith.constant 0 : i32
    %c0_i32_2 = arith.constant 0 : i32
    return %c0_i32, %c0_i32_0, %c0_i32_1 : i32, i32, i32
  }
  func.func @transform_15(%arg0: i32) -> (i32, i32, i32) {
    %c0_i32 = arith.constant 0 : i32
    %c0_i32_0 = arith.constant 0 : i32
    %c0_i32_1 = arith.constant 0 : i32
    %c0_i32_2 = arith.constant 0 : i32
    return %c0_i32, %c0_i32_0, %c0_i32_1 : i32, i32, i32
  }
  func.func @transform_16(%arg0: i32) -> (i32, i32, i32) {
    %c0_i32 = arith.constant 0 : i32
    %c0_i32_0 = arith.constant 0 : i32
    %c0_i32_1 = arith.constant 0 : i32
    %c0_i32_2 = arith.constant 0 : i32
    return %c0_i32, %c0_i32_0, %c0_i32_1 : i32, i32, i32
  }
  func.func @transform_17(%arg0: i32) -> (i32, i32, i32) {
    %c0_i32 = arith.constant 0 : i32
    %c0_i32_0 = arith.constant 0 : i32
    %c0_i32_1 = arith.constant 0 : i32
    return %arg0, %c0_i32, %c0_i32_0 : i32, i32, i32
  }
}

</mosaic_0001>

<llo_original>
// kernel: decoder_stage_forward.1
$region0: #{decoder_stage_forward.1}
  #allocation0 [shape = 'u32[]', space=smem, size = 0x4, offset = 0x4, fixed_abs, tag = 'smem constant byte address 0x4 - core index']
  #allocation1 [shape = 'u32[72,128]{1,0:T(1,128)}', space=vmem, size = 0x9000, scoped, tag = 'internal scratch']
  %s0 = inlined_call_operand.vmem [shape: f32[2,256,8], index: 0, kind: input, shape index: {}]
  %s1 = inlined_call_operand.vmem [shape: f32[2,256,4], index: 1, kind: input, shape index: {}]
  %s2 = inlined_call_operand.vmem [shape: bf16[8,16], index: 2, kind: input, shape index: {}]
  %s3 = inlined_call_operand.vmem [shape: bf16[4,16], index: 3, kind: input, shape index: {}]
  %s4 = inlined_call_operand.vmem [shape: f32[1,16], index: 4, kind: input, shape index: {}]
  %s5 = inlined_call_operand.vmem [shape: f32[2,1,16], index: 5, kind: input, shape index: {}]
  %s6 = inlined_call_operand.vmem [shape: f32[2,1,16], index: 6, kind: input, shape index: {}]
  %s7 = inlined_call_operand.vmem [shape: bf16[2,16,48], index: 7, kind: input, shape index: {}]
  %s8 = inlined_call_operand.vmem [shape: f32[2,1,48], index: 8, kind: input, shape index: {}]
  %s9 = inlined_call_operand.vmem [shape: bf16[2,16,16], index: 9, kind: input, shape index: {}]
  %s10 = inlined_call_operand.vmem [shape: f32[2,1,16], index: 10, kind: input, shape index: {}]
  %s11 = inlined_call_operand.vmem [shape: f32[2,1,16], index: 11, kind: input, shape index: {}]
  %s12 = inlined_call_operand.vmem [shape: f32[2,1,16], index: 12, kind: input, shape index: {}]
  %s13 = inlined_call_operand.vmem [shape: bf16[2,16,64], index: 13, kind: input, shape index: {}]
  %s14 = inlined_call_operand.vmem [shape: f32[2,1,64], index: 14, kind: input, shape index: {}]
  %s15 = inlined_call_operand.vmem [shape: bf16[2,64,16], index: 15, kind: input, shape index: {}]
  %s16 = inlined_call_operand.vmem [shape: f32[2,1,16], index: 16, kind: input, shape index: {}]
  %s17 = inlined_call_operand.vmem [shape: f32[2,256,16], index: 17, kind: output, shape index: {}]
  %s18 = sld [smem:[#allocation0]]
  $region101: #{decoder_stage_forward.1} parent=0
    _
  %s20 = ssub.s32 1, %s18
  %s21 = scalar_select 0, %s20, %s18
  loop: start=0, step=1, limit=4
  $region2: #{decoder_stage_forward.1} parent=0 // loop_pre_header
    _
  $region3: #{decoder_stage_forward.1} parent=0 // loop_header
    %s23 = sphi 0, %s27
    %p24 = scmp.ge.s32.totalorder %s23, 4
    %s33 = sphi 0, %s35
    %s36 = sphi 0, %s33
    %s37 = sphi 0, %s36
    %s53 = sphi 0, %s37
    %s59 = sphi 0, %s61
    %s62 = sphi 0, %s59
    %s63 = sphi 0, %s62
    %s79 = sphi 0, %s63
    %s83 = sphi 0, %s83
    %s85 = sphi 0, %s83
    %s86 = sphi 0, %s85
    %s100 = sphi 0, %s86
    %s104 = sphi 0, %s104
    %s106 = sphi 0, %s104
    %s107 = sphi 0, %s106
    %s121 = sphi 0, %s107
    %s125 = sphi 0, %s125
    %s127 = sphi 0, %s125
    %s128 = sphi 0, %s127
    %s142 = sphi 0, %s128
    %s146 = sphi 0, %s146
    %s148 = sphi 0, %s146
    %s149 = sphi 0, %s148
    %s163 = sphi 0, %s149
    %s167 = sphi 0, %s167
    %s169 = sphi 0, %s167
    %s170 = sphi 0, %s169
    %s184 = sphi 0, %s170
    %s188 = sphi 0, %s188
    %s190 = sphi 0, %s188
    %s191 = sphi 0, %s190
    %s205 = sphi 0, %s191
    %s209 = sphi 0, %s209
    %s211 = sphi 0, %s209
    %s212 = sphi 0, %s211
    %s226 = sphi 0, %s212
    %s230 = sphi 0, %s230
    %s232 = sphi 0, %s230
    %s233 = sphi 0, %s232
    %s247 = sphi 0, %s233
    %s251 = sphi 0, %s251
    %s253 = sphi 0, %s251
    %s254 = sphi 0, %s253
    %s268 = sphi 0, %s254
    %s272 = sphi 0, %s272
    %s274 = sphi 0, %s272
    %s275 = sphi 0, %s274
    %s289 = sphi 0, %s275
    %s293 = sphi 0, %s293
    %s295 = sphi 0, %s293
    %s296 = sphi 0, %s295
    %s310 = sphi 0, %s296
    %s314 = sphi 0, %s314
    %s316 = sphi 0, %s314
    %s317 = sphi 0, %s316
    %s331 = sphi 0, %s317
    %s335 = sphi 0, %s335
    %s337 = sphi 0, %s335
    %s338 = sphi 0, %s337
    %s352 = sphi 0, %s338
    %s356 = sphi 0, %s356
    %s358 = sphi 0, %s356
    %s359 = sphi 0, %s358
    %s373 = sphi 0, %s359
    %s377 = sphi 0, %s377
    %s379 = sphi 0, %s377
    %s380 = sphi 0, %s379
    %s394 = sphi 0, %s380
    %s400 = sphi 0, %s402
    %s403 = sphi 0, %s400
    %s404 = sphi 0, %s403
    %s420 = sphi 0, %s404
  $region4: #{decoder_stage_forward.1} parent=0 // loop_header_branch
    %26 = sbr.rel (%p24) target = $region8
  $region5: #{decoder_stage_forward.1} parent=0 // loop_body
    %s28 = ssub.s32 %s23, 1
    %s29 = ssub.s32 %s23, 2
    %s30 = sadd.s32 %s23, 1
    %s31 = ssub.s32 %s23, %s30
    %p32 = scmp.eq.s32.totalorder %s31, 0
    %s34 = sadd.s32 %s33, 1
    %s35 = scalar_select %p32, %s33, %s34
    %p38 = pneg %p32
    %p39 = scmp.eq.s32.totalorder %s23, 1
    %p40 = por %p38, %p39
    %p41 = scmp.ne.s32.totalorder %s33, %s36
    %p42 = scmp.eq.s32.totalorder %s23, 0
    %p43 = por %p41, %p42
    %p44 = scmp.ne.s32.totalorder %s33, %s36
    %p45 = scmp.eq.s32.totalorder %s28, 1
    %p46 = por %p44, %p45
    %p47 = scmp.ne.s32.totalorder %s36, %s37
    %p48 = scmp.eq.s32.totalorder %s28, 0
    %p49 = por %p47, %p48
    %p50 = scmp.ne.s32.totalorder %s36, %s37
    %p51 = scmp.eq.s32.totalorder %s29, 1
    %p52 = por %p50, %p51
    %p54 = scmp.ne.s32.totalorder %s37, %s53
    %p55 = scmp.eq.s32.totalorder %s29, 0
    %p56 = por %p54, %p55
    %s57 = ssub.s32 %s23, %s30
    %p58 = scmp.eq.s32.totalorder %s57, 0
    %s60 = sadd.s32 %s59, 1
    %s61 = scalar_select %p58, %s59, %s60
    %p64 = pneg %p58
    %p65 = scmp.eq.s32.totalorder %s23, 1
    %p66 = por %p64, %p65
    %p67 = scmp.ne.s32.totalorder %s59, %s62
    %p68 = scmp.eq.s32.totalorder %s23, 0
    %p69 = por %p67, %p68
    %p70 = scmp.ne.s32.totalorder %s59, %s62
    %p71 = scmp.eq.s32.totalorder %s28, 1
    %p72 = por %p70, %p71
    %p73 = scmp.ne.s32.totalorder %s62, %s63
    %p74 = scmp.eq.s32.totalorder %s28, 0
    %p75 = por %p73, %p74
    %p76 = scmp.ne.s32.totalorder %s62, %s63
    %p77 = scmp.eq.s32.totalorder %s29, 1
    %p78 = por %p76, %p77
    %p80 = scmp.ne.s32.totalorder %s63, %s79
    %p81 = scmp.eq.s32.totalorder %s29, 0
    %p82 = por %p80, %p81
    %s84 = sadd.s32 %s83, 1
    %p87 = scmp.eq.s32.totalorder %s23, 1
    %p88 = scmp.ne.s32.totalorder %s83, %s85
    %p89 = scmp.eq.s32.totalorder %s23, 0
    %p90 = por %p88, %p89
    %p91 = scmp.ne.s32.totalorder %s83, %s85
    %p92 = scmp.eq.s32.totalorder %s28, 1
    %p93 = por %p91, %p92
    %p94 = scmp.ne.s32.totalorder %s85, %s86
    %p95 = scmp.eq.s32.totalorder %s28, 0
    %p96 = por %p94, %p95
    %p97 = scmp.ne.s32.totalorder %s85, %s86
    %p98 = scmp.eq.s32.totalorder %s29, 1
    %p99 = por %p97, %p98
    %p101 = scmp.ne.s32.totalorder %s86, %s100
    %p102 = scmp.eq.s32.totalorder %s29, 0
    %p103 = por %p101, %p102
    %s105 = sadd.s32 %s104, 1
    %p108 = scmp.eq.s32.totalorder %s23, 1
    %p109 = scmp.ne.s32.totalorder %s104, %s106
    %p110 = scmp.eq.s32.totalorder %s23, 0
    %p111 = por %p109, %p110
    %p112 = scmp.ne.s32.totalorder %s104, %s106
    %p113 = scmp.eq.s32.totalorder %s28, 1
    %p114 = por %p112, %p113
    %p115 = scmp.ne.s32.totalorder %s106, %s107
    %p116 = scmp.eq.s32.totalorder %s28, 0
    %p117 = por %p115, %p116
    %p118 = scmp.ne.s32.totalorder %s106, %s107
    %p119 = scmp.eq.s32.totalorder %s29, 1
    %p120 = por %p118, %p119
    %p122 = scmp.ne.s32.totalorder %s107, %s121
    %p123 = scmp.eq.s32.totalorder %s29, 0
    %p124 = por %p122, %p123
    %s126 = sadd.s32 %s125, 1
    %p129 = scmp.eq.s32.totalorder %s23, 1
    %p130 = scmp.ne.s32.totalorder %s125, %s127
    %p131 = scmp.eq.s32.totalorder %s23, 0
    %p132 = por %p130, %p131
    %p133 = scmp.ne.s32.totalorder %s125, %s127
    %p134 = scmp.eq.s32.totalorder %s28, 1
    %p135 = por %p133, %p134
    %p136 = scmp.ne.s32.totalorder %s127, %s128
    %p137 = scmp.eq.s32.totalorder %s28, 0
    %p138 = por %p136, %p137
    %p139 = scmp.ne.s32.totalorder %s127, %s128
    %p140 = scmp.eq.s32.totalorder %s29, 1
    %p141 = por %p139, %p140
    %p143 = scmp.ne.s32.totalorder %s128, %s142
    %p144 = scmp.eq.s32.totalorder %s29, 0
    %p145 = por %p143, %p144
    %s147 = sadd.s32 %s146, 1
    %p150 = scmp.eq.s32.totalorder %s23, 1
    %p151 = scmp.ne.s32.totalorder %s146, %s148
    %p152 = scmp.eq.s32.totalorder %s23, 0
    %p153 = por %p151, %p152
    %p154 = scmp.ne.s32.totalorder %s146, %s148
    %p155 = scmp.eq.s32.totalorder %s28, 1
    %p156 = por %p154, %p155
    %p157 = scmp.ne.s32.totalorder %s148, %s149
    %p158 = scmp.eq.s32.totalorder %s28, 0
    %p159 = por %p157, %p158
    %p160 = scmp.ne.s32.totalorder %s148, %s149
    %p161 = scmp.eq.s32.totalorder %s29, 1
    %p162 = por %p160, %p161
    %p164 = scmp.ne.s32.totalorder %s149, %s163
    %p165 = scmp.eq.s32.totalorder %s29, 0
    %p166 = por %p164, %p165
    %s168 = sadd.s32 %s167, 1
    %p171 = scmp.eq.s32.totalorder %s23, 1
    %p172 = scmp.ne.s32.totalorder %s167, %s169
    %p173 = scmp.eq.s32.totalorder %s23, 0
    %p174 = por %p172, %p173
    %p175 = scmp.ne.s32.totalorder %s167, %s169
    %p176 = scmp.eq.s32.totalorder %s28, 1
    %p177 = por %p175, %p176
    %p178 = scmp.ne.s32.totalorder %s169, %s170
    %p179 = scmp.eq.s32.totalorder %s28, 0
    %p180 = por %p178, %p179
    %p181 = scmp.ne.s32.totalorder %s169, %s170
    %p182 = scmp.eq.s32.totalorder %s29, 1
    %p183 = por %p181, %p182
    %p185 = scmp.ne.s32.totalorder %s170, %s184
    %p186 = scmp.eq.s32.totalorder %s29, 0
    %p187 = por %p185, %p186
    %s189 = sadd.s32 %s188, 1
    %p192 = scmp.eq.s32.totalorder %s23, 1
    %p193 = scmp.ne.s32.totalorder %s188, %s190
    %p194 = scmp.eq.s32.totalorder %s23, 0
    %p195 = por %p193, %p194
    %p196 = scmp.ne.s32.totalorder %s188, %s190
    %p197 = scmp.eq.s32.totalorder %s28, 1
    %p198 = por %p196, %p197
    %p199 = scmp.ne.s32.totalorder %s190, %s191
    %p200 = scmp.eq.s32.totalorder %s28, 0
    %p201 = por %p199, %p200
    %p202 = scmp.ne.s32.totalorder %s190, %s191
    %p203 = scmp.eq.s32.totalorder %s29, 1
    %p204 = por %p202, %p203
    %p206 = scmp.ne.s32.totalorder %s191, %s205
    %p207 = scmp.eq.s32.totalorder %s29, 0
    %p208 = por %p206, %p207
    %s210 = sadd.s32 %s209, 1
    %p213 = scmp.eq.s32.totalorder %s23, 1
    %p214 = scmp.ne.s32.totalorder %s209, %s211
    %p215 = scmp.eq.s32.totalorder %s23, 0
    %p216 = por %p214, %p215
    %p217 = scmp.ne.s32.totalorder %s209, %s211
    %p218 = scmp.eq.s32.totalorder %s28, 1
    %p219 = por %p217, %p218
    %p220 = scmp.ne.s32.totalorder %s211, %s212
    %p221 = scmp.eq.s32.totalorder %s28, 0
    %p222 = por %p220, %p221
    %p223 = scmp.ne.s32.totalorder %s211, %s212
    %p224 = scmp.eq.s32.totalorder %s29, 1
    %p225 = por %p223, %p224
    %p227 = scmp.ne.s32.totalorder %s212, %s226
    %p228 = scmp.eq.s32.totalorder %s29, 0
    %p229 = por %p227, %p228
    %s231 = sadd.s32 %s230, 1
    %p234 = scmp.eq.s32.totalorder %s23, 1
    %p235 = scmp.ne.s32.totalorder %s230, %s232
    %p236 = scmp.eq.s32.totalorder %s23, 0
    %p237 = por %p235, %p236
    %p238 = scmp.ne.s32.totalorder %s230, %s232
    %p239 = scmp.eq.s32.totalorder %s28, 1
    %p240 = por %p238, %p239
    %p241 = scmp.ne.s32.totalorder %s232, %s233
    %p242 = scmp.eq.s32.totalorder %s28, 0
    %p243 = por %p241, %p242
    %p244 = scmp.ne.s32.totalorder %s232, %s233
    %p245 = scmp.eq.s32.totalorder %s29, 1
    %p246 = por %p244, %p245
    %p248 = scmp.ne.s32.totalorder %s233, %s247
    %p249 = scmp.eq.s32.totalorder %s29, 0
    %p250 = por %p248, %p249
    %s252 = sadd.s32 %s251, 1
    %p255 = scmp.eq.s32.totalorder %s23, 1
    %p256 = scmp.ne.s32.totalorder %s251, %s253
    %p257 = scmp.eq.s32.totalorder %s23, 0
    %p258 = por %p256, %p257
    %p259 = scmp.ne.s32.totalorder %s251, %s253
    %p260 = scmp.eq.s32.totalorder %s28, 1
    %p261 = por %p259, %p260
    %p262 = scmp.ne.s32.totalorder %s253, %s254
    %p263 = scmp.eq.s32.totalorder %s28, 0
    %p264 = por %p262, %p263
    %p265 = scmp.ne.s32.totalorder %s253, %s254
    %p266 = scmp.eq.s32.totalorder %s29, 1
    %p267 = por %p265, %p266
    %p269 = scmp.ne.s32.totalorder %s254, %s268
    %p270 = scmp.eq.s32.totalorder %s29, 0
    %p271 = por %p269, %p270
    %s273 = sadd.s32 %s272, 1
    %p276 = scmp.eq.s32.totalorder %s23, 1
    %p277 = scmp.ne.s32.totalorder %s272, %s274
    %p278 = scmp.eq.s32.totalorder %s23, 0
    %p279 = por %p277, %p278
    %p280 = scmp.ne.s32.totalorder %s272, %s274
    %p281 = scmp.eq.s32.totalorder %s28, 1
    %p282 = por %p280, %p281
    %p283 = scmp.ne.s32.totalorder %s274, %s275
    %p284 = scmp.eq.s32.totalorder %s28, 0
    %p285 = por %p283, %p284
    %p286 = scmp.ne.s32.totalorder %s274, %s275
    %p287 = scmp.eq.s32.totalorder %s29, 1
    %p288 = por %p286, %p287
    %p290 = scmp.ne.s32.totalorder %s275, %s289
    %p291 = scmp.eq.s32.totalorder %s29, 0
    %p292 = por %p290, %p291
    %s294 = sadd.s32 %s293, 1
    %p297 = scmp.eq.s32.totalorder %s23, 1
    %p298 = scmp.ne.s32.totalorder %s293, %s295
    %p299 = scmp.eq.s32.totalorder %s23, 0
    %p300 = por %p298, %p299
    %p301 = scmp.ne.s32.totalorder %s293, %s295
    %p302 = scmp.eq.s32.totalorder %s28, 1
    %p303 = por %p301, %p302
    %p304 = scmp.ne.s32.totalorder %s295, %s296
    %p305 = scmp.eq.s32.totalorder %s28, 0
    %p306 = por %p304, %p305
    %p307 = scmp.ne.s32.totalorder %s295, %s296
    %p308 = scmp.eq.s32.totalorder %s29, 1
    %p309 = por %p307, %p308
    %p311 = scmp.ne.s32.totalorder %s296, %s310
    %p312 = scmp.eq.s32.totalorder %s29, 0
    %p313 = por %p311, %p312
    %s315 = sadd.s32 %s314, 1
    %p318 = scmp.eq.s32.totalorder %s23, 1
    %p319 = scmp.ne.s32.totalorder %s314, %s316
    %p320 = scmp.eq.s32.totalorder %s23, 0
    %p321 = por %p319, %p320
    %p322 = scmp.ne.s32.totalorder %s314, %s316
    %p323 = scmp.eq.s32.totalorder %s28, 1
    %p324 = por %p322, %p323
    %p325 = scmp.ne.s32.totalorder %s316, %s317
    %p326 = scmp.eq.s32.totalorder %s28, 0
    %p327 = por %p325, %p326
    %p328 = scmp.ne.s32.totalorder %s316, %s317
    %p329 = scmp.eq.s32.totalorder %s29, 1
    %p330 = por %p328, %p329
    %p332 = scmp.ne.s32.totalorder %s317, %s331
    %p333 = scmp.eq.s32.totalorder %s29, 0
    %p334 = por %p332, %p333
    %s336 = sadd.s32 %s335, 1
    %p339 = scmp.eq.s32.totalorder %s23, 1
    %p340 = scmp.ne.s32.totalorder %s335, %s337
    %p341 = scmp.eq.s32.totalorder %s23, 0
    %p342 = por %p340, %p341
    %p343 = scmp.ne.s32.totalorder %s335, %s337
    %p344 = scmp.eq.s32.totalorder %s28, 1
    %p345 = por %p343, %p344
    %p346 = scmp.ne.s32.totalorder %s337, %s338
    %p347 = scmp.eq.s32.totalorder %s28, 0
    %p348 = por %p346, %p347
    %p349 = scmp.ne.s32.totalorder %s337, %s338
    %p350 = scmp.eq.s32.totalorder %s29, 1
    %p351 = por %p349, %p350
    %p353 = scmp.ne.s32.totalorder %s338, %s352
    %p354 = scmp.eq.s32.totalorder %s29, 0
    %p355 = por %p353, %p354
    %s357 = sadd.s32 %s356, 1
    %p360 = scmp.eq.s32.totalorder %s23, 1
    %p361 = scmp.ne.s32.totalorder %s356, %s358
    %p362 = scmp.eq.s32.totalorder %s23, 0
    %p363 = por %p361, %p362
    %p364 = scmp.ne.s32.totalorder %s356, %s358
    %p365 = scmp.eq.s32.totalorder %s28, 1
    %p366 = por %p364, %p365
    %p367 = scmp.ne.s32.totalorder %s358, %s359
    %p368 = scmp.eq.s32.totalorder %s28, 0
    %p369 = por %p367, %p368
    %p370 = scmp.ne.s32.totalorder %s358, %s359
    %p371 = scmp.eq.s32.totalorder %s29, 1
    %p372 = por %p370, %p371
    %p374 = scmp.ne.s32.totalorder %s359, %s373
    %p375 = scmp.eq.s32.totalorder %s29, 0
    %p376 = por %p374, %p375
    %s378 = sadd.s32 %s377, 1
    %p381 = scmp.eq.s32.totalorder %s23, 1
    %p382 = scmp.ne.s32.totalorder %s377, %s379
    %p383 = scmp.eq.s32.totalorder %s23, 0
    %p384 = por %p382, %p383
    %p385 = scmp.ne.s32.totalorder %s377, %s379
    %p386 = scmp.eq.s32.totalorder %s28, 1
    %p387 = por %p385, %p386
    %p388 = scmp.ne.s32.totalorder %s379, %s380
    %p389 = scmp.eq.s32.totalorder %s28, 0
    %p390 = por %p388, %p389
    %p391 = scmp.ne.s32.totalorder %s379, %s380
    %p392 = scmp.eq.s32.totalorder %s29, 1
    %p393 = por %p391, %p392
    %p395 = scmp.ne.s32.totalorder %s380, %s394
    %p396 = scmp.eq.s32.totalorder %s29, 0
    %p397 = por %p395, %p396
    %s398 = ssub.s32 %s23, %s30
    %p399 = scmp.eq.s32.totalorder %s398, 0
    %s401 = sadd.s32 %s400, 1
    %s402 = scalar_select %p399, %s400, %s401
    %p405 = pneg %p399
    %p406 = scmp.eq.s32.totalorder %s23, 1
    %p407 = por %p405, %p406
    %p408 = scmp.ne.s32.totalorder %s400, %s403
    %p409 = scmp.eq.s32.totalorder %s23, 0
    %p410 = por %p408, %p409
    %p411 = scmp.ne.s32.totalorder %s400, %s403
    %p412 = scmp.eq.s32.totalorder %s28, 1
    %p413 = por %p411, %p412
    %p414 = scmp.ne.s32.totalorder %s403, %s404
    %p415 = scmp.eq.s32.totalorder %s28, 0
    %p416 = por %p414, %p415
    %p417 = scmp.ne.s32.totalorder %s403, %s404
    %p418 = scmp.eq.s32.totalorder %s29, 1
    %p419 = por %p417, %p418
    %p421 = scmp.ne.s32.totalorder %s404, %s420
    %p422 = scmp.eq.s32.totalorder %s29, 0
    %p423 = por %p421, %p422
    %p424 = scmp.le.s32.totalorder 1, %s23
    %p425 = scmp.lt.s32.totalorder %s23, 3
    %p426 = pnand %p424, %p425
    %p427 = pneg %p426
    // Predicated region
    $region9: #{decoder_stage_forward.1} parent=5 // pred_check
      _
    $region10: #{decoder_stage_forward.1} parent=5 // pred_check_branch
      %429 = sbr.rel (%p426) target = $region12
    $region11: #{decoder_stage_forward.1} parent=5 // pred_region
      %s430 = ssub.s32 %s23, 1
      // Predicated region
      $region13: #{decoder_stage_forward.1} parent=11 // pred_check
        %p431 = pneg %p96
      $region14: #{decoder_stage_forward.1} parent=11 // pred_check_branch
        %433 = sbr.rel (%p431) target = $region16
      $region15: #{decoder_stage_forward.1} parent=11 // pred_region
        _
      $region16: #{decoder_stage_forward.1} parent=11 // pred_fallthru
        _
      // Predicated region
      $region17: #{decoder_stage_forward.1} parent=11 // pred_check
        %p434 = pneg %p117
      $region18: #{decoder_stage_forward.1} parent=11 // pred_check_branch
        %436 = sbr.rel (%p434) target = $region20
      $region19: #{decoder_stage_forward.1} parent=11 // pred_region
        _
      $region20: #{decoder_stage_forward.1} parent=11 // pred_fallthru
        _
      // Predicated region
      $region21: #{decoder_stage_forward.1} parent=11 // pred_check
        %p437 = pneg %p138
      $region22: #{decoder_stage_forward.1} parent=11 // pred_check_branch
        %439 = sbr.rel (%p437) target = $region24
      $region23: #{decoder_stage_forward.1} parent=11 // pred_region
        _
      $region24: #{decoder_stage_forward.1} parent=11 // pred_fallthru
        _
      // Predicated region
      $region25: #{decoder_stage_forward.1} parent=11 // pred_check
        %p440 = pneg %p159
      $region26: #{decoder_stage_forward.1} parent=11 // pred_check_branch
        %442 = sbr.rel (%p440) target = $region28
      $region27: #{decoder_stage_forward.1} parent=11 // pred_region
        _
      $region28: #{decoder_stage_forward.1} parent=11 // pred_fallthru
        _
      // Predicated region
      $region29: #{decoder_stage_forward.1} parent=11 // pred_check
        %p443 = pneg %p180
      $region30: #{decoder_stage_forward.1} parent=11 // pred_check_branch
        %445 = sbr.rel (%p443) target = $region32
      $region31: #{decoder_stage_forward.1} parent=11 // pred_region
        _
      $region32: #{decoder_stage_forward.1} parent=11 // pred_fallthru
        _
      // Predicated region
      $region33: #{decoder_stage_forward.1} parent=11 // pred_check
        %p446 = pneg %p201
      $region34: #{decoder_stage_forward.1} parent=11 // pred_check_branch
        %448 = sbr.rel (%p446) target = $region36
      $region35: #{decoder_stage_forward.1} parent=11 // pred_region
        _
      $region36: #{decoder_stage_forward.1} parent=11 // pred_fallthru
        _
      // Predicated region
      $region37: #{decoder_stage_forward.1} parent=11 // pred_check
        %p449 = pneg %p222
      $region38: #{decoder_stage_forward.1} parent=11 // pred_check_branch
        %451 = sbr.rel (%p449) target = $region40
      $region39: #{decoder_stage_forward.1} parent=11 // pred_region
        _
      $region40: #{decoder_stage_forward.1} parent=11 // pred_fallthru
        _
      // Predicated region
      $region41: #{decoder_stage_forward.1} parent=11 // pred_check
        %p452 = pneg %p243
      $region42: #{decoder_stage_forward.1} parent=11 // pred_check_branch
        %454 = sbr.rel (%p452) target = $region44
      $region43: #{decoder_stage_forward.1} parent=11 // pred_region
        _
      $region44: #{decoder_stage_forward.1} parent=11 // pred_fallthru
        _
      // Predicated region
      $region45: #{decoder_stage_forward.1} parent=11 // pred_check
        %p455 = pneg %p264
      $region46: #{decoder_stage_forward.1} parent=11 // pred_check_branch
        %457 = sbr.rel (%p455) target = $region48
      $region47: #{decoder_stage_forward.1} parent=11 // pred_region
        _
      $region48: #{decoder_stage_forward.1} parent=11 // pred_fallthru
        _
      // Predicated region
      $region49: #{decoder_stage_forward.1} parent=11 // pred_check
        %p458 = pneg %p285
      $region50: #{decoder_stage_forward.1} parent=11 // pred_check_branch
        %460 = sbr.rel (%p458) target = $region52
      $region51: #{decoder_stage_forward.1} parent=11 // pred_region
        _
      $region52: #{decoder_stage_forward.1} parent=11 // pred_fallthru
        _
      // Predicated region
      $region53: #{decoder_stage_forward.1} parent=11 // pred_check
        %p461 = pneg %p306
      $region54: #{decoder_stage_forward.1} parent=11 // pred_check_branch
        %463 = sbr.rel (%p461) target = $region56
      $region55: #{decoder_stage_forward.1} parent=11 // pred_region
        _
      $region56: #{decoder_stage_forward.1} parent=11 // pred_fallthru
        _
      // Predicated region
      $region57: #{decoder_stage_forward.1} parent=11 // pred_check
        %p464 = pneg %p327
      $region58: #{decoder_stage_forward.1} parent=11 // pred_check_branch
        %466 = sbr.rel (%p464) target = $region60
      $region59: #{decoder_stage_forward.1} parent=11 // pred_region
        _
      $region60: #{decoder_stage_forward.1} parent=11 // pred_fallthru
        _
      // Predicated region
      $region61: #{decoder_stage_forward.1} parent=11 // pred_check
        %p467 = pneg %p348
      $region62: #{decoder_stage_forward.1} parent=11 // pred_check_branch
        %469 = sbr.rel (%p467) target = $region64
      $region63: #{decoder_stage_forward.1} parent=11 // pred_region
        _
      $region64: #{decoder_stage_forward.1} parent=11 // pred_fallthru
        _
      // Predicated region
      $region65: #{decoder_stage_forward.1} parent=11 // pred_check
        %p470 = pneg %p369
      $region66: #{decoder_stage_forward.1} parent=11 // pred_check_branch
        %472 = sbr.rel (%p470) target = $region68
      $region67: #{decoder_stage_forward.1} parent=11 // pred_region
        _
      $region68: #{decoder_stage_forward.1} parent=11 // pred_fallthru
        _
      // Predicated region
      $region69: #{decoder_stage_forward.1} parent=11 // pred_check
        %p473 = pneg %p390
      $region70: #{decoder_stage_forward.1} parent=11 // pred_check_branch
        %475 = sbr.rel (%p473) target = $region72
      $region71: #{decoder_stage_forward.1} parent=11 // pred_region
        _
      $region72: #{decoder_stage_forward.1} parent=11 // pred_fallthru
        _
    $region12: #{decoder_stage_forward.1} parent=5 // pred_fallthru
      _
    %p476 = scmp.lt.s32.totalorder %s23, 2
    // Predicated region
    $region73: #{decoder_stage_forward.1} parent=5 // pred_check
      %p477 = pneg %p476
    $region74: #{decoder_stage_forward.1} parent=5 // pred_check_branch
      %479 = sbr.rel (%p477) target = $region76
    $region75: #{decoder_stage_forward.1} parent=5 // pred_region
      // Predicated region
      $region77: #{decoder_stage_forward.1} parent=75 // pred_check
        %p480 = pneg %p43
      $region78: #{decoder_stage_forward.1} parent=75 // pred_check_branch
        %482 = sbr.rel (%p480) target = $region80
      $region79: #{decoder_stage_forward.1} parent=75 // pred_region
        %p483 = scmp.lt.s32.totalorder %s23, 1
        %s484 = scalar_select %p483, %s23, 1
        %s485 = smul.addr %s484, 32
        %s486 = smul.addr %s485, 8
        %s487 = scalar_lea.vmem %s0, %s486
      $region80: #{decoder_stage_forward.1} parent=75 // pred_fallthru
        _
      // Predicated region
      $region81: #{decoder_stage_forward.1} parent=75 // pred_check
        %p488 = pneg %p69
      $region82: #{decoder_stage_forward.1} parent=75 // pred_check_branch
        %490 = sbr.rel (%p488) target = $region84
      $region83: #{decoder_stage_forward.1} parent=75 // pred_region
        %p491 = scmp.lt.s32.totalorder %s23, 1
        %s492 = scalar_select %p491, %s23, 1
        %s493 = smul.addr %s492, 32
        %s494 = smul.addr %s493, 8
        %s495 = scalar_lea.vmem %s1, %s494
      $region84: #{decoder_stage_forward.1} parent=75 // pred_fallthru
        _
    $region76: #{decoder_stage_forward.1} parent=5 // pred_fallthru
      _
    %p496 = scmp.le.s32.totalorder 1, %s23
    %p497 = scmp.lt.s32.totalorder %s23, 3
    %p498 = pnand %p496, %p497
    %p499 = pneg %p498
    // Predicated region
    $region85: #{decoder_stage_forward.1} parent=5 // pred_check
      _
    $region86: #{decoder_stage_forward.1} parent=5 // pred_check_branch
      %501 = sbr.rel (%p498) target = $region88
    $region87: #{decoder_stage_forward.1} parent=5 // pred_region
      %s502 = ssub.s32 %s23, 1
      %p503 = scmp.lt.s32.totalorder %s28, 1
      %s504 = scalar_select %p503, %s28, 1
      %s505 = smul.addr %s504, 32
      %s506 = smul.addr %s505, 8
      %s507 = scalar_lea.vmem %s0, %s506
      %p508 = pneg %p49
      %p509 = pneg %p46
      %p510 = scmp.lt.s32.totalorder %s28, 1
      %s511 = scalar_select %p510, %s28, 1
      %s512 = smul.addr %s511, 32
      %s513 = smul.addr %s512, 8
      %s514 = scalar_lea.vmem %s1, %s513
      %p515 = pneg %p75
      %p516 = pneg %p72
      %p517 = pneg %p96
      %p518 = pneg %p93
      %p519 = pneg %p117
      %p520 = pneg %p114
      %p521 = pneg %p138
      %p522 = pneg %p135
      %p523 = pneg %p159
      %p524 = pneg %p156
      %p525 = pneg %p180
      %p526 = pneg %p177
      %p527 = pneg %p201
      %p528 = pneg %p198
      %p529 = pneg %p222
      %p530 = pneg %p219
      %p531 = pneg %p243
      %p532 = pneg %p240
      %p533 = pneg %p264
      %p534 = pneg %p261
      %p535 = pneg %p285
      %p536 = pneg %p282
      %p537 = pneg %p306
      %p538 = pneg %p303
      %p539 = pneg %p327
      %p540 = pneg %p324
      %p541 = pneg %p348
      %p542 = pneg %p345
      %p543 = pneg %p369
      %p544 = pneg %p366
      %p545 = pneg %p390
      %p546 = pneg %p387
      %p547 = pneg %p416
      %p548 = pneg %p413
      %p549 = scmp.lt.s32.totalorder %s28, 1
      %s550 = scalar_select %p549, %s28, 1
      %s551 = smul.addr %s550, 32
      %s552 = smul.addr %s551, 8
      %s553 = scalar_lea.vmem %s17, %s552
      %p554 = scmp.lt.s32.totalorder %s28, 1
      %s555 = scalar_select %p554, %s28, 1
      %s556 = smul.addr %s555, 32
      %s557 = smul.addr %s556, 8
      %s558 = scalar_lea.vmem %s0, %s557
      %p559 = scmp.lt.s32.totalorder %s28, 1
      %s560 = scalar_select %p559, %s28, 1
      %s561 = smul.addr %s560, 32
      %s562 = smul.addr %s561, 8
      %s563 = scalar_lea.vmem %s1, %s562
      %p564 = scmp.lt.s32.totalorder %s28, 1
      %s565 = scalar_select %p564, %s28, 1
      %s566 = smul.addr %s565, 32
      %s567 = smul.addr %s566, 8
      %s568 = scalar_lea.vmem %s17, %s567
      %v570 = vld [vmem:[%s558] sm:$0xff]
      %v571 = vld [vmem:[%s558 + $0x8] sm:$0xff]
      %v572 = vld [vmem:[%s558 + $0x10] sm:$0xff]
      %v573 = vld [vmem:[%s558 + $0x18] sm:$0xff]
      %v574 = vld [vmem:[%s558 + $0x20] sm:$0xff]
      %v575 = vld [vmem:[%s558 + $0x28] sm:$0xff]
      %v576 = vld [vmem:[%s558 + $0x30] sm:$0xff]
      %v577 = vld [vmem:[%s558 + $0x38] sm:$0xff]
      %v578 = vld [vmem:[%s558 + $0x40] sm:$0xff]
      %v579 = vld [vmem:[%s558 + $0x48] sm:$0xff]
      %v580 = vld [vmem:[%s558 + $0x50] sm:$0xff]
      %v581 = vld [vmem:[%s558 + $0x58] sm:$0xff]
      %v582 = vld [vmem:[%s558 + $0x60] sm:$0xff]
      %v583 = vld [vmem:[%s558 + $0x68] sm:$0xff]
      %v584 = vld [vmem:[%s558 + $0x70] sm:$0xff]
      %v585 = vld [vmem:[%s558 + $0x78] sm:$0xff]
      %v586 = vld [vmem:[%s558 + $0x80] sm:$0xff]
      %v587 = vld [vmem:[%s558 + $0x88] sm:$0xff]
      %v588 = vld [vmem:[%s558 + $0x90] sm:$0xff]
      %v589 = vld [vmem:[%s558 + $0x98] sm:$0xff]
      %v590 = vld [vmem:[%s558 + $0xa0] sm:$0xff]
      %v591 = vld [vmem:[%s558 + $0xa8] sm:$0xff]
      %v592 = vld [vmem:[%s558 + $0xb0] sm:$0xff]
      %v593 = vld [vmem:[%s558 + $0xb8] sm:$0xff]
      %v594 = vld [vmem:[%s558 + $0xc0] sm:$0xff]
      %v595 = vld [vmem:[%s558 + $0xc8] sm:$0xff]
      %v596 = vld [vmem:[%s558 + $0xd0] sm:$0xff]
      %v597 = vld [vmem:[%s558 + $0xd8] sm:$0xff]
      %v598 = vld [vmem:[%s558 + $0xe0] sm:$0xff]
      %v599 = vld [vmem:[%s558 + $0xe8] sm:$0xff]
      %v600 = vld [vmem:[%s558 + $0xf0] sm:$0xff]
      %v601 = vld [vmem:[%s558 + $0xf8] sm:$0xff]
      %v602 = vpack.c.bf16 %v571, %v570
      %v603 = vpack.c.bf16 %v573, %v572
      %v604 = vpack.c.bf16 %v575, %v574
      %v605 = vpack.c.bf16 %v577, %v576
      %v606 = vpack.c.bf16 %v579, %v578
      %v607 = vpack.c.bf16 %v581, %v580
      %v608 = vpack.c.bf16 %v583, %v582
      %v609 = vpack.c.bf16 %v585, %v584
      %v610 = vpack.c.bf16 %v587, %v586
      %v611 = vpack.c.bf16 %v589, %v588
      %v612 = vpack.c.bf16 %v591, %v590
      %v613 = vpack.c.bf16 %v593, %v592
      %v614 = vpack.c.bf16 %v595, %v594
      %v615 = vpack.c.bf16 %v597, %v596
      %v616 = vpack.c.bf16 %v599, %v598
      %v617 = vpack.c.bf16 %v601, %v600
      %v618 = vld [vmem:[%s563] sm:$0xff]
      %v619 = vld [vmem:[%s563 + $0x8] sm:$0xff]
      %v620 = vld [vmem:[%s563 + $0x10] sm:$0xff]
      %v621 = vld [vmem:[%s563 + $0x18] sm:$0xff]
      %v622 = vld [vmem:[%s563 + $0x20] sm:$0xff]
      %v623 = vld [vmem:[%s563 + $0x28] sm:$0xff]
      %v624 = vld [vmem:[%s563 + $0x30] sm:$0xff]
      %v625 = vld [vmem:[%s563 + $0x38] sm:$0xff]
      %v626 = vld [vmem:[%s563 + $0x40] sm:$0xff]
      %v627 = vld [vmem:[%s563 + $0x48] sm:$0xff]
      %v628 = vld [vmem:[%s563 + $0x50] sm:$0xff]
      %v629 = vld [vmem:[%s563 + $0x58] sm:$0xff]
      %v630 = vld [vmem:[%s563 + $0x60] sm:$0xff]
      %v631 = vld [vmem:[%s563 + $0x68] sm:$0xff]
      %v632 = vld [vmem:[%s563 + $0x70] sm:$0xff]
      %v633 = vld [vmem:[%s563 + $0x78] sm:$0xff]
      %v634 = vld [vmem:[%s563 + $0x80] sm:$0xff]
      %v635 = vld [vmem:[%s563 + $0x88] sm:$0xff]
      %v636 = vld [vmem:[%s563 + $0x90] sm:$0xff]
      %v637 = vld [vmem:[%s563 + $0x98] sm:$0xff]
      %v638 = vld [vmem:[%s563 + $0xa0] sm:$0xff]
      %v639 = vld [vmem:[%s563 + $0xa8] sm:$0xff]
      %v640 = vld [vmem:[%s563 + $0xb0] sm:$0xff]
      %v641 = vld [vmem:[%s563 + $0xb8] sm:$0xff]
      %v642 = vld [vmem:[%s563 + $0xc0] sm:$0xff]
      %v643 = vld [vmem:[%s563 + $0xc8] sm:$0xff]
      %v644 = vld [vmem:[%s563 + $0xd0] sm:$0xff]
      %v645 = vld [vmem:[%s563 + $0xd8] sm:$0xff]
      %v646 = vld [vmem:[%s563 + $0xe0] sm:$0xff]
      %v647 = vld [vmem:[%s563 + $0xe8] sm:$0xff]
      %v648 = vld [vmem:[%s563 + $0xf0] sm:$0xff]
      %v649 = vld [vmem:[%s563 + $0xf8] sm:$0xff]
      %v650 = vpack.c.bf16 %v619, %v618
      %v651 = vpack.c.bf16 %v621, %v620
      %v652 = vpack.c.bf16 %v623, %v622
      %v653 = vpack.c.bf16 %v625, %v624
      %v654 = vpack.c.bf16 %v627, %v626
      %v655 = vpack.c.bf16 %v629, %v628
      %v656 = vpack.c.bf16 %v631, %v630
      %v657 = vpack.c.bf16 %v633, %v632
      %v658 = vpack.c.bf16 %v635, %v634
      %v659 = vpack.c.bf16 %v637, %v636
      %v660 = vpack.c.bf16 %v639, %v638
      %v661 = vpack.c.bf16 %v641, %v640
      %v662 = vpack.c.bf16 %v643, %v642
      %v663 = vpack.c.bf16 %v645, %v644
      %v664 = vpack.c.bf16 %v647, %v646
      %v665 = vpack.c.bf16 %v649, %v648
      %v666 = vld [vmem:[%s2] sm:$0xf]
      %v667 = vld [vmem:[%s3] sm:$0x3]
      %vm668 = vcmask 31744
      %v670 = vsel %vm668, %v650, 0
      %v673 = vsel %vm668, %v651, 0
      %v676 = vsel %vm668, %v652, 0
      %v679 = vsel %vm668, %v653, 0
      %v682 = vsel %vm668, %v654, 0
      %v685 = vsel %vm668, %v655, 0
      %v688 = vsel %vm668, %v656, 0
      %v691 = vsel %vm668, %v657, 0
      %v694 = vsel %vm668, %v658, 0
      %v697 = vsel %vm668, %v659, 0
      %v700 = vsel %vm668, %v660, 0
      %v703 = vsel %vm668, %v661, 0
      %v706 = vsel %vm668, %v662, 0
      %v709 = vsel %vm668, %v663, 0
      %v712 = vsel %vm668, %v664, 0
      %v715 = vsel %vm668, %v665, 0
      %vm717 = vcmask 1041408
      %v719 = vsel %vm717, %v667, 0
      %721 = vmatpush.bf16.msra.mxu0 0
      %722 = vmatpush.bf16.msra.mxu0 0
      %723 = vmatpush.bf16.msra.mxu0 0
      %724 = vmatpush.bf16.msra.mxu0 0
      %725 = vmatpush.bf16.msra.mxu0 0
      %726 = vmatpush.bf16.msra.mxu0 0
      %727 = vmatpush.bf16.msra.mxu0 0
      %728 = vmatpush.bf16.msra.mxu0 %v719
      %729 = vmatmul.bf16.gmra.mxu0 %v670
      %v730 = vpop.f32.mrf.mxu0
      %v731 = vadd.f32 0.0, %v730
      %v732 = vpop.f32.mrf.mxu0
      %v733 = vadd.f32 0.0, %v732
      %734 = vmatmul.bf16.gmra.mxu0 %v673
      %v735 = vpop.f32.mrf.mxu0
      %v736 = vadd.f32 0.0, %v735
      %v737 = vpop.f32.mrf.mxu0
      %v738 = vadd.f32 0.0, %v737
      %739 = vmatmul.bf16.gmra.mxu0 %v676
      %v740 = vpop.f32.mrf.mxu0
      %v741 = vadd.f32 0.0, %v740
      %v742 = vpop.f32.mrf.mxu0
      %v743 = vadd.f32 0.0, %v742
      %744 = vmatmul.bf16.gmra.mxu0 %v679
      %v745 = vpop.f32.mrf.mxu0
      %v746 = vadd.f32 0.0, %v745
      %v747 = vpop.f32.mrf.mxu0
      %v748 = vadd.f32 0.0, %v747
      %749 = vmatmul.bf16.gmra.mxu0 %v682
      %v750 = vpop.f32.mrf.mxu0
      %v751 = vadd.f32 0.0, %v750
      %v752 = vpop.f32.mrf.mxu0
      %v753 = vadd.f32 0.0, %v752
      %754 = vmatmul.bf16.gmra.mxu0 %v685
      %v755 = vpop.f32.mrf.mxu0
      %v756 = vadd.f32 0.0, %v755
      %v757 = vpop.f32.mrf.mxu0
      %v758 = vadd.f32 0.0, %v757
      %759 = vmatmul.bf16.gmra.mxu0 %v688
      %v760 = vpop.f32.mrf.mxu0
      %v761 = vadd.f32 0.0, %v760
      %v762 = vpop.f32.mrf.mxu0
      %v763 = vadd.f32 0.0, %v762
      %764 = vmatmul.bf16.gmra.mxu0 %v691
      %v765 = vpop.f32.mrf.mxu0
      %v766 = vadd.f32 0.0, %v765
      %v767 = vpop.f32.mrf.mxu0
      %v768 = vadd.f32 0.0, %v767
      %769 = vmatmul.bf16.gmra.mxu0 %v694
      %v770 = vpop.f32.mrf.mxu0
      %v771 = vadd.f32 0.0, %v770
      %v772 = vpop.f32.mrf.mxu0
      %v773 = vadd.f32 0.0, %v772
      %774 = vmatmul.bf16.gmra.mxu0 %v697
      %v775 = vpop.f32.mrf.mxu0
      %v776 = vadd.f32 0.0, %v775
      %v777 = vpop.f32.mrf.mxu0
      %v778 = vadd.f32 0.0, %v777
      %779 = vmatmul.bf16.gmra.mxu0 %v700
      %v780 = vpop.f32.mrf.mxu0
      %v781 = vadd.f32 0.0, %v780
      %v782 = vpop.f32.mrf.mxu0
      %v783 = vadd.f32 0.0, %v782
      %784 = vmatmul.bf16.gmra.mxu0 %v703
      %v785 = vpop.f32.mrf.mxu0
      %v786 = vadd.f32 0.0, %v785
      %v787 = vpop.f32.mrf.mxu0
      %v788 = vadd.f32 0.0, %v787
      %789 = vmatmul.bf16.gmra.mxu0 %v706
      %v790 = vpop.f32.mrf.mxu0
      %v791 = vadd.f32 0.0, %v790
      %v792 = vpop.f32.mrf.mxu0
      %v793 = vadd.f32 0.0, %v792
      %794 = vmatmul.bf16.gmra.mxu0 %v709
      %v795 = vpop.f32.mrf.mxu0
      %v796 = vadd.f32 0.0, %v795
      %v797 = vpop.f32.mrf.mxu0
      %v798 = vadd.f32 0.0, %v797
      %799 = vmatmul.bf16.gmra.mxu0 %v712
      %v800 = vpop.f32.mrf.mxu0
      %v801 = vadd.f32 0.0, %v800
      %v802 = vpop.f32.mrf.mxu0
      %v803 = vadd.f32 0.0, %v802
      %804 = vmatmul.bf16.gmra.mxu0 %v715
      %v805 = vpop.f32.mrf.mxu0
      %v806 = vadd.f32 0.0, %v805
      %v807 = vpop.f32.mrf.mxu0
      %v808 = vadd.f32 0.0, %v807
      %809 = vdwg.mxu0
      %vm810 = vcmask 64512
      %v812 = vsel %vm810, %v602, 0
      %v815 = vsel %vm810, %v603, 0
      %v818 = vsel %vm810, %v604, 0
      %v821 = vsel %vm810, %v605, 0
      %v824 = vsel %vm810, %v606, 0
      %v827 = vsel %vm810, %v607, 0
      %v830 = vsel %vm810, %v608, 0
      %v833 = vsel %vm810, %v609, 0
      %v836 = vsel %vm810, %v610, 0
      %v839 = vsel %vm810, %v611, 0
      %v842 = vsel %vm810, %v612, 0
      %v845 = vsel %vm810, %v613, 0
      %v848 = vsel %vm810, %v614, 0
      %v851 = vsel %vm810, %v615, 0
      %v854 = vsel %vm810, %v616, 0
      %v857 = vsel %vm810, %v617, 0
      %vm859 = vcmask 1043456
      %v861 = vsel %vm859, %v666, 0
      %863 = vmatpush.bf16.msra.mxu0 0
      %864 = vmatpush.bf16.msra.mxu0 0
      %865 = vmatpush.bf16.msra.mxu0 0
      %866 = vmatpush.bf16.msra.mxu0 0
      %867 = vmatpush.bf16.msra.mxu0 0
      %868 = vmatpush.bf16.msra.mxu0 0
      %869 = vmatpush.bf16.msra.mxu0 0
      %870 = vmatpush.bf16.msra.mxu0 %v861
      %871 = vmatmul.bf16.gmra.mxu0 %v812
      %v872 = vpop.f32.mrf.mxu0
      %v873 = vadd.f32 %v731, %v872
      %v874 = vpop.f32.mrf.mxu0
      %v875 = vadd.f32 %v733, %v874
      %876 = vmatmul.bf16.gmra.mxu0 %v815
      %v877 = vpop.f32.mrf.mxu0
      %v878 = vadd.f32 %v736, %v877
      %v879 = vpop.f32.mrf.mxu0
      %v880 = vadd.f32 %v738, %v879
      %881 = vmatmul.bf16.gmra.mxu0 %v818
      %v882 = vpop.f32.mrf.mxu0
      %v883 = vadd.f32 %v741, %v882
      %v884 = vpop.f32.mrf.mxu0
      %v885 = vadd.f32 %v743, %v884
      %886 = vmatmul.bf16.gmra.mxu0 %v821
      %v887 = vpop.f32.mrf.mxu0
      %v888 = vadd.f32 %v746, %v887
      %v889 = vpop.f32.mrf.mxu0
      %v890 = vadd.f32 %v748, %v889
      %891 = vmatmul.bf16.gmra.mxu0 %v824
      %v892 = vpop.f32.mrf.mxu0
      %v893 = vadd.f32 %v751, %v892
      %v894 = vpop.f32.mrf.mxu0
      %v895 = vadd.f32 %v753, %v894
      %896 = vmatmul.bf16.gmra.mxu0 %v827
      %v897 = vpop.f32.mrf.mxu0
      %v898 = vadd.f32 %v756, %v897
      %v899 = vpop.f32.mrf.mxu0
      %v900 = vadd.f32 %v758, %v899
      %901 = vmatmul.bf16.gmra.mxu0 %v830
      %v902 = vpop.f32.mrf.mxu0
      %v903 = vadd.f32 %v761, %v902
      %v904 = vpop.f32.mrf.mxu0
      %v905 = vadd.f32 %v763, %v904
      %906 = vmatmul.bf16.gmra.mxu0 %v833
      %v907 = vpop.f32.mrf.mxu0
      %v908 = vadd.f32 %v766, %v907
      %v909 = vpop.f32.mrf.mxu0
      %v910 = vadd.f32 %v768, %v909
      %911 = vmatmul.bf16.gmra.mxu0 %v836
      %v912 = vpop.f32.mrf.mxu0
      %v913 = vadd.f32 %v771, %v912
      %v914 = vpop.f32.mrf.mxu0
      %v915 = vadd.f32 %v773, %v914
      %916 = vmatmul.bf16.gmra.mxu0 %v839
      %v917 = vpop.f32.mrf.mxu0
      %v918 = vadd.f32 %v776, %v917
      %v919 = vpop.f32.mrf.mxu0
      %v920 = vadd.f32 %v778, %v919
      %921 = vmatmul.bf16.gmra.mxu0 %v842
      %v922 = vpop.f32.mrf.mxu0
      %v923 = vadd.f32 %v781, %v922
      %v924 = vpop.f32.mrf.mxu0
      %v925 = vadd.f32 %v783, %v924
      %926 = vmatmul.bf16.gmra.mxu0 %v845
      %v927 = vpop.f32.mrf.mxu0
      %v928 = vadd.f32 %v786, %v927
      %v929 = vpop.f32.mrf.mxu0
      %v930 = vadd.f32 %v788, %v929
      %931 = vmatmul.bf16.gmra.mxu0 %v848
      %v932 = vpop.f32.mrf.mxu0
      %v933 = vadd.f32 %v791, %v932
      %v934 = vpop.f32.mrf.mxu0
      %v935 = vadd.f32 %v793, %v934
      %936 = vmatmul.bf16.gmra.mxu0 %v851
      %v937 = vpop.f32.mrf.mxu0
      %v938 = vadd.f32 %v796, %v937
      %v939 = vpop.f32.mrf.mxu0
      %v940 = vadd.f32 %v798, %v939
      %941 = vmatmul.bf16.gmra.mxu0 %v854
      %v942 = vpop.f32.mrf.mxu0
      %v943 = vadd.f32 %v801, %v942
      %v944 = vpop.f32.mrf.mxu0
      %v945 = vadd.f32 %v803, %v944
      %946 = vmatmul.bf16.gmra.mxu0 %v857
      %v947 = vpop.f32.mrf.mxu0
      %v948 = vadd.f32 %v806, %v947
      %v949 = vpop.f32.mrf.mxu0
      %v950 = vadd.f32 %v808, %v949
      %951 = vdwg.mxu0
      %v952 = vld [vmem:[%s4] sm:$0x1]
      %v954 = vperm.slane %v952, 0
      %v956 = vadd.f32 %v873, %v954
      %v957 = vadd.f32 %v875, %v954
      %v958 = vadd.f32 %v878, %v954
      %v959 = vadd.f32 %v880, %v954
      %v960 = vadd.f32 %v883, %v954
      %v961 = vadd.f32 %v885, %v954
      %v962 = vadd.f32 %v888, %v954
      %v963 = vadd.f32 %v890, %v954
      %v964 = vadd.f32 %v893, %v954
      %v965 = vadd.f32 %v895, %v954
      %v966 = vadd.f32 %v898, %v954
      %v967 = vadd.f32 %v900, %v954
      %v968 = vadd.f32 %v903, %v954
      %v969 = vadd.f32 %v905, %v954
      %v970 = vadd.f32 %v908, %v954
      %v971 = vadd.f32 %v910, %v954
      %v972 = vadd.f32 %v913, %v954
      %v973 = vadd.f32 %v915, %v954
      %v974 = vadd.f32 %v918, %v954
      %v975 = vadd.f32 %v920, %v954
      %v976 = vadd.f32 %v923, %v954
      %v977 = vadd.f32 %v925, %v954
      %v978 = vadd.f32 %v928, %v954
      %v979 = vadd.f32 %v930, %v954
      %v980 = vadd.f32 %v933, %v954
      %v981 = vadd.f32 %v935, %v954
      %v982 = vadd.f32 %v938, %v954
      %v983 = vadd.f32 %v940, %v954
      %v984 = vadd.f32 %v943, %v954
      %v985 = vadd.f32 %v945, %v954
      %v986 = vadd.f32 %v948, %v954
      %v987 = vadd.f32 %v950, %v954
      %v988 = vld [vmem:[%s7] sm:$0xf]
      %v989 = vld [vmem:[%s7 + $0x4] sm:$0xf]
      %v990 = vld [vmem:[%s8] sm:$0x1]
      %v991 = vld [vmem:[%s9] sm:$0xf]
      %v992 = vld [vmem:[%s9 + $0x4] sm:$0xf]
      %v993 = vld [vmem:[%s10] sm:$0x1]
      %vm994 = vcmask 130048
      %v995 = vsel %vm994, %v956, 0.0
      %996 = vadd.xlane.f32.xlu0 %v995
      %v997 = vpop.xlane.xlu0 %996
      %v998 = vsel %vm994, %v957, 0.0
      %999 = vadd.xlane.f32.xlu0 %v998
      %v1000 = vpop.xlane.xlu0 %999
      %v1001 = vsel %vm994, %v958, 0.0
      %1002 = vadd.xlane.f32.xlu0 %v1001
      %v1003 = vpop.xlane.xlu0 %1002
      %v1004 = vsel %vm994, %v959, 0.0
      %1005 = vadd.xlane.f32.xlu0 %v1004
      %v1006 = vpop.xlane.xlu0 %1005
      %v1007 = vsel %vm994, %v960, 0.0
      %1008 = vadd.xlane.f32.xlu0 %v1007
      %v1009 = vpop.xlane.xlu0 %1008
      %v1010 = vsel %vm994, %v961, 0.0
      %1011 = vadd.xlane.f32.xlu0 %v1010
      %v1012 = vpop.xlane.xlu0 %1011
      %v1013 = vsel %vm994, %v962, 0.0
      %1014 = vadd.xlane.f32.xlu0 %v1013
      %v1015 = vpop.xlane.xlu0 %1014
      %v1016 = vsel %vm994, %v963, 0.0
      %1017 = vadd.xlane.f32.xlu0 %v1016
      %v1018 = vpop.xlane.xlu0 %1017
      %v1019 = vsel %vm994, %v964, 0.0
      %1020 = vadd.xlane.f32.xlu0 %v1019
      %v1021 = vpop.xlane.xlu0 %1020
      %v1022 = vsel %vm994, %v965, 0.0
      %1023 = vadd.xlane.f32.xlu0 %v1022
      %v1024 = vpop.xlane.xlu0 %1023
      %v1025 = vsel %vm994, %v966, 0.0
      %1026 = vadd.xlane.f32.xlu0 %v1025
      %v1027 = vpop.xlane.xlu0 %1026
      %v1028 = vsel %vm994, %v967, 0.0
      %1029 = vadd.xlane.f32.xlu0 %v1028
      %v1030 = vpop.xlane.xlu0 %1029
      %v1031 = vsel %vm994, %v968, 0.0
      %1032 = vadd.xlane.f32.xlu0 %v1031
      %v1033 = vpop.xlane.xlu0 %1032
      %v1034 = vsel %vm994, %v969, 0.0
      %1035 = vadd.xlane.f32.xlu0 %v1034
      %v1036 = vpop.xlane.xlu0 %1035
      %v1037 = vsel %vm994, %v970, 0.0
      %1038 = vadd.xlane.f32.xlu0 %v1037
      %v1039 = vpop.xlane.xlu0 %1038
      %v1040 = vsel %vm994, %v971, 0.0
      %1041 = vadd.xlane.f32.xlu0 %v1040
      %v1042 = vpop.xlane.xlu0 %1041
      %v1043 = vsel %vm994, %v972, 0.0
      %1044 = vadd.xlane.f32.xlu0 %v1043
      %v1045 = vpop.xlane.xlu0 %1044
      %v1046 = vsel %vm994, %v973, 0.0
      %1047 = vadd.xlane.f32.xlu0 %v1046
      %v1048 = vpop.xlane.xlu0 %1047
      %v1049 = vsel %vm994, %v974, 0.0
      %1050 = vadd.xlane.f32.xlu0 %v1049
      %v1051 = vpop.xlane.xlu0 %1050
      %v1052 = vsel %vm994, %v975, 0.0
      %1053 = vadd.xlane.f32.xlu0 %v1052
      %v1054 = vpop.xlane.xlu0 %1053
      %v1055 = vsel %vm994, %v976, 0.0
      %1056 = vadd.xlane.f32.xlu0 %v1055
      %v1057 = vpop.xlane.xlu0 %1056
      %v1058 = vsel %vm994, %v977, 0.0
      %1059 = vadd.xlane.f32.xlu0 %v1058
      %v1060 = vpop.xlane.xlu0 %1059
      %v1061 = vsel %vm994, %v978, 0.0
      %1062 = vadd.xlane.f32.xlu0 %v1061
      %v1063 = vpop.xlane.xlu0 %1062
      %v1064 = vsel %vm994, %v979, 0.0
      %1065 = vadd.xlane.f32.xlu0 %v1064
      %v1066 = vpop.xlane.xlu0 %1065
      %v1067 = vsel %vm994, %v980, 0.0
      %1068 = vadd.xlane.f32.xlu0 %v1067
      %v1069 = vpop.xlane.xlu0 %1068
      %v1070 = vsel %vm994, %v981, 0.0
      %1071 = vadd.xlane.f32.xlu0 %v1070
      %v1072 = vpop.xlane.xlu0 %1071
      %v1073 = vsel %vm994, %v982, 0.0
      %1074 = vadd.xlane.f32.xlu0 %v1073
      %v1075 = vpop.xlane.xlu0 %1074
      %v1076 = vsel %vm994, %v983, 0.0
      %1077 = vadd.xlane.f32.xlu0 %v1076
      %v1078 = vpop.xlane.xlu0 %1077
      %v1079 = vsel %vm994, %v984, 0.0
      %1080 = vadd.xlane.f32.xlu0 %v1079
      %v1081 = vpop.xlane.xlu0 %1080
      %v1082 = vsel %vm994, %v985, 0.0
      %1083 = vadd.xlane.f32.xlu0 %v1082
      %v1084 = vpop.xlane.xlu0 %1083
      %v1085 = vsel %vm994, %v986, 0.0
      %1086 = vadd.xlane.f32.xlu0 %v1085
      %v1087 = vpop.xlane.xlu0 %1086
      %v1088 = vsel %vm994, %v987, 0.0
      %1089 = vadd.xlane.f32.xlu0 %v1088
      %v1090 = vpop.xlane.xlu0 %1089
      %v1091 = vrcp.pop 16.0
      %v1092 = vmul.f32 16.0, %v1091
      %v1093 = vsub.f32 1.0, %v1092
      %v1094 = vmul.f32 %v1091, %v1093
      %v1095 = vadd.f32 %v1091, %v1094
      %vm1096 = vweird.f32 %v1091
      %v1097 = vsel %vm1096, %v1091, %v1095
      %v1098 = vmul.f32 %v997, %v1097
      %v1099 = vmul.f32 %v1000, %v1097
      %v1100 = vmul.f32 %v1003, %v1097
      %v1101 = vmul.f32 %v1006, %v1097
      %v1102 = vmul.f32 %v1009, %v1097
      %v1103 = vmul.f32 %v1012, %v1097
      %v1104 = vmul.f32 %v1015, %v1097
      %v1105 = vmul.f32 %v1018, %v1097
      %v1106 = vmul.f32 %v1021, %v1097
      %v1107 = vmul.f32 %v1024, %v1097
      %v1108 = vmul.f32 %v1027, %v1097
      %v1109 = vmul.f32 %v1030, %v1097
      %v1110 = vmul.f32 %v1033, %v1097
      %v1111 = vmul.f32 %v1036, %v1097
      %v1112 = vmul.f32 %v1039, %v1097
      %v1113 = vmul.f32 %v1042, %v1097
      %v1114 = vmul.f32 %v1045, %v1097
      %v1115 = vmul.f32 %v1048, %v1097
      %v1116 = vmul.f32 %v1051, %v1097
      %v1117 = vmul.f32 %v1054, %v1097
      %v1118 = vmul.f32 %v1057, %v1097
      %v1119 = vmul.f32 %v1060, %v1097
      %v1120 = vmul.f32 %v1063, %v1097
      %v1121 = vmul.f32 %v1066, %v1097
      %v1122 = vmul.f32 %v1069, %v1097
      %v1123 = vmul.f32 %v1072, %v1097
      %v1124 = vmul.f32 %v1075, %v1097
      %v1125 = vmul.f32 %v1078, %v1097
      %v1126 = vmul.f32 %v1081, %v1097
      %v1127 = vmul.f32 %v1084, %v1097
      %v1128 = vmul.f32 %v1087, %v1097
      %v1129 = vmul.f32 %v1090, %v1097
      %v1130 = vsub.f32 %v956, %v1098
      %v1131 = vsub.f32 %v957, %v1099
      %v1132 = vsub.f32 %v958, %v1100
      %v1133 = vsub.f32 %v959, %v1101
      %v1134 = vsub.f32 %v960, %v1102
      %v1135 = vsub.f32 %v961, %v1103
      %v1136 = vsub.f32 %v962, %v1104
      %v1137 = vsub.f32 %v963, %v1105
      %v1138 = vsub.f32 %v964, %v1106
      %v1139 = vsub.f32 %v965, %v1107
      %v1140 = vsub.f32 %v966, %v1108
      %v1141 = vsub.f32 %v967, %v1109
      %v1142 = vsub.f32 %v968, %v1110
      %v1143 = vsub.f32 %v969, %v1111
      %v1144 = vsub.f32 %v970, %v1112
      %v1145 = vsub.f32 %v971, %v1113
      %v1146 = vsub.f32 %v972, %v1114
      %v1147 = vsub.f32 %v973, %v1115
      %v1148 = vsub.f32 %v974, %v1116
      %v1149 = vsub.f32 %v975, %v1117
      %v1150 = vsub.f32 %v976, %v1118
      %v1151 = vsub.f32 %v977, %v1119
      %v1152 = vsub.f32 %v978, %v1120
      %v1153 = vsub.f32 %v979, %v1121
      %v1154 = vsub.f32 %v980, %v1122
      %v1155 = vsub.f32 %v981, %v1123
      %v1156 = vsub.f32 %v982, %v1124
      %v1157 = vsub.f32 %v983, %v1125
      %v1158 = vsub.f32 %v984, %v1126
      %v1159 = vsub.f32 %v985, %v1127
      %v1160 = vsub.f32 %v986, %v1128
      %v1161 = vsub.f32 %v987, %v1129
      %v1162 = vmul.f32 %v1130, %v1130
      %v1163 = vmul.f32 %v1131, %v1131
      %v1164 = vmul.f32 %v1132, %v1132
      %v1165 = vmul.f32 %v1133, %v1133
      %v1166 = vmul.f32 %v1134, %v1134
      %v1167 = vmul.f32 %v1135, %v1135
      %v1168 = vmul.f32 %v1136, %v1136
      %v1169 = vmul.f32 %v1137, %v1137
      %v1170 = vmul.f32 %v1138, %v1138
      %v1171 = vmul.f32 %v1139, %v1139
      %v1172 = vmul.f32 %v1140, %v1140
      %v1173 = vmul.f32 %v1141, %v1141
      %v1174 = vmul.f32 %v1142, %v1142
      %v1175 = vmul.f32 %v1143, %v1143
      %v1176 = vmul.f32 %v1144, %v1144
      %v1177 = vmul.f32 %v1145, %v1145
      %v1178 = vmul.f32 %v1146, %v1146
      %v1179 = vmul.f32 %v1147, %v1147
      %v1180 = vmul.f32 %v1148, %v1148
      %v1181 = vmul.f32 %v1149, %v1149
      %v1182 = vmul.f32 %v1150, %v1150
      %v1183 = vmul.f32 %v1151, %v1151
      %v1184 = vmul.f32 %v1152, %v1152
      %v1185 = vmul.f32 %v1153, %v1153
      %v1186 = vmul.f32 %v1154, %v1154
      %v1187 = vmul.f32 %v1155, %v1155
      %v1188 = vmul.f32 %v1156, %v1156
      %v1189 = vmul.f32 %v1157, %v1157
      %v1190 = vmul.f32 %v1158, %v1158
      %v1191 = vmul.f32 %v1159, %v1159
      %v1192 = vmul.f32 %v1160, %v1160
      %v1193 = vmul.f32 %v1161, %v1161
      %v1194 = vsel %vm994, %v1162, 0.0
      %1195 = vadd.xlane.f32.xlu0 %v1194
      %v1196 = vpop.xlane.xlu0 %1195
      %v1197 = vsel %vm994, %v1163, 0.0
      %1198 = vadd.xlane.f32.xlu0 %v1197
      %v1199 = vpop.xlane.xlu0 %1198
      %v1200 = vsel %vm994, %v1164, 0.0
      %1201 = vadd.xlane.f32.xlu0 %v1200
      %v1202 = vpop.xlane.xlu0 %1201
      %v1203 = vsel %vm994, %v1165, 0.0
      %1204 = vadd.xlane.f32.xlu0 %v1203
      %v1205 = vpop.xlane.xlu0 %1204
      %v1206 = vsel %vm994, %v1166, 0.0
      %1207 = vadd.xlane.f32.xlu0 %v1206
      %v1208 = vpop.xlane.xlu0 %1207
      %v1209 = vsel %vm994, %v1167, 0.0
      %1210 = vadd.xlane.f32.xlu0 %v1209
      %v1211 = vpop.xlane.xlu0 %1210
      %v1212 = vsel %vm994, %v1168, 0.0
      %1213 = vadd.xlane.f32.xlu0 %v1212
      %v1214 = vpop.xlane.xlu0 %1213
      %v1215 = vsel %vm994, %v1169, 0.0
      %1216 = vadd.xlane.f32.xlu0 %v1215
      %v1217 = vpop.xlane.xlu0 %1216
      %v1218 = vsel %vm994, %v1170, 0.0
      %1219 = vadd.xlane.f32.xlu0 %v1218
      %v1220 = vpop.xlane.xlu0 %1219
      %v1221 = vsel %vm994, %v1171, 0.0
      %1222 = vadd.xlane.f32.xlu0 %v1221
      %v1223 = vpop.xlane.xlu0 %1222
      %v1224 = vsel %vm994, %v1172, 0.0
      %1225 = vadd.xlane.f32.xlu0 %v1224
      %v1226 = vpop.xlane.xlu0 %1225
      %v1227 = vsel %vm994, %v1173, 0.0
      %1228 = vadd.xlane.f32.xlu0 %v1227
      %v1229 = vpop.xlane.xlu0 %1228
      %v1230 = vsel %vm994, %v1174, 0.0
      %1231 = vadd.xlane.f32.xlu0 %v1230
      %v1232 = vpop.xlane.xlu0 %1231
      %v1233 = vsel %vm994, %v1175, 0.0
      %1234 = vadd.xlane.f32.xlu0 %v1233
      %v1235 = vpop.xlane.xlu0 %1234
      %v1236 = vsel %vm994, %v1176, 0.0
      %1237 = vadd.xlane.f32.xlu0 %v1236
      %v1238 = vpop.xlane.xlu0 %1237
      %v1239 = vsel %vm994, %v1177, 0.0
      %1240 = vadd.xlane.f32.xlu0 %v1239
      %v1241 = vpop.xlane.xlu0 %1240
      %v1242 = vsel %vm994, %v1178, 0.0
      %1243 = vadd.xlane.f32.xlu0 %v1242
      %v1244 = vpop.xlane.xlu0 %1243
      %v1245 = vsel %vm994, %v1179, 0.0
      %1246 = vadd.xlane.f32.xlu0 %v1245
      %v1247 = vpop.xlane.xlu0 %1246
      %v1248 = vsel %vm994, %v1180, 0.0
      %1249 = vadd.xlane.f32.xlu0 %v1248
      %v1250 = vpop.xlane.xlu0 %1249
      %v1251 = vsel %vm994, %v1181, 0.0
      %1252 = vadd.xlane.f32.xlu0 %v1251
      %v1253 = vpop.xlane.xlu0 %1252
      %v1254 = vsel %vm994, %v1182, 0.0
      %1255 = vadd.xlane.f32.xlu0 %v1254
      %v1256 = vpop.xlane.xlu0 %1255
      %v1257 = vsel %vm994, %v1183, 0.0
      %1258 = vadd.xlane.f32.xlu0 %v1257
      %v1259 = vpop.xlane.xlu0 %1258
      %v1260 = vsel %vm994, %v1184, 0.0
      %1261 = vadd.xlane.f32.xlu0 %v1260
      %v1262 = vpop.xlane.xlu0 %1261
      %v1263 = vsel %vm994, %v1185, 0.0
      %1264 = vadd.xlane.f32.xlu0 %v1263
      %v1265 = vpop.xlane.xlu0 %1264
      %v1266 = vsel %vm994, %v1186, 0.0
      %1267 = vadd.xlane.f32.xlu0 %v1266
      %v1268 = vpop.xlane.xlu0 %1267
      %v1269 = vsel %vm994, %v1187, 0.0
      %1270 = vadd.xlane.f32.xlu0 %v1269
      %v1271 = vpop.xlane.xlu0 %1270
      %v1272 = vsel %vm994, %v1188, 0.0
      %1273 = vadd.xlane.f32.xlu0 %v1272
      %v1274 = vpop.xlane.xlu0 %1273
      %v1275 = vsel %vm994, %v1189, 0.0
      %1276 = vadd.xlane.f32.xlu0 %v1275
      %v1277 = vpop.xlane.xlu0 %1276
      %v1278 = vsel %vm994, %v1190, 0.0
      %1279 = vadd.xlane.f32.xlu0 %v1278
      %v1280 = vpop.xlane.xlu0 %1279
      %v1281 = vsel %vm994, %v1191, 0.0
      %1282 = vadd.xlane.f32.xlu0 %v1281
      %v1283 = vpop.xlane.xlu0 %1282
      %v1284 = vsel %vm994, %v1192, 0.0
      %1285 = vadd.xlane.f32.xlu0 %v1284
      %v1286 = vpop.xlane.xlu0 %1285
      %v1287 = vsel %vm994, %v1193, 0.0
      %1288 = vadd.xlane.f32.xlu0 %v1287
      %v1289 = vpop.xlane.xlu0 %1288
      %v1290 = vmul.f32 %v1196, %v1097
      %v1291 = vmul.f32 %v1199, %v1097
      %v1292 = vmul.f32 %v1202, %v1097
      %v1293 = vmul.f32 %v1205, %v1097
      %v1294 = vmul.f32 %v1208, %v1097
      %v1295 = vmul.f32 %v1211, %v1097
      %v1296 = vmul.f32 %v1214, %v1097
      %v1297 = vmul.f32 %v1217, %v1097
      %v1298 = vmul.f32 %v1220, %v1097
      %v1299 = vmul.f32 %v1223, %v1097
      %v1300 = vmul.f32 %v1226, %v1097
      %v1301 = vmul.f32 %v1229, %v1097
      %v1302 = vmul.f32 %v1232, %v1097
      %v1303 = vmul.f32 %v1235, %v1097
      %v1304 = vmul.f32 %v1238, %v1097
      %v1305 = vmul.f32 %v1241, %v1097
      %v1306 = vmul.f32 %v1244, %v1097
      %v1307 = vmul.f32 %v1247, %v1097
      %v1308 = vmul.f32 %v1250, %v1097
      %v1309 = vmul.f32 %v1253, %v1097
      %v1310 = vmul.f32 %v1256, %v1097
      %v1311 = vmul.f32 %v1259, %v1097
      %v1312 = vmul.f32 %v1262, %v1097
      %v1313 = vmul.f32 %v1265, %v1097
      %v1314 = vmul.f32 %v1268, %v1097
      %v1315 = vmul.f32 %v1271, %v1097
      %v1316 = vmul.f32 %v1274, %v1097
      %v1317 = vmul.f32 %v1277, %v1097
      %v1318 = vmul.f32 %v1280, %v1097
      %v1319 = vmul.f32 %v1283, %v1097
      %v1320 = vmul.f32 %v1286, %v1097
      %v1321 = vmul.f32 %v1289, %v1097
      %v1322 = vadd.f32 %v1290, 1e-05
      %v1323 = vadd.f32 %v1291, 1e-05
      %v1324 = vadd.f32 %v1292, 1e-05
      %v1325 = vadd.f32 %v1293, 1e-05
      %v1326 = vadd.f32 %v1294, 1e-05
      %v1327 = vadd.f32 %v1295, 1e-05
      %v1328 = vadd.f32 %v1296, 1e-05
      %v1329 = vadd.f32 %v1297, 1e-05
      %v1330 = vadd.f32 %v1298, 1e-05
      %v1331 = vadd.f32 %v1299, 1e-05
      %v1332 = vadd.f32 %v1300, 1e-05
      %v1333 = vadd.f32 %v1301, 1e-05
      %v1334 = vadd.f32 %v1302, 1e-05
      %v1335 = vadd.f32 %v1303, 1e-05
      %v1336 = vadd.f32 %v1304, 1e-05
      %v1337 = vadd.f32 %v1305, 1e-05
      %v1338 = vadd.f32 %v1306, 1e-05
      %v1339 = vadd.f32 %v1307, 1e-05
      %v1340 = vadd.f32 %v1308, 1e-05
      %v1341 = vadd.f32 %v1309, 1e-05
      %v1342 = vadd.f32 %v1310, 1e-05
      %v1343 = vadd.f32 %v1311, 1e-05
      %v1344 = vadd.f32 %v1312, 1e-05
      %v1345 = vadd.f32 %v1313, 1e-05
      %v1346 = vadd.f32 %v1314, 1e-05
      %v1347 = vadd.f32 %v1315, 1e-05
      %v1348 = vadd.f32 %v1316, 1e-05
      %v1349 = vadd.f32 %v1317, 1e-05
      %v1350 = vadd.f32 %v1318, 1e-05
      %v1351 = vadd.f32 %v1319, 1e-05
      %v1352 = vadd.f32 %v1320, 1e-05
      %v1353 = vadd.f32 %v1321, 1e-05
      %v1354 = vrsqrt.pop %v1322
      %v1355 = vmul.f32 %v1354, %v1322
      %v1356 = vmul.f32 %v1355, %v1354
      %v1357 = vmul.f32 0.5, %v1356
      %v1358 = vsub.f32 1.5, %v1357
      %v1359 = vmul.f32 %v1354, %v1358
      %vm1360 = vweird.f32 %v1322
      %vm1361 = vweird.f32 %v1354
      %vm1362 = vmor %vm1360, %vm1361
      %v1363 = vsel %vm1362, %v1354, %v1359
      %v1364 = vrsqrt.pop %v1323
      %v1365 = vmul.f32 %v1364, %v1323
      %v1366 = vmul.f32 %v1365, %v1364
      %v1367 = vmul.f32 0.5, %v1366
      %v1368 = vsub.f32 1.5, %v1367
      %v1369 = vmul.f32 %v1364, %v1368
      %vm1370 = vweird.f32 %v1323
      %vm1371 = vweird.f32 %v1364
      %vm1372 = vmor %vm1370, %vm1371
      %v1373 = vsel %vm1372, %v1364, %v1369
      %v1374 = vrsqrt.pop %v1324
      %v1375 = vmul.f32 %v1374, %v1324
      %v1376 = vmul.f32 %v1375, %v1374
      %v1377 = vmul.f32 0.5, %v1376
      %v1378 = vsub.f32 1.5, %v1377
      %v1379 = vmul.f32 %v1374, %v1378
      %vm1380 = vweird.f32 %v1324
      %vm1381 = vweird.f32 %v1374
      %vm1382 = vmor %vm1380, %vm1381
      %v1383 = vsel %vm1382, %v1374, %v1379
      %v1384 = vrsqrt.pop %v1325
      %v1385 = vmul.f32 %v1384, %v1325
      %v1386 = vmul.f32 %v1385, %v1384
      %v1387 = vmul.f32 0.5, %v1386
      %v1388 = vsub.f32 1.5, %v1387
      %v1389 = vmul.f32 %v1384, %v1388
      %vm1390 = vweird.f32 %v1325
      %vm1391 = vweird.f32 %v1384
      %vm1392 = vmor %vm1390, %vm1391
      %v1393 = vsel %vm1392, %v1384, %v1389
      %v1394 = vrsqrt.pop %v1326
      %v1395 = vmul.f32 %v1394, %v1326
      %v1396 = vmul.f32 %v1395, %v1394
      %v1397 = vmul.f32 0.5, %v1396
      %v1398 = vsub.f32 1.5, %v1397
      %v1399 = vmul.f32 %v1394, %v1398
      %vm1400 = vweird.f32 %v1326
      %vm1401 = vweird.f32 %v1394
      %vm1402 = vmor %vm1400, %vm1401
      %v1403 = vsel %vm1402, %v1394, %v1399
      %v1404 = vrsqrt.pop %v1327
      %v1405 = vmul.f32 %v1404, %v1327
      %v1406 = vmul.f32 %v1405, %v1404
      %v1407 = vmul.f32 0.5, %v1406
      %v1408 = vsub.f32 1.5, %v1407
      %v1409 = vmul.f32 %v1404, %v1408
      %vm1410 = vweird.f32 %v1327
      %vm1411 = vweird.f32 %v1404
      %vm1412 = vmor %vm1410, %vm1411
      %v1413 = vsel %vm1412, %v1404, %v1409
      %v1414 = vrsqrt.pop %v1328
      %v1415 = vmul.f32 %v1414, %v1328
      %v1416 = vmul.f32 %v1415, %v1414
      %v1417 = vmul.f32 0.5, %v1416
      %v1418 = vsub.f32 1.5, %v1417
      %v1419 = vmul.f32 %v1414, %v1418
      %vm1420 = vweird.f32 %v1328
      %vm1421 = vweird.f32 %v1414
      %vm1422 = vmor %vm1420, %vm1421
      %v1423 = vsel %vm1422, %v1414, %v1419
      %v1424 = vrsqrt.pop %v1329
      %v1425 = vmul.f32 %v1424, %v1329
      %v1426 = vmul.f32 %v1425, %v1424
      %v1427 = vmul.f32 0.5, %v1426
      %v1428 = vsub.f32 1.5, %v1427
      %v1429 = vmul.f32 %v1424, %v1428
      %vm1430 = vweird.f32 %v1329
      %vm1431 = vweird.f32 %v1424
      %vm1432 = vmor %vm1430, %vm1431
      %v1433 = vsel %vm1432, %v1424, %v1429
      %v1434 = vrsqrt.pop %v1330
      %v1435 = vmul.f32 %v1434, %v1330
      %v1436 = vmul.f32 %v1435, %v1434
      %v1437 = vmul.f32 0.5, %v1436
      %v1438 = vsub.f32 1.5, %v1437
      %v1439 = vmul.f32 %v1434, %v1438
      %vm1440 = vweird.f32 %v1330
      %vm1441 = vweird.f32 %v1434
      %vm1442 = vmor %vm1440, %vm1441
      %v1443 = vsel %vm1442, %v1434, %v1439
      %v1444 = vrsqrt.pop %v1331
      %v1445 = vmul.f32 %v1444, %v1331
      %v1446 = vmul.f32 %v1445, %v1444
      %v1447 = vmul.f32 0.5, %v1446
      %v1448 = vsub.f32 1.5, %v1447
      %v1449 = vmul.f32 %v1444, %v1448
      %vm1450 = vweird.f32 %v1331
      %vm1451 = vweird.f32 %v1444
      %vm1452 = vmor %vm1450, %vm1451
      %v1453 = vsel %vm1452, %v1444, %v1449
      %v1454 = vrsqrt.pop %v1332
      %v1455 = vmul.f32 %v1454, %v1332
      %v1456 = vmul.f32 %v1455, %v1454
      %v1457 = vmul.f32 0.5, %v1456
      %v1458 = vsub.f32 1.5, %v1457
      %v1459 = vmul.f32 %v1454, %v1458
      %vm1460 = vweird.f32 %v1332
      %vm1461 = vweird.f32 %v1454
      %vm1462 = vmor %vm1460, %vm1461
      %v1463 = vsel %vm1462, %v1454, %v1459
      %v1464 = vrsqrt.pop %v1333
      %v1465 = vmul.f32 %v1464, %v1333
      %v1466 = vmul.f32 %v1465, %v1464
      %v1467 = vmul.f32 0.5, %v1466
      %v1468 = vsub.f32 1.5, %v1467
      %v1469 = vmul.f32 %v1464, %v1468
      %vm1470 = vweird.f32 %v1333
      %vm1471 = vweird.f32 %v1464
      %vm1472 = vmor %vm1470, %vm1471
      %v1473 = vsel %vm1472, %v1464, %v1469
      %v1474 = vrsqrt.pop %v1334
      %v1475 = vmul.f32 %v1474, %v1334
      %v1476 = vmul.f32 %v1475, %v1474
      %v1477 = vmul.f32 0.5, %v1476
      %v1478 = vsub.f32 1.5, %v1477
      %v1479 = vmul.f32 %v1474, %v1478
      %vm1480 = vweird.f32 %v1334
      %vm1481 = vweird.f32 %v1474
      %vm1482 = vmor %vm1480, %vm1481
      %v1483 = vsel %vm1482, %v1474, %v1479
      %v1484 = vrsqrt.pop %v1335
      %v1485 = vmul.f32 %v1484, %v1335
      %v1486 = vmul.f32 %v1485, %v1484
      %v1487 = vmul.f32 0.5, %v1486
      %v1488 = vsub.f32 1.5, %v1487
      %v1489 = vmul.f32 %v1484, %v1488
      %vm1490 = vweird.f32 %v1335
      %vm1491 = vweird.f32 %v1484
      %vm1492 = vmor %vm1490, %vm1491
      %v1493 = vsel %vm1492, %v1484, %v1489
      %v1494 = vrsqrt.pop %v1336
      %v1495 = vmul.f32 %v1494, %v1336
      %v1496 = vmul.f32 %v1495, %v1494
      %v1497 = vmul.f32 0.5, %v1496
      %v1498 = vsub.f32 1.5, %v1497
      %v1499 = vmul.f32 %v1494, %v1498
      %vm1500 = vweird.f32 %v1336
      %vm1501 = vweird.f32 %v1494
      %vm1502 = vmor %vm1500, %vm1501
      %v1503 = vsel %vm1502, %v1494, %v1499
      %v1504 = vrsqrt.pop %v1337
      %v1505 = vmul.f32 %v1504, %v1337
      %v1506 = vmul.f32 %v1505, %v1504
      %v1507 = vmul.f32 0.5, %v1506
      %v1508 = vsub.f32 1.5, %v1507
      %v1509 = vmul.f32 %v1504, %v1508
      %vm1510 = vweird.f32 %v1337
      %vm1511 = vweird.f32 %v1504
      %vm1512 = vmor %vm1510, %vm1511
      %v1513 = vsel %vm1512, %v1504, %v1509
      %v1514 = vrsqrt.pop %v1338
      %v1515 = vmul.f32 %v1514, %v1338
      %v1516 = vmul.f32 %v1515, %v1514
      %v1517 = vmul.f32 0.5, %v1516
      %v1518 = vsub.f32 1.5, %v1517
      %v1519 = vmul.f32 %v1514, %v1518
      %vm1520 = vweird.f32 %v1338
      %vm1521 = vweird.f32 %v1514
      %vm1522 = vmor %vm1520, %vm1521
      %v1523 = vsel %vm1522, %v1514, %v1519
      %v1524 = vrsqrt.pop %v1339
      %v1525 = vmul.f32 %v1524, %v1339
      %v1526 = vmul.f32 %v1525, %v1524
      %v1527 = vmul.f32 0.5, %v1526
      %v1528 = vsub.f32 1.5, %v1527
      %v1529 = vmul.f32 %v1524, %v1528
      %vm1530 = vweird.f32 %v1339
      %vm1531 = vweird.f32 %v1524
      %vm1532 = vmor %vm1530, %vm1531
      %v1533 = vsel %vm1532, %v1524, %v1529
      %v1534 = vrsqrt.pop %v1340
      %v1535 = vmul.f32 %v1534, %v1340
      %v1536 = vmul.f32 %v1535, %v1534
      %v1537 = vmul.f32 0.5, %v1536
      %v1538 = vsub.f32 1.5, %v1537
      %v1539 = vmul.f32 %v1534, %v1538
      %vm1540 = vweird.f32 %v1340
      %vm1541 = vweird.f32 %v1534
      %vm1542 = vmor %vm1540, %vm1541
      %v1543 = vsel %vm1542, %v1534, %v1539
      %v1544 = vrsqrt.pop %v1341
      %v1545 = vmul.f32 %v1544, %v1341
      %v1546 = vmul.f32 %v1545, %v1544
      %v1547 = vmul.f32 0.5, %v1546
      %v1548 = vsub.f32 1.5, %v1547
      %v1549 = vmul.f32 %v1544, %v1548
      %vm1550 = vweird.f32 %v1341
      %vm1551 = vweird.f32 %v1544
      %vm1552 = vmor %vm1550, %vm1551
      %v1553 = vsel %vm1552, %v1544, %v1549
      %v1554 = vrsqrt.pop %v1342
      %v1555 = vmul.f32 %v1554, %v1342
      %v1556 = vmul.f32 %v1555, %v1554
      %v1557 = vmul.f32 0.5, %v1556
      %v1558 = vsub.f32 1.5, %v1557
      %v1559 = vmul.f32 %v1554, %v1558
      %vm1560 = vweird.f32 %v1342
      %vm1561 = vweird.f32 %v1554
      %vm1562 = vmor %vm1560, %vm1561
      %v1563 = vsel %vm1562, %v1554, %v1559
      %v1564 = vrsqrt.pop %v1343
      %v1565 = vmul.f32 %v1564, %v1343
      %v1566 = vmul.f32 %v1565, %v1564
      %v1567 = vmul.f32 0.5, %v1566
      %v1568 = vsub.f32 1.5, %v1567
      %v1569 = vmul.f32 %v1564, %v1568
      %vm1570 = vweird.f32 %v1343
      %vm1571 = vweird.f32 %v1564
      %vm1572 = vmor %vm1570, %vm1571
      %v1573 = vsel %vm1572, %v1564, %v1569
      %v1574 = vrsqrt.pop %v1344
      %v1575 = vmul.f32 %v1574, %v1344
      %v1576 = vmul.f32 %v1575, %v1574
      %v1577 = vmul.f32 0.5, %v1576
      %v1578 = vsub.f32 1.5, %v1577
      %v1579 = vmul.f32 %v1574, %v1578
      %vm1580 = vweird.f32 %v1344
      %vm1581 = vweird.f32 %v1574
      %vm1582 = vmor %vm1580, %vm1581
      %v1583 = vsel %vm1582, %v1574, %v1579
      %v1584 = vrsqrt.pop %v1345
      %v1585 = vmul.f32 %v1584, %v1345
      %v1586 = vmul.f32 %v1585, %v1584
      %v1587 = vmul.f32 0.5, %v1586
      %v1588 = vsub.f32 1.5, %v1587
      %v1589 = vmul.f32 %v1584, %v1588
      %vm1590 = vweird.f32 %v1345
      %vm1591 = vweird.f32 %v1584
      %vm1592 = vmor %vm1590, %vm1591
      %v1593 = vsel %vm1592, %v1584, %v1589
      %v1594 = vrsqrt.pop %v1346
      %v1595 = vmul.f32 %v1594, %v1346
      %v1596 = vmul.f32 %v1595, %v1594
      %v1597 = vmul.f32 0.5, %v1596
      %v1598 = vsub.f32 1.5, %v1597
      %v1599 = vmul.f32 %v1594, %v1598
      %vm1600 = vweird.f32 %v1346
      %vm1601 = vweird.f32 %v1594
      %vm1602 = vmor %vm1600, %vm1601
      %v1603 = vsel %vm1602, %v1594, %v1599
      %v1604 = vrsqrt.pop %v1347
      %v1605 = vmul.f32 %v1604, %v1347
      %v1606 = vmul.f32 %v1605, %v1604
      %v1607 = vmul.f32 0.5, %v1606
      %v1608 = vsub.f32 1.5, %v1607
      %v1609 = vmul.f32 %v1604, %v1608
      %vm1610 = vweird.f32 %v1347
      %vm1611 = vweird.f32 %v1604
      %vm1612 = vmor %vm1610, %vm1611
      %v1613 = vsel %vm1612, %v1604, %v1609
      %v1614 = vrsqrt.pop %v1348
      %v1615 = vmul.f32 %v1614, %v1348
      %v1616 = vmul.f32 %v1615, %v1614
      %v1617 = vmul.f32 0.5, %v1616
      %v1618 = vsub.f32 1.5, %v1617
      %v1619 = vmul.f32 %v1614, %v1618
      %vm1620 = vweird.f32 %v1348
      %vm1621 = vweird.f32 %v1614
      %vm1622 = vmor %vm1620, %vm1621
      %v1623 = vsel %vm1622, %v1614, %v1619
      %v1624 = vrsqrt.pop %v1349
      %v1625 = vmul.f32 %v1624, %v1349
      %v1626 = vmul.f32 %v1625, %v1624
      %v1627 = vmul.f32 0.5, %v1626
      %v1628 = vsub.f32 1.5, %v1627
      %v1629 = vmul.f32 %v1624, %v1628
      %vm1630 = vweird.f32 %v1349
      %vm1631 = vweird.f32 %v1624
      %vm1632 = vmor %vm1630, %vm1631
      %v1633 = vsel %vm1632, %v1624, %v1629
      %v1634 = vrsqrt.pop %v1350
      %v1635 = vmul.f32 %v1634, %v1350
      %v1636 = vmul.f32 %v1635, %v1634
      %v1637 = vmul.f32 0.5, %v1636
      %v1638 = vsub.f32 1.5, %v1637
      %v1639 = vmul.f32 %v1634, %v1638
      %vm1640 = vweird.f32 %v1350
      %vm1641 = vweird.f32 %v1634
      %vm1642 = vmor %vm1640, %vm1641
      %v1643 = vsel %vm1642, %v1634, %v1639
      %v1644 = vrsqrt.pop %v1351
      %v1645 = vmul.f32 %v1644, %v1351
      %v1646 = vmul.f32 %v1645, %v1644
      %v1647 = vmul.f32 0.5, %v1646
      %v1648 = vsub.f32 1.5, %v1647
      %v1649 = vmul.f32 %v1644, %v1648
      %vm1650 = vweird.f32 %v1351
      %vm1651 = vweird.f32 %v1644
      %vm1652 = vmor %vm1650, %vm1651
      %v1653 = vsel %vm1652, %v1644, %v1649
      %v1654 = vrsqrt.pop %v1352
      %v1655 = vmul.f32 %v1654, %v1352
      %v1656 = vmul.f32 %v1655, %v1654
      %v1657 = vmul.f32 0.5, %v1656
      %v1658 = vsub.f32 1.5, %v1657
      %v1659 = vmul.f32 %v1654, %v1658
      %vm1660 = vweird.f32 %v1352
      %vm1661 = vweird.f32 %v1654
      %vm1662 = vmor %vm1660, %vm1661
      %v1663 = vsel %vm1662, %v1654, %v1659
      %v1664 = vrsqrt.pop %v1353
      %v1665 = vmul.f32 %v1664, %v1353
      %v1666 = vmul.f32 %v1665, %v1664
      %v1667 = vmul.f32 0.5, %v1666
      %v1668 = vsub.f32 1.5, %v1667
      %v1669 = vmul.f32 %v1664, %v1668
      %vm1670 = vweird.f32 %v1353
      %vm1671 = vweird.f32 %v1664
      %vm1672 = vmor %vm1670, %vm1671
      %v1673 = vsel %vm1672, %v1664, %v1669
      %v1674 = vmul.f32 %v1130, %v1363
      %v1675 = vmul.f32 %v1131, %v1373
      %v1676 = vmul.f32 %v1132, %v1383
      %v1677 = vmul.f32 %v1133, %v1393
      %v1678 = vmul.f32 %v1134, %v1403
      %v1679 = vmul.f32 %v1135, %v1413
      %v1680 = vmul.f32 %v1136, %v1423
      %v1681 = vmul.f32 %v1137, %v1433
      %v1682 = vmul.f32 %v1138, %v1443
      %v1683 = vmul.f32 %v1139, %v1453
      %v1684 = vmul.f32 %v1140, %v1463
      %v1685 = vmul.f32 %v1141, %v1473
      %v1686 = vmul.f32 %v1142, %v1483
      %v1687 = vmul.f32 %v1143, %v1493
      %v1688 = vmul.f32 %v1144, %v1503
      %v1689 = vmul.f32 %v1145, %v1513
      %v1690 = vmul.f32 %v1146, %v1523
      %v1691 = vmul.f32 %v1147, %v1533
      %v1692 = vmul.f32 %v1148, %v1543
      %v1693 = vmul.f32 %v1149, %v1553
      %v1694 = vmul.f32 %v1150, %v1563
      %v1695 = vmul.f32 %v1151, %v1573
      %v1696 = vmul.f32 %v1152, %v1583
      %v1697 = vmul.f32 %v1153, %v1593
      %v1698 = vmul.f32 %v1154, %v1603
      %v1699 = vmul.f32 %v1155, %v1613
      %v1700 = vmul.f32 %v1156, %v1623
      %v1701 = vmul.f32 %v1157, %v1633
      %v1702 = vmul.f32 %v1158, %v1643
      %v1703 = vmul.f32 %v1159, %v1653
      %v1704 = vmul.f32 %v1160, %v1663
      %v1705 = vmul.f32 %v1161, %v1673
      %v1706 = vld [vmem:[%s5] sm:$0x1]
      %v1708 = vperm.slane %v1706, 0
      %v1710 = vmul.f32 %v1674, %v1708
      %v1711 = vmul.f32 %v1675, %v1708
      %v1712 = vmul.f32 %v1676, %v1708
      %v1713 = vmul.f32 %v1677, %v1708
      %v1714 = vmul.f32 %v1678, %v1708
      %v1715 = vmul.f32 %v1679, %v1708
      %v1716 = vmul.f32 %v1680, %v1708
      %v1717 = vmul.f32 %v1681, %v1708
      %v1718 = vmul.f32 %v1682, %v1708
      %v1719 = vmul.f32 %v1683, %v1708
      %v1720 = vmul.f32 %v1684, %v1708
      %v1721 = vmul.f32 %v1685, %v1708
      %v1722 = vmul.f32 %v1686, %v1708
      %v1723 = vmul.f32 %v1687, %v1708
      %v1724 = vmul.f32 %v1688, %v1708
      %v1725 = vmul.f32 %v1689, %v1708
      %v1726 = vmul.f32 %v1690, %v1708
      %v1727 = vmul.f32 %v1691, %v1708
      %v1728 = vmul.f32 %v1692, %v1708
      %v1729 = vmul.f32 %v1693, %v1708
      %v1730 = vmul.f32 %v1694, %v1708
      %v1731 = vmul.f32 %v1695, %v1708
      %v1732 = vmul.f32 %v1696, %v1708
      %v1733 = vmul.f32 %v1697, %v1708
      %v1734 = vmul.f32 %v1698, %v1708
      %v1735 = vmul.f32 %v1699, %v1708
      %v1736 = vmul.f32 %v1700, %v1708
      %v1737 = vmul.f32 %v1701, %v1708
      %v1738 = vmul.f32 %v1702, %v1708
      %v1739 = vmul.f32 %v1703, %v1708
      %v1740 = vmul.f32 %v1704, %v1708
      %v1741 = vmul.f32 %v1705, %v1708
      %v1742 = vld [vmem:[%s6] sm:$0x1]
      %v1744 = vperm.slane %v1742, 0
      %v1746 = vadd.f32 %v1710, %v1744
      %v1747 = vadd.f32 %v1711, %v1744
      %v1748 = vadd.f32 %v1712, %v1744
      %v1749 = vadd.f32 %v1713, %v1744
      %v1750 = vadd.f32 %v1714, %v1744
      %v1751 = vadd.f32 %v1715, %v1744
      %v1752 = vadd.f32 %v1716, %v1744
      %v1753 = vadd.f32 %v1717, %v1744
      %v1754 = vadd.f32 %v1718, %v1744
      %v1755 = vadd.f32 %v1719, %v1744
      %v1756 = vadd.f32 %v1720, %v1744
      %v1757 = vadd.f32 %v1721, %v1744
      %v1758 = vadd.f32 %v1722, %v1744
      %v1759 = vadd.f32 %v1723, %v1744
      %v1760 = vadd.f32 %v1724, %v1744
      %v1761 = vadd.f32 %v1725, %v1744
      %v1762 = vadd.f32 %v1726, %v1744
      %v1763 = vadd.f32 %v1727, %v1744
      %v1764 = vadd.f32 %v1728, %v1744
      %v1765 = vadd.f32 %v1729, %v1744
      %v1766 = vadd.f32 %v1730, %v1744
      %v1767 = vadd.f32 %v1731, %v1744
      %v1768 = vadd.f32 %v1732, %v1744
      %v1769 = vadd.f32 %v1733, %v1744
      %v1770 = vadd.f32 %v1734, %v1744
      %v1771 = vadd.f32 %v1735, %v1744
      %v1772 = vadd.f32 %v1736, %v1744
      %v1773 = vadd.f32 %v1737, %v1744
      %v1774 = vadd.f32 %v1738, %v1744
      %v1775 = vadd.f32 %v1739, %v1744
      %v1776 = vadd.f32 %v1740, %v1744
      %v1777 = vadd.f32 %v1741, %v1744
      %v1778 = vpack.c.bf16 %v1747, %v1746
      %v1779 = vpack.c.bf16 %v1749, %v1748
      %v1780 = vpack.c.bf16 %v1751, %v1750
      %v1781 = vpack.c.bf16 %v1753, %v1752
      %v1782 = vpack.c.bf16 %v1755, %v1754
      %v1783 = vpack.c.bf16 %v1757, %v1756
      %v1784 = vpack.c.bf16 %v1759, %v1758
      %v1785 = vpack.c.bf16 %v1761, %v1760
      %v1786 = vpack.c.bf16 %v1763, %v1762
      %v1787 = vpack.c.bf16 %v1765, %v1764
      %v1788 = vpack.c.bf16 %v1767, %v1766
      %v1789 = vpack.c.bf16 %v1769, %v1768
      %v1790 = vpack.c.bf16 %v1771, %v1770
      %v1791 = vpack.c.bf16 %v1773, %v1772
      %v1792 = vpack.c.bf16 %v1775, %v1774
      %v1793 = vpack.c.bf16 %v1777, %v1776
      %v1795 = vperm.slane %v990, 0
      %v1799 = vunpack.c.l.b16 %v988
      %v1800 = vunpack.c.l.b16 %v989
      %v1801 = vpack.c.b16 %v1800, %v1799
      %v1804 = vsel %vm994, %v1778, 0
      %v1807 = vsel %vm994, %v1779, 0
      %v1810 = vsel %vm994, %v1780, 0
      %v1813 = vsel %vm994, %v1781, 0
      %v1816 = vsel %vm994, %v1782, 0
      %v1819 = vsel %vm994, %v1783, 0
      %v1822 = vsel %vm994, %v1784, 0
      %v1825 = vsel %vm994, %v1785, 0
      %v1828 = vsel %vm994, %v1786, 0
      %v1831 = vsel %vm994, %v1787, 0
      %v1834 = vsel %vm994, %v1788, 0
      %v1837 = vsel %vm994, %v1789, 0
      %v1840 = vsel %vm994, %v1790, 0
      %v1843 = vsel %vm994, %v1791, 0
      %v1846 = vsel %vm994, %v1792, 0
      %v1849 = vsel %vm994, %v1793, 0
      %1851 = vmatpush.bf16.msra.mxu0 0
      %1852 = vmatpush.bf16.msra.mxu0 0
      %1853 = vmatpush.bf16.msra.mxu0 0
      %1854 = vmatpush.bf16.msra.mxu0 0
      %1855 = vmatpush.bf16.msra.mxu0 0
      %1856 = vmatpush.bf16.msra.mxu0 0
      %1857 = vmatpush.bf16.msra.mxu0 0
      %1858 = vmatpush.bf16.msra.mxu0 %v1801
      %1859 = vmatmul.bf16.gmra.mxu0 %v1804
      %v1860 = vpop.f32.mrf.mxu0
      %v1861 = vadd.f32 %v1795, %v1860
      %v1862 = vpop.f32.mrf.mxu0
      %v1863 = vadd.f32 %v1795, %v1862
      %1864 = vmatmul.bf16.gmra.mxu0 %v1807
      %v1865 = vpop.f32.mrf.mxu0
      %v1866 = vadd.f32 %v1795, %v1865
      %v1867 = vpop.f32.mrf.mxu0
      %v1868 = vadd.f32 %v1795, %v1867
      %1869 = vmatmul.bf16.gmra.mxu0 %v1810
      %v1870 = vpop.f32.mrf.mxu0
      %v1871 = vadd.f32 %v1795, %v1870
      %v1872 = vpop.f32.mrf.mxu0
      %v1873 = vadd.f32 %v1795, %v1872
      %1874 = vmatmul.bf16.gmra.mxu0 %v1813
      %v1875 = vpop.f32.mrf.mxu0
      %v1876 = vadd.f32 %v1795, %v1875
      %v1877 = vpop.f32.mrf.mxu0
      %v1878 = vadd.f32 %v1795, %v1877
      %1879 = vmatmul.bf16.gmra.mxu0 %v1816
      %v1880 = vpop.f32.mrf.mxu0
      %v1881 = vadd.f32 %v1795, %v1880
      %v1882 = vpop.f32.mrf.mxu0
      %v1883 = vadd.f32 %v1795, %v1882
      %1884 = vmatmul.bf16.gmra.mxu0 %v1819
      %v1885 = vpop.f32.mrf.mxu0
      %v1886 = vadd.f32 %v1795, %v1885
      %v1887 = vpop.f32.mrf.mxu0
      %v1888 = vadd.f32 %v1795, %v1887
      %1889 = vmatmul.bf16.gmra.mxu0 %v1822
      %v1890 = vpop.f32.mrf.mxu0
      %v1891 = vadd.f32 %v1795, %v1890
      %v1892 = vpop.f32.mrf.mxu0
      %v1893 = vadd.f32 %v1795, %v1892
      %1894 = vmatmul.bf16.gmra.mxu0 %v1825
      %v1895 = vpop.f32.mrf.mxu0
      %v1896 = vadd.f32 %v1795, %v1895
      %v1897 = vpop.f32.mrf.mxu0
      %v1898 = vadd.f32 %v1795, %v1897
      %1899 = vmatmul.bf16.gmra.mxu0 %v1828
      %v1900 = vpop.f32.mrf.mxu0
      %v1901 = vadd.f32 %v1795, %v1900
      %v1902 = vpop.f32.mrf.mxu0
      %v1903 = vadd.f32 %v1795, %v1902
      %1904 = vmatmul.bf16.gmra.mxu0 %v1831
      %v1905 = vpop.f32.mrf.mxu0
      %v1906 = vadd.f32 %v1795, %v1905
      %v1907 = vpop.f32.mrf.mxu0
      %v1908 = vadd.f32 %v1795, %v1907
      %1909 = vmatmul.bf16.gmra.mxu0 %v1834
      %v1910 = vpop.f32.mrf.mxu0
      %v1911 = vadd.f32 %v1795, %v1910
      %v1912 = vpop.f32.mrf.mxu0
      %v1913 = vadd.f32 %v1795, %v1912
      %1914 = vmatmul.bf16.gmra.mxu0 %v1837
      %v1915 = vpop.f32.mrf.mxu0
      %v1916 = vadd.f32 %v1795, %v1915
      %v1917 = vpop.f32.mrf.mxu0
      %v1918 = vadd.f32 %v1795, %v1917
      %1919 = vmatmul.bf16.gmra.mxu0 %v1840
      %v1920 = vpop.f32.mrf.mxu0
      %v1921 = vadd.f32 %v1795, %v1920
      %v1922 = vpop.f32.mrf.mxu0
      %v1923 = vadd.f32 %v1795, %v1922
      %1924 = vmatmul.bf16.gmra.mxu0 %v1843
      %v1925 = vpop.f32.mrf.mxu0
      %v1926 = vadd.f32 %v1795, %v1925
      %v1927 = vpop.f32.mrf.mxu0
      %v1928 = vadd.f32 %v1795, %v1927
      %1929 = vmatmul.bf16.gmra.mxu0 %v1846
      %v1930 = vpop.f32.mrf.mxu0
      %v1931 = vadd.f32 %v1795, %v1930
      %v1932 = vpop.f32.mrf.mxu0
      %v1933 = vadd.f32 %v1795, %v1932
      %1934 = vmatmul.bf16.gmra.mxu0 %v1849
      %v1935 = vpop.f32.mrf.mxu0
      %v1936 = vadd.f32 %v1795, %v1935
      %v1937 = vpop.f32.mrf.mxu0
      %v1938 = vadd.f32 %v1795, %v1937
      %1939 = vdwg.mxu0
      %v1940 = vpack.c.bf16 %v1861, %v1861
      %v1941 = vpack.c.bf16 %v1863, %v1863
      %v1942 = vpack.c.bf16 %v1866, %v1866
      %v1943 = vpack.c.bf16 %v1868, %v1868
      %v1944 = vpack.c.bf16 %v1871, %v1871
      %v1945 = vpack.c.bf16 %v1873, %v1873
      %v1946 = vpack.c.bf16 %v1876, %v1876
      %v1947 = vpack.c.bf16 %v1878, %v1878
      %v1948 = vpack.c.bf16 %v1881, %v1881
      %v1949 = vpack.c.bf16 %v1883, %v1883
      %v1950 = vpack.c.bf16 %v1886, %v1886
      %v1951 = vpack.c.bf16 %v1888, %v1888
      %v1952 = vpack.c.bf16 %v1891, %v1891
      %v1953 = vpack.c.bf16 %v1893, %v1893
      %v1954 = vpack.c.bf16 %v1896, %v1896
      %v1955 = vpack.c.bf16 %v1898, %v1898
      %v1956 = vpack.c.bf16 %v1901, %v1901
      %v1957 = vpack.c.bf16 %v1903, %v1903
      %v1958 = vpack.c.bf16 %v1906, %v1906
      %v1959 = vpack.c.bf16 %v1908, %v1908
      %v1960 = vpack.c.bf16 %v1911, %v1911
      %v1961 = vpack.c.bf16 %v1913, %v1913
      %v1962 = vpack.c.bf16 %v1916, %v1916
      %v1963 = vpack.c.bf16 %v1918, %v1918
      %v1964 = vpack.c.bf16 %v1921, %v1921
      %v1965 = vpack.c.bf16 %v1923, %v1923
      %v1966 = vpack.c.bf16 %v1926, %v1926
      %v1967 = vpack.c.bf16 %v1928, %v1928
      %v1968 = vpack.c.bf16 %v1931, %v1931
      %v1969 = vpack.c.bf16 %v1933, %v1933
      %v1970 = vpack.c.bf16 %v1936, %v1936
      %v1971 = vpack.c.bf16 %v1938, %v1938
      %v1974 = vunpack.c.l.b16 %v1940
      %v1975 = vunpack.c.l.b16 %v1941
      %v1976 = vpack.c.b16 %v1975, %v1974
      %1977 = vrot.lane.b32.xlu0 %v1976, 112
      %v1978 = vpop.permute.xlu0 %1977
      %v1980 = vsel %vm810, %v1976, 0
      %v1983 = vsel %vm810, %v1978, 0
      %1985 = vmatpush.bf16.xpose.msra.mxu0 0
      %1986 = vmatpush.bf16.xpose.msra.mxu0 0
      %1987 = vmatpush.bf16.xpose.msra.mxu0 0
      %1988 = vmatpush.bf16.xpose.msra.mxu0 0
      %1989 = vmatpush.bf16.xpose.msra.mxu0 0
      %1990 = vmatpush.bf16.xpose.msra.mxu0 0
      %1991 = vmatpush.bf16.xpose.msra.mxu0 0
      %1992 = vmatpush.bf16.xpose.msra.mxu0 %v1983
      %1993 = vmatmul.bf16.gmra.mxu0 %v1980
      %v1994 = vpop.f32.mrf.mxu0
      %v1995 = vadd.f32 0.0, %v1994
      %v1996 = vpop.f32.mrf.mxu0
      %v1997 = vadd.f32 0.0, %v1996
      %1998 = vdwg.mxu0
      %v2001 = vunpack.c.l.b16 %v1942
      %v2002 = vunpack.c.l.b16 %v1943
      %v2003 = vpack.c.b16 %v2002, %v2001
      %2004 = vrot.lane.b32.xlu0 %v2003, 112
      %v2005 = vpop.permute.xlu0 %2004
      %v2007 = vsel %vm810, %v2003, 0
      %v2010 = vsel %vm810, %v2005, 0
      %2012 = vmatpush.bf16.xpose.msra.mxu0 0
      %2013 = vmatpush.bf16.xpose.msra.mxu0 0
      %2014 = vmatpush.bf16.xpose.msra.mxu0 0
      %2015 = vmatpush.bf16.xpose.msra.mxu0 0
      %2016 = vmatpush.bf16.xpose.msra.mxu0 0
      %2017 = vmatpush.bf16.xpose.msra.mxu0 0
      %2018 = vmatpush.bf16.xpose.msra.mxu0 0
      %2019 = vmatpush.bf16.xpose.msra.mxu0 %v2010
      %2020 = vmatmul.bf16.gmra.mxu0 %v2007
      %v2021 = vpop.f32.mrf.mxu0
      %v2022 = vadd.f32 0.0, %v2021
      %v2023 = vpop.f32.mrf.mxu0
      %v2024 = vadd.f32 0.0, %v2023
      %2025 = vdwg.mxu0
      %v2028 = vunpack.c.l.b16 %v1944
      %v2029 = vunpack.c.l.b16 %v1945
      %v2030 = vpack.c.b16 %v2029, %v2028
      %2031 = vrot.lane.b32.xlu0 %v2030, 112
      %v2032 = vpop.permute.xlu0 %2031
      %v2034 = vsel %vm810, %v2030, 0
      %v2037 = vsel %vm810, %v2032, 0
      %2039 = vmatpush.bf16.xpose.msra.mxu0 0
      %2040 = vmatpush.bf16.xpose.msra.mxu0 0
      %2041 = vmatpush.bf16.xpose.msra.mxu0 0
      %2042 = vmatpush.bf16.xpose.msra.mxu0 0
      %2043 = vmatpush.bf16.xpose.msra.mxu0 0
      %2044 = vmatpush.bf16.xpose.msra.mxu0 0
      %2045 = vmatpush.bf16.xpose.msra.mxu0 0
      %2046 = vmatpush.bf16.xpose.msra.mxu0 %v2037
      %2047 = vmatmul.bf16.gmra.mxu0 %v2034
      %v2048 = vpop.f32.mrf.mxu0
      %v2049 = vadd.f32 0.0, %v2048
      %v2050 = vpop.f32.mrf.mxu0
      %v2051 = vadd.f32 0.0, %v2050
      %2052 = vdwg.mxu0
      %v2055 = vunpack.c.l.b16 %v1946
      %v2056 = vunpack.c.l.b16 %v1947
      %v2057 = vpack.c.b16 %v2056, %v2055
      %2058 = vrot.lane.b32.xlu0 %v2057, 112
      %v2059 = vpop.permute.xlu0 %2058
      %v2061 = vsel %vm810, %v2057, 0
      %v2064 = vsel %vm810, %v2059, 0
      %2066 = vmatpush.bf16.xpose.msra.mxu0 0
      %2067 = vmatpush.bf16.xpose.msra.mxu0 0
      %2068 = vmatpush.bf16.xpose.msra.mxu0 0
      %2069 = vmatpush.bf16.xpose.msra.mxu0 0
      %2070 = vmatpush.bf16.xpose.msra.mxu0 0
      %2071 = vmatpush.bf16.xpose.msra.mxu0 0
      %2072 = vmatpush.bf16.xpose.msra.mxu0 0
      %2073 = vmatpush.bf16.xpose.msra.mxu0 %v2064
      %2074 = vmatmul.bf16.gmra.mxu0 %v2061
      %v2075 = vpop.f32.mrf.mxu0
      %v2076 = vadd.f32 0.0, %v2075
      %v2077 = vpop.f32.mrf.mxu0
      %v2078 = vadd.f32 0.0, %v2077
      %2079 = vdwg.mxu0
      %v2082 = vunpack.c.l.b16 %v1948
      %v2083 = vunpack.c.l.b16 %v1949
      %v2084 = vpack.c.b16 %v2083, %v2082
      %2085 = vrot.lane.b32.xlu0 %v2084, 112
      %v2086 = vpop.permute.xlu0 %2085
      %v2088 = vsel %vm810, %v2084, 0
      %v2091 = vsel %vm810, %v2086, 0
      %2093 = vmatpush.bf16.xpose.msra.mxu0 0
      %2094 = vmatpush.bf16.xpose.msra.mxu0 0
      %2095 = vmatpush.bf16.xpose.msra.mxu0 0
      %2096 = vmatpush.bf16.xpose.msra.mxu0 0
      %2097 = vmatpush.bf16.xpose.msra.mxu0 0
      %2098 = vmatpush.bf16.xpose.msra.mxu0 0
      %2099 = vmatpush.bf16.xpose.msra.mxu0 0
      %2100 = vmatpush.bf16.xpose.msra.mxu0 %v2091
      %2101 = vmatmul.bf16.gmra.mxu0 %v2088
      %v2102 = vpop.f32.mrf.mxu0
      %v2103 = vadd.f32 0.0, %v2102
      %v2104 = vpop.f32.mrf.mxu0
      %v2105 = vadd.f32 0.0, %v2104
      %2106 = vdwg.mxu0
      %v2109 = vunpack.c.l.b16 %v1950
      %v2110 = vunpack.c.l.b16 %v1951
      %v2111 = vpack.c.b16 %v2110, %v2109
      %2112 = vrot.lane.b32.xlu0 %v2111, 112
      %v2113 = vpop.permute.xlu0 %2112
      %v2115 = vsel %vm810, %v2111, 0
      %v2118 = vsel %vm810, %v2113, 0
      %2120 = vmatpush.bf16.xpose.msra.mxu0 0
      %2121 = vmatpush.bf16.xpose.msra.mxu0 0
      %2122 = vmatpush.bf16.xpose.msra.mxu0 0
      %2123 = vmatpush.bf16.xpose.msra.mxu0 0
      %2124 = vmatpush.bf16.xpose.msra.mxu0 0
      %2125 = vmatpush.bf16.xpose.msra.mxu0 0
      %2126 = vmatpush.bf16.xpose.msra.mxu0 0
      %2127 = vmatpush.bf16.xpose.msra.mxu0 %v2118
      %2128 = vmatmul.bf16.gmra.mxu0 %v2115
      %v2129 = vpop.f32.mrf.mxu0
      %v2130 = vadd.f32 0.0, %v2129
      %v2131 = vpop.f32.mrf.mxu0
      %v2132 = vadd.f32 0.0, %v2131
      %2133 = vdwg.mxu0
      %v2136 = vunpack.c.l.b16 %v1952
      %v2137 = vunpack.c.l.b16 %v1953
      %v2138 = vpack.c.b16 %v2137, %v2136
      %2139 = vrot.lane.b32.xlu0 %v2138, 112
      %v2140 = vpop.permute.xlu0 %2139
      %v2142 = vsel %vm810, %v2138, 0
      %v2145 = vsel %vm810, %v2140, 0
      %2147 = vmatpush.bf16.xpose.msra.mxu0 0
      %2148 = vmatpush.bf16.xpose.msra.mxu0 0
      %2149 = vmatpush.bf16.xpose.msra.mxu0 0
      %2150 = vmatpush.bf16.xpose.msra.mxu0 0
      %2151 = vmatpush.bf16.xpose.msra.mxu0 0
      %2152 = vmatpush.bf16.xpose.msra.mxu0 0
      %2153 = vmatpush.bf16.xpose.msra.mxu0 0
      %2154 = vmatpush.bf16.xpose.msra.mxu0 %v2145
      %2155 = vmatmul.bf16.gmra.mxu0 %v2142
      %v2156 = vpop.f32.mrf.mxu0
      %v2157 = vadd.f32 0.0, %v2156
      %v2158 = vpop.f32.mrf.mxu0
      %v2159 = vadd.f32 0.0, %v2158
      %2160 = vdwg.mxu0
      %v2163 = vunpack.c.l.b16 %v1954
      %v2164 = vunpack.c.l.b16 %v1955
      %v2165 = vpack.c.b16 %v2164, %v2163
      %2166 = vrot.lane.b32.xlu0 %v2165, 112
      %v2167 = vpop.permute.xlu0 %2166
      %v2169 = vsel %vm810, %v2165, 0
      %v2172 = vsel %vm810, %v2167, 0
      %2174 = vmatpush.bf16.xpose.msra.mxu0 0
      %2175 = vmatpush.bf16.xpose.msra.mxu0 0
      %2176 = vmatpush.bf16.xpose.msra.mxu0 0
      %2177 = vmatpush.bf16.xpose.msra.mxu0 0
      %2178 = vmatpush.bf16.xpose.msra.mxu0 0
      %2179 = vmatpush.bf16.xpose.msra.mxu0 0
      %2180 = vmatpush.bf16.xpose.msra.mxu0 0
      %2181 = vmatpush.bf16.xpose.msra.mxu0 %v2172
      %2182 = vmatmul.bf16.gmra.mxu0 %v2169
      %v2183 = vpop.f32.mrf.mxu0
      %v2184 = vadd.f32 0.0, %v2183
      %v2185 = vpop.f32.mrf.mxu0
      %v2186 = vadd.f32 0.0, %v2185
      %2187 = vdwg.mxu0
      %v2190 = vunpack.c.l.b16 %v1956
      %v2191 = vunpack.c.l.b16 %v1957
      %v2192 = vpack.c.b16 %v2191, %v2190
      %2193 = vrot.lane.b32.xlu0 %v2192, 112
      %v2194 = vpop.permute.xlu0 %2193
      %v2196 = vsel %vm810, %v2192, 0
      %v2199 = vsel %vm810, %v2194, 0
      %2201 = vmatpush.bf16.xpose.msra.mxu0 0
      %2202 = vmatpush.bf16.xpose.msra.mxu0 0
      %2203 = vmatpush.bf16.xpose.msra.mxu0 0
      %2204 = vmatpush.bf16.xpose.msra.mxu0 0
      %2205 = vmatpush.bf16.xpose.msra.mxu0 0
      %2206 = vmatpush.bf16.xpose.msra.mxu0 0
      %2207 = vmatpush.bf16.xpose.msra.mxu0 0
      %2208 = vmatpush.bf16.xpose.msra.mxu0 %v2199
      %2209 = vmatmul.bf16.gmra.mxu0 %v2196
      %v2210 = vpop.f32.mrf.mxu0
      %v2211 = vadd.f32 0.0, %v2210
      %v2212 = vpop.f32.mrf.mxu0
      %v2213 = vadd.f32 0.0, %v2212
      %2214 = vdwg.mxu0
      %v2217 = vunpack.c.l.b16 %v1958
      %v2218 = vunpack.c.l.b16 %v1959
      %v2219 = vpack.c.b16 %v2218, %v2217
      %2220 = vrot.lane.b32.xlu0 %v2219, 112
      %v2221 = vpop.permute.xlu0 %2220
      %v2223 = vsel %vm810, %v2219, 0
      %v2226 = vsel %vm810, %v2221, 0
      %2228 = vmatpush.bf16.xpose.msra.mxu0 0
      %2229 = vmatpush.bf16.xpose.msra.mxu0 0
      %2230 = vmatpush.bf16.xpose.msra.mxu0 0
      %2231 = vmatpush.bf16.xpose.msra.mxu0 0
      %2232 = vmatpush.bf16.xpose.msra.mxu0 0
      %2233 = vmatpush.bf16.xpose.msra.mxu0 0
      %2234 = vmatpush.bf16.xpose.msra.mxu0 0
      %2235 = vmatpush.bf16.xpose.msra.mxu0 %v2226
      %2236 = vmatmul.bf16.gmra.mxu0 %v2223
      %v2237 = vpop.f32.mrf.mxu0
      %v2238 = vadd.f32 0.0, %v2237
      %v2239 = vpop.f32.mrf.mxu0
      %v2240 = vadd.f32 0.0, %v2239
      %2241 = vdwg.mxu0
      %v2244 = vunpack.c.l.b16 %v1960
      %v2245 = vunpack.c.l.b16 %v1961
      %v2246 = vpack.c.b16 %v2245, %v2244
      %2247 = vrot.lane.b32.xlu0 %v2246, 112
      %v2248 = vpop.permute.xlu0 %2247
      %v2250 = vsel %vm810, %v2246, 0
      %v2253 = vsel %vm810, %v2248, 0
      %2255 = vmatpush.bf16.xpose.msra.mxu0 0
      %2256 = vmatpush.bf16.xpose.msra.mxu0 0
      %2257 = vmatpush.bf16.xpose.msra.mxu0 0
      %2258 = vmatpush.bf16.xpose.msra.mxu0 0
      %2259 = vmatpush.bf16.xpose.msra.mxu0 0
      %2260 = vmatpush.bf16.xpose.msra.mxu0 0
      %2261 = vmatpush.bf16.xpose.msra.mxu0 0
      %2262 = vmatpush.bf16.xpose.msra.mxu0 %v2253
      %2263 = vmatmul.bf16.gmra.mxu0 %v2250
      %v2264 = vpop.f32.mrf.mxu0
      %v2265 = vadd.f32 0.0, %v2264
      %v2266 = vpop.f32.mrf.mxu0
      %v2267 = vadd.f32 0.0, %v2266
      %2268 = vdwg.mxu0
      %v2271 = vunpack.c.l.b16 %v1962
      %v2272 = vunpack.c.l.b16 %v1963
      %v2273 = vpack.c.b16 %v2272, %v2271
      %2274 = vrot.lane.b32.xlu0 %v2273, 112
      %v2275 = vpop.permute.xlu0 %2274
      %v2277 = vsel %vm810, %v2273, 0
      %v2280 = vsel %vm810, %v2275, 0
      %2282 = vmatpush.bf16.xpose.msra.mxu0 0
      %2283 = vmatpush.bf16.xpose.msra.mxu0 0
      %2284 = vmatpush.bf16.xpose.msra.mxu0 0
      %2285 = vmatpush.bf16.xpose.msra.mxu0 0
      %2286 = vmatpush.bf16.xpose.msra.mxu0 0
      %2287 = vmatpush.bf16.xpose.msra.mxu0 0
      %2288 = vmatpush.bf16.xpose.msra.mxu0 0
      %2289 = vmatpush.bf16.xpose.msra.mxu0 %v2280
      %2290 = vmatmul.bf16.gmra.mxu0 %v2277
      %v2291 = vpop.f32.mrf.mxu0
      %v2292 = vadd.f32 0.0, %v2291
      %v2293 = vpop.f32.mrf.mxu0
      %v2294 = vadd.f32 0.0, %v2293
      %2295 = vdwg.mxu0
      %v2298 = vunpack.c.l.b16 %v1964
      %v2299 = vunpack.c.l.b16 %v1965
      %v2300 = vpack.c.b16 %v2299, %v2298
      %2301 = vrot.lane.b32.xlu0 %v2300, 112
      %v2302 = vpop.permute.xlu0 %2301
      %v2304 = vsel %vm810, %v2300, 0
      %v2307 = vsel %vm810, %v2302, 0
      %2309 = vmatpush.bf16.xpose.msra.mxu0 0
      %2310 = vmatpush.bf16.xpose.msra.mxu0 0
      %2311 = vmatpush.bf16.xpose.msra.mxu0 0
      %2312 = vmatpush.bf16.xpose.msra.mxu0 0
      %2313 = vmatpush.bf16.xpose.msra.mxu0 0
      %2314 = vmatpush.bf16.xpose.msra.mxu0 0
      %2315 = vmatpush.bf16.xpose.msra.mxu0 0
      %2316 = vmatpush.bf16.xpose.msra.mxu0 %v2307
      %2317 = vmatmul.bf16.gmra.mxu0 %v2304
      %v2318 = vpop.f32.mrf.mxu0
      %v2319 = vadd.f32 0.0, %v2318
      %v2320 = vpop.f32.mrf.mxu0
      %v2321 = vadd.f32 0.0, %v2320
      %2322 = vdwg.mxu0
      %v2325 = vunpack.c.l.b16 %v1966
      %v2326 = vunpack.c.l.b16 %v1967
      %v2327 = vpack.c.b16 %v2326, %v2325
      %2328 = vrot.lane.b32.xlu0 %v2327, 112
      %v2329 = vpop.permute.xlu0 %2328
      %v2331 = vsel %vm810, %v2327, 0
      %v2334 = vsel %vm810, %v2329, 0
      %2336 = vmatpush.bf16.xpose.msra.mxu0 0
      %2337 = vmatpush.bf16.xpose.msra.mxu0 0
      %2338 = vmatpush.bf16.xpose.msra.mxu0 0
      %2339 = vmatpush.bf16.xpose.msra.mxu0 0
      %2340 = vmatpush.bf16.xpose.msra.mxu0 0
      %2341 = vmatpush.bf16.xpose.msra.mxu0 0
      %2342 = vmatpush.bf16.xpose.msra.mxu0 0
      %2343 = vmatpush.bf16.xpose.msra.mxu0 %v2334
      %2344 = vmatmul.bf16.gmra.mxu0 %v2331
      %v2345 = vpop.f32.mrf.mxu0
      %v2346 = vadd.f32 0.0, %v2345
      %v2347 = vpop.f32.mrf.mxu0
      %v2348 = vadd.f32 0.0, %v2347
      %2349 = vdwg.mxu0
      %v2352 = vunpack.c.l.b16 %v1968
      %v2353 = vunpack.c.l.b16 %v1969
      %v2354 = vpack.c.b16 %v2353, %v2352
      %2355 = vrot.lane.b32.xlu0 %v2354, 112
      %v2356 = vpop.permute.xlu0 %2355
      %v2358 = vsel %vm810, %v2354, 0
      %v2361 = vsel %vm810, %v2356, 0
      %2363 = vmatpush.bf16.xpose.msra.mxu0 0
      %2364 = vmatpush.bf16.xpose.msra.mxu0 0
      %2365 = vmatpush.bf16.xpose.msra.mxu0 0
      %2366 = vmatpush.bf16.xpose.msra.mxu0 0
      %2367 = vmatpush.bf16.xpose.msra.mxu0 0
      %2368 = vmatpush.bf16.xpose.msra.mxu0 0
      %2369 = vmatpush.bf16.xpose.msra.mxu0 0
      %2370 = vmatpush.bf16.xpose.msra.mxu0 %v2361
      %2371 = vmatmul.bf16.gmra.mxu0 %v2358
      %v2372 = vpop.f32.mrf.mxu0
      %v2373 = vadd.f32 0.0, %v2372
      %v2374 = vpop.f32.mrf.mxu0
      %v2375 = vadd.f32 0.0, %v2374
      %2376 = vdwg.mxu0
      %v2379 = vunpack.c.l.b16 %v1970
      %v2380 = vunpack.c.l.b16 %v1971
      %v2381 = vpack.c.b16 %v2380, %v2379
      %2382 = vrot.lane.b32.xlu0 %v2381, 112
      %v2383 = vpop.permute.xlu0 %2382
      %v2385 = vsel %vm810, %v2381, 0
      %v2388 = vsel %vm810, %v2383, 0
      %2390 = vmatpush.bf16.xpose.msra.mxu0 0
      %2391 = vmatpush.bf16.xpose.msra.mxu0 0
      %2392 = vmatpush.bf16.xpose.msra.mxu0 0
      %2393 = vmatpush.bf16.xpose.msra.mxu0 0
      %2394 = vmatpush.bf16.xpose.msra.mxu0 0
      %2395 = vmatpush.bf16.xpose.msra.mxu0 0
      %2396 = vmatpush.bf16.xpose.msra.mxu0 0
      %2397 = vmatpush.bf16.xpose.msra.mxu0 %v2388
      %2398 = vmatmul.bf16.gmra.mxu0 %v2385
      %v2399 = vpop.f32.mrf.mxu0
      %v2400 = vadd.f32 0.0, %v2399
      %v2401 = vpop.f32.mrf.mxu0
      %v2402 = vadd.f32 0.0, %v2401
      %2403 = vdwg.mxu0
      %v2404 = vmul.f32 %v1995, 0.35355338
      %v2405 = vmul.f32 %v1997, 0.35355338
      %v2406 = vmul.f32 %v2022, 0.35355338
      %v2407 = vmul.f32 %v2024, 0.35355338
      %v2408 = vmul.f32 %v2049, 0.35355338
      %v2409 = vmul.f32 %v2051, 0.35355338
      %v2410 = vmul.f32 %v2076, 0.35355338
      %v2411 = vmul.f32 %v2078, 0.35355338
      %v2412 = vmul.f32 %v2103, 0.35355338
      %v2413 = vmul.f32 %v2105, 0.35355338
      %v2414 = vmul.f32 %v2130, 0.35355338
      %v2415 = vmul.f32 %v2132, 0.35355338
      %v2416 = vmul.f32 %v2157, 0.35355338
      %v2417 = vmul.f32 %v2159, 0.35355338
      %v2418 = vmul.f32 %v2184, 0.35355338
      %v2419 = vmul.f32 %v2186, 0.35355338
      %v2420 = vmul.f32 %v2211, 0.35355338
      %v2421 = vmul.f32 %v2213, 0.35355338
      %v2422 = vmul.f32 %v2238, 0.35355338
      %v2423 = vmul.f32 %v2240, 0.35355338
      %v2424 = vmul.f32 %v2265, 0.35355338
      %v2425 = vmul.f32 %v2267, 0.35355338
      %v2426 = vmul.f32 %v2292, 0.35355338
      %v2427 = vmul.f32 %v2294, 0.35355338
      %v2428 = vmul.f32 %v2319, 0.35355338
      %v2429 = vmul.f32 %v2321, 0.35355338
      %v2430 = vmul.f32 %v2346, 0.35355338
      %v2431 = vmul.f32 %v2348, 0.35355338
      %v2432 = vmul.f32 %v2373, 0.35355338
      %v2433 = vmul.f32 %v2375, 0.35355338
      %v2434 = vmul.f32 %v2400, 0.35355338
      %v2435 = vmul.f32 %v2402, 0.35355338
      %v2436 = vsel %vm994, %v2404, -inf
      %2437 = vmax.xlane.f32.xlu0 %v2436
      %v2438 = vpop.xlane.xlu0 %2437
      %v2439 = vsel %vm994, %v2405, -inf
      %2440 = vmax.xlane.f32.xlu0 %v2439
      %v2441 = vpop.xlane.xlu0 %2440
      %v2442 = vsel %vm994, %v2406, -inf
      %2443 = vmax.xlane.f32.xlu0 %v2442
      %v2444 = vpop.xlane.xlu0 %2443
      %v2445 = vsel %vm994, %v2407, -inf
      %2446 = vmax.xlane.f32.xlu0 %v2445
      %v2447 = vpop.xlane.xlu0 %2446
      %v2448 = vsel %vm994, %v2408, -inf
      %2449 = vmax.xlane.f32.xlu0 %v2448
      %v2450 = vpop.xlane.xlu0 %2449
      %v2451 = vsel %vm994, %v2409, -inf
      %2452 = vmax.xlane.f32.xlu0 %v2451
      %v2453 = vpop.xlane.xlu0 %2452
      %v2454 = vsel %vm994, %v2410, -inf
      %2455 = vmax.xlane.f32.xlu0 %v2454
      %v2456 = vpop.xlane.xlu0 %2455
      %v2457 = vsel %vm994, %v2411, -inf
      %2458 = vmax.xlane.f32.xlu0 %v2457
      %v2459 = vpop.xlane.xlu0 %2458
      %v2460 = vsel %vm994, %v2412, -inf
      %2461 = vmax.xlane.f32.xlu0 %v2460
      %v2462 = vpop.xlane.xlu0 %2461
      %v2463 = vsel %vm994, %v2413, -inf
      %2464 = vmax.xlane.f32.xlu0 %v2463
      %v2465 = vpop.xlane.xlu0 %2464
      %v2466 = vsel %vm994, %v2414, -inf
      %2467 = vmax.xlane.f32.xlu0 %v2466
      %v2468 = vpop.xlane.xlu0 %2467
      %v2469 = vsel %vm994, %v2415, -inf
      %2470 = vmax.xlane.f32.xlu0 %v2469
      %v2471 = vpop.xlane.xlu0 %2470
      %v2472 = vsel %vm994, %v2416, -inf
      %2473 = vmax.xlane.f32.xlu0 %v2472
      %v2474 = vpop.xlane.xlu0 %2473
      %v2475 = vsel %vm994, %v2417, -inf
      %2476 = vmax.xlane.f32.xlu0 %v2475
      %v2477 = vpop.xlane.xlu0 %2476
      %v2478 = vsel %vm994, %v2418, -inf
      %2479 = vmax.xlane.f32.xlu0 %v2478
      %v2480 = vpop.xlane.xlu0 %2479
      %v2481 = vsel %vm994, %v2419, -inf
      %2482 = vmax.xlane.f32.xlu0 %v2481
      %v2483 = vpop.xlane.xlu0 %2482
      %v2484 = vsel %vm994, %v2420, -inf
      %2485 = vmax.xlane.f32.xlu0 %v2484
      %v2486 = vpop.xlane.xlu0 %2485
      %v2487 = vsel %vm994, %v2421, -inf
      %2488 = vmax.xlane.f32.xlu0 %v2487
      %v2489 = vpop.xlane.xlu0 %2488
      %v2490 = vsel %vm994, %v2422, -inf
      %2491 = vmax.xlane.f32.xlu0 %v2490
      %v2492 = vpop.xlane.xlu0 %2491
      %v2493 = vsel %vm994, %v2423, -inf
      %2494 = vmax.xlane.f32.xlu0 %v2493
      %v2495 = vpop.xlane.xlu0 %2494
      %v2496 = vsel %vm994, %v2424, -inf
      %2497 = vmax.xlane.f32.xlu0 %v2496
      %v2498 = vpop.xlane.xlu0 %2497
      %v2499 = vsel %vm994, %v2425, -inf
      %2500 = vmax.xlane.f32.xlu0 %v2499
      %v2501 = vpop.xlane.xlu0 %2500
      %v2502 = vsel %vm994, %v2426, -inf
      %2503 = vmax.xlane.f32.xlu0 %v2502
      %v2504 = vpop.xlane.xlu0 %2503
      %v2505 = vsel %vm994, %v2427, -inf
      %2506 = vmax.xlane.f32.xlu0 %v2505
      %v2507 = vpop.xlane.xlu0 %2506
      %v2508 = vsel %vm994, %v2428, -inf
      %2509 = vmax.xlane.f32.xlu0 %v2508
      %v2510 = vpop.xlane.xlu0 %2509
      %v2511 = vsel %vm994, %v2429, -inf
      %2512 = vmax.xlane.f32.xlu0 %v2511
      %v2513 = vpop.xlane.xlu0 %2512
      %v2514 = vsel %vm994, %v2430, -inf
      %2515 = vmax.xlane.f32.xlu0 %v2514
      %v2516 = vpop.xlane.xlu0 %2515
      %v2517 = vsel %vm994, %v2431, -inf
      %2518 = vmax.xlane.f32.xlu0 %v2517
      %v2519 = vpop.xlane.xlu0 %2518
      %v2520 = vsel %vm994, %v2432, -inf
      %2521 = vmax.xlane.f32.xlu0 %v2520
      %v2522 = vpop.xlane.xlu0 %2521
      %v2523 = vsel %vm994, %v2433, -inf
      %2524 = vmax.xlane.f32.xlu0 %v2523
      %v2525 = vpop.xlane.xlu0 %2524
      %v2526 = vsel %vm994, %v2434, -inf
      %2527 = vmax.xlane.f32.xlu0 %v2526
      %v2528 = vpop.xlane.xlu0 %2527
      %v2529 = vsel %vm994, %v2435, -inf
      %2530 = vmax.xlane.f32.xlu0 %v2529
      %v2531 = vpop.xlane.xlu0 %2530
      %v2532 = vsub.f32 %v2404, %v2438
      %v2533 = vsub.f32 %v2405, %v2441
      %v2534 = vsub.f32 %v2406, %v2444
      %v2535 = vsub.f32 %v2407, %v2447
      %v2536 = vsub.f32 %v2408, %v2450
      %v2537 = vsub.f32 %v2409, %v2453
      %v2538 = vsub.f32 %v2410, %v2456
      %v2539 = vsub.f32 %v2411, %v2459
      %v2540 = vsub.f32 %v2412, %v2462
      %v2541 = vsub.f32 %v2413, %v2465
      %v2542 = vsub.f32 %v2414, %v2468
      %v2543 = vsub.f32 %v2415, %v2471
      %v2544 = vsub.f32 %v2416, %v2474
      %v2545 = vsub.f32 %v2417, %v2477
      %v2546 = vsub.f32 %v2418, %v2480
      %v2547 = vsub.f32 %v2419, %v2483
      %v2548 = vsub.f32 %v2420, %v2486
      %v2549 = vsub.f32 %v2421, %v2489
      %v2550 = vsub.f32 %v2422, %v2492
      %v2551 = vsub.f32 %v2423, %v2495
      %v2552 = vsub.f32 %v2424, %v2498
      %v2553 = vsub.f32 %v2425, %v2501
      %v2554 = vsub.f32 %v2426, %v2504
      %v2555 = vsub.f32 %v2427, %v2507
      %v2556 = vsub.f32 %v2428, %v2510
      %v2557 = vsub.f32 %v2429, %v2513
      %v2558 = vsub.f32 %v2430, %v2516
      %v2559 = vsub.f32 %v2431, %v2519
      %v2560 = vsub.f32 %v2432, %v2522
      %v2561 = vsub.f32 %v2433, %v2525
      %v2562 = vsub.f32 %v2434, %v2528
      %v2563 = vsub.f32 %v2435, %v2531
      %v2564 = vmul.f32 %v2532, 1.442695
      %v2565 = vpow.pop %v2564
      %v2566 = vmul.f32 %v2533, 1.442695
      %v2567 = vpow.pop %v2566
      %v2568 = vmul.f32 %v2534, 1.442695
      %v2569 = vpow.pop %v2568
      %v2570 = vmul.f32 %v2535, 1.442695
      %v2571 = vpow.pop %v2570
      %v2572 = vmul.f32 %v2536, 1.442695
      %v2573 = vpow.pop %v2572
      %v2574 = vmul.f32 %v2537, 1.442695
      %v2575 = vpow.pop %v2574
      %v2576 = vmul.f32 %v2538, 1.442695
      %v2577 = vpow.pop %v2576
      %v2578 = vmul.f32 %v2539, 1.442695
      %v2579 = vpow.pop %v2578
      %v2580 = vmul.f32 %v2540, 1.442695
      %v2581 = vpow.pop %v2580
      %v2582 = vmul.f32 %v2541, 1.442695
      %v2583 = vpow.pop %v2582
      %v2584 = vmul.f32 %v2542, 1.442695
      %v2585 = vpow.pop %v2584
      %v2586 = vmul.f32 %v2543, 1.442695
      %v2587 = vpow.pop %v2586
      %v2588 = vmul.f32 %v2544, 1.442695
      %v2589 = vpow.pop %v2588
      %v2590 = vmul.f32 %v2545, 1.442695
      %v2591 = vpow.pop %v2590
      %v2592 = vmul.f32 %v2546, 1.442695
      %v2593 = vpow.pop %v2592
      %v2594 = vmul.f32 %v2547, 1.442695
      %v2595 = vpow.pop %v2594
      %v2596 = vmul.f32 %v2548, 1.442695
      %v2597 = vpow.pop %v2596
      %v2598 = vmul.f32 %v2549, 1.442695
      %v2599 = vpow.pop %v2598
      %v2600 = vmul.f32 %v2550, 1.442695
      %v2601 = vpow.pop %v2600
      %v2602 = vmul.f32 %v2551, 1.442695
      %v2603 = vpow.pop %v2602
      %v2604 = vmul.f32 %v2552, 1.442695
      %v2605 = vpow.pop %v2604
      %v2606 = vmul.f32 %v2553, 1.442695
      %v2607 = vpow.pop %v2606
      %v2608 = vmul.f32 %v2554, 1.442695
      %v2609 = vpow.pop %v2608
      %v2610 = vmul.f32 %v2555, 1.442695
      %v2611 = vpow.pop %v2610
      %v2612 = vmul.f32 %v2556, 1.442695
      %v2613 = vpow.pop %v2612
      %v2614 = vmul.f32 %v2557, 1.442695
      %v2615 = vpow.pop %v2614
      %v2616 = vmul.f32 %v2558, 1.442695
      %v2617 = vpow.pop %v2616
      %v2618 = vmul.f32 %v2559, 1.442695
      %v2619 = vpow.pop %v2618
      %v2620 = vmul.f32 %v2560, 1.442695
      %v2621 = vpow.pop %v2620
      %v2622 = vmul.f32 %v2561, 1.442695
      %v2623 = vpow.pop %v2622
      %v2624 = vmul.f32 %v2562, 1.442695
      %v2625 = vpow.pop %v2624
      %v2626 = vmul.f32 %v2563, 1.442695
      %v2627 = vpow.pop %v2626
      %v2628 = vsel %vm994, %v2565, 0.0
      %2629 = vadd.xlane.f32.xlu0 %v2628
      %v2630 = vpop.xlane.xlu0 %2629
      %v2631 = vsel %vm994, %v2567, 0.0
      %2632 = vadd.xlane.f32.xlu0 %v2631
      %v2633 = vpop.xlane.xlu0 %2632
      %v2634 = vsel %vm994, %v2569, 0.0
      %2635 = vadd.xlane.f32.xlu0 %v2634
      %v2636 = vpop.xlane.xlu0 %2635
      %v2637 = vsel %vm994, %v2571, 0.0
      %2638 = vadd.xlane.f32.xlu0 %v2637
      %v2639 = vpop.xlane.xlu0 %2638
      %v2640 = vsel %vm994, %v2573, 0.0
      %2641 = vadd.xlane.f32.xlu0 %v2640
      %v2642 = vpop.xlane.xlu0 %2641
      %v2643 = vsel %vm994, %v2575, 0.0
      %2644 = vadd.xlane.f32.xlu0 %v2643
      %v2645 = vpop.xlane.xlu0 %2644
      %v2646 = vsel %vm994, %v2577, 0.0
      %2647 = vadd.xlane.f32.xlu0 %v2646
      %v2648 = vpop.xlane.xlu0 %2647
      %v2649 = vsel %vm994, %v2579, 0.0
      %2650 = vadd.xlane.f32.xlu0 %v2649
      %v2651 = vpop.xlane.xlu0 %2650
      %v2652 = vsel %vm994, %v2581, 0.0
      %2653 = vadd.xlane.f32.xlu0 %v2652
      %v2654 = vpop.xlane.xlu0 %2653
      %v2655 = vsel %vm994, %v2583, 0.0
      %2656 = vadd.xlane.f32.xlu0 %v2655
      %v2657 = vpop.xlane.xlu0 %2656
      %v2658 = vsel %vm994, %v2585, 0.0
      %2659 = vadd.xlane.f32.xlu0 %v2658
      %v2660 = vpop.xlane.xlu0 %2659
      %v2661 = vsel %vm994, %v2587, 0.0
      %2662 = vadd.xlane.f32.xlu0 %v2661
      %v2663 = vpop.xlane.xlu0 %2662
      %v2664 = vsel %vm994, %v2589, 0.0
      %2665 = vadd.xlane.f32.xlu0 %v2664
      %v2666 = vpop.xlane.xlu0 %2665
      %v2667 = vsel %vm994, %v2591, 0.0
      %2668 = vadd.xlane.f32.xlu0 %v2667
      %v2669 = vpop.xlane.xlu0 %2668
      %v2670 = vsel %vm994, %v2593, 0.0
      %2671 = vadd.xlane.f32.xlu0 %v2670
      %v2672 = vpop.xlane.xlu0 %2671
      %v2673 = vsel %vm994, %v2595, 0.0
      %2674 = vadd.xlane.f32.xlu0 %v2673
      %v2675 = vpop.xlane.xlu0 %2674
      %v2676 = vsel %vm994, %v2597, 0.0
      %2677 = vadd.xlane.f32.xlu0 %v2676
      %v2678 = vpop.xlane.xlu0 %2677
      %v2679 = vsel %vm994, %v2599, 0.0
      %2680 = vadd.xlane.f32.xlu0 %v2679
      %v2681 = vpop.xlane.xlu0 %2680
      %v2682 = vsel %vm994, %v2601, 0.0
      %2683 = vadd.xlane.f32.xlu0 %v2682
      %v2684 = vpop.xlane.xlu0 %2683
      %v2685 = vsel %vm994, %v2603, 0.0
      %2686 = vadd.xlane.f32.xlu0 %v2685
      %v2687 = vpop.xlane.xlu0 %2686
      %v2688 = vsel %vm994, %v2605, 0.0
      %2689 = vadd.xlane.f32.xlu0 %v2688
      %v2690 = vpop.xlane.xlu0 %2689
      %v2691 = vsel %vm994, %v2607, 0.0
      %2692 = vadd.xlane.f32.xlu0 %v2691
      %v2693 = vpop.xlane.xlu0 %2692
      %v2694 = vsel %vm994, %v2609, 0.0
      %2695 = vadd.xlane.f32.xlu0 %v2694
      %v2696 = vpop.xlane.xlu0 %2695
      %v2697 = vsel %vm994, %v2611, 0.0
      %2698 = vadd.xlane.f32.xlu0 %v2697
      %v2699 = vpop.xlane.xlu0 %2698
      %v2700 = vsel %vm994, %v2613, 0.0
      %2701 = vadd.xlane.f32.xlu0 %v2700
      %v2702 = vpop.xlane.xlu0 %2701
      %v2703 = vsel %vm994, %v2615, 0.0
      %2704 = vadd.xlane.f32.xlu0 %v2703
      %v2705 = vpop.xlane.xlu0 %2704
      %v2706 = vsel %vm994, %v2617, 0.0
      %2707 = vadd.xlane.f32.xlu0 %v2706
      %v2708 = vpop.xlane.xlu0 %2707
      %v2709 = vsel %vm994, %v2619, 0.0
      %2710 = vadd.xlane.f32.xlu0 %v2709
      %v2711 = vpop.xlane.xlu0 %2710
      %v2712 = vsel %vm994, %v2621, 0.0
      %2713 = vadd.xlane.f32.xlu0 %v2712
      %v2714 = vpop.xlane.xlu0 %2713
      %v2715 = vsel %vm994, %v2623, 0.0
      %2716 = vadd.xlane.f32.xlu0 %v2715
      %v2717 = vpop.xlane.xlu0 %2716
      %v2718 = vsel %vm994, %v2625, 0.0
      %2719 = vadd.xlane.f32.xlu0 %v2718
      %v2720 = vpop.xlane.xlu0 %2719
      %v2721 = vsel %vm994, %v2627, 0.0
      %2722 = vadd.xlane.f32.xlu0 %v2721
      %v2723 = vpop.xlane.xlu0 %2722
      %v2724 = vrcp.pop %v2630
      %v2725 = vrcp.pop %v2633
      %v2726 = vrcp.pop %v2636
      %v2727 = vrcp.pop %v2639
      %v2728 = vrcp.pop %v2642
      %v2729 = vrcp.pop %v2645
      %v2730 = vrcp.pop %v2648
      %v2731 = vrcp.pop %v2651
      %v2732 = vrcp.pop %v2654
      %v2733 = vrcp.pop %v2657
      %v2734 = vrcp.pop %v2660
      %v2735 = vrcp.pop %v2663
      %v2736 = vrcp.pop %v2666
      %v2737 = vrcp.pop %v2669
      %v2738 = vrcp.pop %v2672
      %v2739 = vrcp.pop %v2675
      %v2740 = vrcp.pop %v2678
      %v2741 = vrcp.pop %v2681
      %v2742 = vrcp.pop %v2684
      %v2743 = vrcp.pop %v2687
      %v2744 = vrcp.pop %v2690
      %v2745 = vrcp.pop %v2693
      %v2746 = vrcp.pop %v2696
      %v2747 = vrcp.pop %v2699
      %v2748 = vrcp.pop %v2702
      %v2749 = vrcp.pop %v2705
      %v2750 = vrcp.pop %v2708
      %v2751 = vrcp.pop %v2711
      %v2752 = vrcp.pop %v2714
      %v2753 = vrcp.pop %v2717
      %v2754 = vrcp.pop %v2720
      %v2755 = vrcp.pop %v2723
      %v2756 = vpack.c.bf16 %v2565, %v2565
      %v2757 = vpack.c.bf16 %v2567, %v2567
      %v2758 = vpack.c.bf16 %v2569, %v2569
      %v2759 = vpack.c.bf16 %v2571, %v2571
      %v2760 = vpack.c.bf16 %v2573, %v2573
      %v2761 = vpack.c.bf16 %v2575, %v2575
      %v2762 = vpack.c.bf16 %v2577, %v2577
      %v2763 = vpack.c.bf16 %v2579, %v2579
      %v2764 = vpack.c.bf16 %v2581, %v2581
      %v2765 = vpack.c.bf16 %v2583, %v2583
      %v2766 = vpack.c.bf16 %v2585, %v2585
      %v2767 = vpack.c.bf16 %v2587, %v2587
      %v2768 = vpack.c.bf16 %v2589, %v2589
      %v2769 = vpack.c.bf16 %v2591, %v2591
      %v2770 = vpack.c.bf16 %v2593, %v2593
      %v2771 = vpack.c.bf16 %v2595, %v2595
      %v2772 = vpack.c.bf16 %v2597, %v2597
      %v2773 = vpack.c.bf16 %v2599, %v2599
      %v2774 = vpack.c.bf16 %v2601, %v2601
      %v2775 = vpack.c.bf16 %v2603, %v2603
      %v2776 = vpack.c.bf16 %v2605, %v2605
      %v2777 = vpack.c.bf16 %v2607, %v2607
      %v2778 = vpack.c.bf16 %v2609, %v2609
      %v2779 = vpack.c.bf16 %v2611, %v2611
      %v2780 = vpack.c.bf16 %v2613, %v2613
      %v2781 = vpack.c.bf16 %v2615, %v2615
      %v2782 = vpack.c.bf16 %v2617, %v2617
      %v2783 = vpack.c.bf16 %v2619, %v2619
      %v2784 = vpack.c.bf16 %v2621, %v2621
      %v2785 = vpack.c.bf16 %v2623, %v2623
      %v2786 = vpack.c.bf16 %v2625, %v2625
      %v2787 = vpack.c.bf16 %v2627, %v2627
      %v2790 = vunpack.c.l.b16 %v2756
      %v2791 = vunpack.c.l.b16 %v2757
      %v2792 = vpack.c.b16 %v2791, %v2790
      %2793 = vrot.lane.b32.xlu0 %v1976, 96
      %v2794 = vpop.permute.xlu0 %2793
      %v2797 = vsel %vm994, %v2792, 0
      %2799 = vmatpush.bf16.msra.mxu0 0
      %2800 = vmatpush.bf16.msra.mxu0 0
      %2801 = vmatpush.bf16.msra.mxu0 0
      %2802 = vmatpush.bf16.msra.mxu0 0
      %2803 = vmatpush.bf16.msra.mxu0 0
      %2804 = vmatpush.bf16.msra.mxu0 0
      %2805 = vmatpush.bf16.msra.mxu0 0
      %2806 = vmatpush.bf16.msra.mxu0 %v2794
      %2807 = vmatmul.bf16.gmra.mxu0 %v2797
      %v2808 = vpop.f32.mrf.mxu0
      %v2809 = vadd.f32 0.0, %v2808
      %v2810 = vpop.f32.mrf.mxu0
      %v2811 = vadd.f32 0.0, %v2810
      %2812 = vdwg.mxu0
      %v2815 = vunpack.c.l.b16 %v2758
      %v2816 = vunpack.c.l.b16 %v2759
      %v2817 = vpack.c.b16 %v2816, %v2815
      %2818 = vrot.lane.b32.xlu0 %v2003, 96
      %v2819 = vpop.permute.xlu0 %2818
      %v2822 = vsel %vm994, %v2817, 0
      %2824 = vmatpush.bf16.msra.mxu0 0
      %2825 = vmatpush.bf16.msra.mxu0 0
      %2826 = vmatpush.bf16.msra.mxu0 0
      %2827 = vmatpush.bf16.msra.mxu0 0
      %2828 = vmatpush.bf16.msra.mxu0 0
      %2829 = vmatpush.bf16.msra.mxu0 0
      %2830 = vmatpush.bf16.msra.mxu0 0
      %2831 = vmatpush.bf16.msra.mxu0 %v2819
      %2832 = vmatmul.bf16.gmra.mxu0 %v2822
      %v2833 = vpop.f32.mrf.mxu0
      %v2834 = vadd.f32 0.0, %v2833
      %v2835 = vpop.f32.mrf.mxu0
      %v2836 = vadd.f32 0.0, %v2835
      %2837 = vdwg.mxu0
      %v2840 = vunpack.c.l.b16 %v2760
      %v2841 = vunpack.c.l.b16 %v2761
      %v2842 = vpack.c.b16 %v2841, %v2840
      %2843 = vrot.lane.b32.xlu0 %v2030, 96
      %v2844 = vpop.permute.xlu0 %2843
      %v2847 = vsel %vm994, %v2842, 0
      %2849 = vmatpush.bf16.msra.mxu0 0
      %2850 = vmatpush.bf16.msra.mxu0 0
      %2851 = vmatpush.bf16.msra.mxu0 0
      %2852 = vmatpush.bf16.msra.mxu0 0
      %2853 = vmatpush.bf16.msra.mxu0 0
      %2854 = vmatpush.bf16.msra.mxu0 0
      %2855 = vmatpush.bf16.msra.mxu0 0
      %2856 = vmatpush.bf16.msra.mxu0 %v2844
      %2857 = vmatmul.bf16.gmra.mxu0 %v2847
      %v2858 = vpop.f32.mrf.mxu0
      %v2859 = vadd.f32 0.0, %v2858
      %v2860 = vpop.f32.mrf.mxu0
      %v2861 = vadd.f32 0.0, %v2860
      %2862 = vdwg.mxu0
      %v2865 = vunpack.c.l.b16 %v2762
      %v2866 = vunpack.c.l.b16 %v2763
      %v2867 = vpack.c.b16 %v2866, %v2865
      %2868 = vrot.lane.b32.xlu0 %v2057, 96
      %v2869 = vpop.permute.xlu0 %2868
      %v2872 = vsel %vm994, %v2867, 0
      %2874 = vmatpush.bf16.msra.mxu0 0
      %2875 = vmatpush.bf16.msra.mxu0 0
      %2876 = vmatpush.bf16.msra.mxu0 0
      %2877 = vmatpush.bf16.msra.mxu0 0
      %2878 = vmatpush.bf16.msra.mxu0 0
      %2879 = vmatpush.bf16.msra.mxu0 0
      %2880 = vmatpush.bf16.msra.mxu0 0
      %2881 = vmatpush.bf16.msra.mxu0 %v2869
      %2882 = vmatmul.bf16.gmra.mxu0 %v2872
      %v2883 = vpop.f32.mrf.mxu0
      %v2884 = vadd.f32 0.0, %v2883
      %v2885 = vpop.f32.mrf.mxu0
      %v2886 = vadd.f32 0.0, %v2885
      %2887 = vdwg.mxu0
      %v2890 = vunpack.c.l.b16 %v2764
      %v2891 = vunpack.c.l.b16 %v2765
      %v2892 = vpack.c.b16 %v2891, %v2890
      %2893 = vrot.lane.b32.xlu0 %v2084, 96
      %v2894 = vpop.permute.xlu0 %2893
      %v2897 = vsel %vm994, %v2892, 0
      %2899 = vmatpush.bf16.msra.mxu0 0
      %2900 = vmatpush.bf16.msra.mxu0 0
      %2901 = vmatpush.bf16.msra.mxu0 0
      %2902 = vmatpush.bf16.msra.mxu0 0
      %2903 = vmatpush.bf16.msra.mxu0 0
      %2904 = vmatpush.bf16.msra.mxu0 0
      %2905 = vmatpush.bf16.msra.mxu0 0
      %2906 = vmatpush.bf16.msra.mxu0 %v2894
      %2907 = vmatmul.bf16.gmra.mxu0 %v2897
      %v2908 = vpop.f32.mrf.mxu0
      %v2909 = vadd.f32 0.0, %v2908
      %v2910 = vpop.f32.mrf.mxu0
      %v2911 = vadd.f32 0.0, %v2910
      %2912 = vdwg.mxu0
      %v2915 = vunpack.c.l.b16 %v2766
      %v2916 = vunpack.c.l.b16 %v2767
      %v2917 = vpack.c.b16 %v2916, %v2915
      %2918 = vrot.lane.b32.xlu0 %v2111, 96
      %v2919 = vpop.permute.xlu0 %2918
      %v2922 = vsel %vm994, %v2917, 0
      %2924 = vmatpush.bf16.msra.mxu0 0
      %2925 = vmatpush.bf16.msra.mxu0 0
      %2926 = vmatpush.bf16.msra.mxu0 0
      %2927 = vmatpush.bf16.msra.mxu0 0
      %2928 = vmatpush.bf16.msra.mxu0 0
      %2929 = vmatpush.bf16.msra.mxu0 0
      %2930 = vmatpush.bf16.msra.mxu0 0
      %2931 = vmatpush.bf16.msra.mxu0 %v2919
      %2932 = vmatmul.bf16.gmra.mxu0 %v2922
      %v2933 = vpop.f32.mrf.mxu0
      %v2934 = vadd.f32 0.0, %v2933
      %v2935 = vpop.f32.mrf.mxu0
      %v2936 = vadd.f32 0.0, %v2935
      %2937 = vdwg.mxu0
      %v2940 = vunpack.c.l.b16 %v2768
      %v2941 = vunpack.c.l.b16 %v2769
      %v2942 = vpack.c.b16 %v2941, %v2940
      %2943 = vrot.lane.b32.xlu0 %v2138, 96
      %v2944 = vpop.permute.xlu0 %2943
      %v2947 = vsel %vm994, %v2942, 0
      %2949 = vmatpush.bf16.msra.mxu0 0
      %2950 = vmatpush.bf16.msra.mxu0 0
      %2951 = vmatpush.bf16.msra.mxu0 0
      %2952 = vmatpush.bf16.msra.mxu0 0
      %2953 = vmatpush.bf16.msra.mxu0 0
      %2954 = vmatpush.bf16.msra.mxu0 0
      %2955 = vmatpush.bf16.msra.mxu0 0
      %2956 = vmatpush.bf16.msra.mxu0 %v2944
      %2957 = vmatmul.bf16.gmra.mxu0 %v2947
      %v2958 = vpop.f32.mrf.mxu0
      %v2959 = vadd.f32 0.0, %v2958
      %v2960 = vpop.f32.mrf.mxu0
      %v2961 = vadd.f32 0.0, %v2960
      %2962 = vdwg.mxu0
      %v2965 = vunpack.c.l.b16 %v2770
      %v2966 = vunpack.c.l.b16 %v2771
      %v2967 = vpack.c.b16 %v2966, %v2965
      %2968 = vrot.lane.b32.xlu0 %v2165, 96
      %v2969 = vpop.permute.xlu0 %2968
      %v2972 = vsel %vm994, %v2967, 0
      %2974 = vmatpush.bf16.msra.mxu0 0
      %2975 = vmatpush.bf16.msra.mxu0 0
      %2976 = vmatpush.bf16.msra.mxu0 0
      %2977 = vmatpush.bf16.msra.mxu0 0
      %2978 = vmatpush.bf16.msra.mxu0 0
      %2979 = vmatpush.bf16.msra.mxu0 0
      %2980 = vmatpush.bf16.msra.mxu0 0
      %2981 = vmatpush.bf16.msra.mxu0 %v2969
      %2982 = vmatmul.bf16.gmra.mxu0 %v2972
      %v2983 = vpop.f32.mrf.mxu0
      %v2984 = vadd.f32 0.0, %v2983
      %v2985 = vpop.f32.mrf.mxu0
      %v2986 = vadd.f32 0.0, %v2985
      %2987 = vdwg.mxu0
      %v2990 = vunpack.c.l.b16 %v2772
      %v2991 = vunpack.c.l.b16 %v2773
      %v2992 = vpack.c.b16 %v2991, %v2990
      %2993 = vrot.lane.b32.xlu0 %v2192, 96
      %v2994 = vpop.permute.xlu0 %2993
      %v2997 = vsel %vm994, %v2992, 0
      %2999 = vmatpush.bf16.msra.mxu0 0
      %3000 = vmatpush.bf16.msra.mxu0 0
      %3001 = vmatpush.bf16.msra.mxu0 0
      %3002 = vmatpush.bf16.msra.mxu0 0
      %3003 = vmatpush.bf16.msra.mxu0 0
      %3004 = vmatpush.bf16.msra.mxu0 0
      %3005 = vmatpush.bf16.msra.mxu0 0
      %3006 = vmatpush.bf16.msra.mxu0 %v2994
      %3007 = vmatmul.bf16.gmra.mxu0 %v2997
      %v3008 = vpop.f32.mrf.mxu0
      %v3009 = vadd.f32 0.0, %v3008
      %v3010 = vpop.f32.mrf.mxu0
      %v3011 = vadd.f32 0.0, %v3010
      %3012 = vdwg.mxu0
      %v3015 = vunpack.c.l.b16 %v2774
      %v3016 = vunpack.c.l.b16 %v2775
      %v3017 = vpack.c.b16 %v3016, %v3015
      %3018 = vrot.lane.b32.xlu0 %v2219, 96
      %v3019 = vpop.permute.xlu0 %3018
      %v3022 = vsel %vm994, %v3017, 0
      %3024 = vmatpush.bf16.msra.mxu0 0
      %3025 = vmatpush.bf16.msra.mxu0 0
      %3026 = vmatpush.bf16.msra.mxu0 0
      %3027 = vmatpush.bf16.msra.mxu0 0
      %3028 = vmatpush.bf16.msra.mxu0 0
      %3029 = vmatpush.bf16.msra.mxu0 0
      %3030 = vmatpush.bf16.msra.mxu0 0
      %3031 = vmatpush.bf16.msra.mxu0 %v3019
      %3032 = vmatmul.bf16.gmra.mxu0 %v3022
      %v3033 = vpop.f32.mrf.mxu0
      %v3034 = vadd.f32 0.0, %v3033
      %v3035 = vpop.f32.mrf.mxu0
      %v3036 = vadd.f32 0.0, %v3035
      %3037 = vdwg.mxu0
      %v3040 = vunpack.c.l.b16 %v2776
      %v3041 = vunpack.c.l.b16 %v2777
      %v3042 = vpack.c.b16 %v3041, %v3040
      %3043 = vrot.lane.b32.xlu0 %v2246, 96
      %v3044 = vpop.permute.xlu0 %3043
      %v3047 = vsel %vm994, %v3042, 0
      %3049 = vmatpush.bf16.msra.mxu0 0
      %3050 = vmatpush.bf16.msra.mxu0 0
      %3051 = vmatpush.bf16.msra.mxu0 0
      %3052 = vmatpush.bf16.msra.mxu0 0
      %3053 = vmatpush.bf16.msra.mxu0 0
      %3054 = vmatpush.bf16.msra.mxu0 0
      %3055 = vmatpush.bf16.msra.mxu0 0
      %3056 = vmatpush.bf16.msra.mxu0 %v3044
      %3057 = vmatmul.bf16.gmra.mxu0 %v3047
      %v3058 = vpop.f32.mrf.mxu0
      %v3059 = vadd.f32 0.0, %v3058
      %v3060 = vpop.f32.mrf.mxu0
      %v3061 = vadd.f32 0.0, %v3060
      %3062 = vdwg.mxu0
      %v3065 = vunpack.c.l.b16 %v2778
      %v3066 = vunpack.c.l.b16 %v2779
      %v3067 = vpack.c.b16 %v3066, %v3065
      %3068 = vrot.lane.b32.xlu0 %v2273, 96
      %v3069 = vpop.permute.xlu0 %3068
      %v3072 = vsel %vm994, %v3067, 0
      %3074 = vmatpush.bf16.msra.mxu0 0
      %3075 = vmatpush.bf16.msra.mxu0 0
      %3076 = vmatpush.bf16.msra.mxu0 0
      %3077 = vmatpush.bf16.msra.mxu0 0
      %3078 = vmatpush.bf16.msra.mxu0 0
      %3079 = vmatpush.bf16.msra.mxu0 0
      %3080 = vmatpush.bf16.msra.mxu0 0
      %3081 = vmatpush.bf16.msra.mxu0 %v3069
      %3082 = vmatmul.bf16.gmra.mxu0 %v3072
      %v3083 = vpop.f32.mrf.mxu0
      %v3084 = vadd.f32 0.0, %v3083
      %v3085 = vpop.f32.mrf.mxu0
      %v3086 = vadd.f32 0.0, %v3085
      %3087 = vdwg.mxu0
      %v3090 = vunpack.c.l.b16 %v2780
      %v3091 = vunpack.c.l.b16 %v2781
      %v3092 = vpack.c.b16 %v3091, %v3090
      %3093 = vrot.lane.b32.xlu0 %v2300, 96
      %v3094 = vpop.permute.xlu0 %3093
      %v3097 = vsel %vm994, %v3092, 0
      %3099 = vmatpush.bf16.msra.mxu0 0
      %3100 = vmatpush.bf16.msra.mxu0 0
      %3101 = vmatpush.bf16.msra.mxu0 0
      %3102 = vmatpush.bf16.msra.mxu0 0
      %3103 = vmatpush.bf16.msra.mxu0 0
      %3104 = vmatpush.bf16.msra.mxu0 0
      %3105 = vmatpush.bf16.msra.mxu0 0
      %3106 = vmatpush.bf16.msra.mxu0 %v3094
      %3107 = vmatmul.bf16.gmra.mxu0 %v3097
      %v3108 = vpop.f32.mrf.mxu0
      %v3109 = vadd.f32 0.0, %v3108
      %v3110 = vpop.f32.mrf.mxu0
      %v3111 = vadd.f32 0.0, %v3110
      %3112 = vdwg.mxu0
      %v3115 = vunpack.c.l.b16 %v2782
      %v3116 = vunpack.c.l.b16 %v2783
      %v3117 = vpack.c.b16 %v3116, %v3115
      %3118 = vrot.lane.b32.xlu0 %v2327, 96
      %v3119 = vpop.permute.xlu0 %3118
      %v3122 = vsel %vm994, %v3117, 0
      %3124 = vmatpush.bf16.msra.mxu0 0
      %3125 = vmatpush.bf16.msra.mxu0 0
      %3126 = vmatpush.bf16.msra.mxu0 0
      %3127 = vmatpush.bf16.msra.mxu0 0
      %3128 = vmatpush.bf16.msra.mxu0 0
      %3129 = vmatpush.bf16.msra.mxu0 0
      %3130 = vmatpush.bf16.msra.mxu0 0
      %3131 = vmatpush.bf16.msra.mxu0 %v3119
      %3132 = vmatmul.bf16.gmra.mxu0 %v3122
      %v3133 = vpop.f32.mrf.mxu0
      %v3134 = vadd.f32 0.0, %v3133
      %v3135 = vpop.f32.mrf.mxu0
      %v3136 = vadd.f32 0.0, %v3135
      %3137 = vdwg.mxu0
      %v3140 = vunpack.c.l.b16 %v2784
      %v3141 = vunpack.c.l.b16 %v2785
      %v3142 = vpack.c.b16 %v3141, %v3140
      %3143 = vrot.lane.b32.xlu0 %v2354, 96
      %v3144 = vpop.permute.xlu0 %3143
      %v3147 = vsel %vm994, %v3142, 0
      %3149 = vmatpush.bf16.msra.mxu0 0
      %3150 = vmatpush.bf16.msra.mxu0 0
      %3151 = vmatpush.bf16.msra.mxu0 0
      %3152 = vmatpush.bf16.msra.mxu0 0
      %3153 = vmatpush.bf16.msra.mxu0 0
      %3154 = vmatpush.bf16.msra.mxu0 0
      %3155 = vmatpush.bf16.msra.mxu0 0
      %3156 = vmatpush.bf16.msra.mxu0 %v3144
      %3157 = vmatmul.bf16.gmra.mxu0 %v3147
      %v3158 = vpop.f32.mrf.mxu0
      %v3159 = vadd.f32 0.0, %v3158
      %v3160 = vpop.f32.mrf.mxu0
      %v3161 = vadd.f32 0.0, %v3160
      %3162 = vdwg.mxu0
      %v3165 = vunpack.c.l.b16 %v2786
      %v3166 = vunpack.c.l.b16 %v2787
      %v3167 = vpack.c.b16 %v3166, %v3165
      %3168 = vrot.lane.b32.xlu0 %v2381, 96
      %v3169 = vpop.permute.xlu0 %3168
      %v3172 = vsel %vm994, %v3167, 0
      %3174 = vmatpush.bf16.msra.mxu0 0
      %3175 = vmatpush.bf16.msra.mxu0 0
      %3176 = vmatpush.bf16.msra.mxu0 0
      %3177 = vmatpush.bf16.msra.mxu0 0
      %3178 = vmatpush.bf16.msra.mxu0 0
      %3179 = vmatpush.bf16.msra.mxu0 0
      %3180 = vmatpush.bf16.msra.mxu0 0
      %3181 = vmatpush.bf16.msra.mxu0 %v3169
      %3182 = vmatmul.bf16.gmra.mxu0 %v3172
      %v3183 = vpop.f32.mrf.mxu0
      %v3184 = vadd.f32 0.0, %v3183
      %v3185 = vpop.f32.mrf.mxu0
      %v3186 = vadd.f32 0.0, %v3185
      %3187 = vdwg.mxu0
      %v3188 = vmul.f32 %v2809, %v2724
      %v3189 = vmul.f32 %v2811, %v2725
      %v3190 = vmul.f32 %v2834, %v2726
      %v3191 = vmul.f32 %v2836, %v2727
      %v3192 = vmul.f32 %v2859, %v2728
      %v3193 = vmul.f32 %v2861, %v2729
      %v3194 = vmul.f32 %v2884, %v2730
      %v3195 = vmul.f32 %v2886, %v2731
      %v3196 = vmul.f32 %v2909, %v2732
      %v3197 = vmul.f32 %v2911, %v2733
      %v3198 = vmul.f32 %v2934, %v2734
      %v3199 = vmul.f32 %v2936, %v2735
      %v3200 = vmul.f32 %v2959, %v2736
      %v3201 = vmul.f32 %v2961, %v2737
      %v3202 = vmul.f32 %v2984, %v2738
      %v3203 = vmul.f32 %v2986, %v2739
      %v3204 = vmul.f32 %v3009, %v2740
      %v3205 = vmul.f32 %v3011, %v2741
      %v3206 = vmul.f32 %v3034, %v2742
      %v3207 = vmul.f32 %v3036, %v2743
      %v3208 = vmul.f32 %v3059, %v2744
      %v3209 = vmul.f32 %v3061, %v2745
      %v3210 = vmul.f32 %v3084, %v2746
      %v3211 = vmul.f32 %v3086, %v2747
      %v3212 = vmul.f32 %v3109, %v2748
      %v3213 = vmul.f32 %v3111, %v2749
      %v3214 = vmul.f32 %v3134, %v2750
      %v3215 = vmul.f32 %v3136, %v2751
      %v3216 = vmul.f32 %v3159, %v2752
      %v3217 = vmul.f32 %v3161, %v2753
      %v3218 = vmul.f32 %v3184, %v2754
      %v3219 = vmul.f32 %v3186, %v2755
      %v3220 = vpack.c.bf16 %v3189, %v3188
      %v3221 = vpack.c.bf16 %v3191, %v3190
      %v3222 = vpack.c.bf16 %v3193, %v3192
      %v3223 = vpack.c.bf16 %v3195, %v3194
      %v3224 = vpack.c.bf16 %v3197, %v3196
      %v3225 = vpack.c.bf16 %v3199, %v3198
      %v3226 = vpack.c.bf16 %v3201, %v3200
      %v3227 = vpack.c.bf16 %v3203, %v3202
      %v3228 = vpack.c.bf16 %v3205, %v3204
      %v3229 = vpack.c.bf16 %v3207, %v3206
      %v3230 = vpack.c.bf16 %v3209, %v3208
      %v3231 = vpack.c.bf16 %v3211, %v3210
      %v3232 = vpack.c.bf16 %v3213, %v3212
      %v3233 = vpack.c.bf16 %v3215, %v3214
      %v3234 = vpack.c.bf16 %v3217, %v3216
      %v3235 = vpack.c.bf16 %v3219, %v3218
      %3236 = vrot.lane.b32.xlu0 %v1976, 120
      %v3237 = vpop.permute.xlu0 %3236
      %3238 = vrot.lane.b32.xlu0 %v1976, 104
      %v3239 = vpop.permute.xlu0 %3238
      %v3241 = vsel %vm810, %v3237, 0
      %v3244 = vsel %vm810, %v3239, 0
      %3246 = vmatpush.bf16.xpose.msra.mxu0 0
      %3247 = vmatpush.bf16.xpose.msra.mxu0 0
      %3248 = vmatpush.bf16.xpose.msra.mxu0 0
      %3249 = vmatpush.bf16.xpose.msra.mxu0 0
      %3250 = vmatpush.bf16.xpose.msra.mxu0 0
      %3251 = vmatpush.bf16.xpose.msra.mxu0 0
      %3252 = vmatpush.bf16.xpose.msra.mxu0 0
      %3253 = vmatpush.bf16.xpose.msra.mxu0 %v3244
      %3254 = vmatmul.bf16.gmra.mxu0 %v3241
      %v3255 = vpop.f32.mrf.mxu0
      %v3256 = vadd.f32 0.0, %v3255
      %v3257 = vpop.f32.mrf.mxu0
      %v3258 = vadd.f32 0.0, %v3257
      %3259 = vdwg.mxu0
      %3260 = vrot.lane.b32.xlu0 %v2003, 120
      %v3261 = vpop.permute.xlu0 %3260
      %3262 = vrot.lane.b32.xlu0 %v2003, 104
      %v3263 = vpop.permute.xlu0 %3262
      %v3265 = vsel %vm810, %v3261, 0
      %v3268 = vsel %vm810, %v3263, 0
      %3270 = vmatpush.bf16.xpose.msra.mxu0 0
      %3271 = vmatpush.bf16.xpose.msra.mxu0 0
      %3272 = vmatpush.bf16.xpose.msra.mxu0 0
      %3273 = vmatpush.bf16.xpose.msra.mxu0 0
      %3274 = vmatpush.bf16.xpose.msra.mxu0 0
      %3275 = vmatpush.bf16.xpose.msra.mxu0 0
      %3276 = vmatpush.bf16.xpose.msra.mxu0 0
      %3277 = vmatpush.bf16.xpose.msra.mxu0 %v3268
      %3278 = vmatmul.bf16.gmra.mxu0 %v3265
      %v3279 = vpop.f32.mrf.mxu0
      %v3280 = vadd.f32 0.0, %v3279
      %v3281 = vpop.f32.mrf.mxu0
      %v3282 = vadd.f32 0.0, %v3281
      %3283 = vdwg.mxu0
      %3284 = vrot.lane.b32.xlu0 %v2030, 120
      %v3285 = vpop.permute.xlu0 %3284
      %3286 = vrot.lane.b32.xlu0 %v2030, 104
      %v3287 = vpop.permute.xlu0 %3286
      %v3289 = vsel %vm810, %v3285, 0
      %v3292 = vsel %vm810, %v3287, 0
      %3294 = vmatpush.bf16.xpose.msra.mxu0 0
      %3295 = vmatpush.bf16.xpose.msra.mxu0 0
      %3296 = vmatpush.bf16.xpose.msra.mxu0 0
      %3297 = vmatpush.bf16.xpose.msra.mxu0 0
      %3298 = vmatpush.bf16.xpose.msra.mxu0 0
      %3299 = vmatpush.bf16.xpose.msra.mxu0 0
      %3300 = vmatpush.bf16.xpose.msra.mxu0 0
      %3301 = vmatpush.bf16.xpose.msra.mxu0 %v3292
      %3302 = vmatmul.bf16.gmra.mxu0 %v3289
      %v3303 = vpop.f32.mrf.mxu0
      %v3304 = vadd.f32 0.0, %v3303
      %v3305 = vpop.f32.mrf.mxu0
      %v3306 = vadd.f32 0.0, %v3305
      %3307 = vdwg.mxu0
      %3308 = vrot.lane.b32.xlu0 %v2057, 120
      %v3309 = vpop.permute.xlu0 %3308
      %3310 = vrot.lane.b32.xlu0 %v2057, 104
      %v3311 = vpop.permute.xlu0 %3310
      %v3313 = vsel %vm810, %v3309, 0
      %v3316 = vsel %vm810, %v3311, 0
      %3318 = vmatpush.bf16.xpose.msra.mxu0 0
      %3319 = vmatpush.bf16.xpose.msra.mxu0 0
      %3320 = vmatpush.bf16.xpose.msra.mxu0 0
      %3321 = vmatpush.bf16.xpose.msra.mxu0 0
      %3322 = vmatpush.bf16.xpose.msra.mxu0 0
      %3323 = vmatpush.bf16.xpose.msra.mxu0 0
      %3324 = vmatpush.bf16.xpose.msra.mxu0 0
      %3325 = vmatpush.bf16.xpose.msra.mxu0 %v3316
      %3326 = vmatmul.bf16.gmra.mxu0 %v3313
      %v3327 = vpop.f32.mrf.mxu0
      %v3328 = vadd.f32 0.0, %v3327
      %v3329 = vpop.f32.mrf.mxu0
      %v3330 = vadd.f32 0.0, %v3329
      %3331 = vdwg.mxu0
      %3332 = vrot.lane.b32.xlu0 %v2084, 120
      %v3333 = vpop.permute.xlu0 %3332
      %3334 = vrot.lane.b32.xlu0 %v2084, 104
      %v3335 = vpop.permute.xlu0 %3334
      %v3337 = vsel %vm810, %v3333, 0
      %v3340 = vsel %vm810, %v3335, 0
      %3342 = vmatpush.bf16.xpose.msra.mxu0 0
      %3343 = vmatpush.bf16.xpose.msra.mxu0 0
      %3344 = vmatpush.bf16.xpose.msra.mxu0 0
      %3345 = vmatpush.bf16.xpose.msra.mxu0 0
      %3346 = vmatpush.bf16.xpose.msra.mxu0 0
      %3347 = vmatpush.bf16.xpose.msra.mxu0 0
      %3348 = vmatpush.bf16.xpose.msra.mxu0 0
      %3349 = vmatpush.bf16.xpose.msra.mxu0 %v3340
      %3350 = vmatmul.bf16.gmra.mxu0 %v3337
      %v3351 = vpop.f32.mrf.mxu0
      %v3352 = vadd.f32 0.0, %v3351
      %v3353 = vpop.f32.mrf.mxu0
      %v3354 = vadd.f32 0.0, %v3353
      %3355 = vdwg.mxu0
      %3356 = vrot.lane.b32.xlu0 %v2111, 120
      %v3357 = vpop.permute.xlu0 %3356
      %3358 = vrot.lane.b32.xlu0 %v2111, 104
      %v3359 = vpop.permute.xlu0 %3358
      %v3361 = vsel %vm810, %v3357, 0
      %v3364 = vsel %vm810, %v3359, 0
      %3366 = vmatpush.bf16.xpose.msra.mxu0 0
      %3367 = vmatpush.bf16.xpose.msra.mxu0 0
      %3368 = vmatpush.bf16.xpose.msra.mxu0 0
      %3369 = vmatpush.bf16.xpose.msra.mxu0 0
      %3370 = vmatpush.bf16.xpose.msra.mxu0 0
      %3371 = vmatpush.bf16.xpose.msra.mxu0 0
      %3372 = vmatpush.bf16.xpose.msra.mxu0 0
      %3373 = vmatpush.bf16.xpose.msra.mxu0 %v3364
      %3374 = vmatmul.bf16.gmra.mxu0 %v3361
      %v3375 = vpop.f32.mrf.mxu0
      %v3376 = vadd.f32 0.0, %v3375
      %v3377 = vpop.f32.mrf.mxu0
      %v3378 = vadd.f32 0.0, %v3377
      %3379 = vdwg.mxu0
      %3380 = vrot.lane.b32.xlu0 %v2138, 120
      %v3381 = vpop.permute.xlu0 %3380
      %3382 = vrot.lane.b32.xlu0 %v2138, 104
      %v3383 = vpop.permute.xlu0 %3382
      %v3385 = vsel %vm810, %v3381, 0
      %v3388 = vsel %vm810, %v3383, 0
      %3390 = vmatpush.bf16.xpose.msra.mxu0 0
      %3391 = vmatpush.bf16.xpose.msra.mxu0 0
      %3392 = vmatpush.bf16.xpose.msra.mxu0 0
      %3393 = vmatpush.bf16.xpose.msra.mxu0 0
      %3394 = vmatpush.bf16.xpose.msra.mxu0 0
      %3395 = vmatpush.bf16.xpose.msra.mxu0 0
      %3396 = vmatpush.bf16.xpose.msra.mxu0 0
      %3397 = vmatpush.bf16.xpose.msra.mxu0 %v3388
      %3398 = vmatmul.bf16.gmra.mxu0 %v3385
      %v3399 = vpop.f32.mrf.mxu0
      %v3400 = vadd.f32 0.0, %v3399
      %v3401 = vpop.f32.mrf.mxu0
      %v3402 = vadd.f32 0.0, %v3401
      %3403 = vdwg.mxu0
      %3404 = vrot.lane.b32.xlu0 %v2165, 120
      %v3405 = vpop.permute.xlu0 %3404
      %3406 = vrot.lane.b32.xlu0 %v2165, 104
      %v3407 = vpop.permute.xlu0 %3406
      %v3409 = vsel %vm810, %v3405, 0
      %v3412 = vsel %vm810, %v3407, 0
      %3414 = vmatpush.bf16.xpose.msra.mxu0 0
      %3415 = vmatpush.bf16.xpose.msra.mxu0 0
      %3416 = vmatpush.bf16.xpose.msra.mxu0 0
      %3417 = vmatpush.bf16.xpose.msra.mxu0 0
      %3418 = vmatpush.bf16.xpose.msra.mxu0 0
      %3419 = vmatpush.bf16.xpose.msra.mxu0 0
      %3420 = vmatpush.bf16.xpose.msra.mxu0 0
      %3421 = vmatpush.bf16.xpose.msra.mxu0 %v3412
      %3422 = vmatmul.bf16.gmra.mxu0 %v3409
      %v3423 = vpop.f32.mrf.mxu0
      %v3424 = vadd.f32 0.0, %v3423
      %v3425 = vpop.f32.mrf.mxu0
      %v3426 = vadd.f32 0.0, %v3425
      %3427 = vdwg.mxu0
      %3428 = vrot.lane.b32.xlu0 %v2192, 120
      %v3429 = vpop.permute.xlu0 %3428
      %3430 = vrot.lane.b32.xlu0 %v2192, 104
      %v3431 = vpop.permute.xlu0 %3430
      %v3433 = vsel %vm810, %v3429, 0
      %v3436 = vsel %vm810, %v3431, 0
      %3438 = vmatpush.bf16.xpose.msra.mxu0 0
      %3439 = vmatpush.bf16.xpose.msra.mxu0 0
      %3440 = vmatpush.bf16.xpose.msra.mxu0 0
      %3441 = vmatpush.bf16.xpose.msra.mxu0 0
      %3442 = vmatpush.bf16.xpose.msra.mxu0 0
      %3443 = vmatpush.bf16.xpose.msra.mxu0 0
      %3444 = vmatpush.bf16.xpose.msra.mxu0 0
      %3445 = vmatpush.bf16.xpose.msra.mxu0 %v3436
      %3446 = vmatmul.bf16.gmra.mxu0 %v3433
      %v3447 = vpop.f32.mrf.mxu0
      %v3448 = vadd.f32 0.0, %v3447
      %v3449 = vpop.f32.mrf.mxu0
      %v3450 = vadd.f32 0.0, %v3449
      %3451 = vdwg.mxu0
      %3452 = vrot.lane.b32.xlu0 %v2219, 120
      %v3453 = vpop.permute.xlu0 %3452
      %3454 = vrot.lane.b32.xlu0 %v2219, 104
      %v3455 = vpop.permute.xlu0 %3454
      %v3457 = vsel %vm810, %v3453, 0
      %v3460 = vsel %vm810, %v3455, 0
      %3462 = vmatpush.bf16.xpose.msra.mxu0 0
      %3463 = vmatpush.bf16.xpose.msra.mxu0 0
      %3464 = vmatpush.bf16.xpose.msra.mxu0 0
      %3465 = vmatpush.bf16.xpose.msra.mxu0 0
      %3466 = vmatpush.bf16.xpose.msra.mxu0 0
      %3467 = vmatpush.bf16.xpose.msra.mxu0 0
      %3468 = vmatpush.bf16.xpose.msra.mxu0 0
      %3469 = vmatpush.bf16.xpose.msra.mxu0 %v3460
      %3470 = vmatmul.bf16.gmra.mxu0 %v3457
      %v3471 = vpop.f32.mrf.mxu0
      %v3472 = vadd.f32 0.0, %v3471
      %v3473 = vpop.f32.mrf.mxu0
      %v3474 = vadd.f32 0.0, %v3473
      %3475 = vdwg.mxu0
      %3476 = vrot.lane.b32.xlu0 %v2246, 120
      %v3477 = vpop.permute.xlu0 %3476
      %3478 = vrot.lane.b32.xlu0 %v2246, 104
      %v3479 = vpop.permute.xlu0 %3478
      %v3481 = vsel %vm810, %v3477, 0
      %v3484 = vsel %vm810, %v3479, 0
      %3486 = vmatpush.bf16.xpose.msra.mxu0 0
      %3487 = vmatpush.bf16.xpose.msra.mxu0 0
      %3488 = vmatpush.bf16.xpose.msra.mxu0 0
      %3489 = vmatpush.bf16.xpose.msra.mxu0 0
      %3490 = vmatpush.bf16.xpose.msra.mxu0 0
      %3491 = vmatpush.bf16.xpose.msra.mxu0 0
      %3492 = vmatpush.bf16.xpose.msra.mxu0 0
      %3493 = vmatpush.bf16.xpose.msra.mxu0 %v3484
      %3494 = vmatmul.bf16.gmra.mxu0 %v3481
      %v3495 = vpop.f32.mrf.mxu0
      %v3496 = vadd.f32 0.0, %v3495
      %v3497 = vpop.f32.mrf.mxu0
      %v3498 = vadd.f32 0.0, %v3497
      %3499 = vdwg.mxu0
      %3500 = vrot.lane.b32.xlu0 %v2273, 120
      %v3501 = vpop.permute.xlu0 %3500
      %3502 = vrot.lane.b32.xlu0 %v2273, 104
      %v3503 = vpop.permute.xlu0 %3502
      %v3505 = vsel %vm810, %v3501, 0
      %v3508 = vsel %vm810, %v3503, 0
      %3510 = vmatpush.bf16.xpose.msra.mxu0 0
      %3511 = vmatpush.bf16.xpose.msra.mxu0 0
      %3512 = vmatpush.bf16.xpose.msra.mxu0 0
      %3513 = vmatpush.bf16.xpose.msra.mxu0 0
      %3514 = vmatpush.bf16.xpose.msra.mxu0 0
      %3515 = vmatpush.bf16.xpose.msra.mxu0 0
      %3516 = vmatpush.bf16.xpose.msra.mxu0 0
      %3517 = vmatpush.bf16.xpose.msra.mxu0 %v3508
      %3518 = vmatmul.bf16.gmra.mxu0 %v3505
      %v3519 = vpop.f32.mrf.mxu0
      %v3520 = vadd.f32 0.0, %v3519
      %v3521 = vpop.f32.mrf.mxu0
      %v3522 = vadd.f32 0.0, %v3521
      %3523 = vdwg.mxu0
      %3524 = vrot.lane.b32.xlu0 %v2300, 120
      %v3525 = vpop.permute.xlu0 %3524
      %3526 = vrot.lane.b32.xlu0 %v2300, 104
      %v3527 = vpop.permute.xlu0 %3526
      %v3529 = vsel %vm810, %v3525, 0
      %v3532 = vsel %vm810, %v3527, 0
      %3534 = vmatpush.bf16.xpose.msra.mxu0 0
      %3535 = vmatpush.bf16.xpose.msra.mxu0 0
      %3536 = vmatpush.bf16.xpose.msra.mxu0 0
      %3537 = vmatpush.bf16.xpose.msra.mxu0 0
      %3538 = vmatpush.bf16.xpose.msra.mxu0 0
      %3539 = vmatpush.bf16.xpose.msra.mxu0 0
      %3540 = vmatpush.bf16.xpose.msra.mxu0 0
      %3541 = vmatpush.bf16.xpose.msra.mxu0 %v3532
      %3542 = vmatmul.bf16.gmra.mxu0 %v3529
      %v3543 = vpop.f32.mrf.mxu0
      %v3544 = vadd.f32 0.0, %v3543
      %v3545 = vpop.f32.mrf.mxu0
      %v3546 = vadd.f32 0.0, %v3545
      %3547 = vdwg.mxu0
      %3548 = vrot.lane.b32.xlu0 %v2327, 120
      %v3549 = vpop.permute.xlu0 %3548
      %3550 = vrot.lane.b32.xlu0 %v2327, 104
      %v3551 = vpop.permute.xlu0 %3550
      %v3553 = vsel %vm810, %v3549, 0
      %v3556 = vsel %vm810, %v3551, 0
      %3558 = vmatpush.bf16.xpose.msra.mxu0 0
      %3559 = vmatpush.bf16.xpose.msra.mxu0 0
      %3560 = vmatpush.bf16.xpose.msra.mxu0 0
      %3561 = vmatpush.bf16.xpose.msra.mxu0 0
      %3562 = vmatpush.bf16.xpose.msra.mxu0 0
      %3563 = vmatpush.bf16.xpose.msra.mxu0 0
      %3564 = vmatpush.bf16.xpose.msra.mxu0 0
      %3565 = vmatpush.bf16.xpose.msra.mxu0 %v3556
      %3566 = vmatmul.bf16.gmra.mxu0 %v3553
      %v3567 = vpop.f32.mrf.mxu0
      %v3568 = vadd.f32 0.0, %v3567
      %v3569 = vpop.f32.mrf.mxu0
      %v3570 = vadd.f32 0.0, %v3569
      %3571 = vdwg.mxu0
      %3572 = vrot.lane.b32.xlu0 %v2354, 120
      %v3573 = vpop.permute.xlu0 %3572
      %3574 = vrot.lane.b32.xlu0 %v2354, 104
      %v3575 = vpop.permute.xlu0 %3574
      %v3577 = vsel %vm810, %v3573, 0
      %v3580 = vsel %vm810, %v3575, 0
      %3582 = vmatpush.bf16.xpose.msra.mxu0 0
      %3583 = vmatpush.bf16.xpose.msra.mxu0 0
      %3584 = vmatpush.bf16.xpose.msra.mxu0 0
      %3585 = vmatpush.bf16.xpose.msra.mxu0 0
      %3586 = vmatpush.bf16.xpose.msra.mxu0 0
      %3587 = vmatpush.bf16.xpose.msra.mxu0 0
      %3588 = vmatpush.bf16.xpose.msra.mxu0 0
      %3589 = vmatpush.bf16.xpose.msra.mxu0 %v3580
      %3590 = vmatmul.bf16.gmra.mxu0 %v3577
      %v3591 = vpop.f32.mrf.mxu0
      %v3592 = vadd.f32 0.0, %v3591
      %v3593 = vpop.f32.mrf.mxu0
      %v3594 = vadd.f32 0.0, %v3593
      %3595 = vdwg.mxu0
      %3596 = vrot.lane.b32.xlu0 %v2381, 120
      %v3597 = vpop.permute.xlu0 %3596
      %3598 = vrot.lane.b32.xlu0 %v2381, 104
      %v3599 = vpop.permute.xlu0 %3598
      %v3601 = vsel %vm810, %v3597, 0
      %v3604 = vsel %vm810, %v3599, 0
      %3606 = vmatpush.bf16.xpose.msra.mxu0 0
      %3607 = vmatpush.bf16.xpose.msra.mxu0 0
      %3608 = vmatpush.bf16.xpose.msra.mxu0 0
      %3609 = vmatpush.bf16.xpose.msra.mxu0 0
      %3610 = vmatpush.bf16.xpose.msra.mxu0 0
      %3611 = vmatpush.bf16.xpose.msra.mxu0 0
      %3612 = vmatpush.bf16.xpose.msra.mxu0 0
      %3613 = vmatpush.bf16.xpose.msra.mxu0 %v3604
      %3614 = vmatmul.bf16.gmra.mxu0 %v3601
      %v3615 = vpop.f32.mrf.mxu0
      %v3616 = vadd.f32 0.0, %v3615
      %v3617 = vpop.f32.mrf.mxu0
      %v3618 = vadd.f32 0.0, %v3617
      %3619 = vdwg.mxu0
      %v3620 = vmul.f32 %v3256, 0.35355338
      %v3621 = vmul.f32 %v3258, 0.35355338
      %v3622 = vmul.f32 %v3280, 0.35355338
      %v3623 = vmul.f32 %v3282, 0.35355338
      %v3624 = vmul.f32 %v3304, 0.35355338
      %v3625 = vmul.f32 %v3306, 0.35355338
      %v3626 = vmul.f32 %v3328, 0.35355338
      %v3627 = vmul.f32 %v3330, 0.35355338
      %v3628 = vmul.f32 %v3352, 0.35355338
      %v3629 = vmul.f32 %v3354, 0.35355338
      %v3630 = vmul.f32 %v3376, 0.35355338
      %v3631 = vmul.f32 %v3378, 0.35355338
      %v3632 = vmul.f32 %v3400, 0.35355338
      %v3633 = vmul.f32 %v3402, 0.35355338
      %v3634 = vmul.f32 %v3424, 0.35355338
      %v3635 = vmul.f32 %v3426, 0.35355338
      %v3636 = vmul.f32 %v3448, 0.35355338
      %v3637 = vmul.f32 %v3450, 0.35355338
      %v3638 = vmul.f32 %v3472, 0.35355338
      %v3639 = vmul.f32 %v3474, 0.35355338
      %v3640 = vmul.f32 %v3496, 0.35355338
      %v3641 = vmul.f32 %v3498, 0.35355338
      %v3642 = vmul.f32 %v3520, 0.35355338
      %v3643 = vmul.f32 %v3522, 0.35355338
      %v3644 = vmul.f32 %v3544, 0.35355338
      %v3645 = vmul.f32 %v3546, 0.35355338
      %v3646 = vmul.f32 %v3568, 0.35355338
      %v3647 = vmul.f32 %v3570, 0.35355338
      %v3648 = vmul.f32 %v3592, 0.35355338
      %v3649 = vmul.f32 %v3594, 0.35355338
      %v3650 = vmul.f32 %v3616, 0.35355338
      %v3651 = vmul.f32 %v3618, 0.35355338
      %v3652 = vsel %vm994, %v3620, -inf
      %3653 = vmax.xlane.f32.xlu0 %v3652
      %v3654 = vpop.xlane.xlu0 %3653
      %v3655 = vsel %vm994, %v3621, -inf
      %3656 = vmax.xlane.f32.xlu0 %v3655
      %v3657 = vpop.xlane.xlu0 %3656
      %v3658 = vsel %vm994, %v3622, -inf
      %3659 = vmax.xlane.f32.xlu0 %v3658
      %v3660 = vpop.xlane.xlu0 %3659
      %v3661 = vsel %vm994, %v3623, -inf
      %3662 = vmax.xlane.f32.xlu0 %v3661
      %v3663 = vpop.xlane.xlu0 %3662
      %v3664 = vsel %vm994, %v3624, -inf
      %3665 = vmax.xlane.f32.xlu0 %v3664
      %v3666 = vpop.xlane.xlu0 %3665
      %v3667 = vsel %vm994, %v3625, -inf
      %3668 = vmax.xlane.f32.xlu0 %v3667
      %v3669 = vpop.xlane.xlu0 %3668
      %v3670 = vsel %vm994, %v3626, -inf
      %3671 = vmax.xlane.f32.xlu0 %v3670
      %v3672 = vpop.xlane.xlu0 %3671
      %v3673 = vsel %vm994, %v3627, -inf
      %3674 = vmax.xlane.f32.xlu0 %v3673
      %v3675 = vpop.xlane.xlu0 %3674
      %v3676 = vsel %vm994, %v3628, -inf
      %3677 = vmax.xlane.f32.xlu0 %v3676
      %v3678 = vpop.xlane.xlu0 %3677
      %v3679 = vsel %vm994, %v3629, -inf
      %3680 = vmax.xlane.f32.xlu0 %v3679
      %v3681 = vpop.xlane.xlu0 %3680
      %v3682 = vsel %vm994, %v3630, -inf
      %3683 = vmax.xlane.f32.xlu0 %v3682
      %v3684 = vpop.xlane.xlu0 %3683
      %v3685 = vsel %vm994, %v3631, -inf
      %3686 = vmax.xlane.f32.xlu0 %v3685
      %v3687 = vpop.xlane.xlu0 %3686
      %v3688 = vsel %vm994, %v3632, -inf
      %3689 = vmax.xlane.f32.xlu0 %v3688
      %v3690 = vpop.xlane.xlu0 %3689
      %v3691 = vsel %vm994, %v3633, -inf
      %3692 = vmax.xlane.f32.xlu0 %v3691
      %v3693 = vpop.xlane.xlu0 %3692
      %v3694 = vsel %vm994, %v3634, -inf
      %3695 = vmax.xlane.f32.xlu0 %v3694
      %v3696 = vpop.xlane.xlu0 %3695
      %v3697 = vsel %vm994, %v3635, -inf
      %3698 = vmax.xlane.f32.xlu0 %v3697
      %v3699 = vpop.xlane.xlu0 %3698
      %v3700 = vsel %vm994, %v3636, -inf
      %3701 = vmax.xlane.f32.xlu0 %v3700
      %v3702 = vpop.xlane.xlu0 %3701
      %v3703 = vsel %vm994, %v3637, -inf
      %3704 = vmax.xlane.f32.xlu0 %v3703
      %v3705 = vpop.xlane.xlu0 %3704
      %v3706 = vsel %vm994, %v3638, -inf
      %3707 = vmax.xlane.f32.xlu0 %v3706
      %v3708 = vpop.xlane.xlu0 %3707
      %v3709 = vsel %vm994, %v3639, -inf
      %3710 = vmax.xlane.f32.xlu0 %v3709
      %v3711 = vpop.xlane.xlu0 %3710
      %v3712 = vsel %vm994, %v3640, -inf
      %3713 = vmax.xlane.f32.xlu0 %v3712
      %v3714 = vpop.xlane.xlu0 %3713
      %v3715 = vsel %vm994, %v3641, -inf
      %3716 = vmax.xlane.f32.xlu0 %v3715
      %v3717 = vpop.xlane.xlu0 %3716
      %v3718 = vsel %vm994, %v3642, -inf
      %3719 = vmax.xlane.f32.xlu0 %v3718
      %v3720 = vpop.xlane.xlu0 %3719
      %v3721 = vsel %vm994, %v3643, -inf
      %3722 = vmax.xlane.f32.xlu0 %v3721
      %v3723 = vpop.xlane.xlu0 %3722
      %v3724 = vsel %vm994, %v3644, -inf
      %3725 = vmax.xlane.f32.xlu0 %v3724
      %v3726 = vpop.xlane.xlu0 %3725
      %v3727 = vsel %vm994, %v3645, -inf
      %3728 = vmax.xlane.f32.xlu0 %v3727
      %v3729 = vpop.xlane.xlu0 %3728
      %v3730 = vsel %vm994, %v3646, -inf
      %3731 = vmax.xlane.f32.xlu0 %v3730
      %v3732 = vpop.xlane.xlu0 %3731
      %v3733 = vsel %vm994, %v3647, -inf
      %3734 = vmax.xlane.f32.xlu0 %v3733
      %v3735 = vpop.xlane.xlu0 %3734
      %v3736 = vsel %vm994, %v3648, -inf
      %3737 = vmax.xlane.f32.xlu0 %v3736
      %v3738 = vpop.xlane.xlu0 %3737
      %v3739 = vsel %vm994, %v3649, -inf
      %3740 = vmax.xlane.f32.xlu0 %v3739
      %v3741 = vpop.xlane.xlu0 %3740
      %v3742 = vsel %vm994, %v3650, -inf
      %3743 = vmax.xlane.f32.xlu0 %v3742
      %v3744 = vpop.xlane.xlu0 %3743
      %v3745 = vsel %vm994, %v3651, -inf
      %3746 = vmax.xlane.f32.xlu0 %v3745
      %v3747 = vpop.xlane.xlu0 %3746
      %v3748 = vsub.f32 %v3620, %v3654
      %v3749 = vsub.f32 %v3621, %v3657
      %v3750 = vsub.f32 %v3622, %v3660
      %v3751 = vsub.f32 %v3623, %v3663
      %v3752 = vsub.f32 %v3624, %v3666
      %v3753 = vsub.f32 %v3625, %v3669
      %v3754 = vsub.f32 %v3626, %v3672
      %v3755 = vsub.f32 %v3627, %v3675
      %v3756 = vsub.f32 %v3628, %v3678
      %v3757 = vsub.f32 %v3629, %v3681
      %v3758 = vsub.f32 %v3630, %v3684
      %v3759 = vsub.f32 %v3631, %v3687
      %v3760 = vsub.f32 %v3632, %v3690
      %v3761 = vsub.f32 %v3633, %v3693
      %v3762 = vsub.f32 %v3634, %v3696
      %v3763 = vsub.f32 %v3635, %v3699
      %v3764 = vsub.f32 %v3636, %v3702
      %v3765 = vsub.f32 %v3637, %v3705
      %v3766 = vsub.f32 %v3638, %v3708
      %v3767 = vsub.f32 %v3639, %v3711
      %v3768 = vsub.f32 %v3640, %v3714
      %v3769 = vsub.f32 %v3641, %v3717
      %v3770 = vsub.f32 %v3642, %v3720
      %v3771 = vsub.f32 %v3643, %v3723
      %v3772 = vsub.f32 %v3644, %v3726
      %v3773 = vsub.f32 %v3645, %v3729
      %v3774 = vsub.f32 %v3646, %v3732
      %v3775 = vsub.f32 %v3647, %v3735
      %v3776 = vsub.f32 %v3648, %v3738
      %v3777 = vsub.f32 %v3649, %v3741
      %v3778 = vsub.f32 %v3650, %v3744
      %v3779 = vsub.f32 %v3651, %v3747
      %v3780 = vmul.f32 %v3748, 1.442695
      %v3781 = vpow.pop %v3780
      %v3782 = vmul.f32 %v3749, 1.442695
      %v3783 = vpow.pop %v3782
      %v3784 = vmul.f32 %v3750, 1.442695
      %v3785 = vpow.pop %v3784
      %v3786 = vmul.f32 %v3751, 1.442695
      %v3787 = vpow.pop %v3786
      %v3788 = vmul.f32 %v3752, 1.442695
      %v3789 = vpow.pop %v3788
      %v3790 = vmul.f32 %v3753, 1.442695
      %v3791 = vpow.pop %v3790
      %v3792 = vmul.f32 %v3754, 1.442695
      %v3793 = vpow.pop %v3792
      %v3794 = vmul.f32 %v3755, 1.442695
      %v3795 = vpow.pop %v3794
      %v3796 = vmul.f32 %v3756, 1.442695
      %v3797 = vpow.pop %v3796
      %v3798 = vmul.f32 %v3757, 1.442695
      %v3799 = vpow.pop %v3798
      %v3800 = vmul.f32 %v3758, 1.442695
      %v3801 = vpow.pop %v3800
      %v3802 = vmul.f32 %v3759, 1.442695
      %v3803 = vpow.pop %v3802
      %v3804 = vmul.f32 %v3760, 1.442695
      %v3805 = vpow.pop %v3804
      %v3806 = vmul.f32 %v3761, 1.442695
      %v3807 = vpow.pop %v3806
      %v3808 = vmul.f32 %v3762, 1.442695
      %v3809 = vpow.pop %v3808
      %v3810 = vmul.f32 %v3763, 1.442695
      %v3811 = vpow.pop %v3810
      %v3812 = vmul.f32 %v3764, 1.442695
      %v3813 = vpow.pop %v3812
      %v3814 = vmul.f32 %v3765, 1.442695
      %v3815 = vpow.pop %v3814
      %v3816 = vmul.f32 %v3766, 1.442695
      %v3817 = vpow.pop %v3816
      %v3818 = vmul.f32 %v3767, 1.442695
      %v3819 = vpow.pop %v3818
      %v3820 = vmul.f32 %v3768, 1.442695
      %v3821 = vpow.pop %v3820
      %v3822 = vmul.f32 %v3769, 1.442695
      %v3823 = vpow.pop %v3822
      %v3824 = vmul.f32 %v3770, 1.442695
      %v3825 = vpow.pop %v3824
      %v3826 = vmul.f32 %v3771, 1.442695
      %v3827 = vpow.pop %v3826
      %v3828 = vmul.f32 %v3772, 1.442695
      %v3829 = vpow.pop %v3828
      %v3830 = vmul.f32 %v3773, 1.442695
      %v3831 = vpow.pop %v3830
      %v3832 = vmul.f32 %v3774, 1.442695
      %v3833 = vpow.pop %v3832
      %v3834 = vmul.f32 %v3775, 1.442695
      %v3835 = vpow.pop %v3834
      %v3836 = vmul.f32 %v3776, 1.442695
      %v3837 = vpow.pop %v3836
      %v3838 = vmul.f32 %v3777, 1.442695
      %v3839 = vpow.pop %v3838
      %v3840 = vmul.f32 %v3778, 1.442695
      %v3841 = vpow.pop %v3840
      %v3842 = vmul.f32 %v3779, 1.442695
      %v3843 = vpow.pop %v3842
      %v3844 = vsel %vm994, %v3781, 0.0
      %3845 = vadd.xlane.f32.xlu0 %v3844
      %v3846 = vpop.xlane.xlu0 %3845
      %v3847 = vsel %vm994, %v3783, 0.0
      %3848 = vadd.xlane.f32.xlu0 %v3847
      %v3849 = vpop.xlane.xlu0 %3848
      %v3850 = vsel %vm994, %v3785, 0.0
      %3851 = vadd.xlane.f32.xlu0 %v3850
      %v3852 = vpop.xlane.xlu0 %3851
      %v3853 = vsel %vm994, %v3787, 0.0
      %3854 = vadd.xlane.f32.xlu0 %v3853
      %v3855 = vpop.xlane.xlu0 %3854
      %v3856 = vsel %vm994, %v3789, 0.0
      %3857 = vadd.xlane.f32.xlu0 %v3856
      %v3858 = vpop.xlane.xlu0 %3857
      %v3859 = vsel %vm994, %v3791, 0.0
      %3860 = vadd.xlane.f32.xlu0 %v3859
      %v3861 = vpop.xlane.xlu0 %3860
      %v3862 = vsel %vm994, %v3793, 0.0
      %3863 = vadd.xlane.f32.xlu0 %v3862
      %v3864 = vpop.xlane.xlu0 %3863
      %v3865 = vsel %vm994, %v3795, 0.0
      %3866 = vadd.xlane.f32.xlu0 %v3865
      %v3867 = vpop.xlane.xlu0 %3866
      %v3868 = vsel %vm994, %v3797, 0.0
      %3869 = vadd.xlane.f32.xlu0 %v3868
      %v3870 = vpop.xlane.xlu0 %3869
      %v3871 = vsel %vm994, %v3799, 0.0
      %3872 = vadd.xlane.f32.xlu0 %v3871
      %v3873 = vpop.xlane.xlu0 %3872
      %v3874 = vsel %vm994, %v3801, 0.0
      %3875 = vadd.xlane.f32.xlu0 %v3874
      %v3876 = vpop.xlane.xlu0 %3875
      %v3877 = vsel %vm994, %v3803, 0.0
      %3878 = vadd.xlane.f32.xlu0 %v3877
      %v3879 = vpop.xlane.xlu0 %3878
      %v3880 = vsel %vm994, %v3805, 0.0
      %3881 = vadd.xlane.f32.xlu0 %v3880
      %v3882 = vpop.xlane.xlu0 %3881
      %v3883 = vsel %vm994, %v3807, 0.0
      %3884 = vadd.xlane.f32.xlu0 %v3883
      %v3885 = vpop.xlane.xlu0 %3884
      %v3886 = vsel %vm994, %v3809, 0.0
      %3887 = vadd.xlane.f32.xlu0 %v3886
      %v3888 = vpop.xlane.xlu0 %3887
      %v3889 = vsel %vm994, %v3811, 0.0
      %3890 = vadd.xlane.f32.xlu0 %v3889
      %v3891 = vpop.xlane.xlu0 %3890
      %v3892 = vsel %vm994, %v3813, 0.0
      %3893 = vadd.xlane.f32.xlu0 %v3892
      %v3894 = vpop.xlane.xlu0 %3893
      %v3895 = vsel %vm994, %v3815, 0.0
      %3896 = vadd.xlane.f32.xlu0 %v3895
      %v3897 = vpop.xlane.xlu0 %3896
      %v3898 = vsel %vm994, %v3817, 0.0
      %3899 = vadd.xlane.f32.xlu0 %v3898
      %v3900 = vpop.xlane.xlu0 %3899
      %v3901 = vsel %vm994, %v3819, 0.0
      %3902 = vadd.xlane.f32.xlu0 %v3901
      %v3903 = vpop.xlane.xlu0 %3902
      %v3904 = vsel %vm994, %v3821, 0.0
      %3905 = vadd.xlane.f32.xlu0 %v3904
      %v3906 = vpop.xlane.xlu0 %3905
      %v3907 = vsel %vm994, %v3823, 0.0
      %3908 = vadd.xlane.f32.xlu0 %v3907
      %v3909 = vpop.xlane.xlu0 %3908
      %v3910 = vsel %vm994, %v3825, 0.0
      %3911 = vadd.xlane.f32.xlu0 %v3910
      %v3912 = vpop.xlane.xlu0 %3911
      %v3913 = vsel %vm994, %v3827, 0.0
      %3914 = vadd.xlane.f32.xlu0 %v3913
      %v3915 = vpop.xlane.xlu0 %3914
      %v3916 = vsel %vm994, %v3829, 0.0
      %3917 = vadd.xlane.f32.xlu0 %v3916
      %v3918 = vpop.xlane.xlu0 %3917
      %v3919 = vsel %vm994, %v3831, 0.0
      %3920 = vadd.xlane.f32.xlu0 %v3919
      %v3921 = vpop.xlane.xlu0 %3920
      %v3922 = vsel %vm994, %v3833, 0.0
      %3923 = vadd.xlane.f32.xlu0 %v3922
      %v3924 = vpop.xlane.xlu0 %3923
      %v3925 = vsel %vm994, %v3835, 0.0
      %3926 = vadd.xlane.f32.xlu0 %v3925
      %v3927 = vpop.xlane.xlu0 %3926
      %v3928 = vsel %vm994, %v3837, 0.0
      %3929 = vadd.xlane.f32.xlu0 %v3928
      %v3930 = vpop.xlane.xlu0 %3929
      %v3931 = vsel %vm994, %v3839, 0.0
      %3932 = vadd.xlane.f32.xlu0 %v3931
      %v3933 = vpop.xlane.xlu0 %3932
      %v3934 = vsel %vm994, %v3841, 0.0
      %3935 = vadd.xlane.f32.xlu0 %v3934
      %v3936 = vpop.xlane.xlu0 %3935
      %v3937 = vsel %vm994, %v3843, 0.0
      %3938 = vadd.xlane.f32.xlu0 %v3937
      %v3939 = vpop.xlane.xlu0 %3938
      %v3940 = vrcp.pop %v3846
      %v3941 = vrcp.pop %v3849
      %v3942 = vrcp.pop %v3852
      %v3943 = vrcp.pop %v3855
      %v3944 = vrcp.pop %v3858
      %v3945 = vrcp.pop %v3861
      %v3946 = vrcp.pop %v3864
      %v3947 = vrcp.pop %v3867
      %v3948 = vrcp.pop %v3870
      %v3949 = vrcp.pop %v3873
      %v3950 = vrcp.pop %v3876
      %v3951 = vrcp.pop %v3879
      %v3952 = vrcp.pop %v3882
      %v3953 = vrcp.pop %v3885
      %v3954 = vrcp.pop %v3888
      %v3955 = vrcp.pop %v3891
      %v3956 = vrcp.pop %v3894
      %v3957 = vrcp.pop %v3897
      %v3958 = vrcp.pop %v3900
      %v3959 = vrcp.pop %v3903
      %v3960 = vrcp.pop %v3906
      %v3961 = vrcp.pop %v3909
      %v3962 = vrcp.pop %v3912
      %v3963 = vrcp.pop %v3915
      %v3964 = vrcp.pop %v3918
      %v3965 = vrcp.pop %v3921
      %v3966 = vrcp.pop %v3924
      %v3967 = vrcp.pop %v3927
      %v3968 = vrcp.pop %v3930
      %v3969 = vrcp.pop %v3933
      %v3970 = vrcp.pop %v3936
      %v3971 = vrcp.pop %v3939
      %v3972 = vpack.c.bf16 %v3781, %v3781
      %v3973 = vpack.c.bf16 %v3783, %v3783
      %v3974 = vpack.c.bf16 %v3785, %v3785
      %v3975 = vpack.c.bf16 %v3787, %v3787
      %v3976 = vpack.c.bf16 %v3789, %v3789
      %v3977 = vpack.c.bf16 %v3791, %v3791
      %v3978 = vpack.c.bf16 %v3793, %v3793
      %v3979 = vpack.c.bf16 %v3795, %v3795
      %v3980 = vpack.c.bf16 %v3797, %v3797
      %v3981 = vpack.c.bf16 %v3799, %v3799
      %v3982 = vpack.c.bf16 %v3801, %v3801
      %v3983 = vpack.c.bf16 %v3803, %v3803
      %v3984 = vpack.c.bf16 %v3805, %v3805
      %v3985 = vpack.c.bf16 %v3807, %v3807
      %v3986 = vpack.c.bf16 %v3809, %v3809
      %v3987 = vpack.c.bf16 %v3811, %v3811
      %v3988 = vpack.c.bf16 %v3813, %v3813
      %v3989 = vpack.c.bf16 %v3815, %v3815
      %v3990 = vpack.c.bf16 %v3817, %v3817
      %v3991 = vpack.c.bf16 %v3819, %v3819
      %v3992 = vpack.c.bf16 %v3821, %v3821
      %v3993 = vpack.c.bf16 %v3823, %v3823
      %v3994 = vpack.c.bf16 %v3825, %v3825
      %v3995 = vpack.c.bf16 %v3827, %v3827
      %v3996 = vpack.c.bf16 %v3829, %v3829
      %v3997 = vpack.c.bf16 %v3831, %v3831
      %v3998 = vpack.c.bf16 %v3833, %v3833
      %v3999 = vpack.c.bf16 %v3835, %v3835
      %v4000 = vpack.c.bf16 %v3837, %v3837
      %v4001 = vpack.c.bf16 %v3839, %v3839
      %v4002 = vpack.c.bf16 %v3841, %v3841
      %v4003 = vpack.c.bf16 %v3843, %v3843
      %v4006 = vunpack.c.l.b16 %v3972
      %v4007 = vunpack.c.l.b16 %v3973
      %v4008 = vpack.c.b16 %v4007, %v4006
      %4009 = vrot.lane.b32.xlu0 %v1976, 88
      %v4010 = vpop.permute.xlu0 %4009
      %v4013 = vsel %vm994, %v4008, 0
      %4015 = vmatpush.bf16.msra.mxu0 0
      %4016 = vmatpush.bf16.msra.mxu0 0
      %4017 = vmatpush.bf16.msra.mxu0 0
      %4018 = vmatpush.bf16.msra.mxu0 0
      %4019 = vmatpush.bf16.msra.mxu0 0
      %4020 = vmatpush.bf16.msra.mxu0 0
      %4021 = vmatpush.bf16.msra.mxu0 0
      %4022 = vmatpush.bf16.msra.mxu0 %v4010
      %4023 = vmatmul.bf16.gmra.mxu0 %v4013
      %v4024 = vpop.f32.mrf.mxu0
      %v4025 = vadd.f32 0.0, %v4024
      %v4026 = vpop.f32.mrf.mxu0
      %v4027 = vadd.f32 0.0, %v4026
      %4028 = vdwg.mxu0
      %v4031 = vunpack.c.l.b16 %v3974
      %v4032 = vunpack.c.l.b16 %v3975
      %v4033 = vpack.c.b16 %v4032, %v4031
      %4034 = vrot.lane.b32.xlu0 %v2003, 88
      %v4035 = vpop.permute.xlu0 %4034
      %v4038 = vsel %vm994, %v4033, 0
      %4040 = vmatpush.bf16.msra.mxu0 0
      %4041 = vmatpush.bf16.msra.mxu0 0
      %4042 = vmatpush.bf16.msra.mxu0 0
      %4043 = vmatpush.bf16.msra.mxu0 0
      %4044 = vmatpush.bf16.msra.mxu0 0
      %4045 = vmatpush.bf16.msra.mxu0 0
      %4046 = vmatpush.bf16.msra.mxu0 0
      %4047 = vmatpush.bf16.msra.mxu0 %v4035
      %4048 = vmatmul.bf16.gmra.mxu0 %v4038
      %v4049 = vpop.f32.mrf.mxu0
      %v4050 = vadd.f32 0.0, %v4049
      %v4051 = vpop.f32.mrf.mxu0
      %v4052 = vadd.f32 0.0, %v4051
      %4053 = vdwg.mxu0
      %v4056 = vunpack.c.l.b16 %v3976
      %v4057 = vunpack.c.l.b16 %v3977
      %v4058 = vpack.c.b16 %v4057, %v4056
      %4059 = vrot.lane.b32.xlu0 %v2030, 88
      %v4060 = vpop.permute.xlu0 %4059
      %v4063 = vsel %vm994, %v4058, 0
      %4065 = vmatpush.bf16.msra.mxu0 0
      %4066 = vmatpush.bf16.msra.mxu0 0
      %4067 = vmatpush.bf16.msra.mxu0 0
      %4068 = vmatpush.bf16.msra.mxu0 0
      %4069 = vmatpush.bf16.msra.mxu0 0
      %4070 = vmatpush.bf16.msra.mxu0 0
      %4071 = vmatpush.bf16.msra.mxu0 0
      %4072 = vmatpush.bf16.msra.mxu0 %v4060
      %4073 = vmatmul.bf16.gmra.mxu0 %v4063
      %v4074 = vpop.f32.mrf.mxu0
      %v4075 = vadd.f32 0.0, %v4074
      %v4076 = vpop.f32.mrf.mxu0
      %v4077 = vadd.f32 0.0, %v4076
      %4078 = vdwg.mxu0
      %v4081 = vunpack.c.l.b16 %v3978
      %v4082 = vunpack.c.l.b16 %v3979
      %v4083 = vpack.c.b16 %v4082, %v4081
      %4084 = vrot.lane.b32.xlu0 %v2057, 88
      %v4085 = vpop.permute.xlu0 %4084
      %v4088 = vsel %vm994, %v4083, 0
      %4090 = vmatpush.bf16.msra.mxu0 0
      %4091 = vmatpush.bf16.msra.mxu0 0
      %4092 = vmatpush.bf16.msra.mxu0 0
      %4093 = vmatpush.bf16.msra.mxu0 0
      %4094 = vmatpush.bf16.msra.mxu0 0
      %4095 = vmatpush.bf16.msra.mxu0 0
      %4096 = vmatpush.bf16.msra.mxu0 0
      %4097 = vmatpush.bf16.msra.mxu0 %v4085
      %4098 = vmatmul.bf16.gmra.mxu0 %v4088
      %v4099 = vpop.f32.mrf.mxu0
      %v4100 = vadd.f32 0.0, %v4099
      %v4101 = vpop.f32.mrf.mxu0
      %v4102 = vadd.f32 0.0, %v4101
      %4103 = vdwg.mxu0
      %v4106 = vunpack.c.l.b16 %v3980
      %v4107 = vunpack.c.l.b16 %v3981
      %v4108 = vpack.c.b16 %v4107, %v4106
      %4109 = vrot.lane.b32.xlu0 %v2084, 88
      %v4110 = vpop.permute.xlu0 %4109
      %v4113 = vsel %vm994, %v4108, 0
      %4115 = vmatpush.bf16.msra.mxu0 0
      %4116 = vmatpush.bf16.msra.mxu0 0
      %4117 = vmatpush.bf16.msra.mxu0 0
      %4118 = vmatpush.bf16.msra.mxu0 0
      %4119 = vmatpush.bf16.msra.mxu0 0
      %4120 = vmatpush.bf16.msra.mxu0 0
      %4121 = vmatpush.bf16.msra.mxu0 0
      %4122 = vmatpush.bf16.msra.mxu0 %v4110
      %4123 = vmatmul.bf16.gmra.mxu0 %v4113
      %v4124 = vpop.f32.mrf.mxu0
      %v4125 = vadd.f32 0.0, %v4124
      %v4126 = vpop.f32.mrf.mxu0
      %v4127 = vadd.f32 0.0, %v4126
      %4128 = vdwg.mxu0
      %v4131 = vunpack.c.l.b16 %v3982
      %v4132 = vunpack.c.l.b16 %v3983
      %v4133 = vpack.c.b16 %v4132, %v4131
      %4134 = vrot.lane.b32.xlu0 %v2111, 88
      %v4135 = vpop.permute.xlu0 %4134
      %v4138 = vsel %vm994, %v4133, 0
      %4140 = vmatpush.bf16.msra.mxu0 0
      %4141 = vmatpush.bf16.msra.mxu0 0
      %4142 = vmatpush.bf16.msra.mxu0 0
      %4143 = vmatpush.bf16.msra.mxu0 0
      %4144 = vmatpush.bf16.msra.mxu0 0
      %4145 = vmatpush.bf16.msra.mxu0 0
      %4146 = vmatpush.bf16.msra.mxu0 0
      %4147 = vmatpush.bf16.msra.mxu0 %v4135
      %4148 = vmatmul.bf16.gmra.mxu0 %v4138
      %v4149 = vpop.f32.mrf.mxu0
      %v4150 = vadd.f32 0.0, %v4149
      %v4151 = vpop.f32.mrf.mxu0
      %v4152 = vadd.f32 0.0, %v4151
      %4153 = vdwg.mxu0
      %v4156 = vunpack.c.l.b16 %v3984
      %v4157 = vunpack.c.l.b16 %v3985
      %v4158 = vpack.c.b16 %v4157, %v4156
      %4159 = vrot.lane.b32.xlu0 %v2138, 88
      %v4160 = vpop.permute.xlu0 %4159
      %v4163 = vsel %vm994, %v4158, 0
      %4165 = vmatpush.bf16.msra.mxu0 0
      %4166 = vmatpush.bf16.msra.mxu0 0
      %4167 = vmatpush.bf16.msra.mxu0 0
      %4168 = vmatpush.bf16.msra.mxu0 0
      %4169 = vmatpush.bf16.msra.mxu0 0
      %4170 = vmatpush.bf16.msra.mxu0 0
      %4171 = vmatpush.bf16.msra.mxu0 0
      %4172 = vmatpush.bf16.msra.mxu0 %v4160
      %4173 = vmatmul.bf16.gmra.mxu0 %v4163
      %v4174 = vpop.f32.mrf.mxu0
      %v4175 = vadd.f32 0.0, %v4174
      %v4176 = vpop.f32.mrf.mxu0
      %v4177 = vadd.f32 0.0, %v4176
      %4178 = vdwg.mxu0
      %v4181 = vunpack.c.l.b16 %v3986
      %v4182 = vunpack.c.l.b16 %v3987
      %v4183 = vpack.c.b16 %v4182, %v4181
      %4184 = vrot.lane.b32.xlu0 %v2165, 88
      %v4185 = vpop.permute.xlu0 %4184
      %v4188 = vsel %vm994, %v4183, 0
      %4190 = vmatpush.bf16.msra.mxu0 0
      %4191 = vmatpush.bf16.msra.mxu0 0
      %4192 = vmatpush.bf16.msra.mxu0 0
      %4193 = vmatpush.bf16.msra.mxu0 0
      %4194 = vmatpush.bf16.msra.mxu0 0
      %4195 = vmatpush.bf16.msra.mxu0 0
      %4196 = vmatpush.bf16.msra.mxu0 0
      %4197 = vmatpush.bf16.msra.mxu0 %v4185
      %4198 = vmatmul.bf16.gmra.mxu0 %v4188
      %v4199 = vpop.f32.mrf.mxu0
      %v4200 = vadd.f32 0.0, %v4199
      %v4201 = vpop.f32.mrf.mxu0
      %v4202 = vadd.f32 0.0, %v4201
      %4203 = vdwg.mxu0
      %v4206 = vunpack.c.l.b16 %v3988
      %v4207 = vunpack.c.l.b16 %v3989
      %v4208 = vpack.c.b16 %v4207, %v4206
      %4209 = vrot.lane.b32.xlu0 %v2192, 88
      %v4210 = vpop.permute.xlu0 %4209
      %v4213 = vsel %vm994, %v4208, 0
      %4215 = vmatpush.bf16.msra.mxu0 0
      %4216 = vmatpush.bf16.msra.mxu0 0
      %4217 = vmatpush.bf16.msra.mxu0 0
      %4218 = vmatpush.bf16.msra.mxu0 0
      %4219 = vmatpush.bf16.msra.mxu0 0
      %4220 = vmatpush.bf16.msra.mxu0 0
      %4221 = vmatpush.bf16.msra.mxu0 0
      %4222 = vmatpush.bf16.msra.mxu0 %v4210
      %4223 = vmatmul.bf16.gmra.mxu0 %v4213
      %v4224 = vpop.f32.mrf.mxu0
      %v4225 = vadd.f32 0.0, %v4224
      %v4226 = vpop.f32.mrf.mxu0
      %v4227 = vadd.f32 0.0, %v4226
      %4228 = vdwg.mxu0
      %v4231 = vunpack.c.l.b16 %v3990
      %v4232 = vunpack.c.l.b16 %v3991
      %v4233 = vpack.c.b16 %v4232, %v4231
      %4234 = vrot.lane.b32.xlu0 %v2219, 88
      %v4235 = vpop.permute.xlu0 %4234
      %v4238 = vsel %vm994, %v4233, 0
      %4240 = vmatpush.bf16.msra.mxu0 0
      %4241 = vmatpush.bf16.msra.mxu0 0
      %4242 = vmatpush.bf16.msra.mxu0 0
      %4243 = vmatpush.bf16.msra.mxu0 0
      %4244 = vmatpush.bf16.msra.mxu0 0
      %4245 = vmatpush.bf16.msra.mxu0 0
      %4246 = vmatpush.bf16.msra.mxu0 0
      %4247 = vmatpush.bf16.msra.mxu0 %v4235
      %4248 = vmatmul.bf16.gmra.mxu0 %v4238
      %v4249 = vpop.f32.mrf.mxu0
      %v4250 = vadd.f32 0.0, %v4249
      %v4251 = vpop.f32.mrf.mxu0
      %v4252 = vadd.f32 0.0, %v4251
      %4253 = vdwg.mxu0
      %v4256 = vunpack.c.l.b16 %v3992
      %v4257 = vunpack.c.l.b16 %v3993
      %v4258 = vpack.c.b16 %v4257, %v4256
      %4259 = vrot.lane.b32.xlu0 %v2246, 88
      %v4260 = vpop.permute.xlu0 %4259
      %v4263 = vsel %vm994, %v4258, 0
      %4265 = vmatpush.bf16.msra.mxu0 0
      %4266 = vmatpush.bf16.msra.mxu0 0
      %4267 = vmatpush.bf16.msra.mxu0 0
      %4268 = vmatpush.bf16.msra.mxu0 0
      %4269 = vmatpush.bf16.msra.mxu0 0
      %4270 = vmatpush.bf16.msra.mxu0 0
      %4271 = vmatpush.bf16.msra.mxu0 0
      %4272 = vmatpush.bf16.msra.mxu0 %v4260
      %4273 = vmatmul.bf16.gmra.mxu0 %v4263
      %v4274 = vpop.f32.mrf.mxu0
      %v4275 = vadd.f32 0.0, %v4274
      %v4276 = vpop.f32.mrf.mxu0
      %v4277 = vadd.f32 0.0, %v4276
      %4278 = vdwg.mxu0
      %v4281 = vunpack.c.l.b16 %v3994
      %v4282 = vunpack.c.l.b16 %v3995
      %v4283 = vpack.c.b16 %v4282, %v4281
      %4284 = vrot.lane.b32.xlu0 %v2273, 88
      %v4285 = vpop.permute.xlu0 %4284
      %v4288 = vsel %vm994, %v4283, 0
      %4290 = vmatpush.bf16.msra.mxu0 0
      %4291 = vmatpush.bf16.msra.mxu0 0
      %4292 = vmatpush.bf16.msra.mxu0 0
      %4293 = vmatpush.bf16.msra.mxu0 0
      %4294 = vmatpush.bf16.msra.mxu0 0
      %4295 = vmatpush.bf16.msra.mxu0 0
      %4296 = vmatpush.bf16.msra.mxu0 0
      %4297 = vmatpush.bf16.msra.mxu0 %v4285
      %4298 = vmatmul.bf16.gmra.mxu0 %v4288
      %v4299 = vpop.f32.mrf.mxu0
      %v4300 = vadd.f32 0.0, %v4299
      %v4301 = vpop.f32.mrf.mxu0
      %v4302 = vadd.f32 0.0, %v4301
      %4303 = vdwg.mxu0
      %v4306 = vunpack.c.l.b16 %v3996
      %v4307 = vunpack.c.l.b16 %v3997
      %v4308 = vpack.c.b16 %v4307, %v4306
      %4309 = vrot.lane.b32.xlu0 %v2300, 88
      %v4310 = vpop.permute.xlu0 %4309
      %v4313 = vsel %vm994, %v4308, 0
      %4315 = vmatpush.bf16.msra.mxu0 0
      %4316 = vmatpush.bf16.msra.mxu0 0
      %4317 = vmatpush.bf16.msra.mxu0 0
      %4318 = vmatpush.bf16.msra.mxu0 0
      %4319 = vmatpush.bf16.msra.mxu0 0
      %4320 = vmatpush.bf16.msra.mxu0 0
      %4321 = vmatpush.bf16.msra.mxu0 0
      %4322 = vmatpush.bf16.msra.mxu0 %v4310
      %4323 = vmatmul.bf16.gmra.mxu0 %v4313
      %v4324 = vpop.f32.mrf.mxu0
      %v4325 = vadd.f32 0.0, %v4324
      %v4326 = vpop.f32.mrf.mxu0
      %v4327 = vadd.f32 0.0, %v4326
      %4328 = vdwg.mxu0
      %v4331 = vunpack.c.l.b16 %v3998
      %v4332 = vunpack.c.l.b16 %v3999
      %v4333 = vpack.c.b16 %v4332, %v4331
      %4334 = vrot.lane.b32.xlu0 %v2327, 88
      %v4335 = vpop.permute.xlu0 %4334
      %v4338 = vsel %vm994, %v4333, 0
      %4340 = vmatpush.bf16.msra.mxu0 0
      %4341 = vmatpush.bf16.msra.mxu0 0
      %4342 = vmatpush.bf16.msra.mxu0 0
      %4343 = vmatpush.bf16.msra.mxu0 0
      %4344 = vmatpush.bf16.msra.mxu0 0
      %4345 = vmatpush.bf16.msra.mxu0 0
      %4346 = vmatpush.bf16.msra.mxu0 0
      %4347 = vmatpush.bf16.msra.mxu0 %v4335
      %4348 = vmatmul.bf16.gmra.mxu0 %v4338
      %v4349 = vpop.f32.mrf.mxu0
      %v4350 = vadd.f32 0.0, %v4349
      %v4351 = vpop.f32.mrf.mxu0
      %v4352 = vadd.f32 0.0, %v4351
      %4353 = vdwg.mxu0
      %v4356 = vunpack.c.l.b16 %v4000
      %v4357 = vunpack.c.l.b16 %v4001
      %v4358 = vpack.c.b16 %v4357, %v4356
      %4359 = vrot.lane.b32.xlu0 %v2354, 88
      %v4360 = vpop.permute.xlu0 %4359
      %v4363 = vsel %vm994, %v4358, 0
      %4365 = vmatpush.bf16.msra.mxu0 0
      %4366 = vmatpush.bf16.msra.mxu0 0
      %4367 = vmatpush.bf16.msra.mxu0 0
      %4368 = vmatpush.bf16.msra.mxu0 0
      %4369 = vmatpush.bf16.msra.mxu0 0
      %4370 = vmatpush.bf16.msra.mxu0 0
      %4371 = vmatpush.bf16.msra.mxu0 0
      %4372 = vmatpush.bf16.msra.mxu0 %v4360
      %4373 = vmatmul.bf16.gmra.mxu0 %v4363
      %v4374 = vpop.f32.mrf.mxu0
      %v4375 = vadd.f32 0.0, %v4374
      %v4376 = vpop.f32.mrf.mxu0
      %v4377 = vadd.f32 0.0, %v4376
      %4378 = vdwg.mxu0
      %v4381 = vunpack.c.l.b16 %v4002
      %v4382 = vunpack.c.l.b16 %v4003
      %v4383 = vpack.c.b16 %v4382, %v4381
      %4384 = vrot.lane.b32.xlu0 %v2381, 88
      %v4385 = vpop.permute.xlu0 %4384
      %v4388 = vsel %vm994, %v4383, 0
      %4390 = vmatpush.bf16.msra.mxu0 0
      %4391 = vmatpush.bf16.msra.mxu0 0
      %4392 = vmatpush.bf16.msra.mxu0 0
      %4393 = vmatpush.bf16.msra.mxu0 0
      %4394 = vmatpush.bf16.msra.mxu0 0
      %4395 = vmatpush.bf16.msra.mxu0 0
      %4396 = vmatpush.bf16.msra.mxu0 0
      %4397 = vmatpush.bf16.msra.mxu0 %v4385
      %4398 = vmatmul.bf16.gmra.mxu0 %v4388
      %v4399 = vpop.f32.mrf.mxu0
      %v4400 = vadd.f32 0.0, %v4399
      %v4401 = vpop.f32.mrf.mxu0
      %v4402 = vadd.f32 0.0, %v4401
      %4403 = vdwg.mxu0
      %v4404 = vmul.f32 %v4025, %v3940
      %v4405 = vmul.f32 %v4027, %v3941
      %v4406 = vmul.f32 %v4050, %v3942
      %v4407 = vmul.f32 %v4052, %v3943
      %v4408 = vmul.f32 %v4075, %v3944
      %v4409 = vmul.f32 %v4077, %v3945
      %v4410 = vmul.f32 %v4100, %v3946
      %v4411 = vmul.f32 %v4102, %v3947
      %v4412 = vmul.f32 %v4125, %v3948
      %v4413 = vmul.f32 %v4127, %v3949
      %v4414 = vmul.f32 %v4150, %v3950
      %v4415 = vmul.f32 %v4152, %v3951
      %v4416 = vmul.f32 %v4175, %v3952
      %v4417 = vmul.f32 %v4177, %v3953
      %v4418 = vmul.f32 %v4200, %v3954
      %v4419 = vmul.f32 %v4202, %v3955
      %v4420 = vmul.f32 %v4225, %v3956
      %v4421 = vmul.f32 %v4227, %v3957
      %v4422 = vmul.f32 %v4250, %v3958
      %v4423 = vmul.f32 %v4252, %v3959
      %v4424 = vmul.f32 %v4275, %v3960
      %v4425 = vmul.f32 %v4277, %v3961
      %v4426 = vmul.f32 %v4300, %v3962
      %v4427 = vmul.f32 %v4302, %v3963
      %v4428 = vmul.f32 %v4325, %v3964
      %v4429 = vmul.f32 %v4327, %v3965
      %v4430 = vmul.f32 %v4350, %v3966
      %v4431 = vmul.f32 %v4352, %v3967
      %v4432 = vmul.f32 %v4375, %v3968
      %v4433 = vmul.f32 %v4377, %v3969
      %v4434 = vmul.f32 %v4400, %v3970
      %v4435 = vmul.f32 %v4402, %v3971
      %v4436 = vpack.c.bf16 %v4405, %v4404
      %v4437 = vpack.c.bf16 %v4407, %v4406
      %v4438 = vpack.c.bf16 %v4409, %v4408
      %v4439 = vpack.c.bf16 %v4411, %v4410
      %v4440 = vpack.c.bf16 %v4413, %v4412
      %v4441 = vpack.c.bf16 %v4415, %v4414
      %v4442 = vpack.c.bf16 %v4417, %v4416
      %v4443 = vpack.c.bf16 %v4419, %v4418
      %v4444 = vpack.c.bf16 %v4421, %v4420
      %v4445 = vpack.c.bf16 %v4423, %v4422
      %v4446 = vpack.c.bf16 %v4425, %v4424
      %v4447 = vpack.c.bf16 %v4427, %v4426
      %v4448 = vpack.c.bf16 %v4429, %v4428
      %v4449 = vpack.c.bf16 %v4431, %v4430
      %v4450 = vpack.c.bf16 %v4433, %v4432
      %v4451 = vpack.c.bf16 %v4435, %v4434
      %v4453 = vsel %vm810, %v4436, 0
      %v4456 = vsel %vm810, %v4437, 0
      %v4459 = vsel %vm810, %v4438, 0
      %v4462 = vsel %vm810, %v4439, 0
      %v4465 = vsel %vm810, %v4440, 0
      %v4468 = vsel %vm810, %v4441, 0
      %v4471 = vsel %vm810, %v4442, 0
      %v4474 = vsel %vm810, %v4443, 0
      %v4477 = vsel %vm810, %v4444, 0
      %v4480 = vsel %vm810, %v4445, 0
      %v4483 = vsel %vm810, %v4446, 0
      %v4486 = vsel %vm810, %v4447, 0
      %v4489 = vsel %vm810, %v4448, 0
      %v4492 = vsel %vm810, %v4449, 0
      %v4495 = vsel %vm810, %v4450, 0
      %v4498 = vsel %vm810, %v4451, 0
      %v4501 = vsel %vm859, %v992, 0
      %4503 = vmatpush.bf16.msra.mxu0 0
      %4504 = vmatpush.bf16.msra.mxu0 0
      %4505 = vmatpush.bf16.msra.mxu0 0
      %4506 = vmatpush.bf16.msra.mxu0 0
      %4507 = vmatpush.bf16.msra.mxu0 0
      %4508 = vmatpush.bf16.msra.mxu0 0
      %4509 = vmatpush.bf16.msra.mxu0 0
      %4510 = vmatpush.bf16.msra.mxu0 %v4501
      %4511 = vmatmul.bf16.gmra.mxu0 %v4453
      %v4512 = vpop.f32.mrf.mxu0
      %v4513 = vadd.f32 0.0, %v4512
      %v4514 = vpop.f32.mrf.mxu0
      %v4515 = vadd.f32 0.0, %v4514
      %4516 = vmatmul.bf16.gmra.mxu0 %v4456
      %v4517 = vpop.f32.mrf.mxu0
      %v4518 = vadd.f32 0.0, %v4517
      %v4519 = vpop.f32.mrf.mxu0
      %v4520 = vadd.f32 0.0, %v4519
      %4521 = vmatmul.bf16.gmra.mxu0 %v4459
      %v4522 = vpop.f32.mrf.mxu0
      %v4523 = vadd.f32 0.0, %v4522
      %v4524 = vpop.f32.mrf.mxu0
      %v4525 = vadd.f32 0.0, %v4524
      %4526 = vmatmul.bf16.gmra.mxu0 %v4462
      %v4527 = vpop.f32.mrf.mxu0
      %v4528 = vadd.f32 0.0, %v4527
      %v4529 = vpop.f32.mrf.mxu0
      %v4530 = vadd.f32 0.0, %v4529
      %4531 = vmatmul.bf16.gmra.mxu0 %v4465
      %v4532 = vpop.f32.mrf.mxu0
      %v4533 = vadd.f32 0.0, %v4532
      %v4534 = vpop.f32.mrf.mxu0
      %v4535 = vadd.f32 0.0, %v4534
      %4536 = vmatmul.bf16.gmra.mxu0 %v4468
      %v4537 = vpop.f32.mrf.mxu0
      %v4538 = vadd.f32 0.0, %v4537
      %v4539 = vpop.f32.mrf.mxu0
      %v4540 = vadd.f32 0.0, %v4539
      %4541 = vmatmul.bf16.gmra.mxu0 %v4471
      %v4542 = vpop.f32.mrf.mxu0
      %v4543 = vadd.f32 0.0, %v4542
      %v4544 = vpop.f32.mrf.mxu0
      %v4545 = vadd.f32 0.0, %v4544
      %4546 = vmatmul.bf16.gmra.mxu0 %v4474
      %v4547 = vpop.f32.mrf.mxu0
      %v4548 = vadd.f32 0.0, %v4547
      %v4549 = vpop.f32.mrf.mxu0
      %v4550 = vadd.f32 0.0, %v4549
      %4551 = vmatmul.bf16.gmra.mxu0 %v4477
      %v4552 = vpop.f32.mrf.mxu0
      %v4553 = vadd.f32 0.0, %v4552
      %v4554 = vpop.f32.mrf.mxu0
      %v4555 = vadd.f32 0.0, %v4554
      %4556 = vmatmul.bf16.gmra.mxu0 %v4480
      %v4557 = vpop.f32.mrf.mxu0
      %v4558 = vadd.f32 0.0, %v4557
      %v4559 = vpop.f32.mrf.mxu0
      %v4560 = vadd.f32 0.0, %v4559
      %4561 = vmatmul.bf16.gmra.mxu0 %v4483
      %v4562 = vpop.f32.mrf.mxu0
      %v4563 = vadd.f32 0.0, %v4562
      %v4564 = vpop.f32.mrf.mxu0
      %v4565 = vadd.f32 0.0, %v4564
      %4566 = vmatmul.bf16.gmra.mxu0 %v4486
      %v4567 = vpop.f32.mrf.mxu0
      %v4568 = vadd.f32 0.0, %v4567
      %v4569 = vpop.f32.mrf.mxu0
      %v4570 = vadd.f32 0.0, %v4569
      %4571 = vmatmul.bf16.gmra.mxu0 %v4489
      %v4572 = vpop.f32.mrf.mxu0
      %v4573 = vadd.f32 0.0, %v4572
      %v4574 = vpop.f32.mrf.mxu0
      %v4575 = vadd.f32 0.0, %v4574
      %4576 = vmatmul.bf16.gmra.mxu0 %v4492
      %v4577 = vpop.f32.mrf.mxu0
      %v4578 = vadd.f32 0.0, %v4577
      %v4579 = vpop.f32.mrf.mxu0
      %v4580 = vadd.f32 0.0, %v4579
      %4581 = vmatmul.bf16.gmra.mxu0 %v4495
      %v4582 = vpop.f32.mrf.mxu0
      %v4583 = vadd.f32 0.0, %v4582
      %v4584 = vpop.f32.mrf.mxu0
      %v4585 = vadd.f32 0.0, %v4584
      %4586 = vmatmul.bf16.gmra.mxu0 %v4498
      %v4587 = vpop.f32.mrf.mxu0
      %v4588 = vadd.f32 0.0, %v4587
      %v4589 = vpop.f32.mrf.mxu0
      %v4590 = vadd.f32 0.0, %v4589
      %4591 = vdwg.mxu0
      %v4593 = vsel %vm810, %v3220, 0
      %v4596 = vsel %vm810, %v3221, 0
      %v4599 = vsel %vm810, %v3222, 0
      %v4602 = vsel %vm810, %v3223, 0
      %v4605 = vsel %vm810, %v3224, 0
      %v4608 = vsel %vm810, %v3225, 0
      %v4611 = vsel %vm810, %v3226, 0
      %v4614 = vsel %vm810, %v3227, 0
      %v4617 = vsel %vm810, %v3228, 0
      %v4620 = vsel %vm810, %v3229, 0
      %v4623 = vsel %vm810, %v3230, 0
      %v4626 = vsel %vm810, %v3231, 0
      %v4629 = vsel %vm810, %v3232, 0
      %v4632 = vsel %vm810, %v3233, 0
      %v4635 = vsel %vm810, %v3234, 0
      %v4638 = vsel %vm810, %v3235, 0
      %v4641 = vsel %vm859, %v991, 0
      %4643 = vmatpush.bf16.msra.mxu0 0
      %4644 = vmatpush.bf16.msra.mxu0 0
      %4645 = vmatpush.bf16.msra.mxu0 0
      %4646 = vmatpush.bf16.msra.mxu0 0
      %4647 = vmatpush.bf16.msra.mxu0 0
      %4648 = vmatpush.bf16.msra.mxu0 0
      %4649 = vmatpush.bf16.msra.mxu0 0
      %4650 = vmatpush.bf16.msra.mxu0 %v4641
      %4651 = vmatmul.bf16.gmra.mxu0 %v4593
      %v4652 = vpop.f32.mrf.mxu0
      %v4653 = vadd.f32 %v4513, %v4652
      %v4654 = vpop.f32.mrf.mxu0
      %v4655 = vadd.f32 %v4515, %v4654
      %4656 = vmatmul.bf16.gmra.mxu0 %v4596
      %v4657 = vpop.f32.mrf.mxu0
      %v4658 = vadd.f32 %v4518, %v4657
      %v4659 = vpop.f32.mrf.mxu0
      %v4660 = vadd.f32 %v4520, %v4659
      %4661 = vmatmul.bf16.gmra.mxu0 %v4599
      %v4662 = vpop.f32.mrf.mxu0
      %v4663 = vadd.f32 %v4523, %v4662
      %v4664 = vpop.f32.mrf.mxu0
      %v4665 = vadd.f32 %v4525, %v4664
      %4666 = vmatmul.bf16.gmra.mxu0 %v4602
      %v4667 = vpop.f32.mrf.mxu0
      %v4668 = vadd.f32 %v4528, %v4667
      %v4669 = vpop.f32.mrf.mxu0
      %v4670 = vadd.f32 %v4530, %v4669
      %4671 = vmatmul.bf16.gmra.mxu0 %v4605
      %v4672 = vpop.f32.mrf.mxu0
      %v4673 = vadd.f32 %v4533, %v4672
      %v4674 = vpop.f32.mrf.mxu0
      %v4675 = vadd.f32 %v4535, %v4674
      %4676 = vmatmul.bf16.gmra.mxu0 %v4608
      %v4677 = vpop.f32.mrf.mxu0
      %v4678 = vadd.f32 %v4538, %v4677
      %v4679 = vpop.f32.mrf.mxu0
      %v4680 = vadd.f32 %v4540, %v4679
      %4681 = vmatmul.bf16.gmra.mxu0 %v4611
      %v4682 = vpop.f32.mrf.mxu0
      %v4683 = vadd.f32 %v4543, %v4682
      %v4684 = vpop.f32.mrf.mxu0
      %v4685 = vadd.f32 %v4545, %v4684
      %4686 = vmatmul.bf16.gmra.mxu0 %v4614
      %v4687 = vpop.f32.mrf.mxu0
      %v4688 = vadd.f32 %v4548, %v4687
      %v4689 = vpop.f32.mrf.mxu0
      %v4690 = vadd.f32 %v4550, %v4689
      %4691 = vmatmul.bf16.gmra.mxu0 %v4617
      %v4692 = vpop.f32.mrf.mxu0
      %v4693 = vadd.f32 %v4553, %v4692
      %v4694 = vpop.f32.mrf.mxu0
      %v4695 = vadd.f32 %v4555, %v4694
      %4696 = vmatmul.bf16.gmra.mxu0 %v4620
      %v4697 = vpop.f32.mrf.mxu0
      %v4698 = vadd.f32 %v4558, %v4697
      %v4699 = vpop.f32.mrf.mxu0
      %v4700 = vadd.f32 %v4560, %v4699
      %4701 = vmatmul.bf16.gmra.mxu0 %v4623
      %v4702 = vpop.f32.mrf.mxu0
      %v4703 = vadd.f32 %v4563, %v4702
      %v4704 = vpop.f32.mrf.mxu0
      %v4705 = vadd.f32 %v4565, %v4704
      %4706 = vmatmul.bf16.gmra.mxu0 %v4626
      %v4707 = vpop.f32.mrf.mxu0
      %v4708 = vadd.f32 %v4568, %v4707
      %v4709 = vpop.f32.mrf.mxu0
      %v4710 = vadd.f32 %v4570, %v4709
      %4711 = vmatmul.bf16.gmra.mxu0 %v4629
      %v4712 = vpop.f32.mrf.mxu0
      %v4713 = vadd.f32 %v4573, %v4712
      %v4714 = vpop.f32.mrf.mxu0
      %v4715 = vadd.f32 %v4575, %v4714
      %4716 = vmatmul.bf16.gmra.mxu0 %v4632
      %v4717 = vpop.f32.mrf.mxu0
      %v4718 = vadd.f32 %v4578, %v4717
      %v4719 = vpop.f32.mrf.mxu0
      %v4720 = vadd.f32 %v4580, %v4719
      %4721 = vmatmul.bf16.gmra.mxu0 %v4635
      %v4722 = vpop.f32.mrf.mxu0
      %v4723 = vadd.f32 %v4583, %v4722
      %v4724 = vpop.f32.mrf.mxu0
      %v4725 = vadd.f32 %v4585, %v4724
      %4726 = vmatmul.bf16.gmra.mxu0 %v4638
      %v4727 = vpop.f32.mrf.mxu0
      %v4728 = vadd.f32 %v4588, %v4727
      %v4729 = vpop.f32.mrf.mxu0
      %v4730 = vadd.f32 %v4590, %v4729
      %4731 = vdwg.mxu0
      %v4732 = vadd.f32 %v956, %v4653
      %v4733 = vadd.f32 %v957, %v4655
      %v4734 = vadd.f32 %v958, %v4658
      %v4735 = vadd.f32 %v959, %v4660
      %v4736 = vadd.f32 %v960, %v4663
      %v4737 = vadd.f32 %v961, %v4665
      %v4738 = vadd.f32 %v962, %v4668
      %v4739 = vadd.f32 %v963, %v4670
      %v4740 = vadd.f32 %v964, %v4673
      %v4741 = vadd.f32 %v965, %v4675
      %v4742 = vadd.f32 %v966, %v4678
      %v4743 = vadd.f32 %v967, %v4680
      %v4744 = vadd.f32 %v968, %v4683
      %v4745 = vadd.f32 %v969, %v4685
      %v4746 = vadd.f32 %v970, %v4688
      %v4747 = vadd.f32 %v971, %v4690
      %v4748 = vadd.f32 %v972, %v4693
      %v4749 = vadd.f32 %v973, %v4695
      %v4750 = vadd.f32 %v974, %v4698
      %v4751 = vadd.f32 %v975, %v4700
      %v4752 = vadd.f32 %v976, %v4703
      %v4753 = vadd.f32 %v977, %v4705
      %v4754 = vadd.f32 %v978, %v4708
      %v4755 = vadd.f32 %v979, %v4710
      %v4756 = vadd.f32 %v980, %v4713
      %v4757 = vadd.f32 %v981, %v4715
      %v4758 = vadd.f32 %v982, %v4718
      %v4759 = vadd.f32 %v983, %v4720
      %v4760 = vadd.f32 %v984, %v4723
      %v4761 = vadd.f32 %v985, %v4725
      %v4762 = vadd.f32 %v986, %v4728
      %v4763 = vadd.f32 %v987, %v4730
      %v4765 = vperm.slane %v993, 0
      %v4767 = vadd.f32 %v4732, %v4765
      %v4768 = vadd.f32 %v4733, %v4765
      %v4769 = vadd.f32 %v4734, %v4765
      %v4770 = vadd.f32 %v4735, %v4765
      %v4771 = vadd.f32 %v4736, %v4765
      %v4772 = vadd.f32 %v4737, %v4765
      %v4773 = vadd.f32 %v4738, %v4765
      %v4774 = vadd.f32 %v4739, %v4765
      %v4775 = vadd.f32 %v4740, %v4765
      %v4776 = vadd.f32 %v4741, %v4765
      %v4777 = vadd.f32 %v4742, %v4765
      %v4778 = vadd.f32 %v4743, %v4765
      %v4779 = vadd.f32 %v4744, %v4765
      %v4780 = vadd.f32 %v4745, %v4765
      %v4781 = vadd.f32 %v4746, %v4765
      %v4782 = vadd.f32 %v4747, %v4765
      %v4783 = vadd.f32 %v4748, %v4765
      %v4784 = vadd.f32 %v4749, %v4765
      %v4785 = vadd.f32 %v4750, %v4765
      %v4786 = vadd.f32 %v4751, %v4765
      %v4787 = vadd.f32 %v4752, %v4765
      %v4788 = vadd.f32 %v4753, %v4765
      %v4789 = vadd.f32 %v4754, %v4765
      %v4790 = vadd.f32 %v4755, %v4765
      %v4791 = vadd.f32 %v4756, %v4765
      %v4792 = vadd.f32 %v4757, %v4765
      %v4793 = vadd.f32 %v4758, %v4765
      %v4794 = vadd.f32 %v4759, %v4765
      %v4795 = vadd.f32 %v4760, %v4765
      %v4796 = vadd.f32 %v4761, %v4765
      %v4797 = vadd.f32 %v4762, %v4765
      %v4798 = vadd.f32 %v4763, %v4765
      %v4799 = vsel %vm994, %v4767, 0.0
      %4800 = vadd.xlane.f32.xlu0 %v4799
      %v4801 = vpop.xlane.xlu0 %4800
      %v4802 = vsel %vm994, %v4768, 0.0
      %4803 = vadd.xlane.f32.xlu0 %v4802
      %v4804 = vpop.xlane.xlu0 %4803
      %v4805 = vsel %vm994, %v4769, 0.0
      %4806 = vadd.xlane.f32.xlu0 %v4805
      %v4807 = vpop.xlane.xlu0 %4806
      %v4808 = vsel %vm994, %v4770, 0.0
      %4809 = vadd.xlane.f32.xlu0 %v4808
      %v4810 = vpop.xlane.xlu0 %4809
      %v4811 = vsel %vm994, %v4771, 0.0
      %4812 = vadd.xlane.f32.xlu0 %v4811
      %v4813 = vpop.xlane.xlu0 %4812
      %v4814 = vsel %vm994, %v4772, 0.0
      %4815 = vadd.xlane.f32.xlu0 %v4814
      %v4816 = vpop.xlane.xlu0 %4815
      %v4817 = vsel %vm994, %v4773, 0.0
      %4818 = vadd.xlane.f32.xlu0 %v4817
      %v4819 = vpop.xlane.xlu0 %4818
      %v4820 = vsel %vm994, %v4774, 0.0
      %4821 = vadd.xlane.f32.xlu0 %v4820
      %v4822 = vpop.xlane.xlu0 %4821
      %v4823 = vsel %vm994, %v4775, 0.0
      %4824 = vadd.xlane.f32.xlu0 %v4823
      %v4825 = vpop.xlane.xlu0 %4824
      %v4826 = vsel %vm994, %v4776, 0.0
      %4827 = vadd.xlane.f32.xlu0 %v4826
      %v4828 = vpop.xlane.xlu0 %4827
      %v4829 = vsel %vm994, %v4777, 0.0
      %4830 = vadd.xlane.f32.xlu0 %v4829
      %v4831 = vpop.xlane.xlu0 %4830
      %v4832 = vsel %vm994, %v4778, 0.0
      %4833 = vadd.xlane.f32.xlu0 %v4832
      %v4834 = vpop.xlane.xlu0 %4833
      %v4835 = vsel %vm994, %v4779, 0.0
      %4836 = vadd.xlane.f32.xlu0 %v4835
      %v4837 = vpop.xlane.xlu0 %4836
      %v4838 = vsel %vm994, %v4780, 0.0
      %4839 = vadd.xlane.f32.xlu0 %v4838
      %v4840 = vpop.xlane.xlu0 %4839
      %v4841 = vsel %vm994, %v4781, 0.0
      %4842 = vadd.xlane.f32.xlu0 %v4841
      %v4843 = vpop.xlane.xlu0 %4842
      %v4844 = vsel %vm994, %v4782, 0.0
      %4845 = vadd.xlane.f32.xlu0 %v4844
      %v4846 = vpop.xlane.xlu0 %4845
      %v4847 = vsel %vm994, %v4783, 0.0
      %4848 = vadd.xlane.f32.xlu0 %v4847
      %v4849 = vpop.xlane.xlu0 %4848
      %v4850 = vsel %vm994, %v4784, 0.0
      %4851 = vadd.xlane.f32.xlu0 %v4850
      %v4852 = vpop.xlane.xlu0 %4851
      %v4853 = vsel %vm994, %v4785, 0.0
      %4854 = vadd.xlane.f32.xlu0 %v4853
      %v4855 = vpop.xlane.xlu0 %4854
      %v4856 = vsel %vm994, %v4786, 0.0
      %4857 = vadd.xlane.f32.xlu0 %v4856
      %v4858 = vpop.xlane.xlu0 %4857
      %v4859 = vsel %vm994, %v4787, 0.0
      %4860 = vadd.xlane.f32.xlu0 %v4859
      %v4861 = vpop.xlane.xlu0 %4860
      %v4862 = vsel %vm994, %v4788, 0.0
      %4863 = vadd.xlane.f32.xlu0 %v4862
      %v4864 = vpop.xlane.xlu0 %4863
      %v4865 = vsel %vm994, %v4789, 0.0
      %4866 = vadd.xlane.f32.xlu0 %v4865
      %v4867 = vpop.xlane.xlu0 %4866
      %v4868 = vsel %vm994, %v4790, 0.0
      %4869 = vadd.xlane.f32.xlu0 %v4868
      %v4870 = vpop.xlane.xlu0 %4869
      %v4871 = vsel %vm994, %v4791, 0.0
      %4872 = vadd.xlane.f32.xlu0 %v4871
      %v4873 = vpop.xlane.xlu0 %4872
      %v4874 = vsel %vm994, %v4792, 0.0
      %4875 = vadd.xlane.f32.xlu0 %v4874
      %v4876 = vpop.xlane.xlu0 %4875
      %v4877 = vsel %vm994, %v4793, 0.0
      %4878 = vadd.xlane.f32.xlu0 %v4877
      %v4879 = vpop.xlane.xlu0 %4878
      %v4880 = vsel %vm994, %v4794, 0.0
      %4881 = vadd.xlane.f32.xlu0 %v4880
      %v4882 = vpop.xlane.xlu0 %4881
      %v4883 = vsel %vm994, %v4795, 0.0
      %4884 = vadd.xlane.f32.xlu0 %v4883
      %v4885 = vpop.xlane.xlu0 %4884
      %v4886 = vsel %vm994, %v4796, 0.0
      %4887 = vadd.xlane.f32.xlu0 %v4886
      %v4888 = vpop.xlane.xlu0 %4887
      %v4889 = vsel %vm994, %v4797, 0.0
      %4890 = vadd.xlane.f32.xlu0 %v4889
      %v4891 = vpop.xlane.xlu0 %4890
      %v4892 = vsel %vm994, %v4798, 0.0
      %4893 = vadd.xlane.f32.xlu0 %v4892
      %v4894 = vpop.xlane.xlu0 %4893
      %v4895 = vmul.f32 %v4801, %v1097
      %v4896 = vmul.f32 %v4804, %v1097
      %v4897 = vmul.f32 %v4807, %v1097
      %v4898 = vmul.f32 %v4810, %v1097
      %v4899 = vmul.f32 %v4813, %v1097
      %v4900 = vmul.f32 %v4816, %v1097
      %v4901 = vmul.f32 %v4819, %v1097
      %v4902 = vmul.f32 %v4822, %v1097
      %v4903 = vmul.f32 %v4825, %v1097
      %v4904 = vmul.f32 %v4828, %v1097
      %v4905 = vmul.f32 %v4831, %v1097
      %v4906 = vmul.f32 %v4834, %v1097
      %v4907 = vmul.f32 %v4837, %v1097
      %v4908 = vmul.f32 %v4840, %v1097
      %v4909 = vmul.f32 %v4843, %v1097
      %v4910 = vmul.f32 %v4846, %v1097
      %v4911 = vmul.f32 %v4849, %v1097
      %v4912 = vmul.f32 %v4852, %v1097
      %v4913 = vmul.f32 %v4855, %v1097
      %v4914 = vmul.f32 %v4858, %v1097
      %v4915 = vmul.f32 %v4861, %v1097
      %v4916 = vmul.f32 %v4864, %v1097
      %v4917 = vmul.f32 %v4867, %v1097
      %v4918 = vmul.f32 %v4870, %v1097
      %v4919 = vmul.f32 %v4873, %v1097
      %v4920 = vmul.f32 %v4876, %v1097
      %v4921 = vmul.f32 %v4879, %v1097
      %v4922 = vmul.f32 %v4882, %v1097
      %v4923 = vmul.f32 %v4885, %v1097
      %v4924 = vmul.f32 %v4888, %v1097
      %v4925 = vmul.f32 %v4891, %v1097
      %v4926 = vmul.f32 %v4894, %v1097
      %v4927 = vsub.f32 %v4767, %v4895
      %v4928 = vsub.f32 %v4768, %v4896
      %v4929 = vsub.f32 %v4769, %v4897
      %v4930 = vsub.f32 %v4770, %v4898
      %v4931 = vsub.f32 %v4771, %v4899
      %v4932 = vsub.f32 %v4772, %v4900
      %v4933 = vsub.f32 %v4773, %v4901
      %v4934 = vsub.f32 %v4774, %v4902
      %v4935 = vsub.f32 %v4775, %v4903
      %v4936 = vsub.f32 %v4776, %v4904
      %v4937 = vsub.f32 %v4777, %v4905
      %v4938 = vsub.f32 %v4778, %v4906
      %v4939 = vsub.f32 %v4779, %v4907
      %v4940 = vsub.f32 %v4780, %v4908
      %v4941 = vsub.f32 %v4781, %v4909
      %v4942 = vsub.f32 %v4782, %v4910
      %v4943 = vsub.f32 %v4783, %v4911
      %v4944 = vsub.f32 %v4784, %v4912
      %v4945 = vsub.f32 %v4785, %v4913
      %v4946 = vsub.f32 %v4786, %v4914
      %v4947 = vsub.f32 %v4787, %v4915
      %v4948 = vsub.f32 %v4788, %v4916
      %v4949 = vsub.f32 %v4789, %v4917
      %v4950 = vsub.f32 %v4790, %v4918
      %v4951 = vsub.f32 %v4791, %v4919
      %v4952 = vsub.f32 %v4792, %v4920
      %v4953 = vsub.f32 %v4793, %v4921
      %v4954 = vsub.f32 %v4794, %v4922
      %v4955 = vsub.f32 %v4795, %v4923
      %v4956 = vsub.f32 %v4796, %v4924
      %v4957 = vsub.f32 %v4797, %v4925
      %v4958 = vsub.f32 %v4798, %v4926
      %v4959 = vmul.f32 %v4927, %v4927
      %v4960 = vmul.f32 %v4928, %v4928
      %v4961 = vmul.f32 %v4929, %v4929
      %v4962 = vmul.f32 %v4930, %v4930
      %v4963 = vmul.f32 %v4931, %v4931
      %v4964 = vmul.f32 %v4932, %v4932
      %v4965 = vmul.f32 %v4933, %v4933
      %v4966 = vmul.f32 %v4934, %v4934
      %v4967 = vmul.f32 %v4935, %v4935
      %v4968 = vmul.f32 %v4936, %v4936
      %v4969 = vmul.f32 %v4937, %v4937
      %v4970 = vmul.f32 %v4938, %v4938
      %v4971 = vmul.f32 %v4939, %v4939
      %v4972 = vmul.f32 %v4940, %v4940
      %v4973 = vmul.f32 %v4941, %v4941
      %v4974 = vmul.f32 %v4942, %v4942
      %v4975 = vmul.f32 %v4943, %v4943
      %v4976 = vmul.f32 %v4944, %v4944
      %v4977 = vmul.f32 %v4945, %v4945
      %v4978 = vmul.f32 %v4946, %v4946
      %v4979 = vmul.f32 %v4947, %v4947
      %v4980 = vmul.f32 %v4948, %v4948
      %v4981 = vmul.f32 %v4949, %v4949
      %v4982 = vmul.f32 %v4950, %v4950
      %v4983 = vmul.f32 %v4951, %v4951
      %v4984 = vmul.f32 %v4952, %v4952
      %v4985 = vmul.f32 %v4953, %v4953
      %v4986 = vmul.f32 %v4954, %v4954
      %v4987 = vmul.f32 %v4955, %v4955
      %v4988 = vmul.f32 %v4956, %v4956
      %v4989 = vmul.f32 %v4957, %v4957
      %v4990 = vmul.f32 %v4958, %v4958
      %v4991 = vsel %vm994, %v4959, 0.0
      %4992 = vadd.xlane.f32.xlu0 %v4991
      %v4993 = vpop.xlane.xlu0 %4992
      %v4994 = vsel %vm994, %v4960, 0.0
      %4995 = vadd.xlane.f32.xlu0 %v4994
      %v4996 = vpop.xlane.xlu0 %4995
      %v4997 = vsel %vm994, %v4961, 0.0
      %4998 = vadd.xlane.f32.xlu0 %v4997
      %v4999 = vpop.xlane.xlu0 %4998
      %v5000 = vsel %vm994, %v4962, 0.0
      %5001 = vadd.xlane.f32.xlu0 %v5000
      %v5002 = vpop.xlane.xlu0 %5001
      %v5003 = vsel %vm994, %v4963, 0.0
      %5004 = vadd.xlane.f32.xlu0 %v5003
      %v5005 = vpop.xlane.xlu0 %5004
      %v5006 = vsel %vm994, %v4964, 0.0
      %5007 = vadd.xlane.f32.xlu0 %v5006
      %v5008 = vpop.xlane.xlu0 %5007
      %v5009 = vsel %vm994, %v4965, 0.0
      %5010 = vadd.xlane.f32.xlu0 %v5009
      %v5011 = vpop.xlane.xlu0 %5010
      %v5012 = vsel %vm994, %v4966, 0.0
      %5013 = vadd.xlane.f32.xlu0 %v5012
      %v5014 = vpop.xlane.xlu0 %5013
      %v5015 = vsel %vm994, %v4967, 0.0
      %5016 = vadd.xlane.f32.xlu0 %v5015
      %v5017 = vpop.xlane.xlu0 %5016
      %v5018 = vsel %vm994, %v4968, 0.0
      %5019 = vadd.xlane.f32.xlu0 %v5018
      %v5020 = vpop.xlane.xlu0 %5019
      %v5021 = vsel %vm994, %v4969, 0.0
      %5022 = vadd.xlane.f32.xlu0 %v5021
      %v5023 = vpop.xlane.xlu0 %5022
      %v5024 = vsel %vm994, %v4970, 0.0
      %5025 = vadd.xlane.f32.xlu0 %v5024
      %v5026 = vpop.xlane.xlu0 %5025
      %v5027 = vsel %vm994, %v4971, 0.0
      %5028 = vadd.xlane.f32.xlu0 %v5027
      %v5029 = vpop.xlane.xlu0 %5028
      %v5030 = vsel %vm994, %v4972, 0.0
      %5031 = vadd.xlane.f32.xlu0 %v5030
      %v5032 = vpop.xlane.xlu0 %5031
      %v5033 = vsel %vm994, %v4973, 0.0
      %5034 = vadd.xlane.f32.xlu0 %v5033
      %v5035 = vpop.xlane.xlu0 %5034
      %v5036 = vsel %vm994, %v4974, 0.0
      %5037 = vadd.xlane.f32.xlu0 %v5036
      %v5038 = vpop.xlane.xlu0 %5037
      %v5039 = vsel %vm994, %v4975, 0.0
      %5040 = vadd.xlane.f32.xlu0 %v5039
      %v5041 = vpop.xlane.xlu0 %5040
      %v5042 = vsel %vm994, %v4976, 0.0
      %5043 = vadd.xlane.f32.xlu0 %v5042
      %v5044 = vpop.xlane.xlu0 %5043
      %v5045 = vsel %vm994, %v4977, 0.0
      %5046 = vadd.xlane.f32.xlu0 %v5045
      %v5047 = vpop.xlane.xlu0 %5046
      %v5048 = vsel %vm994, %v4978, 0.0
      %5049 = vadd.xlane.f32.xlu0 %v5048
      %v5050 = vpop.xlane.xlu0 %5049
      %v5051 = vsel %vm994, %v4979, 0.0
      %5052 = vadd.xlane.f32.xlu0 %v5051
      %v5053 = vpop.xlane.xlu0 %5052
      %v5054 = vsel %vm994, %v4980, 0.0
      %5055 = vadd.xlane.f32.xlu0 %v5054
      %v5056 = vpop.xlane.xlu0 %5055
      %v5057 = vsel %vm994, %v4981, 0.0
      %5058 = vadd.xlane.f32.xlu0 %v5057
      %v5059 = vpop.xlane.xlu0 %5058
      %v5060 = vsel %vm994, %v4982, 0.0
      %5061 = vadd.xlane.f32.xlu0 %v5060
      %v5062 = vpop.xlane.xlu0 %5061
      %v5063 = vsel %vm994, %v4983, 0.0
      %5064 = vadd.xlane.f32.xlu0 %v5063
      %v5065 = vpop.xlane.xlu0 %5064
      %v5066 = vsel %vm994, %v4984, 0.0
      %5067 = vadd.xlane.f32.xlu0 %v5066
      %v5068 = vpop.xlane.xlu0 %5067
      %v5069 = vsel %vm994, %v4985, 0.0
      %5070 = vadd.xlane.f32.xlu0 %v5069
      %v5071 = vpop.xlane.xlu0 %5070
      %v5072 = vsel %vm994, %v4986, 0.0
      %5073 = vadd.xlane.f32.xlu0 %v5072
      %v5074 = vpop.xlane.xlu0 %5073
      %v5075 = vsel %vm994, %v4987, 0.0
      %5076 = vadd.xlane.f32.xlu0 %v5075
      %v5077 = vpop.xlane.xlu0 %5076
      %v5078 = vsel %vm994, %v4988, 0.0
      %5079 = vadd.xlane.f32.xlu0 %v5078
      %v5080 = vpop.xlane.xlu0 %5079
      %v5081 = vsel %vm994, %v4989, 0.0
      %5082 = vadd.xlane.f32.xlu0 %v5081
      %v5083 = vpop.xlane.xlu0 %5082
      %v5084 = vsel %vm994, %v4990, 0.0
      %5085 = vadd.xlane.f32.xlu0 %v5084
      %v5086 = vpop.xlane.xlu0 %5085
      %v5087 = vmul.f32 %v4993, %v1097
      %v5088 = vmul.f32 %v4996, %v1097
      %v5089 = vmul.f32 %v4999, %v1097
      %v5090 = vmul.f32 %v5002, %v1097
      %v5091 = vmul.f32 %v5005, %v1097
      %v5092 = vmul.f32 %v5008, %v1097
      %v5093 = vmul.f32 %v5011, %v1097
      %v5094 = vmul.f32 %v5014, %v1097
      %v5095 = vmul.f32 %v5017, %v1097
      %v5096 = vmul.f32 %v5020, %v1097
      %v5097 = vmul.f32 %v5023, %v1097
      %v5098 = vmul.f32 %v5026, %v1097
      %v5099 = vmul.f32 %v5029, %v1097
      %v5100 = vmul.f32 %v5032, %v1097
      %v5101 = vmul.f32 %v5035, %v1097
      %v5102 = vmul.f32 %v5038, %v1097
      %v5103 = vmul.f32 %v5041, %v1097
      %v5104 = vmul.f32 %v5044, %v1097
      %v5105 = vmul.f32 %v5047, %v1097
      %v5106 = vmul.f32 %v5050, %v1097
      %v5107 = vmul.f32 %v5053, %v1097
      %v5108 = vmul.f32 %v5056, %v1097
      %v5109 = vmul.f32 %v5059, %v1097
      %v5110 = vmul.f32 %v5062, %v1097
      %v5111 = vmul.f32 %v5065, %v1097
      %v5112 = vmul.f32 %v5068, %v1097
      %v5113 = vmul.f32 %v5071, %v1097
      %v5114 = vmul.f32 %v5074, %v1097
      %v5115 = vmul.f32 %v5077, %v1097
      %v5116 = vmul.f32 %v5080, %v1097
      %v5117 = vmul.f32 %v5083, %v1097
      %v5118 = vmul.f32 %v5086, %v1097
      %v5119 = vadd.f32 %v5087, 1e-05
      %v5120 = vadd.f32 %v5088, 1e-05
      %v5121 = vadd.f32 %v5089, 1e-05
      %v5122 = vadd.f32 %v5090, 1e-05
      %v5123 = vadd.f32 %v5091, 1e-05
      %v5124 = vadd.f32 %v5092, 1e-05
      %v5125 = vadd.f32 %v5093, 1e-05
      %v5126 = vadd.f32 %v5094, 1e-05
      %v5127 = vadd.f32 %v5095, 1e-05
      %v5128 = vadd.f32 %v5096, 1e-05
      %v5129 = vadd.f32 %v5097, 1e-05
      %v5130 = vadd.f32 %v5098, 1e-05
      %v5131 = vadd.f32 %v5099, 1e-05
      %v5132 = vadd.f32 %v5100, 1e-05
      %v5133 = vadd.f32 %v5101, 1e-05
      %v5134 = vadd.f32 %v5102, 1e-05
      %v5135 = vadd.f32 %v5103, 1e-05
      %v5136 = vadd.f32 %v5104, 1e-05
      %v5137 = vadd.f32 %v5105, 1e-05
      %v5138 = vadd.f32 %v5106, 1e-05
      %v5139 = vadd.f32 %v5107, 1e-05
      %v5140 = vadd.f32 %v5108, 1e-05
      %v5141 = vadd.f32 %v5109, 1e-05
      %v5142 = vadd.f32 %v5110, 1e-05
      %v5143 = vadd.f32 %v5111, 1e-05
      %v5144 = vadd.f32 %v5112, 1e-05
      %v5145 = vadd.f32 %v5113, 1e-05
      %v5146 = vadd.f32 %v5114, 1e-05
      %v5147 = vadd.f32 %v5115, 1e-05
      %v5148 = vadd.f32 %v5116, 1e-05
      %v5149 = vadd.f32 %v5117, 1e-05
      %v5150 = vadd.f32 %v5118, 1e-05
      %v5151 = vrsqrt.pop %v5119
      %v5152 = vmul.f32 %v5151, %v5119
      %v5153 = vmul.f32 %v5152, %v5151
      %v5154 = vmul.f32 0.5, %v5153
      %v5155 = vsub.f32 1.5, %v5154
      %v5156 = vmul.f32 %v5151, %v5155
      %vm5157 = vweird.f32 %v5119
      %vm5158 = vweird.f32 %v5151
      %vm5159 = vmor %vm5157, %vm5158
      %v5160 = vsel %vm5159, %v5151, %v5156
      %v5161 = vrsqrt.pop %v5120
      %v5162 = vmul.f32 %v5161, %v5120
      %v5163 = vmul.f32 %v5162, %v5161
      %v5164 = vmul.f32 0.5, %v5163
      %v5165 = vsub.f32 1.5, %v5164
      %v5166 = vmul.f32 %v5161, %v5165
      %vm5167 = vweird.f32 %v5120
      %vm5168 = vweird.f32 %v5161
      %vm5169 = vmor %vm5167, %vm5168
      %v5170 = vsel %vm5169, %v5161, %v5166
      %v5171 = vrsqrt.pop %v5121
      %v5172 = vmul.f32 %v5171, %v5121
      %v5173 = vmul.f32 %v5172, %v5171
      %v5174 = vmul.f32 0.5, %v5173
      %v5175 = vsub.f32 1.5, %v5174
      %v5176 = vmul.f32 %v5171, %v5175
      %vm5177 = vweird.f32 %v5121
      %vm5178 = vweird.f32 %v5171
      %vm5179 = vmor %vm5177, %vm5178
      %v5180 = vsel %vm5179, %v5171, %v5176
      %v5181 = vrsqrt.pop %v5122
      %v5182 = vmul.f32 %v5181, %v5122
      %v5183 = vmul.f32 %v5182, %v5181
      %v5184 = vmul.f32 0.5, %v5183
      %v5185 = vsub.f32 1.5, %v5184
      %v5186 = vmul.f32 %v5181, %v5185
      %vm5187 = vweird.f32 %v5122
      %vm5188 = vweird.f32 %v5181
      %vm5189 = vmor %vm5187, %vm5188
      %v5190 = vsel %vm5189, %v5181, %v5186
      %v5191 = vrsqrt.pop %v5123
      %v5192 = vmul.f32 %v5191, %v5123
      %v5193 = vmul.f32 %v5192, %v5191
      %v5194 = vmul.f32 0.5, %v5193
      %v5195 = vsub.f32 1.5, %v5194
      %v5196 = vmul.f32 %v5191, %v5195
      %vm5197 = vweird.f32 %v5123
      %vm5198 = vweird.f32 %v5191
      %vm5199 = vmor %vm5197, %vm5198
      %v5200 = vsel %vm5199, %v5191, %v5196
      %v5201 = vrsqrt.pop %v5124
      %v5202 = vmul.f32 %v5201, %v5124
      %v5203 = vmul.f32 %v5202, %v5201
      %v5204 = vmul.f32 0.5, %v5203
      %v5205 = vsub.f32 1.5, %v5204
      %v5206 = vmul.f32 %v5201, %v5205
      %vm5207 = vweird.f32 %v5124
      %vm5208 = vweird.f32 %v5201
      %vm5209 = vmor %vm5207, %vm5208
      %v5210 = vsel %vm5209, %v5201, %v5206
      %v5211 = vrsqrt.pop %v5125
      %v5212 = vmul.f32 %v5211, %v5125
      %v5213 = vmul.f32 %v5212, %v5211
      %v5214 = vmul.f32 0.5, %v5213
      %v5215 = vsub.f32 1.5, %v5214
      %v5216 = vmul.f32 %v5211, %v5215
      %vm5217 = vweird.f32 %v5125
      %vm5218 = vweird.f32 %v5211
      %vm5219 = vmor %vm5217, %vm5218
      %v5220 = vsel %vm5219, %v5211, %v5216
      %v5221 = vrsqrt.pop %v5126
      %v5222 = vmul.f32 %v5221, %v5126
      %v5223 = vmul.f32 %v5222, %v5221
      %v5224 = vmul.f32 0.5, %v5223
      %v5225 = vsub.f32 1.5, %v5224
      %v5226 = vmul.f32 %v5221, %v5225
      %vm5227 = vweird.f32 %v5126
      %vm5228 = vweird.f32 %v5221
      %vm5229 = vmor %vm5227, %vm5228
      %v5230 = vsel %vm5229, %v5221, %v5226
      %v5231 = vrsqrt.pop %v5127
      %v5232 = vmul.f32 %v5231, %v5127
      %v5233 = vmul.f32 %v5232, %v5231
      %v5234 = vmul.f32 0.5, %v5233
      %v5235 = vsub.f32 1.5, %v5234
      %v5236 = vmul.f32 %v5231, %v5235
      %vm5237 = vweird.f32 %v5127
      %vm5238 = vweird.f32 %v5231
      %vm5239 = vmor %vm5237, %vm5238
      %v5240 = vsel %vm5239, %v5231, %v5236
      %v5241 = vrsqrt.pop %v5128
      %v5242 = vmul.f32 %v5241, %v5128
      %v5243 = vmul.f32 %v5242, %v5241
      %v5244 = vmul.f32 0.5, %v5243
      %v5245 = vsub.f32 1.5, %v5244
      %v5246 = vmul.f32 %v5241, %v5245
      %vm5247 = vweird.f32 %v5128
      %vm5248 = vweird.f32 %v5241
      %vm5249 = vmor %vm5247, %vm5248
      %v5250 = vsel %vm5249, %v5241, %v5246
      %v5251 = vrsqrt.pop %v5129
      %v5252 = vmul.f32 %v5251, %v5129
      %v5253 = vmul.f32 %v5252, %v5251
      %v5254 = vmul.f32 0.5, %v5253
      %v5255 = vsub.f32 1.5, %v5254
      %v5256 = vmul.f32 %v5251, %v5255
      %vm5257 = vweird.f32 %v5129
      %vm5258 = vweird.f32 %v5251
      %vm5259 = vmor %vm5257, %vm5258
      %v5260 = vsel %vm5259, %v5251, %v5256
      %v5261 = vrsqrt.pop %v5130
      %v5262 = vmul.f32 %v5261, %v5130
      %v5263 = vmul.f32 %v5262, %v5261
      %v5264 = vmul.f32 0.5, %v5263
      %v5265 = vsub.f32 1.5, %v5264
      %v5266 = vmul.f32 %v5261, %v5265
      %vm5267 = vweird.f32 %v5130
      %vm5268 = vweird.f32 %v5261
      %vm5269 = vmor %vm5267, %vm5268
      %v5270 = vsel %vm5269, %v5261, %v5266
      %v5271 = vrsqrt.pop %v5131
      %v5272 = vmul.f32 %v5271, %v5131
      %v5273 = vmul.f32 %v5272, %v5271
      %v5274 = vmul.f32 0.5, %v5273
      %v5275 = vsub.f32 1.5, %v5274
      %v5276 = vmul.f32 %v5271, %v5275
      %vm5277 = vweird.f32 %v5131
      %vm5278 = vweird.f32 %v5271
      %vm5279 = vmor %vm5277, %vm5278
      %v5280 = vsel %vm5279, %v5271, %v5276
      %v5281 = vrsqrt.pop %v5132
      %v5282 = vmul.f32 %v5281, %v5132
      %v5283 = vmul.f32 %v5282, %v5281
      %v5284 = vmul.f32 0.5, %v5283
      %v5285 = vsub.f32 1.5, %v5284
      %v5286 = vmul.f32 %v5281, %v5285
      %vm5287 = vweird.f32 %v5132
      %vm5288 = vweird.f32 %v5281
      %vm5289 = vmor %vm5287, %vm5288
      %v5290 = vsel %vm5289, %v5281, %v5286
      %v5291 = vrsqrt.pop %v5133
      %v5292 = vmul.f32 %v5291, %v5133
      %v5293 = vmul.f32 %v5292, %v5291
      %v5294 = vmul.f32 0.5, %v5293
      %v5295 = vsub.f32 1.5, %v5294
      %v5296 = vmul.f32 %v5291, %v5295
      %vm5297 = vweird.f32 %v5133
      %vm5298 = vweird.f32 %v5291
      %vm5299 = vmor %vm5297, %vm5298
      %v5300 = vsel %vm5299, %v5291, %v5296
      %v5301 = vrsqrt.pop %v5134
      %v5302 = vmul.f32 %v5301, %v5134
      %v5303 = vmul.f32 %v5302, %v5301
      %v5304 = vmul.f32 0.5, %v5303
      %v5305 = vsub.f32 1.5, %v5304
      %v5306 = vmul.f32 %v5301, %v5305
      %vm5307 = vweird.f32 %v5134
      %vm5308 = vweird.f32 %v5301
      %vm5309 = vmor %vm5307, %vm5308
      %v5310 = vsel %vm5309, %v5301, %v5306
      %v5311 = vrsqrt.pop %v5135
      %v5312 = vmul.f32 %v5311, %v5135
      %v5313 = vmul.f32 %v5312, %v5311
      %v5314 = vmul.f32 0.5, %v5313
      %v5315 = vsub.f32 1.5, %v5314
      %v5316 = vmul.f32 %v5311, %v5315
      %vm5317 = vweird.f32 %v5135
      %vm5318 = vweird.f32 %v5311
      %vm5319 = vmor %vm5317, %vm5318
      %v5320 = vsel %vm5319, %v5311, %v5316
      %v5321 = vrsqrt.pop %v5136
      %v5322 = vmul.f32 %v5321, %v5136
      %v5323 = vmul.f32 %v5322, %v5321
      %v5324 = vmul.f32 0.5, %v5323
      %v5325 = vsub.f32 1.5, %v5324
      %v5326 = vmul.f32 %v5321, %v5325
      %vm5327 = vweird.f32 %v5136
      %vm5328 = vweird.f32 %v5321
      %vm5329 = vmor %vm5327, %vm5328
      %v5330 = vsel %vm5329, %v5321, %v5326
      %v5331 = vrsqrt.pop %v5137
      %v5332 = vmul.f32 %v5331, %v5137
      %v5333 = vmul.f32 %v5332, %v5331
      %v5334 = vmul.f32 0.5, %v5333
      %v5335 = vsub.f32 1.5, %v5334
      %v5336 = vmul.f32 %v5331, %v5335
      %vm5337 = vweird.f32 %v5137
      %vm5338 = vweird.f32 %v5331
      %vm5339 = vmor %vm5337, %vm5338
      %v5340 = vsel %vm5339, %v5331, %v5336
      %v5341 = vrsqrt.pop %v5138
      %v5342 = vmul.f32 %v5341, %v5138
      %v5343 = vmul.f32 %v5342, %v5341
      %v5344 = vmul.f32 0.5, %v5343
      %v5345 = vsub.f32 1.5, %v5344
      %v5346 = vmul.f32 %v5341, %v5345
      %vm5347 = vweird.f32 %v5138
      %vm5348 = vweird.f32 %v5341
      %vm5349 = vmor %vm5347, %vm5348
      %v5350 = vsel %vm5349, %v5341, %v5346
      %v5351 = vrsqrt.pop %v5139
      %v5352 = vmul.f32 %v5351, %v5139
      %v5353 = vmul.f32 %v5352, %v5351
      %v5354 = vmul.f32 0.5, %v5353
      %v5355 = vsub.f32 1.5, %v5354
      %v5356 = vmul.f32 %v5351, %v5355
      %vm5357 = vweird.f32 %v5139
      %vm5358 = vweird.f32 %v5351
      %vm5359 = vmor %vm5357, %vm5358
      %v5360 = vsel %vm5359, %v5351, %v5356
      %v5361 = vrsqrt.pop %v5140
      %v5362 = vmul.f32 %v5361, %v5140
      %v5363 = vmul.f32 %v5362, %v5361
      %v5364 = vmul.f32 0.5, %v5363
      %v5365 = vsub.f32 1.5, %v5364
      %v5366 = vmul.f32 %v5361, %v5365
      %vm5367 = vweird.f32 %v5140
      %vm5368 = vweird.f32 %v5361
      %vm5369 = vmor %vm5367, %vm5368
      %v5370 = vsel %vm5369, %v5361, %v5366
      %v5371 = vrsqrt.pop %v5141
      %v5372 = vmul.f32 %v5371, %v5141
      %v5373 = vmul.f32 %v5372, %v5371
      %v5374 = vmul.f32 0.5, %v5373
      %v5375 = vsub.f32 1.5, %v5374
      %v5376 = vmul.f32 %v5371, %v5375
      %vm5377 = vweird.f32 %v5141
      %vm5378 = vweird.f32 %v5371
      %vm5379 = vmor %vm5377, %vm5378
      %v5380 = vsel %vm5379, %v5371, %v5376
      %v5381 = vrsqrt.pop %v5142
      %v5382 = vmul.f32 %v5381, %v5142
      %v5383 = vmul.f32 %v5382, %v5381
      %v5384 = vmul.f32 0.5, %v5383
      %v5385 = vsub.f32 1.5, %v5384
      %v5386 = vmul.f32 %v5381, %v5385
      %vm5387 = vweird.f32 %v5142
      %vm5388 = vweird.f32 %v5381
      %vm5389 = vmor %vm5387, %vm5388
      %v5390 = vsel %vm5389, %v5381, %v5386
      %v5391 = vrsqrt.pop %v5143
      %v5392 = vmul.f32 %v5391, %v5143
      %v5393 = vmul.f32 %v5392, %v5391
      %v5394 = vmul.f32 0.5, %v5393
      %v5395 = vsub.f32 1.5, %v5394
      %v5396 = vmul.f32 %v5391, %v5395
      %vm5397 = vweird.f32 %v5143
      %vm5398 = vweird.f32 %v5391
      %vm5399 = vmor %vm5397, %vm5398
      %v5400 = vsel %vm5399, %v5391, %v5396
      %v5401 = vrsqrt.pop %v5144
      %v5402 = vmul.f32 %v5401, %v5144
      %v5403 = vmul.f32 %v5402, %v5401
      %v5404 = vmul.f32 0.5, %v5403
      %v5405 = vsub.f32 1.5, %v5404
      %v5406 = vmul.f32 %v5401, %v5405
      %vm5407 = vweird.f32 %v5144
      %vm5408 = vweird.f32 %v5401
      %vm5409 = vmor %vm5407, %vm5408
      %v5410 = vsel %vm5409, %v5401, %v5406
      %v5411 = vrsqrt.pop %v5145
      %v5412 = vmul.f32 %v5411, %v5145
      %v5413 = vmul.f32 %v5412, %v5411
      %v5414 = vmul.f32 0.5, %v5413
      %v5415 = vsub.f32 1.5, %v5414
      %v5416 = vmul.f32 %v5411, %v5415
      %vm5417 = vweird.f32 %v5145
      %vm5418 = vweird.f32 %v5411
      %vm5419 = vmor %vm5417, %vm5418
      %v5420 = vsel %vm5419, %v5411, %v5416
      %v5421 = vrsqrt.pop %v5146
      %v5422 = vmul.f32 %v5421, %v5146
      %v5423 = vmul.f32 %v5422, %v5421
      %v5424 = vmul.f32 0.5, %v5423
      %v5425 = vsub.f32 1.5, %v5424
      %v5426 = vmul.f32 %v5421, %v5425
      %vm5427 = vweird.f32 %v5146
      %vm5428 = vweird.f32 %v5421
      %vm5429 = vmor %vm5427, %vm5428
      %v5430 = vsel %vm5429, %v5421, %v5426
      %v5431 = vrsqrt.pop %v5147
      %v5432 = vmul.f32 %v5431, %v5147
      %v5433 = vmul.f32 %v5432, %v5431
      %v5434 = vmul.f32 0.5, %v5433
      %v5435 = vsub.f32 1.5, %v5434
      %v5436 = vmul.f32 %v5431, %v5435
      %vm5437 = vweird.f32 %v5147
      %vm5438 = vweird.f32 %v5431
      %vm5439 = vmor %vm5437, %vm5438
      %v5440 = vsel %vm5439, %v5431, %v5436
      %v5441 = vrsqrt.pop %v5148
      %v5442 = vmul.f32 %v5441, %v5148
      %v5443 = vmul.f32 %v5442, %v5441
      %v5444 = vmul.f32 0.5, %v5443
      %v5445 = vsub.f32 1.5, %v5444
      %v5446 = vmul.f32 %v5441, %v5445
      %vm5447 = vweird.f32 %v5148
      %vm5448 = vweird.f32 %v5441
      %vm5449 = vmor %vm5447, %vm5448
      %v5450 = vsel %vm5449, %v5441, %v5446
      %v5451 = vrsqrt.pop %v5149
      %v5452 = vmul.f32 %v5451, %v5149
      %v5453 = vmul.f32 %v5452, %v5451
      %v5454 = vmul.f32 0.5, %v5453
      %v5455 = vsub.f32 1.5, %v5454
      %v5456 = vmul.f32 %v5451, %v5455
      %vm5457 = vweird.f32 %v5149
      %vm5458 = vweird.f32 %v5451
      %vm5459 = vmor %vm5457, %vm5458
      %v5460 = vsel %vm5459, %v5451, %v5456
      %v5461 = vrsqrt.pop %v5150
      %v5462 = vmul.f32 %v5461, %v5150
      %v5463 = vmul.f32 %v5462, %v5461
      %v5464 = vmul.f32 0.5, %v5463
      %v5465 = vsub.f32 1.5, %v5464
      %v5466 = vmul.f32 %v5461, %v5465
      %vm5467 = vweird.f32 %v5150
      %vm5468 = vweird.f32 %v5461
      %vm5469 = vmor %vm5467, %vm5468
      %v5470 = vsel %vm5469, %v5461, %v5466
      %v5471 = vmul.f32 %v4927, %v5160
      %v5472 = vmul.f32 %v4928, %v5170
      %v5473 = vmul.f32 %v4929, %v5180
      %v5474 = vmul.f32 %v4930, %v5190
      %v5475 = vmul.f32 %v4931, %v5200
      %v5476 = vmul.f32 %v4932, %v5210
      %v5477 = vmul.f32 %v4933, %v5220
      %v5478 = vmul.f32 %v4934, %v5230
      %v5479 = vmul.f32 %v4935, %v5240
      %v5480 = vmul.f32 %v4936, %v5250
      %v5481 = vmul.f32 %v4937, %v5260
      %v5482 = vmul.f32 %v4938, %v5270
      %v5483 = vmul.f32 %v4939, %v5280
      %v5484 = vmul.f32 %v4940, %v5290
      %v5485 = vmul.f32 %v4941, %v5300
      %v5486 = vmul.f32 %v4942, %v5310
      %v5487 = vmul.f32 %v4943, %v5320
      %v5488 = vmul.f32 %v4944, %v5330
      %v5489 = vmul.f32 %v4945, %v5340
      %v5490 = vmul.f32 %v4946, %v5350
      %v5491 = vmul.f32 %v4947, %v5360
      %v5492 = vmul.f32 %v4948, %v5370
      %v5493 = vmul.f32 %v4949, %v5380
      %v5494 = vmul.f32 %v4950, %v5390
      %v5495 = vmul.f32 %v4951, %v5400
      %v5496 = vmul.f32 %v4952, %v5410
      %v5497 = vmul.f32 %v4953, %v5420
      %v5498 = vmul.f32 %v4954, %v5430
      %v5499 = vmul.f32 %v4955, %v5440
      %v5500 = vmul.f32 %v4956, %v5450
      %v5501 = vmul.f32 %v4957, %v5460
      %v5502 = vmul.f32 %v4958, %v5470
      %v5503 = vld [vmem:[%s11] sm:$0x1]
      %v5505 = vperm.slane %v5503, 0
      %v5507 = vmul.f32 %v5471, %v5505
      %v5508 = vmul.f32 %v5472, %v5505
      %v5509 = vmul.f32 %v5473, %v5505
      %v5510 = vmul.f32 %v5474, %v5505
      %v5511 = vmul.f32 %v5475, %v5505
      %v5512 = vmul.f32 %v5476, %v5505
      %v5513 = vmul.f32 %v5477, %v5505
      %v5514 = vmul.f32 %v5478, %v5505
      %v5515 = vmul.f32 %v5479, %v5505
      %v5516 = vmul.f32 %v5480, %v5505
      %v5517 = vmul.f32 %v5481, %v5505
      %v5518 = vmul.f32 %v5482, %v5505
      %v5519 = vmul.f32 %v5483, %v5505
      %v5520 = vmul.f32 %v5484, %v5505
      %v5521 = vmul.f32 %v5485, %v5505
      %v5522 = vmul.f32 %v5486, %v5505
      %v5523 = vmul.f32 %v5487, %v5505
      %v5524 = vmul.f32 %v5488, %v5505
      %v5525 = vmul.f32 %v5489, %v5505
      %v5526 = vmul.f32 %v5490, %v5505
      %v5527 = vmul.f32 %v5491, %v5505
      %v5528 = vmul.f32 %v5492, %v5505
      %v5529 = vmul.f32 %v5493, %v5505
      %v5530 = vmul.f32 %v5494, %v5505
      %v5531 = vmul.f32 %v5495, %v5505
      %v5532 = vmul.f32 %v5496, %v5505
      %v5533 = vmul.f32 %v5497, %v5505
      %v5534 = vmul.f32 %v5498, %v5505
      %v5535 = vmul.f32 %v5499, %v5505
      %v5536 = vmul.f32 %v5500, %v5505
      %v5537 = vmul.f32 %v5501, %v5505
      %v5538 = vmul.f32 %v5502, %v5505
      %v5539 = vld [vmem:[%s12] sm:$0x1]
      %v5541 = vperm.slane %v5539, 0
      %v5543 = vadd.f32 %v5507, %v5541
      %v5544 = vadd.f32 %v5508, %v5541
      %v5545 = vadd.f32 %v5509, %v5541
      %v5546 = vadd.f32 %v5510, %v5541
      %v5547 = vadd.f32 %v5511, %v5541
      %v5548 = vadd.f32 %v5512, %v5541
      %v5549 = vadd.f32 %v5513, %v5541
      %v5550 = vadd.f32 %v5514, %v5541
      %v5551 = vadd.f32 %v5515, %v5541
      %v5552 = vadd.f32 %v5516, %v5541
      %v5553 = vadd.f32 %v5517, %v5541
      %v5554 = vadd.f32 %v5518, %v5541
      %v5555 = vadd.f32 %v5519, %v5541
      %v5556 = vadd.f32 %v5520, %v5541
      %v5557 = vadd.f32 %v5521, %v5541
      %v5558 = vadd.f32 %v5522, %v5541
      %v5559 = vadd.f32 %v5523, %v5541
      %v5560 = vadd.f32 %v5524, %v5541
      %v5561 = vadd.f32 %v5525, %v5541
      %v5562 = vadd.f32 %v5526, %v5541
      %v5563 = vadd.f32 %v5527, %v5541
      %v5564 = vadd.f32 %v5528, %v5541
      %v5565 = vadd.f32 %v5529, %v5541
      %v5566 = vadd.f32 %v5530, %v5541
      %v5567 = vadd.f32 %v5531, %v5541
      %v5568 = vadd.f32 %v5532, %v5541
      %v5569 = vadd.f32 %v5533, %v5541
      %v5570 = vadd.f32 %v5534, %v5541
      %v5571 = vadd.f32 %v5535, %v5541
      %v5572 = vadd.f32 %v5536, %v5541
      %v5573 = vadd.f32 %v5537, %v5541
      %v5574 = vadd.f32 %v5538, %v5541
      %v5575 = vpack.c.bf16 %v5544, %v5543
      %v5576 = vpack.c.bf16 %v5546, %v5545
      %v5577 = vpack.c.bf16 %v5548, %v5547
      %v5578 = vpack.c.bf16 %v5550, %v5549
      %v5579 = vpack.c.bf16 %v5552, %v5551
      %v5580 = vpack.c.bf16 %v5554, %v5553
      %v5581 = vpack.c.bf16 %v5556, %v5555
      %v5582 = vpack.c.bf16 %v5558, %v5557
      %v5583 = vpack.c.bf16 %v5560, %v5559
      %v5584 = vpack.c.bf16 %v5562, %v5561
      %v5585 = vpack.c.bf16 %v5564, %v5563
      %v5586 = vpack.c.bf16 %v5566, %v5565
      %v5587 = vpack.c.bf16 %v5568, %v5567
      %v5588 = vpack.c.bf16 %v5570, %v5569
      %v5589 = vpack.c.bf16 %v5572, %v5571
      %v5590 = vpack.c.bf16 %v5574, %v5573
      %v5591 = vld [vmem:[%s13] sm:$0xf]
      %v5592 = vld [vmem:[%s13 + $0x4] sm:$0xf]
      %v5593 = vld [vmem:[%s14] sm:$0x1]
      %v5595 = vperm.slane %v5593, 0
      %v5599 = vunpack.c.l.b16 %v5591
      %v5600 = vunpack.c.l.b16 %v5592
      %v5601 = vpack.c.b16 %v5600, %v5599
      %v5604 = vsel %vm994, %v5575, 0
      %v5607 = vsel %vm994, %v5576, 0
      %v5610 = vsel %vm994, %v5577, 0
      %v5613 = vsel %vm994, %v5578, 0
      %v5616 = vsel %vm994, %v5579, 0
      %v5619 = vsel %vm994, %v5580, 0
      %v5622 = vsel %vm994, %v5581, 0
      %v5625 = vsel %vm994, %v5582, 0
      %v5628 = vsel %vm994, %v5583, 0
      %v5631 = vsel %vm994, %v5584, 0
      %v5634 = vsel %vm994, %v5585, 0
      %v5637 = vsel %vm994, %v5586, 0
      %v5640 = vsel %vm994, %v5587, 0
      %v5643 = vsel %vm994, %v5588, 0
      %v5646 = vsel %vm994, %v5589, 0
      %v5649 = vsel %vm994, %v5590, 0
      %5651 = vmatpush.bf16.msra.mxu0 0
      %5652 = vmatpush.bf16.msra.mxu0 0
      %5653 = vmatpush.bf16.msra.mxu0 0
      %5654 = vmatpush.bf16.msra.mxu0 0
      %5655 = vmatpush.bf16.msra.mxu0 0
      %5656 = vmatpush.bf16.msra.mxu0 0
      %5657 = vmatpush.bf16.msra.mxu0 0
      %5658 = vmatpush.bf16.msra.mxu0 %v5601
      %5659 = vmatmul.bf16.gmra.mxu0 %v5604
      %v5660 = vpop.f32.mrf.mxu0
      %v5661 = vadd.f32 %v5595, %v5660
      %v5662 = vpop.f32.mrf.mxu0
      %v5663 = vadd.f32 %v5595, %v5662
      %5664 = vmatmul.bf16.gmra.mxu0 %v5607
      %v5665 = vpop.f32.mrf.mxu0
      %v5666 = vadd.f32 %v5595, %v5665
      %v5667 = vpop.f32.mrf.mxu0
      %v5668 = vadd.f32 %v5595, %v5667
      %5669 = vmatmul.bf16.gmra.mxu0 %v5610
      %v5670 = vpop.f32.mrf.mxu0
      %v5671 = vadd.f32 %v5595, %v5670
      %v5672 = vpop.f32.mrf.mxu0
      %v5673 = vadd.f32 %v5595, %v5672
      %5674 = vmatmul.bf16.gmra.mxu0 %v5613
      %v5675 = vpop.f32.mrf.mxu0
      %v5676 = vadd.f32 %v5595, %v5675
      %v5677 = vpop.f32.mrf.mxu0
      %v5678 = vadd.f32 %v5595, %v5677
      %5679 = vmatmul.bf16.gmra.mxu0 %v5616
      %v5680 = vpop.f32.mrf.mxu0
      %v5681 = vadd.f32 %v5595, %v5680
      %v5682 = vpop.f32.mrf.mxu0
      %v5683 = vadd.f32 %v5595, %v5682
      %5684 = vmatmul.bf16.gmra.mxu0 %v5619
      %v5685 = vpop.f32.mrf.mxu0
      %v5686 = vadd.f32 %v5595, %v5685
      %v5687 = vpop.f32.mrf.mxu0
      %v5688 = vadd.f32 %v5595, %v5687
      %5689 = vmatmul.bf16.gmra.mxu0 %v5622
      %v5690 = vpop.f32.mrf.mxu0
      %v5691 = vadd.f32 %v5595, %v5690
      %v5692 = vpop.f32.mrf.mxu0
      %v5693 = vadd.f32 %v5595, %v5692
      %5694 = vmatmul.bf16.gmra.mxu0 %v5625
      %v5695 = vpop.f32.mrf.mxu0
      %v5696 = vadd.f32 %v5595, %v5695
      %v5697 = vpop.f32.mrf.mxu0
      %v5698 = vadd.f32 %v5595, %v5697
      %5699 = vmatmul.bf16.gmra.mxu0 %v5628
      %v5700 = vpop.f32.mrf.mxu0
      %v5701 = vadd.f32 %v5595, %v5700
      %v5702 = vpop.f32.mrf.mxu0
      %v5703 = vadd.f32 %v5595, %v5702
      %5704 = vmatmul.bf16.gmra.mxu0 %v5631
      %v5705 = vpop.f32.mrf.mxu0
      %v5706 = vadd.f32 %v5595, %v5705
      %v5707 = vpop.f32.mrf.mxu0
      %v5708 = vadd.f32 %v5595, %v5707
      %5709 = vmatmul.bf16.gmra.mxu0 %v5634
      %v5710 = vpop.f32.mrf.mxu0
      %v5711 = vadd.f32 %v5595, %v5710
      %v5712 = vpop.f32.mrf.mxu0
      %v5713 = vadd.f32 %v5595, %v5712
      %5714 = vmatmul.bf16.gmra.mxu0 %v5637
      %v5715 = vpop.f32.mrf.mxu0
      %v5716 = vadd.f32 %v5595, %v5715
      %v5717 = vpop.f32.mrf.mxu0
      %v5718 = vadd.f32 %v5595, %v5717
      %5719 = vmatmul.bf16.gmra.mxu0 %v5640
      %v5720 = vpop.f32.mrf.mxu0
      %v5721 = vadd.f32 %v5595, %v5720
      %v5722 = vpop.f32.mrf.mxu0
      %v5723 = vadd.f32 %v5595, %v5722
      %5724 = vmatmul.bf16.gmra.mxu0 %v5643
      %v5725 = vpop.f32.mrf.mxu0
      %v5726 = vadd.f32 %v5595, %v5725
      %v5727 = vpop.f32.mrf.mxu0
      %v5728 = vadd.f32 %v5595, %v5727
      %5729 = vmatmul.bf16.gmra.mxu0 %v5646
      %v5730 = vpop.f32.mrf.mxu0
      %v5731 = vadd.f32 %v5595, %v5730
      %v5732 = vpop.f32.mrf.mxu0
      %v5733 = vadd.f32 %v5595, %v5732
      %5734 = vmatmul.bf16.gmra.mxu0 %v5649
      %v5735 = vpop.f32.mrf.mxu0
      %v5736 = vadd.f32 %v5595, %v5735
      %v5737 = vpop.f32.mrf.mxu0
      %v5738 = vadd.f32 %v5595, %v5737
      %5739 = vdwg.mxu0
      %v5740 = vmul.f32 %v5661, %v5661
      %v5741 = vmul.f32 %v5663, %v5663
      %v5742 = vmul.f32 %v5666, %v5666
      %v5743 = vmul.f32 %v5668, %v5668
      %v5744 = vmul.f32 %v5671, %v5671
      %v5745 = vmul.f32 %v5673, %v5673
      %v5746 = vmul.f32 %v5676, %v5676
      %v5747 = vmul.f32 %v5678, %v5678
      %v5748 = vmul.f32 %v5681, %v5681
      %v5749 = vmul.f32 %v5683, %v5683
      %v5750 = vmul.f32 %v5686, %v5686
      %v5751 = vmul.f32 %v5688, %v5688
      %v5752 = vmul.f32 %v5691, %v5691
      %v5753 = vmul.f32 %v5693, %v5693
      %v5754 = vmul.f32 %v5696, %v5696
      %v5755 = vmul.f32 %v5698, %v5698
      %v5756 = vmul.f32 %v5701, %v5701
      %v5757 = vmul.f32 %v5703, %v5703
      %v5758 = vmul.f32 %v5706, %v5706
      %v5759 = vmul.f32 %v5708, %v5708
      %v5760 = vmul.f32 %v5711, %v5711
      %v5761 = vmul.f32 %v5713, %v5713
      %v5762 = vmul.f32 %v5716, %v5716
      %v5763 = vmul.f32 %v5718, %v5718
      %v5764 = vmul.f32 %v5721, %v5721
      %v5765 = vmul.f32 %v5723, %v5723
      %v5766 = vmul.f32 %v5726, %v5726
      %v5767 = vmul.f32 %v5728, %v5728
      %v5768 = vmul.f32 %v5731, %v5731
      %v5769 = vmul.f32 %v5733, %v5733
      %v5770 = vmul.f32 %v5736, %v5736
      %v5771 = vmul.f32 %v5738, %v5738
      %v5772 = vmul.f32 %v5661, %v5740
      %v5773 = vmul.f32 %v5663, %v5741
      %v5774 = vmul.f32 %v5666, %v5742
      %v5775 = vmul.f32 %v5668, %v5743
      %v5776 = vmul.f32 %v5671, %v5744
      %v5777 = vmul.f32 %v5673, %v5745
      %v5778 = vmul.f32 %v5676, %v5746
      %v5779 = vmul.f32 %v5678, %v5747
      %v5780 = vmul.f32 %v5681, %v5748
      %v5781 = vmul.f32 %v5683, %v5749
      %v5782 = vmul.f32 %v5686, %v5750
      %v5783 = vmul.f32 %v5688, %v5751
      %v5784 = vmul.f32 %v5691, %v5752
      %v5785 = vmul.f32 %v5693, %v5753
      %v5786 = vmul.f32 %v5696, %v5754
      %v5787 = vmul.f32 %v5698, %v5755
      %v5788 = vmul.f32 %v5701, %v5756
      %v5789 = vmul.f32 %v5703, %v5757
      %v5790 = vmul.f32 %v5706, %v5758
      %v5791 = vmul.f32 %v5708, %v5759
      %v5792 = vmul.f32 %v5711, %v5760
      %v5793 = vmul.f32 %v5713, %v5761
      %v5794 = vmul.f32 %v5716, %v5762
      %v5795 = vmul.f32 %v5718, %v5763
      %v5796 = vmul.f32 %v5721, %v5764
      %v5797 = vmul.f32 %v5723, %v5765
      %v5798 = vmul.f32 %v5726, %v5766
      %v5799 = vmul.f32 %v5728, %v5767
      %v5800 = vmul.f32 %v5731, %v5768
      %v5801 = vmul.f32 %v5733, %v5769
      %v5802 = vmul.f32 %v5736, %v5770
      %v5803 = vmul.f32 %v5738, %v5771
      %v5804 = vmul.f32 %v5772, 0.044715
      %v5805 = vmul.f32 %v5773, 0.044715
      %v5806 = vmul.f32 %v5774, 0.044715
      %v5807 = vmul.f32 %v5775, 0.044715
      %v5808 = vmul.f32 %v5776, 0.044715
      %v5809 = vmul.f32 %v5777, 0.044715
      %v5810 = vmul.f32 %v5778, 0.044715
      %v5811 = vmul.f32 %v5779, 0.044715
      %v5812 = vmul.f32 %v5780, 0.044715
      %v5813 = vmul.f32 %v5781, 0.044715
      %v5814 = vmul.f32 %v5782, 0.044715
      %v5815 = vmul.f32 %v5783, 0.044715
      %v5816 = vmul.f32 %v5784, 0.044715
      %v5817 = vmul.f32 %v5785, 0.044715
      %v5818 = vmul.f32 %v5786, 0.044715
      %v5819 = vmul.f32 %v5787, 0.044715
      %v5820 = vmul.f32 %v5788, 0.044715
      %v5821 = vmul.f32 %v5789, 0.044715
      %v5822 = vmul.f32 %v5790, 0.044715
      %v5823 = vmul.f32 %v5791, 0.044715
      %v5824 = vmul.f32 %v5792, 0.044715
      %v5825 = vmul.f32 %v5793, 0.044715
      %v5826 = vmul.f32 %v5794, 0.044715
      %v5827 = vmul.f32 %v5795, 0.044715
      %v5828 = vmul.f32 %v5796, 0.044715
      %v5829 = vmul.f32 %v5797, 0.044715
      %v5830 = vmul.f32 %v5798, 0.044715
      %v5831 = vmul.f32 %v5799, 0.044715
      %v5832 = vmul.f32 %v5800, 0.044715
      %v5833 = vmul.f32 %v5801, 0.044715
      %v5834 = vmul.f32 %v5802, 0.044715
      %v5835 = vmul.f32 %v5803, 0.044715
      %v5836 = vadd.f32 %v5661, %v5804
      %v5837 = vadd.f32 %v5663, %v5805
      %v5838 = vadd.f32 %v5666, %v5806
      %v5839 = vadd.f32 %v5668, %v5807
      %v5840 = vadd.f32 %v5671, %v5808
      %v5841 = vadd.f32 %v5673, %v5809
      %v5842 = vadd.f32 %v5676, %v5810
      %v5843 = vadd.f32 %v5678, %v5811
      %v5844 = vadd.f32 %v5681, %v5812
      %v5845 = vadd.f32 %v5683, %v5813
      %v5846 = vadd.f32 %v5686, %v5814
      %v5847 = vadd.f32 %v5688, %v5815
      %v5848 = vadd.f32 %v5691, %v5816
      %v5849 = vadd.f32 %v5693, %v5817
      %v5850 = vadd.f32 %v5696, %v5818
      %v5851 = vadd.f32 %v5698, %v5819
      %v5852 = vadd.f32 %v5701, %v5820
      %v5853 = vadd.f32 %v5703, %v5821
      %v5854 = vadd.f32 %v5706, %v5822
      %v5855 = vadd.f32 %v5708, %v5823
      %v5856 = vadd.f32 %v5711, %v5824
      %v5857 = vadd.f32 %v5713, %v5825
      %v5858 = vadd.f32 %v5716, %v5826
      %v5859 = vadd.f32 %v5718, %v5827
      %v5860 = vadd.f32 %v5721, %v5828
      %v5861 = vadd.f32 %v5723, %v5829
      %v5862 = vadd.f32 %v5726, %v5830
      %v5863 = vadd.f32 %v5728, %v5831
      %v5864 = vadd.f32 %v5731, %v5832
      %v5865 = vadd.f32 %v5733, %v5833
      %v5866 = vadd.f32 %v5736, %v5834
      %v5867 = vadd.f32 %v5738, %v5835
      %v5868 = vmul.f32 %v5836, 0.7978846
      %v5869 = vmul.f32 %v5837, 0.7978846
      %v5870 = vmul.f32 %v5838, 0.7978846
      %v5871 = vmul.f32 %v5839, 0.7978846
      %v5872 = vmul.f32 %v5840, 0.7978846
      %v5873 = vmul.f32 %v5841, 0.7978846
      %v5874 = vmul.f32 %v5842, 0.7978846
      %v5875 = vmul.f32 %v5843, 0.7978846
      %v5876 = vmul.f32 %v5844, 0.7978846
      %v5877 = vmul.f32 %v5845, 0.7978846
      %v5878 = vmul.f32 %v5846, 0.7978846
      %v5879 = vmul.f32 %v5847, 0.7978846
      %v5880 = vmul.f32 %v5848, 0.7978846
      %v5881 = vmul.f32 %v5849, 0.7978846
      %v5882 = vmul.f32 %v5850, 0.7978846
      %v5883 = vmul.f32 %v5851, 0.7978846
      %v5884 = vmul.f32 %v5852, 0.7978846
      %v5885 = vmul.f32 %v5853, 0.7978846
      %v5886 = vmul.f32 %v5854, 0.7978846
      %v5887 = vmul.f32 %v5855, 0.7978846
      %v5888 = vmul.f32 %v5856, 0.7978846
      %v5889 = vmul.f32 %v5857, 0.7978846
      %v5890 = vmul.f32 %v5858, 0.7978846
      %v5891 = vmul.f32 %v5859, 0.7978846
      %v5892 = vmul.f32 %v5860, 0.7978846
      %v5893 = vmul.f32 %v5861, 0.7978846
      %v5894 = vmul.f32 %v5862, 0.7978846
      %v5895 = vmul.f32 %v5863, 0.7978846
      %v5896 = vmul.f32 %v5864, 0.7978846
      %v5897 = vmul.f32 %v5865, 0.7978846
      %v5898 = vmul.f32 %v5866, 0.7978846
      %v5899 = vmul.f32 %v5867, 0.7978846
      %v5900 = vtanh.pop %v5868
      %v5901 = vtanh.pop %v5869
      %v5902 = vtanh.pop %v5870
      %v5903 = vtanh.pop %v5871
      %v5904 = vtanh.pop %v5872
      %v5905 = vtanh.pop %v5873
      %v5906 = vtanh.pop %v5874
      %v5907 = vtanh.pop %v5875
      %v5908 = vtanh.pop %v5876
      %v5909 = vtanh.pop %v5877
      %v5910 = vtanh.pop %v5878
      %v5911 = vtanh.pop %v5879
      %v5912 = vtanh.pop %v5880
      %v5913 = vtanh.pop %v5881
      %v5914 = vtanh.pop %v5882
      %v5915 = vtanh.pop %v5883
      %v5916 = vtanh.pop %v5884
      %v5917 = vtanh.pop %v5885
      %v5918 = vtanh.pop %v5886
      %v5919 = vtanh.pop %v5887
      %v5920 = vtanh.pop %v5888
      %v5921 = vtanh.pop %v5889
      %v5922 = vtanh.pop %v5890
      %v5923 = vtanh.pop %v5891
      %v5924 = vtanh.pop %v5892
      %v5925 = vtanh.pop %v5893
      %v5926 = vtanh.pop %v5894
      %v5927 = vtanh.pop %v5895
      %v5928 = vtanh.pop %v5896
      %v5929 = vtanh.pop %v5897
      %v5930 = vtanh.pop %v5898
      %v5931 = vtanh.pop %v5899
      %v5932 = vadd.f32 %v5900, 1.0
      %v5933 = vadd.f32 %v5901, 1.0
      %v5934 = vadd.f32 %v5902, 1.0
      %v5935 = vadd.f32 %v5903, 1.0
      %v5936 = vadd.f32 %v5904, 1.0
      %v5937 = vadd.f32 %v5905, 1.0
      %v5938 = vadd.f32 %v5906, 1.0
      %v5939 = vadd.f32 %v5907, 1.0
      %v5940 = vadd.f32 %v5908, 1.0
      %v5941 = vadd.f32 %v5909, 1.0
      %v5942 = vadd.f32 %v5910, 1.0
      %v5943 = vadd.f32 %v5911, 1.0
      %v5944 = vadd.f32 %v5912, 1.0
      %v5945 = vadd.f32 %v5913, 1.0
      %v5946 = vadd.f32 %v5914, 1.0
      %v5947 = vadd.f32 %v5915, 1.0
      %v5948 = vadd.f32 %v5916, 1.0
      %v5949 = vadd.f32 %v5917, 1.0
      %v5950 = vadd.f32 %v5918, 1.0
      %v5951 = vadd.f32 %v5919, 1.0
      %v5952 = vadd.f32 %v5920, 1.0
      %v5953 = vadd.f32 %v5921, 1.0
      %v5954 = vadd.f32 %v5922, 1.0
      %v5955 = vadd.f32 %v5923, 1.0
      %v5956 = vadd.f32 %v5924, 1.0
      %v5957 = vadd.f32 %v5925, 1.0
      %v5958 = vadd.f32 %v5926, 1.0
      %v5959 = vadd.f32 %v5927, 1.0
      %v5960 = vadd.f32 %v5928, 1.0
      %v5961 = vadd.f32 %v5929, 1.0
      %v5962 = vadd.f32 %v5930, 1.0
      %v5963 = vadd.f32 %v5931, 1.0
      %v5964 = vmul.f32 %v5932, 0.5
      %v5965 = vmul.f32 %v5933, 0.5
      %v5966 = vmul.f32 %v5934, 0.5
      %v5967 = vmul.f32 %v5935, 0.5
      %v5968 = vmul.f32 %v5936, 0.5
      %v5969 = vmul.f32 %v5937, 0.5
      %v5970 = vmul.f32 %v5938, 0.5
      %v5971 = vmul.f32 %v5939, 0.5
      %v5972 = vmul.f32 %v5940, 0.5
      %v5973 = vmul.f32 %v5941, 0.5
      %v5974 = vmul.f32 %v5942, 0.5
      %v5975 = vmul.f32 %v5943, 0.5
      %v5976 = vmul.f32 %v5944, 0.5
      %v5977 = vmul.f32 %v5945, 0.5
      %v5978 = vmul.f32 %v5946, 0.5
      %v5979 = vmul.f32 %v5947, 0.5
      %v5980 = vmul.f32 %v5948, 0.5
      %v5981 = vmul.f32 %v5949, 0.5
      %v5982 = vmul.f32 %v5950, 0.5
      %v5983 = vmul.f32 %v5951, 0.5
      %v5984 = vmul.f32 %v5952, 0.5
      %v5985 = vmul.f32 %v5953, 0.5
      %v5986 = vmul.f32 %v5954, 0.5
      %v5987 = vmul.f32 %v5955, 0.5
      %v5988 = vmul.f32 %v5956, 0.5
      %v5989 = vmul.f32 %v5957, 0.5
      %v5990 = vmul.f32 %v5958, 0.5
      %v5991 = vmul.f32 %v5959, 0.5
      %v5992 = vmul.f32 %v5960, 0.5
      %v5993 = vmul.f32 %v5961, 0.5
      %v5994 = vmul.f32 %v5962, 0.5
      %v5995 = vmul.f32 %v5963, 0.5
      %v5996 = vmul.f32 %v5661, %v5964
      %v5997 = vmul.f32 %v5663, %v5965
      %v5998 = vmul.f32 %v5666, %v5966
      %v5999 = vmul.f32 %v5668, %v5967
      %v6000 = vmul.f32 %v5671, %v5968
      %v6001 = vmul.f32 %v5673, %v5969
      %v6002 = vmul.f32 %v5676, %v5970
      %v6003 = vmul.f32 %v5678, %v5971
      %v6004 = vmul.f32 %v5681, %v5972
      %v6005 = vmul.f32 %v5683, %v5973
      %v6006 = vmul.f32 %v5686, %v5974
      %v6007 = vmul.f32 %v5688, %v5975
      %v6008 = vmul.f32 %v5691, %v5976
      %v6009 = vmul.f32 %v5693, %v5977
      %v6010 = vmul.f32 %v5696, %v5978
      %v6011 = vmul.f32 %v5698, %v5979
      %v6012 = vmul.f32 %v5701, %v5980
      %v6013 = vmul.f32 %v5703, %v5981
      %v6014 = vmul.f32 %v5706, %v5982
      %v6015 = vmul.f32 %v5708, %v5983
      %v6016 = vmul.f32 %v5711, %v5984
      %v6017 = vmul.f32 %v5713, %v5985
      %v6018 = vmul.f32 %v5716, %v5986
      %v6019 = vmul.f32 %v5718, %v5987
      %v6020 = vmul.f32 %v5721, %v5988
      %v6021 = vmul.f32 %v5723, %v5989
      %v6022 = vmul.f32 %v5726, %v5990
      %v6023 = vmul.f32 %v5728, %v5991
      %v6024 = vmul.f32 %v5731, %v5992
      %v6025 = vmul.f32 %v5733, %v5993
      %v6026 = vmul.f32 %v5736, %v5994
      %v6027 = vmul.f32 %v5738, %v5995
      %v6028 = vpack.c.bf16 %v5997, %v5996
      %v6029 = vpack.c.bf16 %v5999, %v5998
      %v6030 = vpack.c.bf16 %v6001, %v6000
      %v6031 = vpack.c.bf16 %v6003, %v6002
      %v6032 = vpack.c.bf16 %v6005, %v6004
      %v6033 = vpack.c.bf16 %v6007, %v6006
      %v6034 = vpack.c.bf16 %v6009, %v6008
      %v6035 = vpack.c.bf16 %v6011, %v6010
      %v6036 = vpack.c.bf16 %v6013, %v6012
      %v6037 = vpack.c.bf16 %v6015, %v6014
      %v6038 = vpack.c.bf16 %v6017, %v6016
      %v6039 = vpack.c.bf16 %v6019, %v6018
      %v6040 = vpack.c.bf16 %v6021, %v6020
      %v6041 = vpack.c.bf16 %v6023, %v6022
      %v6042 = vpack.c.bf16 %v6025, %v6024
      %v6043 = vpack.c.bf16 %v6027, %v6026
      %v6044 = vld [vmem:[%s15] sm:$0xf]
      %v6045 = vld [vmem:[%s15 + $0x4] sm:$0xf]
      %v6046 = vld [vmem:[%s15 + $0x8] sm:$0xf]
      %v6047 = vld [vmem:[%s15 + $0xc] sm:$0xf]
      %v6048 = vld [vmem:[%s15 + $0x10] sm:$0xf]
      %v6049 = vld [vmem:[%s15 + $0x14] sm:$0xf]
      %v6050 = vld [vmem:[%s15 + $0x18] sm:$0xf]
      %v6051 = vld [vmem:[%s15 + $0x1c] sm:$0xf]
      %v6060 = vunpack.c.l.b16 %v6044
      %v6061 = vunpack.c.l.b16 %v6045
      %v6062 = vunpack.c.l.b16 %v6046
      %v6063 = vunpack.c.l.b16 %v6047
      %v6064 = vunpack.c.l.b16 %v6048
      %v6065 = vunpack.c.l.b16 %v6049
      %v6066 = vunpack.c.l.b16 %v6050
      %v6067 = vunpack.c.l.b16 %v6051
      %v6068 = vpack.c.b16 %v6061, %v6060
      %v6069 = vpack.c.b16 %v6063, %v6062
      %v6070 = vpack.c.b16 %v6065, %v6064
      %v6071 = vpack.c.b16 %v6067, %v6066
      %vm6076 = vcmask 523264
      %v6078 = vsel %vm6076, %v6028, 0
      %v6081 = vsel %vm6076, %v6029, 0
      %v6084 = vsel %vm6076, %v6030, 0
      %v6087 = vsel %vm6076, %v6031, 0
      %v6090 = vsel %vm6076, %v6032, 0
      %v6093 = vsel %vm6076, %v6033, 0
      %v6096 = vsel %vm6076, %v6034, 0
      %v6099 = vsel %vm6076, %v6035, 0
      %v6102 = vsel %vm6076, %v6036, 0
      %v6105 = vsel %vm6076, %v6037, 0
      %v6108 = vsel %vm6076, %v6038, 0
      %v6111 = vsel %vm6076, %v6039, 0
      %v6114 = vsel %vm6076, %v6040, 0
      %v6117 = vsel %vm6076, %v6041, 0
      %v6120 = vsel %vm6076, %v6042, 0
      %v6123 = vsel %vm6076, %v6043, 0
      %6125 = vmatpush.bf16.msra.mxu0 0
      %6126 = vmatpush.bf16.msra.mxu0 0
      %6127 = vmatpush.bf16.msra.mxu0 0
      %6128 = vmatpush.bf16.msra.mxu0 0
      %6129 = vmatpush.bf16.msra.mxu0 %v6071
      %6130 = vmatpush.bf16.msra.mxu0 %v6070
      %6131 = vmatpush.bf16.msra.mxu0 %v6069
      %6132 = vmatpush.bf16.msra.mxu0 %v6068
      %6133 = vmatmul.bf16.gmra.mxu0 %v6078
      %v6134 = vpop.f32.mrf.mxu0
      %v6135 = vadd.f32 0.0, %v6134
      %v6136 = vpop.f32.mrf.mxu0
      %v6137 = vadd.f32 0.0, %v6136
      %6138 = vmatmul.bf16.gmra.mxu0 %v6081
      %v6139 = vpop.f32.mrf.mxu0
      %v6140 = vadd.f32 0.0, %v6139
      %v6141 = vpop.f32.mrf.mxu0
      %v6142 = vadd.f32 0.0, %v6141
      %6143 = vmatmul.bf16.gmra.mxu0 %v6084
      %v6144 = vpop.f32.mrf.mxu0
      %v6145 = vadd.f32 0.0, %v6144
      %v6146 = vpop.f32.mrf.mxu0
      %v6147 = vadd.f32 0.0, %v6146
      %6148 = vmatmul.bf16.gmra.mxu0 %v6087
      %v6149 = vpop.f32.mrf.mxu0
      %v6150 = vadd.f32 0.0, %v6149
      %v6151 = vpop.f32.mrf.mxu0
      %v6152 = vadd.f32 0.0, %v6151
      %6153 = vmatmul.bf16.gmra.mxu0 %v6090
      %v6154 = vpop.f32.mrf.mxu0
      %v6155 = vadd.f32 0.0, %v6154
      %v6156 = vpop.f32.mrf.mxu0
      %v6157 = vadd.f32 0.0, %v6156
      %6158 = vmatmul.bf16.gmra.mxu0 %v6093
      %v6159 = vpop.f32.mrf.mxu0
      %v6160 = vadd.f32 0.0, %v6159
      %v6161 = vpop.f32.mrf.mxu0
      %v6162 = vadd.f32 0.0, %v6161
      %6163 = vmatmul.bf16.gmra.mxu0 %v6096
      %v6164 = vpop.f32.mrf.mxu0
      %v6165 = vadd.f32 0.0, %v6164
      %v6166 = vpop.f32.mrf.mxu0
      %v6167 = vadd.f32 0.0, %v6166
      %6168 = vmatmul.bf16.gmra.mxu0 %v6099
      %v6169 = vpop.f32.mrf.mxu0
      %v6170 = vadd.f32 0.0, %v6169
      %v6171 = vpop.f32.mrf.mxu0
      %v6172 = vadd.f32 0.0, %v6171
      %6173 = vmatmul.bf16.gmra.mxu0 %v6102
      %v6174 = vpop.f32.mrf.mxu0
      %v6175 = vadd.f32 0.0, %v6174
      %v6176 = vpop.f32.mrf.mxu0
      %v6177 = vadd.f32 0.0, %v6176
      %6178 = vmatmul.bf16.gmra.mxu0 %v6105
      %v6179 = vpop.f32.mrf.mxu0
      %v6180 = vadd.f32 0.0, %v6179
      %v6181 = vpop.f32.mrf.mxu0
      %v6182 = vadd.f32 0.0, %v6181
      %6183 = vmatmul.bf16.gmra.mxu0 %v6108
      %v6184 = vpop.f32.mrf.mxu0
      %v6185 = vadd.f32 0.0, %v6184
      %v6186 = vpop.f32.mrf.mxu0
      %v6187 = vadd.f32 0.0, %v6186
      %6188 = vmatmul.bf16.gmra.mxu0 %v6111
      %v6189 = vpop.f32.mrf.mxu0
      %v6190 = vadd.f32 0.0, %v6189
      %v6191 = vpop.f32.mrf.mxu0
      %v6192 = vadd.f32 0.0, %v6191
      %6193 = vmatmul.bf16.gmra.mxu0 %v6114
      %v6194 = vpop.f32.mrf.mxu0
      %v6195 = vadd.f32 0.0, %v6194
      %v6196 = vpop.f32.mrf.mxu0
      %v6197 = vadd.f32 0.0, %v6196
      %6198 = vmatmul.bf16.gmra.mxu0 %v6117
      %v6199 = vpop.f32.mrf.mxu0
      %v6200 = vadd.f32 0.0, %v6199
      %v6201 = vpop.f32.mrf.mxu0
      %v6202 = vadd.f32 0.0, %v6201
      %6203 = vmatmul.bf16.gmra.mxu0 %v6120
      %v6204 = vpop.f32.mrf.mxu0
      %v6205 = vadd.f32 0.0, %v6204
      %v6206 = vpop.f32.mrf.mxu0
      %v6207 = vadd.f32 0.0, %v6206
      %6208 = vmatmul.bf16.gmra.mxu0 %v6123
      %v6209 = vpop.f32.mrf.mxu0
      %v6210 = vadd.f32 0.0, %v6209
      %v6211 = vpop.f32.mrf.mxu0
      %v6212 = vadd.f32 0.0, %v6211
      %6213 = vdwg.mxu0
      %v6214 = vadd.f32 %v4767, %v6135
      %v6215 = vadd.f32 %v4768, %v6137
      %v6216 = vadd.f32 %v4769, %v6140
      %v6217 = vadd.f32 %v4770, %v6142
      %v6218 = vadd.f32 %v4771, %v6145
      %v6219 = vadd.f32 %v4772, %v6147
      %v6220 = vadd.f32 %v4773, %v6150
      %v6221 = vadd.f32 %v4774, %v6152
      %v6222 = vadd.f32 %v4775, %v6155
      %v6223 = vadd.f32 %v4776, %v6157
      %v6224 = vadd.f32 %v4777, %v6160
      %v6225 = vadd.f32 %v4778, %v6162
      %v6226 = vadd.f32 %v4779, %v6165
      %v6227 = vadd.f32 %v4780, %v6167
      %v6228 = vadd.f32 %v4781, %v6170
      %v6229 = vadd.f32 %v4782, %v6172
      %v6230 = vadd.f32 %v4783, %v6175
      %v6231 = vadd.f32 %v4784, %v6177
      %v6232 = vadd.f32 %v4785, %v6180
      %v6233 = vadd.f32 %v4786, %v6182
      %v6234 = vadd.f32 %v4787, %v6185
      %v6235 = vadd.f32 %v4788, %v6187
      %v6236 = vadd.f32 %v4789, %v6190
      %v6237 = vadd.f32 %v4790, %v6192
      %v6238 = vadd.f32 %v4791, %v6195
      %v6239 = vadd.f32 %v4792, %v6197
      %v6240 = vadd.f32 %v4793, %v6200
      %v6241 = vadd.f32 %v4794, %v6202
      %v6242 = vadd.f32 %v4795, %v6205
      %v6243 = vadd.f32 %v4796, %v6207
      %v6244 = vadd.f32 %v4797, %v6210
      %v6245 = vadd.f32 %v4798, %v6212
      %v6246 = vld [vmem:[%s16] sm:$0x1]
      %v6248 = vperm.slane %v6246, 0
      %v6250 = vadd.f32 %v6214, %v6248
      %v6251 = vadd.f32 %v6215, %v6248
      %v6252 = vadd.f32 %v6216, %v6248
      %v6253 = vadd.f32 %v6217, %v6248
      %v6254 = vadd.f32 %v6218, %v6248
      %v6255 = vadd.f32 %v6219, %v6248
      %v6256 = vadd.f32 %v6220, %v6248
      %v6257 = vadd.f32 %v6221, %v6248
      %v6258 = vadd.f32 %v6222, %v6248
      %v6259 = vadd.f32 %v6223, %v6248
      %v6260 = vadd.f32 %v6224, %v6248
      %v6261 = vadd.f32 %v6225, %v6248
      %v6262 = vadd.f32 %v6226, %v6248
      %v6263 = vadd.f32 %v6227, %v6248
      %v6264 = vadd.f32 %v6228, %v6248
      %v6265 = vadd.f32 %v6229, %v6248
      %v6266 = vadd.f32 %v6230, %v6248
      %v6267 = vadd.f32 %v6231, %v6248
      %v6268 = vadd.f32 %v6232, %v6248
      %v6269 = vadd.f32 %v6233, %v6248
      %v6270 = vadd.f32 %v6234, %v6248
      %v6271 = vadd.f32 %v6235, %v6248
      %v6272 = vadd.f32 %v6236, %v6248
      %v6273 = vadd.f32 %v6237, %v6248
      %v6274 = vadd.f32 %v6238, %v6248
      %v6275 = vadd.f32 %v6239, %v6248
      %v6276 = vadd.f32 %v6240, %v6248
      %v6277 = vadd.f32 %v6241, %v6248
      %v6278 = vadd.f32 %v6242, %v6248
      %v6279 = vadd.f32 %v6243, %v6248
      %v6280 = vadd.f32 %v6244, %v6248
      %v6281 = vadd.f32 %v6245, %v6248
      %s6282 = scalar_lea.vmem %s7, 8
      %v6283 = vld [vmem:[%s6282] sm:$0xf]
      %v6284 = vld [vmem:[%s6282 + $0x4] sm:$0xf]
      %s6285 = scalar_lea.vmem %s8, 1
      %v6286 = vld [vmem:[%s6285] sm:$0x1]
      %s6287 = scalar_lea.vmem %s9, 8
      %v6288 = vld [vmem:[%s6287] sm:$0xf]
      %v6289 = vld [vmem:[%s6287 + $0x4] sm:$0xf]
      %s6290 = scalar_lea.vmem %s10, 1
      %v6291 = vld [vmem:[%s6290] sm:$0x1]
      %v6292 = vsel %vm994, %v6250, 0.0
      %6293 = vadd.xlane.f32.xlu0 %v6292
      %v6294 = vpop.xlane.xlu0 %6293
      %v6295 = vsel %vm994, %v6251, 0.0
      %6296 = vadd.xlane.f32.xlu0 %v6295
      %v6297 = vpop.xlane.xlu0 %6296
      %v6298 = vsel %vm994, %v6252, 0.0
      %6299 = vadd.xlane.f32.xlu0 %v6298
      %v6300 = vpop.xlane.xlu0 %6299
      %v6301 = vsel %vm994, %v6253, 0.0
      %6302 = vadd.xlane.f32.xlu0 %v6301
      %v6303 = vpop.xlane.xlu0 %6302
      %v6304 = vsel %vm994, %v6254, 0.0
      %6305 = vadd.xlane.f32.xlu0 %v6304
      %v6306 = vpop.xlane.xlu0 %6305
      %v6307 = vsel %vm994, %v6255, 0.0
      %6308 = vadd.xlane.f32.xlu0 %v6307
      %v6309 = vpop.xlane.xlu0 %6308
      %v6310 = vsel %vm994, %v6256, 0.0
      %6311 = vadd.xlane.f32.xlu0 %v6310
      %v6312 = vpop.xlane.xlu0 %6311
      %v6313 = vsel %vm994, %v6257, 0.0
      %6314 = vadd.xlane.f32.xlu0 %v6313
      %v6315 = vpop.xlane.xlu0 %6314
      %v6316 = vsel %vm994, %v6258, 0.0
      %6317 = vadd.xlane.f32.xlu0 %v6316
      %v6318 = vpop.xlane.xlu0 %6317
      %v6319 = vsel %vm994, %v6259, 0.0
      %6320 = vadd.xlane.f32.xlu0 %v6319
      %v6321 = vpop.xlane.xlu0 %6320
      %v6322 = vsel %vm994, %v6260, 0.0
      %6323 = vadd.xlane.f32.xlu0 %v6322
      %v6324 = vpop.xlane.xlu0 %6323
      %v6325 = vsel %vm994, %v6261, 0.0
      %6326 = vadd.xlane.f32.xlu0 %v6325
      %v6327 = vpop.xlane.xlu0 %6326
      %v6328 = vsel %vm994, %v6262, 0.0
      %6329 = vadd.xlane.f32.xlu0 %v6328
      %v6330 = vpop.xlane.xlu0 %6329
      %v6331 = vsel %vm994, %v6263, 0.0
      %6332 = vadd.xlane.f32.xlu0 %v6331
      %v6333 = vpop.xlane.xlu0 %6332
      %v6334 = vsel %vm994, %v6264, 0.0
      %6335 = vadd.xlane.f32.xlu0 %v6334
      %v6336 = vpop.xlane.xlu0 %6335
      %v6337 = vsel %vm994, %v6265, 0.0
      %6338 = vadd.xlane.f32.xlu0 %v6337
      %v6339 = vpop.xlane.xlu0 %6338
      %v6340 = vsel %vm994, %v6266, 0.0
      %6341 = vadd.xlane.f32.xlu0 %v6340
      %v6342 = vpop.xlane.xlu0 %6341
      %v6343 = vsel %vm994, %v6267, 0.0
      %6344 = vadd.xlane.f32.xlu0 %v6343
      %v6345 = vpop.xlane.xlu0 %6344
      %v6346 = vsel %vm994, %v6268, 0.0
      %6347 = vadd.xlane.f32.xlu0 %v6346
      %v6348 = vpop.xlane.xlu0 %6347
      %v6349 = vsel %vm994, %v6269, 0.0
      %6350 = vadd.xlane.f32.xlu0 %v6349
      %v6351 = vpop.xlane.xlu0 %6350
      %v6352 = vsel %vm994, %v6270, 0.0
      %6353 = vadd.xlane.f32.xlu0 %v6352
      %v6354 = vpop.xlane.xlu0 %6353
      %v6355 = vsel %vm994, %v6271, 0.0
      %6356 = vadd.xlane.f32.xlu0 %v6355
      %v6357 = vpop.xlane.xlu0 %6356
      %v6358 = vsel %vm994, %v6272, 0.0
      %6359 = vadd.xlane.f32.xlu0 %v6358
      %v6360 = vpop.xlane.xlu0 %6359
      %v6361 = vsel %vm994, %v6273, 0.0
      %6362 = vadd.xlane.f32.xlu0 %v6361
      %v6363 = vpop.xlane.xlu0 %6362
      %v6364 = vsel %vm994, %v6274, 0.0
      %6365 = vadd.xlane.f32.xlu0 %v6364
      %v6366 = vpop.xlane.xlu0 %6365
      %v6367 = vsel %vm994, %v6275, 0.0
      %6368 = vadd.xlane.f32.xlu0 %v6367
      %v6369 = vpop.xlane.xlu0 %6368
      %v6370 = vsel %vm994, %v6276, 0.0
      %6371 = vadd.xlane.f32.xlu0 %v6370
      %v6372 = vpop.xlane.xlu0 %6371
      %v6373 = vsel %vm994, %v6277, 0.0
      %6374 = vadd.xlane.f32.xlu0 %v6373
      %v6375 = vpop.xlane.xlu0 %6374
      %v6376 = vsel %vm994, %v6278, 0.0
      %6377 = vadd.xlane.f32.xlu0 %v6376
      %v6378 = vpop.xlane.xlu0 %6377
      %v6379 = vsel %vm994, %v6279, 0.0
      %6380 = vadd.xlane.f32.xlu0 %v6379
      %v6381 = vpop.xlane.xlu0 %6380
      %v6382 = vsel %vm994, %v6280, 0.0
      %6383 = vadd.xlane.f32.xlu0 %v6382
      %v6384 = vpop.xlane.xlu0 %6383
      %v6385 = vsel %vm994, %v6281, 0.0
      %6386 = vadd.xlane.f32.xlu0 %v6385
      %v6387 = vpop.xlane.xlu0 %6386
      %v6388 = vmul.f32 %v6294, %v1097
      %v6389 = vmul.f32 %v6297, %v1097
      %v6390 = vmul.f32 %v6300, %v1097
      %v6391 = vmul.f32 %v6303, %v1097
      %v6392 = vmul.f32 %v6306, %v1097
      %v6393 = vmul.f32 %v6309, %v1097
      %v6394 = vmul.f32 %v6312, %v1097
      %v6395 = vmul.f32 %v6315, %v1097
      %v6396 = vmul.f32 %v6318, %v1097
      %v6397 = vmul.f32 %v6321, %v1097
      %v6398 = vmul.f32 %v6324, %v1097
      %v6399 = vmul.f32 %v6327, %v1097
      %v6400 = vmul.f32 %v6330, %v1097
      %v6401 = vmul.f32 %v6333, %v1097
      %v6402 = vmul.f32 %v6336, %v1097
      %v6403 = vmul.f32 %v6339, %v1097
      %v6404 = vmul.f32 %v6342, %v1097
      %v6405 = vmul.f32 %v6345, %v1097
      %v6406 = vmul.f32 %v6348, %v1097
      %v6407 = vmul.f32 %v6351, %v1097
      %v6408 = vmul.f32 %v6354, %v1097
      %v6409 = vmul.f32 %v6357, %v1097
      %v6410 = vmul.f32 %v6360, %v1097
      %v6411 = vmul.f32 %v6363, %v1097
      %v6412 = vmul.f32 %v6366, %v1097
      %v6413 = vmul.f32 %v6369, %v1097
      %v6414 = vmul.f32 %v6372, %v1097
      %v6415 = vmul.f32 %v6375, %v1097
      %v6416 = vmul.f32 %v6378, %v1097
      %v6417 = vmul.f32 %v6381, %v1097
      %v6418 = vmul.f32 %v6384, %v1097
      %v6419 = vmul.f32 %v6387, %v1097
      %v6420 = vsub.f32 %v6250, %v6388
      %v6421 = vsub.f32 %v6251, %v6389
      %v6422 = vsub.f32 %v6252, %v6390
      %v6423 = vsub.f32 %v6253, %v6391
      %v6424 = vsub.f32 %v6254, %v6392
      %v6425 = vsub.f32 %v6255, %v6393
      %v6426 = vsub.f32 %v6256, %v6394
      %v6427 = vsub.f32 %v6257, %v6395
      %v6428 = vsub.f32 %v6258, %v6396
      %v6429 = vsub.f32 %v6259, %v6397
      %v6430 = vsub.f32 %v6260, %v6398
      %v6431 = vsub.f32 %v6261, %v6399
      %v6432 = vsub.f32 %v6262, %v6400
      %v6433 = vsub.f32 %v6263, %v6401
      %v6434 = vsub.f32 %v6264, %v6402
      %v6435 = vsub.f32 %v6265, %v6403
      %v6436 = vsub.f32 %v6266, %v6404
      %v6437 = vsub.f32 %v6267, %v6405
      %v6438 = vsub.f32 %v6268, %v6406
      %v6439 = vsub.f32 %v6269, %v6407
      %v6440 = vsub.f32 %v6270, %v6408
      %v6441 = vsub.f32 %v6271, %v6409
      %v6442 = vsub.f32 %v6272, %v6410
      %v6443 = vsub.f32 %v6273, %v6411
      %v6444 = vsub.f32 %v6274, %v6412
      %v6445 = vsub.f32 %v6275, %v6413
      %v6446 = vsub.f32 %v6276, %v6414
      %v6447 = vsub.f32 %v6277, %v6415
      %v6448 = vsub.f32 %v6278, %v6416
      %v6449 = vsub.f32 %v6279, %v6417
      %v6450 = vsub.f32 %v6280, %v6418
      %v6451 = vsub.f32 %v6281, %v6419
      %v6452 = vmul.f32 %v6420, %v6420
      %v6453 = vmul.f32 %v6421, %v6421
      %v6454 = vmul.f32 %v6422, %v6422
      %v6455 = vmul.f32 %v6423, %v6423
      %v6456 = vmul.f32 %v6424, %v6424
      %v6457 = vmul.f32 %v6425, %v6425
      %v6458 = vmul.f32 %v6426, %v6426
      %v6459 = vmul.f32 %v6427, %v6427
      %v6460 = vmul.f32 %v6428, %v6428
      %v6461 = vmul.f32 %v6429, %v6429
      %v6462 = vmul.f32 %v6430, %v6430
      %v6463 = vmul.f32 %v6431, %v6431
      %v6464 = vmul.f32 %v6432, %v6432
      %v6465 = vmul.f32 %v6433, %v6433
      %v6466 = vmul.f32 %v6434, %v6434
      %v6467 = vmul.f32 %v6435, %v6435
      %v6468 = vmul.f32 %v6436, %v6436
      %v6469 = vmul.f32 %v6437, %v6437
      %v6470 = vmul.f32 %v6438, %v6438
      %v6471 = vmul.f32 %v6439, %v6439
      %v6472 = vmul.f32 %v6440, %v6440
      %v6473 = vmul.f32 %v6441, %v6441
      %v6474 = vmul.f32 %v6442, %v6442
      %v6475 = vmul.f32 %v6443, %v6443
      %v6476 = vmul.f32 %v6444, %v6444
      %v6477 = vmul.f32 %v6445, %v6445
      %v6478 = vmul.f32 %v6446, %v6446
      %v6479 = vmul.f32 %v6447, %v6447
      %v6480 = vmul.f32 %v6448, %v6448
      %v6481 = vmul.f32 %v6449, %v6449
      %v6482 = vmul.f32 %v6450, %v6450
      %v6483 = vmul.f32 %v6451, %v6451
      %v6484 = vsel %vm994, %v6452, 0.0
      %6485 = vadd.xlane.f32.xlu0 %v6484
      %v6486 = vpop.xlane.xlu0 %6485
      %v6487 = vsel %vm994, %v6453, 0.0
      %6488 = vadd.xlane.f32.xlu0 %v6487
      %v6489 = vpop.xlane.xlu0 %6488
      %v6490 = vsel %vm994, %v6454, 0.0
      %6491 = vadd.xlane.f32.xlu0 %v6490
      %v6492 = vpop.xlane.xlu0 %6491
      %v6493 = vsel %vm994, %v6455, 0.0
      %6494 = vadd.xlane.f32.xlu0 %v6493
      %v6495 = vpop.xlane.xlu0 %6494
      %v6496 = vsel %vm994, %v6456, 0.0
      %6497 = vadd.xlane.f32.xlu0 %v6496
      %v6498 = vpop.xlane.xlu0 %6497
      %v6499 = vsel %vm994, %v6457, 0.0
      %6500 = vadd.xlane.f32.xlu0 %v6499
      %v6501 = vpop.xlane.xlu0 %6500
      %v6502 = vsel %vm994, %v6458, 0.0
      %6503 = vadd.xlane.f32.xlu0 %v6502
      %v6504 = vpop.xlane.xlu0 %6503
      %v6505 = vsel %vm994, %v6459, 0.0
      %6506 = vadd.xlane.f32.xlu0 %v6505
      %v6507 = vpop.xlane.xlu0 %6506
      %v6508 = vsel %vm994, %v6460, 0.0
      %6509 = vadd.xlane.f32.xlu0 %v6508
      %v6510 = vpop.xlane.xlu0 %6509
      %v6511 = vsel %vm994, %v6461, 0.0
      %6512 = vadd.xlane.f32.xlu0 %v6511
      %v6513 = vpop.xlane.xlu0 %6512
      %v6514 = vsel %vm994, %v6462, 0.0
      %6515 = vadd.xlane.f32.xlu0 %v6514
      %v6516 = vpop.xlane.xlu0 %6515
      %v6517 = vsel %vm994, %v6463, 0.0
      %6518 = vadd.xlane.f32.xlu0 %v6517
      %v6519 = vpop.xlane.xlu0 %6518
      %v6520 = vsel %vm994, %v6464, 0.0
      %6521 = vadd.xlane.f32.xlu0 %v6520
      %v6522 = vpop.xlane.xlu0 %6521
      %v6523 = vsel %vm994, %v6465, 0.0
      %6524 = vadd.xlane.f32.xlu0 %v6523
      %v6525 = vpop.xlane.xlu0 %6524
      %v6526 = vsel %vm994, %v6466, 0.0
      %6527 = vadd.xlane.f32.xlu0 %v6526
      %v6528 = vpop.xlane.xlu0 %6527
      %v6529 = vsel %vm994, %v6467, 0.0
      %6530 = vadd.xlane.f32.xlu0 %v6529
      %v6531 = vpop.xlane.xlu0 %6530
      %v6532 = vsel %vm994, %v6468, 0.0
      %6533 = vadd.xlane.f32.xlu0 %v6532
      %v6534 = vpop.xlane.xlu0 %6533
      %v6535 = vsel %vm994, %v6469, 0.0
      %6536 = vadd.xlane.f32.xlu0 %v6535
      %v6537 = vpop.xlane.xlu0 %6536
      %v6538 = vsel %vm994, %v6470, 0.0
      %6539 = vadd.xlane.f32.xlu0 %v6538
      %v6540 = vpop.xlane.xlu0 %6539
      %v6541 = vsel %vm994, %v6471, 0.0
      %6542 = vadd.xlane.f32.xlu0 %v6541
      %v6543 = vpop.xlane.xlu0 %6542
      %v6544 = vsel %vm994, %v6472, 0.0
      %6545 = vadd.xlane.f32.xlu0 %v6544
      %v6546 = vpop.xlane.xlu0 %6545
      %v6547 = vsel %vm994, %v6473, 0.0
      %6548 = vadd.xlane.f32.xlu0 %v6547
      %v6549 = vpop.xlane.xlu0 %6548
      %v6550 = vsel %vm994, %v6474, 0.0
      %6551 = vadd.xlane.f32.xlu0 %v6550
      %v6552 = vpop.xlane.xlu0 %6551
      %v6553 = vsel %vm994, %v6475, 0.0
      %6554 = vadd.xlane.f32.xlu0 %v6553
      %v6555 = vpop.xlane.xlu0 %6554
      %v6556 = vsel %vm994, %v6476, 0.0
      %6557 = vadd.xlane.f32.xlu0 %v6556
      %v6558 = vpop.xlane.xlu0 %6557
      %v6559 = vsel %vm994, %v6477, 0.0
      %6560 = vadd.xlane.f32.xlu0 %v6559
      %v6561 = vpop.xlane.xlu0 %6560
      %v6562 = vsel %vm994, %v6478, 0.0
      %6563 = vadd.xlane.f32.xlu0 %v6562
      %v6564 = vpop.xlane.xlu0 %6563
      %v6565 = vsel %vm994, %v6479, 0.0
      %6566 = vadd.xlane.f32.xlu0 %v6565
      %v6567 = vpop.xlane.xlu0 %6566
      %v6568 = vsel %vm994, %v6480, 0.0
      %6569 = vadd.xlane.f32.xlu0 %v6568
      %v6570 = vpop.xlane.xlu0 %6569
      %v6571 = vsel %vm994, %v6481, 0.0
      %6572 = vadd.xlane.f32.xlu0 %v6571
      %v6573 = vpop.xlane.xlu0 %6572
      %v6574 = vsel %vm994, %v6482, 0.0
      %6575 = vadd.xlane.f32.xlu0 %v6574
      %v6576 = vpop.xlane.xlu0 %6575
      %v6577 = vsel %vm994, %v6483, 0.0
      %6578 = vadd.xlane.f32.xlu0 %v6577
      %v6579 = vpop.xlane.xlu0 %6578
      %v6580 = vmul.f32 %v6486, %v1097
      %v6581 = vmul.f32 %v6489, %v1097
      %v6582 = vmul.f32 %v6492, %v1097
      %v6583 = vmul.f32 %v6495, %v1097
      %v6584 = vmul.f32 %v6498, %v1097
      %v6585 = vmul.f32 %v6501, %v1097
      %v6586 = vmul.f32 %v6504, %v1097
      %v6587 = vmul.f32 %v6507, %v1097
      %v6588 = vmul.f32 %v6510, %v1097
      %v6589 = vmul.f32 %v6513, %v1097
      %v6590 = vmul.f32 %v6516, %v1097
      %v6591 = vmul.f32 %v6519, %v1097
      %v6592 = vmul.f32 %v6522, %v1097
      %v6593 = vmul.f32 %v6525, %v1097
      %v6594 = vmul.f32 %v6528, %v1097
      %v6595 = vmul.f32 %v6531, %v1097
      %v6596 = vmul.f32 %v6534, %v1097
      %v6597 = vmul.f32 %v6537, %v1097
      %v6598 = vmul.f32 %v6540, %v1097
      %v6599 = vmul.f32 %v6543, %v1097
      %v6600 = vmul.f32 %v6546, %v1097
      %v6601 = vmul.f32 %v6549, %v1097
      %v6602 = vmul.f32 %v6552, %v1097
      %v6603 = vmul.f32 %v6555, %v1097
      %v6604 = vmul.f32 %v6558, %v1097
      %v6605 = vmul.f32 %v6561, %v1097
      %v6606 = vmul.f32 %v6564, %v1097
      %v6607 = vmul.f32 %v6567, %v1097
      %v6608 = vmul.f32 %v6570, %v1097
      %v6609 = vmul.f32 %v6573, %v1097
      %v6610 = vmul.f32 %v6576, %v1097
      %v6611 = vmul.f32 %v6579, %v1097
      %v6612 = vadd.f32 %v6580, 1e-05
      %v6613 = vadd.f32 %v6581, 1e-05
      %v6614 = vadd.f32 %v6582, 1e-05
      %v6615 = vadd.f32 %v6583, 1e-05
      %v6616 = vadd.f32 %v6584, 1e-05
      %v6617 = vadd.f32 %v6585, 1e-05
      %v6618 = vadd.f32 %v6586, 1e-05
      %v6619 = vadd.f32 %v6587, 1e-05
      %v6620 = vadd.f32 %v6588, 1e-05
      %v6621 = vadd.f32 %v6589, 1e-05
      %v6622 = vadd.f32 %v6590, 1e-05
      %v6623 = vadd.f32 %v6591, 1e-05
      %v6624 = vadd.f32 %v6592, 1e-05
      %v6625 = vadd.f32 %v6593, 1e-05
      %v6626 = vadd.f32 %v6594, 1e-05
      %v6627 = vadd.f32 %v6595, 1e-05
      %v6628 = vadd.f32 %v6596, 1e-05
      %v6629 = vadd.f32 %v6597, 1e-05
      %v6630 = vadd.f32 %v6598, 1e-05
      %v6631 = vadd.f32 %v6599, 1e-05
      %v6632 = vadd.f32 %v6600, 1e-05
      %v6633 = vadd.f32 %v6601, 1e-05
      %v6634 = vadd.f32 %v6602, 1e-05
      %v6635 = vadd.f32 %v6603, 1e-05
      %v6636 = vadd.f32 %v6604, 1e-05
      %v6637 = vadd.f32 %v6605, 1e-05
      %v6638 = vadd.f32 %v6606, 1e-05
      %v6639 = vadd.f32 %v6607, 1e-05
      %v6640 = vadd.f32 %v6608, 1e-05
      %v6641 = vadd.f32 %v6609, 1e-05
      %v6642 = vadd.f32 %v6610, 1e-05
      %v6643 = vadd.f32 %v6611, 1e-05
      %v6644 = vrsqrt.pop %v6612
      %v6645 = vmul.f32 %v6644, %v6612
      %v6646 = vmul.f32 %v6645, %v6644
      %v6647 = vmul.f32 0.5, %v6646
      %v6648 = vsub.f32 1.5, %v6647
      %v6649 = vmul.f32 %v6644, %v6648
      %vm6650 = vweird.f32 %v6612
      %vm6651 = vweird.f32 %v6644
      %vm6652 = vmor %vm6650, %vm6651
      %v6653 = vsel %vm6652, %v6644, %v6649
      %v6654 = vrsqrt.pop %v6613
      %v6655 = vmul.f32 %v6654, %v6613
      %v6656 = vmul.f32 %v6655, %v6654
      %v6657 = vmul.f32 0.5, %v6656
      %v6658 = vsub.f32 1.5, %v6657
      %v6659 = vmul.f32 %v6654, %v6658
      %vm6660 = vweird.f32 %v6613
      %vm6661 = vweird.f32 %v6654
      %vm6662 = vmor %vm6660, %vm6661
      %v6663 = vsel %vm6662, %v6654, %v6659
      %v6664 = vrsqrt.pop %v6614
      %v6665 = vmul.f32 %v6664, %v6614
      %v6666 = vmul.f32 %v6665, %v6664
      %v6667 = vmul.f32 0.5, %v6666
      %v6668 = vsub.f32 1.5, %v6667
      %v6669 = vmul.f32 %v6664, %v6668
      %vm6670 = vweird.f32 %v6614
      %vm6671 = vweird.f32 %v6664
      %vm6672 = vmor %vm6670, %vm6671
      %v6673 = vsel %vm6672, %v6664, %v6669
      %v6674 = vrsqrt.pop %v6615
      %v6675 = vmul.f32 %v6674, %v6615
      %v6676 = vmul.f32 %v6675, %v6674
      %v6677 = vmul.f32 0.5, %v6676
      %v6678 = vsub.f32 1.5, %v6677
      %v6679 = vmul.f32 %v6674, %v6678
      %vm6680 = vweird.f32 %v6615
      %vm6681 = vweird.f32 %v6674
      %vm6682 = vmor %vm6680, %vm6681
      %v6683 = vsel %vm6682, %v6674, %v6679
      %v6684 = vrsqrt.pop %v6616
      %v6685 = vmul.f32 %v6684, %v6616
      %v6686 = vmul.f32 %v6685, %v6684
      %v6687 = vmul.f32 0.5, %v6686
      %v6688 = vsub.f32 1.5, %v6687
      %v6689 = vmul.f32 %v6684, %v6688
      %vm6690 = vweird.f32 %v6616
      %vm6691 = vweird.f32 %v6684
      %vm6692 = vmor %vm6690, %vm6691
      %v6693 = vsel %vm6692, %v6684, %v6689
      %v6694 = vrsqrt.pop %v6617
      %v6695 = vmul.f32 %v6694, %v6617
      %v6696 = vmul.f32 %v6695, %v6694
      %v6697 = vmul.f32 0.5, %v6696
      %v6698 = vsub.f32 1.5, %v6697
      %v6699 = vmul.f32 %v6694, %v6698
      %vm6700 = vweird.f32 %v6617
      %vm6701 = vweird.f32 %v6694
      %vm6702 = vmor %vm6700, %vm6701
      %v6703 = vsel %vm6702, %v6694, %v6699
      %v6704 = vrsqrt.pop %v6618
      %v6705 = vmul.f32 %v6704, %v6618
      %v6706 = vmul.f32 %v6705, %v6704
      %v6707 = vmul.f32 0.5, %v6706
      %v6708 = vsub.f32 1.5, %v6707
      %v6709 = vmul.f32 %v6704, %v6708
      %vm6710 = vweird.f32 %v6618
      %vm6711 = vweird.f32 %v6704
      %vm6712 = vmor %vm6710, %vm6711
      %v6713 = vsel %vm6712, %v6704, %v6709
      %v6714 = vrsqrt.pop %v6619
      %v6715 = vmul.f32 %v6714, %v6619
      %v6716 = vmul.f32 %v6715, %v6714
      %v6717 = vmul.f32 0.5, %v6716
      %v6718 = vsub.f32 1.5, %v6717
      %v6719 = vmul.f32 %v6714, %v6718
      %vm6720 = vweird.f32 %v6619
      %vm6721 = vweird.f32 %v6714
      %vm6722 = vmor %vm6720, %vm6721
      %v6723 = vsel %vm6722, %v6714, %v6719
      %v6724 = vrsqrt.pop %v6620
      %v6725 = vmul.f32 %v6724, %v6620
      %v6726 = vmul.f32 %v6725, %v6724
      %v6727 = vmul.f32 0.5, %v6726
      %v6728 = vsub.f32 1.5, %v6727
      %v6729 = vmul.f32 %v6724, %v6728
      %vm6730 = vweird.f32 %v6620
      %vm6731 = vweird.f32 %v6724
      %vm6732 = vmor %vm6730, %vm6731
      %v6733 = vsel %vm6732, %v6724, %v6729
      %v6734 = vrsqrt.pop %v6621
      %v6735 = vmul.f32 %v6734, %v6621
      %v6736 = vmul.f32 %v6735, %v6734
      %v6737 = vmul.f32 0.5, %v6736
      %v6738 = vsub.f32 1.5, %v6737
      %v6739 = vmul.f32 %v6734, %v6738
      %vm6740 = vweird.f32 %v6621
      %vm6741 = vweird.f32 %v6734
      %vm6742 = vmor %vm6740, %vm6741
      %v6743 = vsel %vm6742, %v6734, %v6739
      %v6744 = vrsqrt.pop %v6622
      %v6745 = vmul.f32 %v6744, %v6622
      %v6746 = vmul.f32 %v6745, %v6744
      %v6747 = vmul.f32 0.5, %v6746
      %v6748 = vsub.f32 1.5, %v6747
      %v6749 = vmul.f32 %v6744, %v6748
      %vm6750 = vweird.f32 %v6622
      %vm6751 = vweird.f32 %v6744
      %vm6752 = vmor %vm6750, %vm6751
      %v6753 = vsel %vm6752, %v6744, %v6749
      %v6754 = vrsqrt.pop %v6623
      %v6755 = vmul.f32 %v6754, %v6623
      %v6756 = vmul.f32 %v6755, %v6754
      %v6757 = vmul.f32 0.5, %v6756
      %v6758 = vsub.f32 1.5, %v6757
      %v6759 = vmul.f32 %v6754, %v6758
      %vm6760 = vweird.f32 %v6623
      %vm6761 = vweird.f32 %v6754
      %vm6762 = vmor %vm6760, %vm6761
      %v6763 = vsel %vm6762, %v6754, %v6759
      %v6764 = vrsqrt.pop %v6624
      %v6765 = vmul.f32 %v6764, %v6624
      %v6766 = vmul.f32 %v6765, %v6764
      %v6767 = vmul.f32 0.5, %v6766
      %v6768 = vsub.f32 1.5, %v6767
      %v6769 = vmul.f32 %v6764, %v6768
      %vm6770 = vweird.f32 %v6624
      %vm6771 = vweird.f32 %v6764
      %vm6772 = vmor %vm6770, %vm6771
      %v6773 = vsel %vm6772, %v6764, %v6769
      %v6774 = vrsqrt.pop %v6625
      %v6775 = vmul.f32 %v6774, %v6625
      %v6776 = vmul.f32 %v6775, %v6774
      %v6777 = vmul.f32 0.5, %v6776
      %v6778 = vsub.f32 1.5, %v6777
      %v6779 = vmul.f32 %v6774, %v6778
      %vm6780 = vweird.f32 %v6625
      %vm6781 = vweird.f32 %v6774
      %vm6782 = vmor %vm6780, %vm6781
      %v6783 = vsel %vm6782, %v6774, %v6779
      %v6784 = vrsqrt.pop %v6626
      %v6785 = vmul.f32 %v6784, %v6626
      %v6786 = vmul.f32 %v6785, %v6784
      %v6787 = vmul.f32 0.5, %v6786
      %v6788 = vsub.f32 1.5, %v6787
      %v6789 = vmul.f32 %v6784, %v6788
      %vm6790 = vweird.f32 %v6626
      %vm6791 = vweird.f32 %v6784
      %vm6792 = vmor %vm6790, %vm6791
      %v6793 = vsel %vm6792, %v6784, %v6789
      %v6794 = vrsqrt.pop %v6627
      %v6795 = vmul.f32 %v6794, %v6627
      %v6796 = vmul.f32 %v6795, %v6794
      %v6797 = vmul.f32 0.5, %v6796
      %v6798 = vsub.f32 1.5, %v6797
      %v6799 = vmul.f32 %v6794, %v6798
      %vm6800 = vweird.f32 %v6627
      %vm6801 = vweird.f32 %v6794
      %vm6802 = vmor %vm6800, %vm6801
      %v6803 = vsel %vm6802, %v6794, %v6799
      %v6804 = vrsqrt.pop %v6628
      %v6805 = vmul.f32 %v6804, %v6628
      %v6806 = vmul.f32 %v6805, %v6804
      %v6807 = vmul.f32 0.5, %v6806
      %v6808 = vsub.f32 1.5, %v6807
      %v6809 = vmul.f32 %v6804, %v6808
      %vm6810 = vweird.f32 %v6628
      %vm6811 = vweird.f32 %v6804
      %vm6812 = vmor %vm6810, %vm6811
      %v6813 = vsel %vm6812, %v6804, %v6809
      %v6814 = vrsqrt.pop %v6629
      %v6815 = vmul.f32 %v6814, %v6629
      %v6816 = vmul.f32 %v6815, %v6814
      %v6817 = vmul.f32 0.5, %v6816
      %v6818 = vsub.f32 1.5, %v6817
      %v6819 = vmul.f32 %v6814, %v6818
      %vm6820 = vweird.f32 %v6629
      %vm6821 = vweird.f32 %v6814
      %vm6822 = vmor %vm6820, %vm6821
      %v6823 = vsel %vm6822, %v6814, %v6819
      %v6824 = vrsqrt.pop %v6630
      %v6825 = vmul.f32 %v6824, %v6630
      %v6826 = vmul.f32 %v6825, %v6824
      %v6827 = vmul.f32 0.5, %v6826
      %v6828 = vsub.f32 1.5, %v6827
      %v6829 = vmul.f32 %v6824, %v6828
      %vm6830 = vweird.f32 %v6630
      %vm6831 = vweird.f32 %v6824
      %vm6832 = vmor %vm6830, %vm6831
      %v6833 = vsel %vm6832, %v6824, %v6829
      %v6834 = vrsqrt.pop %v6631
      %v6835 = vmul.f32 %v6834, %v6631
      %v6836 = vmul.f32 %v6835, %v6834
      %v6837 = vmul.f32 0.5, %v6836
      %v6838 = vsub.f32 1.5, %v6837
      %v6839 = vmul.f32 %v6834, %v6838
      %vm6840 = vweird.f32 %v6631
      %vm6841 = vweird.f32 %v6834
      %vm6842 = vmor %vm6840, %vm6841
      %v6843 = vsel %vm6842, %v6834, %v6839
      %v6844 = vrsqrt.pop %v6632
      %v6845 = vmul.f32 %v6844, %v6632
      %v6846 = vmul.f32 %v6845, %v6844
      %v6847 = vmul.f32 0.5, %v6846
      %v6848 = vsub.f32 1.5, %v6847
      %v6849 = vmul.f32 %v6844, %v6848
      %vm6850 = vweird.f32 %v6632
      %vm6851 = vweird.f32 %v6844
      %vm6852 = vmor %vm6850, %vm6851
      %v6853 = vsel %vm6852, %v6844, %v6849
      %v6854 = vrsqrt.pop %v6633
      %v6855 = vmul.f32 %v6854, %v6633
      %v6856 = vmul.f32 %v6855, %v6854
      %v6857 = vmul.f32 0.5, %v6856
      %v6858 = vsub.f32 1.5, %v6857
      %v6859 = vmul.f32 %v6854, %v6858
      %vm6860 = vweird.f32 %v6633
      %vm6861 = vweird.f32 %v6854
      %vm6862 = vmor %vm6860, %vm6861
      %v6863 = vsel %vm6862, %v6854, %v6859
      %v6864 = vrsqrt.pop %v6634
      %v6865 = vmul.f32 %v6864, %v6634
      %v6866 = vmul.f32 %v6865, %v6864
      %v6867 = vmul.f32 0.5, %v6866
      %v6868 = vsub.f32 1.5, %v6867
      %v6869 = vmul.f32 %v6864, %v6868
      %vm6870 = vweird.f32 %v6634
      %vm6871 = vweird.f32 %v6864
      %vm6872 = vmor %vm6870, %vm6871
      %v6873 = vsel %vm6872, %v6864, %v6869
      %v6874 = vrsqrt.pop %v6635
      %v6875 = vmul.f32 %v6874, %v6635
      %v6876 = vmul.f32 %v6875, %v6874
      %v6877 = vmul.f32 0.5, %v6876
      %v6878 = vsub.f32 1.5, %v6877
      %v6879 = vmul.f32 %v6874, %v6878
      %vm6880 = vweird.f32 %v6635
      %vm6881 = vweird.f32 %v6874
      %vm6882 = vmor %vm6880, %vm6881
      %v6883 = vsel %vm6882, %v6874, %v6879
      %v6884 = vrsqrt.pop %v6636
      %v6885 = vmul.f32 %v6884, %v6636
      %v6886 = vmul.f32 %v6885, %v6884
      %v6887 = vmul.f32 0.5, %v6886
      %v6888 = vsub.f32 1.5, %v6887
      %v6889 = vmul.f32 %v6884, %v6888
      %vm6890 = vweird.f32 %v6636
      %vm6891 = vweird.f32 %v6884
      %vm6892 = vmor %vm6890, %vm6891
      %v6893 = vsel %vm6892, %v6884, %v6889
      %v6894 = vrsqrt.pop %v6637
      %v6895 = vmul.f32 %v6894, %v6637
      %v6896 = vmul.f32 %v6895, %v6894
      %v6897 = vmul.f32 0.5, %v6896
      %v6898 = vsub.f32 1.5, %v6897
      %v6899 = vmul.f32 %v6894, %v6898
      %vm6900 = vweird.f32 %v6637
      %vm6901 = vweird.f32 %v6894
      %vm6902 = vmor %vm6900, %vm6901
      %v6903 = vsel %vm6902, %v6894, %v6899
      %v6904 = vrsqrt.pop %v6638
      %v6905 = vmul.f32 %v6904, %v6638
      %v6906 = vmul.f32 %v6905, %v6904
      %v6907 = vmul.f32 0.5, %v6906
      %v6908 = vsub.f32 1.5, %v6907
      %v6909 = vmul.f32 %v6904, %v6908
      %vm6910 = vweird.f32 %v6638
      %vm6911 = vweird.f32 %v6904
      %vm6912 = vmor %vm6910, %vm6911
      %v6913 = vsel %vm6912, %v6904, %v6909
      %v6914 = vrsqrt.pop %v6639
      %v6915 = vmul.f32 %v6914, %v6639
      %v6916 = vmul.f32 %v6915, %v6914
      %v6917 = vmul.f32 0.5, %v6916
      %v6918 = vsub.f32 1.5, %v6917
      %v6919 = vmul.f32 %v6914, %v6918
      %vm6920 = vweird.f32 %v6639
      %vm6921 = vweird.f32 %v6914
      %vm6922 = vmor %vm6920, %vm6921
      %v6923 = vsel %vm6922, %v6914, %v6919
      %v6924 = vrsqrt.pop %v6640
      %v6925 = vmul.f32 %v6924, %v6640
      %v6926 = vmul.f32 %v6925, %v6924
      %v6927 = vmul.f32 0.5, %v6926
      %v6928 = vsub.f32 1.5, %v6927
      %v6929 = vmul.f32 %v6924, %v6928
      %vm6930 = vweird.f32 %v6640
      %vm6931 = vweird.f32 %v6924
      %vm6932 = vmor %vm6930, %vm6931
      %v6933 = vsel %vm6932, %v6924, %v6929
      %v6934 = vrsqrt.pop %v6641
      %v6935 = vmul.f32 %v6934, %v6641
      %v6936 = vmul.f32 %v6935, %v6934
      %v6937 = vmul.f32 0.5, %v6936
      %v6938 = vsub.f32 1.5, %v6937
      %v6939 = vmul.f32 %v6934, %v6938
      %vm6940 = vweird.f32 %v6641
      %vm6941 = vweird.f32 %v6934
      %vm6942 = vmor %vm6940, %vm6941
      %v6943 = vsel %vm6942, %v6934, %v6939
      %v6944 = vrsqrt.pop %v6642
      %v6945 = vmul.f32 %v6944, %v6642
      %v6946 = vmul.f32 %v6945, %v6944
      %v6947 = vmul.f32 0.5, %v6946
      %v6948 = vsub.f32 1.5, %v6947
      %v6949 = vmul.f32 %v6944, %v6948
      %vm6950 = vweird.f32 %v6642
      %vm6951 = vweird.f32 %v6944
      %vm6952 = vmor %vm6950, %vm6951
      %v6953 = vsel %vm6952, %v6944, %v6949
      %v6954 = vrsqrt.pop %v6643
      %v6955 = vmul.f32 %v6954, %v6643
      %v6956 = vmul.f32 %v6955, %v6954
      %v6957 = vmul.f32 0.5, %v6956
      %v6958 = vsub.f32 1.5, %v6957
      %v6959 = vmul.f32 %v6954, %v6958
      %vm6960 = vweird.f32 %v6643
      %vm6961 = vweird.f32 %v6954
      %vm6962 = vmor %vm6960, %vm6961
      %v6963 = vsel %vm6962, %v6954, %v6959
      %v6964 = vmul.f32 %v6420, %v6653
      %v6965 = vmul.f32 %v6421, %v6663
      %v6966 = vmul.f32 %v6422, %v6673
      %v6967 = vmul.f32 %v6423, %v6683
      %v6968 = vmul.f32 %v6424, %v6693
      %v6969 = vmul.f32 %v6425, %v6703
      %v6970 = vmul.f32 %v6426, %v6713
      %v6971 = vmul.f32 %v6427, %v6723
      %v6972 = vmul.f32 %v6428, %v6733
      %v6973 = vmul.f32 %v6429, %v6743
      %v6974 = vmul.f32 %v6430, %v6753
      %v6975 = vmul.f32 %v6431, %v6763
      %v6976 = vmul.f32 %v6432, %v6773
      %v6977 = vmul.f32 %v6433, %v6783
      %v6978 = vmul.f32 %v6434, %v6793
      %v6979 = vmul.f32 %v6435, %v6803
      %v6980 = vmul.f32 %v6436, %v6813
      %v6981 = vmul.f32 %v6437, %v6823
      %v6982 = vmul.f32 %v6438, %v6833
      %v6983 = vmul.f32 %v6439, %v6843
      %v6984 = vmul.f32 %v6440, %v6853
      %v6985 = vmul.f32 %v6441, %v6863
      %v6986 = vmul.f32 %v6442, %v6873
      %v6987 = vmul.f32 %v6443, %v6883
      %v6988 = vmul.f32 %v6444, %v6893
      %v6989 = vmul.f32 %v6445, %v6903
      %v6990 = vmul.f32 %v6446, %v6913
      %v6991 = vmul.f32 %v6447, %v6923
      %v6992 = vmul.f32 %v6448, %v6933
      %v6993 = vmul.f32 %v6449, %v6943
      %v6994 = vmul.f32 %v6450, %v6953
      %v6995 = vmul.f32 %v6451, %v6963
      %s6996 = scalar_lea.vmem %s5, 1
      %v6997 = vld [vmem:[%s6996] sm:$0x1]
      %v6999 = vperm.slane %v6997, 0
      %v7001 = vmul.f32 %v6964, %v6999
      %v7002 = vmul.f32 %v6965, %v6999
      %v7003 = vmul.f32 %v6966, %v6999
      %v7004 = vmul.f32 %v6967, %v6999
      %v7005 = vmul.f32 %v6968, %v6999
      %v7006 = vmul.f32 %v6969, %v6999
      %v7007 = vmul.f32 %v6970, %v6999
      %v7008 = vmul.f32 %v6971, %v6999
      %v7009 = vmul.f32 %v6972, %v6999
      %v7010 = vmul.f32 %v6973, %v6999
      %v7011 = vmul.f32 %v6974, %v6999
      %v7012 = vmul.f32 %v6975, %v6999
      %v7013 = vmul.f32 %v6976, %v6999
      %v7014 = vmul.f32 %v6977, %v6999
      %v7015 = vmul.f32 %v6978, %v6999
      %v7016 = vmul.f32 %v6979, %v6999
      %v7017 = vmul.f32 %v6980, %v6999
      %v7018 = vmul.f32 %v6981, %v6999
      %v7019 = vmul.f32 %v6982, %v6999
      %v7020 = vmul.f32 %v6983, %v6999
      %v7021 = vmul.f32 %v6984, %v6999
      %v7022 = vmul.f32 %v6985, %v6999
      %v7023 = vmul.f32 %v6986, %v6999
      %v7024 = vmul.f32 %v6987, %v6999
      %v7025 = vmul.f32 %v6988, %v6999
      %v7026 = vmul.f32 %v6989, %v6999
      %v7027 = vmul.f32 %v6990, %v6999
      %v7028 = vmul.f32 %v6991, %v6999
      %v7029 = vmul.f32 %v6992, %v6999
      %v7030 = vmul.f32 %v6993, %v6999
      %v7031 = vmul.f32 %v6994, %v6999
      %v7032 = vmul.f32 %v6995, %v6999
      %s7033 = scalar_lea.vmem %s6, 1
      %v7034 = vld [vmem:[%s7033] sm:$0x1]
      %v7036 = vperm.slane %v7034, 0
      %v7038 = vadd.f32 %v7001, %v7036
      %v7039 = vadd.f32 %v7002, %v7036
      %v7040 = vadd.f32 %v7003, %v7036
      %v7041 = vadd.f32 %v7004, %v7036
      %v7042 = vadd.f32 %v7005, %v7036
      %v7043 = vadd.f32 %v7006, %v7036
      %v7044 = vadd.f32 %v7007, %v7036
      %v7045 = vadd.f32 %v7008, %v7036
      %v7046 = vadd.f32 %v7009, %v7036
      %v7047 = vadd.f32 %v7010, %v7036
      %v7048 = vadd.f32 %v7011, %v7036
      %v7049 = vadd.f32 %v7012, %v7036
      %v7050 = vadd.f32 %v7013, %v7036
      %v7051 = vadd.f32 %v7014, %v7036
      %v7052 = vadd.f32 %v7015, %v7036
      %v7053 = vadd.f32 %v7016, %v7036
      %v7054 = vadd.f32 %v7017, %v7036
      %v7055 = vadd.f32 %v7018, %v7036
      %v7056 = vadd.f32 %v7019, %v7036
      %v7057 = vadd.f32 %v7020, %v7036
      %v7058 = vadd.f32 %v7021, %v7036
      %v7059 = vadd.f32 %v7022, %v7036
      %v7060 = vadd.f32 %v7023, %v7036
      %v7061 = vadd.f32 %v7024, %v7036
      %v7062 = vadd.f32 %v7025, %v7036
      %v7063 = vadd.f32 %v7026, %v7036
      %v7064 = vadd.f32 %v7027, %v7036
      %v7065 = vadd.f32 %v7028, %v7036
      %v7066 = vadd.f32 %v7029, %v7036
      %v7067 = vadd.f32 %v7030, %v7036
      %v7068 = vadd.f32 %v7031, %v7036
      %v7069 = vadd.f32 %v7032, %v7036
      %v7070 = vpack.c.bf16 %v7039, %v7038
      %v7071 = vpack.c.bf16 %v7041, %v7040
      %v7072 = vpack.c.bf16 %v7043, %v7042
      %v7073 = vpack.c.bf16 %v7045, %v7044
      %v7074 = vpack.c.bf16 %v7047, %v7046
      %v7075 = vpack.c.bf16 %v7049, %v7048
      %v7076 = vpack.c.bf16 %v7051, %v7050
      %v7077 = vpack.c.bf16 %v7053, %v7052
      %v7078 = vpack.c.bf16 %v7055, %v7054
      %v7079 = vpack.c.bf16 %v7057, %v7056
      %v7080 = vpack.c.bf16 %v7059, %v7058
      %v7081 = vpack.c.bf16 %v7061, %v7060
      %v7082 = vpack.c.bf16 %v7063, %v7062
      %v7083 = vpack.c.bf16 %v7065, %v7064
      %v7084 = vpack.c.bf16 %v7067, %v7066
      %v7085 = vpack.c.bf16 %v7069, %v7068
      %v7087 = vperm.slane %v6286, 0
      %v7091 = vunpack.c.l.b16 %v6283
      %v7092 = vunpack.c.l.b16 %v6284
      %v7093 = vpack.c.b16 %v7092, %v7091
      %v7096 = vsel %vm994, %v7070, 0
      %v7099 = vsel %vm994, %v7071, 0
      %v7102 = vsel %vm994, %v7072, 0
      %v7105 = vsel %vm994, %v7073, 0
      %v7108 = vsel %vm994, %v7074, 0
      %v7111 = vsel %vm994, %v7075, 0
      %v7114 = vsel %vm994, %v7076, 0
      %v7117 = vsel %vm994, %v7077, 0
      %v7120 = vsel %vm994, %v7078, 0
      %v7123 = vsel %vm994, %v7079, 0
      %v7126 = vsel %vm994, %v7080, 0
      %v7129 = vsel %vm994, %v7081, 0
      %v7132 = vsel %vm994, %v7082, 0
      %v7135 = vsel %vm994, %v7083, 0
      %v7138 = vsel %vm994, %v7084, 0
      %v7141 = vsel %vm994, %v7085, 0
      %7143 = vmatpush.bf16.msra.mxu0 0
      %7144 = vmatpush.bf16.msra.mxu0 0
      %7145 = vmatpush.bf16.msra.mxu0 0
      %7146 = vmatpush.bf16.msra.mxu0 0
      %7147 = vmatpush.bf16.msra.mxu0 0
      %7148 = vmatpush.bf16.msra.mxu0 0
      %7149 = vmatpush.bf16.msra.mxu0 0
      %7150 = vmatpush.bf16.msra.mxu0 %v7093
      %7151 = vmatmul.bf16.gmra.mxu0 %v7096
      %v7152 = vpop.f32.mrf.mxu0
      %v7153 = vadd.f32 %v7087, %v7152
      %v7154 = vpop.f32.mrf.mxu0
      %v7155 = vadd.f32 %v7087, %v7154
      %7156 = vmatmul.bf16.gmra.mxu0 %v7099
      %v7157 = vpop.f32.mrf.mxu0
      %v7158 = vadd.f32 %v7087, %v7157
      %v7159 = vpop.f32.mrf.mxu0
      %v7160 = vadd.f32 %v7087, %v7159
      %7161 = vmatmul.bf16.gmra.mxu0 %v7102
      %v7162 = vpop.f32.mrf.mxu0
      %v7163 = vadd.f32 %v7087, %v7162
      %v7164 = vpop.f32.mrf.mxu0
      %v7165 = vadd.f32 %v7087, %v7164
      %7166 = vmatmul.bf16.gmra.mxu0 %v7105
      %v7167 = vpop.f32.mrf.mxu0
      %v7168 = vadd.f32 %v7087, %v7167
      %v7169 = vpop.f32.mrf.mxu0
      %v7170 = vadd.f32 %v7087, %v7169
      %7171 = vmatmul.bf16.gmra.mxu0 %v7108
      %v7172 = vpop.f32.mrf.mxu0
      %v7173 = vadd.f32 %v7087, %v7172
      %v7174 = vpop.f32.mrf.mxu0
      %v7175 = vadd.f32 %v7087, %v7174
      %7176 = vmatmul.bf16.gmra.mxu0 %v7111
      %v7177 = vpop.f32.mrf.mxu0
      %v7178 = vadd.f32 %v7087, %v7177
      %v7179 = vpop.f32.mrf.mxu0
      %v7180 = vadd.f32 %v7087, %v7179
      %7181 = vmatmul.bf16.gmra.mxu0 %v7114
      %v7182 = vpop.f32.mrf.mxu0
      %v7183 = vadd.f32 %v7087, %v7182
      %v7184 = vpop.f32.mrf.mxu0
      %v7185 = vadd.f32 %v7087, %v7184
      %7186 = vmatmul.bf16.gmra.mxu0 %v7117
      %v7187 = vpop.f32.mrf.mxu0
      %v7188 = vadd.f32 %v7087, %v7187
      %v7189 = vpop.f32.mrf.mxu0
      %v7190 = vadd.f32 %v7087, %v7189
      %7191 = vmatmul.bf16.gmra.mxu0 %v7120
      %v7192 = vpop.f32.mrf.mxu0
      %v7193 = vadd.f32 %v7087, %v7192
      %v7194 = vpop.f32.mrf.mxu0
      %v7195 = vadd.f32 %v7087, %v7194
      %7196 = vmatmul.bf16.gmra.mxu0 %v7123
      %v7197 = vpop.f32.mrf.mxu0
      %v7198 = vadd.f32 %v7087, %v7197
      %v7199 = vpop.f32.mrf.mxu0
      %v7200 = vadd.f32 %v7087, %v7199
      %7201 = vmatmul.bf16.gmra.mxu0 %v7126
      %v7202 = vpop.f32.mrf.mxu0
      %v7203 = vadd.f32 %v7087, %v7202
      %v7204 = vpop.f32.mrf.mxu0
      %v7205 = vadd.f32 %v7087, %v7204
      %7206 = vmatmul.bf16.gmra.mxu0 %v7129
      %v7207 = vpop.f32.mrf.mxu0
      %v7208 = vadd.f32 %v7087, %v7207
      %v7209 = vpop.f32.mrf.mxu0
      %v7210 = vadd.f32 %v7087, %v7209
      %7211 = vmatmul.bf16.gmra.mxu0 %v7132
      %v7212 = vpop.f32.mrf.mxu0
      %v7213 = vadd.f32 %v7087, %v7212
      %v7214 = vpop.f32.mrf.mxu0
      %v7215 = vadd.f32 %v7087, %v7214
      %7216 = vmatmul.bf16.gmra.mxu0 %v7135
      %v7217 = vpop.f32.mrf.mxu0
      %v7218 = vadd.f32 %v7087, %v7217
      %v7219 = vpop.f32.mrf.mxu0
      %v7220 = vadd.f32 %v7087, %v7219
      %7221 = vmatmul.bf16.gmra.mxu0 %v7138
      %v7222 = vpop.f32.mrf.mxu0
      %v7223 = vadd.f32 %v7087, %v7222
      %v7224 = vpop.f32.mrf.mxu0
      %v7225 = vadd.f32 %v7087, %v7224
      %7226 = vmatmul.bf16.gmra.mxu0 %v7141
      %v7227 = vpop.f32.mrf.mxu0
      %v7228 = vadd.f32 %v7087, %v7227
      %v7229 = vpop.f32.mrf.mxu0
      %v7230 = vadd.f32 %v7087, %v7229
      %7231 = vdwg.mxu0
      %v7232 = vpack.c.bf16 %v7153, %v7153
      %v7233 = vpack.c.bf16 %v7155, %v7155
      %v7234 = vpack.c.bf16 %v7158, %v7158
      %v7235 = vpack.c.bf16 %v7160, %v7160
      %v7236 = vpack.c.bf16 %v7163, %v7163
      %v7237 = vpack.c.bf16 %v7165, %v7165
      %v7238 = vpack.c.bf16 %v7168, %v7168
      %v7239 = vpack.c.bf16 %v7170, %v7170
      %v7240 = vpack.c.bf16 %v7173, %v7173
      %v7241 = vpack.c.bf16 %v7175, %v7175
      %v7242 = vpack.c.bf16 %v7178, %v7178
      %v7243 = vpack.c.bf16 %v7180, %v7180
      %v7244 = vpack.c.bf16 %v7183, %v7183
      %v7245 = vpack.c.bf16 %v7185, %v7185
      %v7246 = vpack.c.bf16 %v7188, %v7188
      %v7247 = vpack.c.bf16 %v7190, %v7190
      %v7248 = vpack.c.bf16 %v7193, %v7193
      %v7249 = vpack.c.bf16 %v7195, %v7195
      %v7250 = vpack.c.bf16 %v7198, %v7198
      %v7251 = vpack.c.bf16 %v7200, %v7200
      %v7252 = vpack.c.bf16 %v7203, %v7203
      %v7253 = vpack.c.bf16 %v7205, %v7205
      %v7254 = vpack.c.bf16 %v7208, %v7208
      %v7255 = vpack.c.bf16 %v7210, %v7210
      %v7256 = vpack.c.bf16 %v7213, %v7213
      %v7257 = vpack.c.bf16 %v7215, %v7215
      %v7258 = vpack.c.bf16 %v7218, %v7218
      %v7259 = vpack.c.bf16 %v7220, %v7220
      %v7260 = vpack.c.bf16 %v7223, %v7223
      %v7261 = vpack.c.bf16 %v7225, %v7225
      %v7262 = vpack.c.bf16 %v7228, %v7228
      %v7263 = vpack.c.bf16 %v7230, %v7230
      %v7266 = vunpack.c.l.b16 %v7232
      %v7267 = vunpack.c.l.b16 %v7233
      %v7268 = vpack.c.b16 %v7267, %v7266
      %7269 = vrot.lane.b32.xlu0 %v7268, 112
      %v7270 = vpop.permute.xlu0 %7269
      %v7272 = vsel %vm810, %v7268, 0
      %v7275 = vsel %vm810, %v7270, 0
      %7277 = vmatpush.bf16.xpose.msra.mxu0 0
      %7278 = vmatpush.bf16.xpose.msra.mxu0 0
      %7279 = vmatpush.bf16.xpose.msra.mxu0 0
      %7280 = vmatpush.bf16.xpose.msra.mxu0 0
      %7281 = vmatpush.bf16.xpose.msra.mxu0 0
      %7282 = vmatpush.bf16.xpose.msra.mxu0 0
      %7283 = vmatpush.bf16.xpose.msra.mxu0 0
      %7284 = vmatpush.bf16.xpose.msra.mxu0 %v7275
      %7285 = vmatmul.bf16.gmra.mxu0 %v7272
      %v7286 = vpop.f32.mrf.mxu0
      %v7287 = vadd.f32 0.0, %v7286
      %v7288 = vpop.f32.mrf.mxu0
      %v7289 = vadd.f32 0.0, %v7288
      %7290 = vdwg.mxu0
      %v7293 = vunpack.c.l.b16 %v7234
      %v7294 = vunpack.c.l.b16 %v7235
      %v7295 = vpack.c.b16 %v7294, %v7293
      %7296 = vrot.lane.b32.xlu0 %v7295, 112
      %v7297 = vpop.permute.xlu0 %7296
      %v7299 = vsel %vm810, %v7295, 0
      %v7302 = vsel %vm810, %v7297, 0
      %7304 = vmatpush.bf16.xpose.msra.mxu0 0
      %7305 = vmatpush.bf16.xpose.msra.mxu0 0
      %7306 = vmatpush.bf16.xpose.msra.mxu0 0
      %7307 = vmatpush.bf16.xpose.msra.mxu0 0
      %7308 = vmatpush.bf16.xpose.msra.mxu0 0
      %7309 = vmatpush.bf16.xpose.msra.mxu0 0
      %7310 = vmatpush.bf16.xpose.msra.mxu0 0
      %7311 = vmatpush.bf16.xpose.msra.mxu0 %v7302
      %7312 = vmatmul.bf16.gmra.mxu0 %v7299
      %v7313 = vpop.f32.mrf.mxu0
      %v7314 = vadd.f32 0.0, %v7313
      %v7315 = vpop.f32.mrf.mxu0
      %v7316 = vadd.f32 0.0, %v7315
      %7317 = vdwg.mxu0
      %v7320 = vunpack.c.l.b16 %v7236
      %v7321 = vunpack.c.l.b16 %v7237
      %v7322 = vpack.c.b16 %v7321, %v7320
      %7323 = vrot.lane.b32.xlu0 %v7322, 112
      %v7324 = vpop.permute.xlu0 %7323
      %v7326 = vsel %vm810, %v7322, 0
      %v7329 = vsel %vm810, %v7324, 0
      %7331 = vmatpush.bf16.xpose.msra.mxu0 0
      %7332 = vmatpush.bf16.xpose.msra.mxu0 0
      %7333 = vmatpush.bf16.xpose.msra.mxu0 0
      %7334 = vmatpush.bf16.xpose.msra.mxu0 0
      %7335 = vmatpush.bf16.xpose.msra.mxu0 0
      %7336 = vmatpush.bf16.xpose.msra.mxu0 0
      %7337 = vmatpush.bf16.xpose.msra.mxu0 0
      %7338 = vmatpush.bf16.xpose.msra.mxu0 %v7329
      %7339 = vmatmul.bf16.gmra.mxu0 %v7326
      %v7340 = vpop.f32.mrf.mxu0
      %v7341 = vadd.f32 0.0, %v7340
      %v7342 = vpop.f32.mrf.mxu0
      %v7343 = vadd.f32 0.0, %v7342
      %7344 = vdwg.mxu0
      %v7347 = vunpack.c.l.b16 %v7238
      %v7348 = vunpack.c.l.b16 %v7239
      %v7349 = vpack.c.b16 %v7348, %v7347
      %7350 = vrot.lane.b32.xlu0 %v7349, 112
      %v7351 = vpop.permute.xlu0 %7350
      %v7353 = vsel %vm810, %v7349, 0
      %v7356 = vsel %vm810, %v7351, 0
      %7358 = vmatpush.bf16.xpose.msra.mxu0 0
      %7359 = vmatpush.bf16.xpose.msra.mxu0 0
      %7360 = vmatpush.bf16.xpose.msra.mxu0 0
      %7361 = vmatpush.bf16.xpose.msra.mxu0 0
      %7362 = vmatpush.bf16.xpose.msra.mxu0 0
      %7363 = vmatpush.bf16.xpose.msra.mxu0 0
      %7364 = vmatpush.bf16.xpose.msra.mxu0 0
      %7365 = vmatpush.bf16.xpose.msra.mxu0 %v7356
      %7366 = vmatmul.bf16.gmra.mxu0 %v7353
      %v7367 = vpop.f32.mrf.mxu0
      %v7368 = vadd.f32 0.0, %v7367
      %v7369 = vpop.f32.mrf.mxu0
      %v7370 = vadd.f32 0.0, %v7369
      %7371 = vdwg.mxu0
      %v7374 = vunpack.c.l.b16 %v7240
      %v7375 = vunpack.c.l.b16 %v7241
      %v7376 = vpack.c.b16 %v7375, %v7374
      %7377 = vrot.lane.b32.xlu0 %v7376, 112
      %v7378 = vpop.permute.xlu0 %7377
      %v7380 = vsel %vm810, %v7376, 0
      %v7383 = vsel %vm810, %v7378, 0
      %7385 = vmatpush.bf16.xpose.msra.mxu0 0
      %7386 = vmatpush.bf16.xpose.msra.mxu0 0
      %7387 = vmatpush.bf16.xpose.msra.mxu0 0
      %7388 = vmatpush.bf16.xpose.msra.mxu0 0
      %7389 = vmatpush.bf16.xpose.msra.mxu0 0
      %7390 = vmatpush.bf16.xpose.msra.mxu0 0
      %7391 = vmatpush.bf16.xpose.msra.mxu0 0
      %7392 = vmatpush.bf16.xpose.msra.mxu0 %v7383
      %7393 = vmatmul.bf16.gmra.mxu0 %v7380
      %v7394 = vpop.f32.mrf.mxu0
      %v7395 = vadd.f32 0.0, %v7394
      %v7396 = vpop.f32.mrf.mxu0
      %v7397 = vadd.f32 0.0, %v7396
      %7398 = vdwg.mxu0
      %v7401 = vunpack.c.l.b16 %v7242
      %v7402 = vunpack.c.l.b16 %v7243
      %v7403 = vpack.c.b16 %v7402, %v7401
      %7404 = vrot.lane.b32.xlu0 %v7403, 112
      %v7405 = vpop.permute.xlu0 %7404
      %v7407 = vsel %vm810, %v7403, 0
      %v7410 = vsel %vm810, %v7405, 0
      %7412 = vmatpush.bf16.xpose.msra.mxu0 0
      %7413 = vmatpush.bf16.xpose.msra.mxu0 0
      %7414 = vmatpush.bf16.xpose.msra.mxu0 0
      %7415 = vmatpush.bf16.xpose.msra.mxu0 0
      %7416 = vmatpush.bf16.xpose.msra.mxu0 0
      %7417 = vmatpush.bf16.xpose.msra.mxu0 0
      %7418 = vmatpush.bf16.xpose.msra.mxu0 0
      %7419 = vmatpush.bf16.xpose.msra.mxu0 %v7410
      %7420 = vmatmul.bf16.gmra.mxu0 %v7407
      %v7421 = vpop.f32.mrf.mxu0
      %v7422 = vadd.f32 0.0, %v7421
      %v7423 = vpop.f32.mrf.mxu0
      %v7424 = vadd.f32 0.0, %v7423
      %7425 = vdwg.mxu0
      %v7428 = vunpack.c.l.b16 %v7244
      %v7429 = vunpack.c.l.b16 %v7245
      %v7430 = vpack.c.b16 %v7429, %v7428
      %7431 = vrot.lane.b32.xlu0 %v7430, 112
      %v7432 = vpop.permute.xlu0 %7431
      %v7434 = vsel %vm810, %v7430, 0
      %v7437 = vsel %vm810, %v7432, 0
      %7439 = vmatpush.bf16.xpose.msra.mxu0 0
      %7440 = vmatpush.bf16.xpose.msra.mxu0 0
      %7441 = vmatpush.bf16.xpose.msra.mxu0 0
      %7442 = vmatpush.bf16.xpose.msra.mxu0 0
      %7443 = vmatpush.bf16.xpose.msra.mxu0 0
      %7444 = vmatpush.bf16.xpose.msra.mxu0 0
      %7445 = vmatpush.bf16.xpose.msra.mxu0 0
      %7446 = vmatpush.bf16.xpose.msra.mxu0 %v7437
      %7447 = vmatmul.bf16.gmra.mxu0 %v7434
      %v7448 = vpop.f32.mrf.mxu0
      %v7449 = vadd.f32 0.0, %v7448
      %v7450 = vpop.f32.mrf.mxu0
      %v7451 = vadd.f32 0.0, %v7450
      %7452 = vdwg.mxu0
      %v7455 = vunpack.c.l.b16 %v7246
      %v7456 = vunpack.c.l.b16 %v7247
      %v7457 = vpack.c.b16 %v7456, %v7455
      %7458 = vrot.lane.b32.xlu0 %v7457, 112
      %v7459 = vpop.permute.xlu0 %7458
      %v7461 = vsel %vm810, %v7457, 0
      %v7464 = vsel %vm810, %v7459, 0
      %7466 = vmatpush.bf16.xpose.msra.mxu0 0
      %7467 = vmatpush.bf16.xpose.msra.mxu0 0
      %7468 = vmatpush.bf16.xpose.msra.mxu0 0
      %7469 = vmatpush.bf16.xpose.msra.mxu0 0
      %7470 = vmatpush.bf16.xpose.msra.mxu0 0
      %7471 = vmatpush.bf16.xpose.msra.mxu0 0
      %7472 = vmatpush.bf16.xpose.msra.mxu0 0
      %7473 = vmatpush.bf16.xpose.msra.mxu0 %v7464
      %7474 = vmatmul.bf16.gmra.mxu0 %v7461
      %v7475 = vpop.f32.mrf.mxu0
      %v7476 = vadd.f32 0.0, %v7475
      %v7477 = vpop.f32.mrf.mxu0
      %v7478 = vadd.f32 0.0, %v7477
      %7479 = vdwg.mxu0
      %v7482 = vunpack.c.l.b16 %v7248
      %v7483 = vunpack.c.l.b16 %v7249
      %v7484 = vpack.c.b16 %v7483, %v7482
      %7485 = vrot.lane.b32.xlu0 %v7484, 112
      %v7486 = vpop.permute.xlu0 %7485
      %v7488 = vsel %vm810, %v7484, 0
      %v7491 = vsel %vm810, %v7486, 0
      %7493 = vmatpush.bf16.xpose.msra.mxu0 0
      %7494 = vmatpush.bf16.xpose.msra.mxu0 0
      %7495 = vmatpush.bf16.xpose.msra.mxu0 0
      %7496 = vmatpush.bf16.xpose.msra.mxu0 0
      %7497 = vmatpush.bf16.xpose.msra.mxu0 0
      %7498 = vmatpush.bf16.xpose.msra.mxu0 0
      %7499 = vmatpush.bf16.xpose.msra.mxu0 0
      %7500 = vmatpush.bf16.xpose.msra.mxu0 %v7491
      %7501 = vmatmul.bf16.gmra.mxu0 %v7488
      %v7502 = vpop.f32.mrf.mxu0
      %v7503 = vadd.f32 0.0, %v7502
      %v7504 = vpop.f32.mrf.mxu0
      %v7505 = vadd.f32 0.0, %v7504
      %7506 = vdwg.mxu0
      %v7509 = vunpack.c.l.b16 %v7250
      %v7510 = vunpack.c.l.b16 %v7251
      %v7511 = vpack.c.b16 %v7510, %v7509
      %7512 = vrot.lane.b32.xlu0 %v7511, 112
      %v7513 = vpop.permute.xlu0 %7512
      %v7515 = vsel %vm810, %v7511, 0
      %v7518 = vsel %vm810, %v7513, 0
      %7520 = vmatpush.bf16.xpose.msra.mxu0 0
      %7521 = vmatpush.bf16.xpose.msra.mxu0 0
      %7522 = vmatpush.bf16.xpose.msra.mxu0 0
      %7523 = vmatpush.bf16.xpose.msra.mxu0 0
      %7524 = vmatpush.bf16.xpose.msra.mxu0 0
      %7525 = vmatpush.bf16.xpose.msra.mxu0 0
      %7526 = vmatpush.bf16.xpose.msra.mxu0 0
      %7527 = vmatpush.bf16.xpose.msra.mxu0 %v7518
      %7528 = vmatmul.bf16.gmra.mxu0 %v7515
      %v7529 = vpop.f32.mrf.mxu0
      %v7530 = vadd.f32 0.0, %v7529
      %v7531 = vpop.f32.mrf.mxu0
      %v7532 = vadd.f32 0.0, %v7531
      %7533 = vdwg.mxu0
      %v7536 = vunpack.c.l.b16 %v7252
      %v7537 = vunpack.c.l.b16 %v7253
      %v7538 = vpack.c.b16 %v7537, %v7536
      %7539 = vrot.lane.b32.xlu0 %v7538, 112
      %v7540 = vpop.permute.xlu0 %7539
      %v7542 = vsel %vm810, %v7538, 0
      %v7545 = vsel %vm810, %v7540, 0
      %7547 = vmatpush.bf16.xpose.msra.mxu0 0
      %7548 = vmatpush.bf16.xpose.msra.mxu0 0
      %7549 = vmatpush.bf16.xpose.msra.mxu0 0
      %7550 = vmatpush.bf16.xpose.msra.mxu0 0
      %7551 = vmatpush.bf16.xpose.msra.mxu0 0
      %7552 = vmatpush.bf16.xpose.msra.mxu0 0
      %7553 = vmatpush.bf16.xpose.msra.mxu0 0
      %7554 = vmatpush.bf16.xpose.msra.mxu0 %v7545
      %7555 = vmatmul.bf16.gmra.mxu0 %v7542
      %v7556 = vpop.f32.mrf.mxu0
      %v7557 = vadd.f32 0.0, %v7556
      %v7558 = vpop.f32.mrf.mxu0
      %v7559 = vadd.f32 0.0, %v7558
      %7560 = vdwg.mxu0
      %v7563 = vunpack.c.l.b16 %v7254
      %v7564 = vunpack.c.l.b16 %v7255
      %v7565 = vpack.c.b16 %v7564, %v7563
      %7566 = vrot.lane.b32.xlu0 %v7565, 112
      %v7567 = vpop.permute.xlu0 %7566
      %v7569 = vsel %vm810, %v7565, 0
      %v7572 = vsel %vm810, %v7567, 0
      %7574 = vmatpush.bf16.xpose.msra.mxu0 0
      %7575 = vmatpush.bf16.xpose.msra.mxu0 0
      %7576 = vmatpush.bf16.xpose.msra.mxu0 0
      %7577 = vmatpush.bf16.xpose.msra.mxu0 0
      %7578 = vmatpush.bf16.xpose.msra.mxu0 0
      %7579 = vmatpush.bf16.xpose.msra.mxu0 0
      %7580 = vmatpush.bf16.xpose.msra.mxu0 0
      %7581 = vmatpush.bf16.xpose.msra.mxu0 %v7572
      %7582 = vmatmul.bf16.gmra.mxu0 %v7569
      %v7583 = vpop.f32.mrf.mxu0
      %v7584 = vadd.f32 0.0, %v7583
      %v7585 = vpop.f32.mrf.mxu0
      %v7586 = vadd.f32 0.0, %v7585
      %7587 = vdwg.mxu0
      %v7590 = vunpack.c.l.b16 %v7256
      %v7591 = vunpack.c.l.b16 %v7257
      %v7592 = vpack.c.b16 %v7591, %v7590
      %7593 = vrot.lane.b32.xlu0 %v7592, 112
      %v7594 = vpop.permute.xlu0 %7593
      %v7596 = vsel %vm810, %v7592, 0
      %v7599 = vsel %vm810, %v7594, 0
      %7601 = vmatpush.bf16.xpose.msra.mxu0 0
      %7602 = vmatpush.bf16.xpose.msra.mxu0 0
      %7603 = vmatpush.bf16.xpose.msra.mxu0 0
      %7604 = vmatpush.bf16.xpose.msra.mxu0 0
      %7605 = vmatpush.bf16.xpose.msra.mxu0 0
      %7606 = vmatpush.bf16.xpose.msra.mxu0 0
      %7607 = vmatpush.bf16.xpose.msra.mxu0 0
      %7608 = vmatpush.bf16.xpose.msra.mxu0 %v7599
      %7609 = vmatmul.bf16.gmra.mxu0 %v7596
      %v7610 = vpop.f32.mrf.mxu0
      %v7611 = vadd.f32 0.0, %v7610
      %v7612 = vpop.f32.mrf.mxu0
      %v7613 = vadd.f32 0.0, %v7612
      %7614 = vdwg.mxu0
      %v7617 = vunpack.c.l.b16 %v7258
      %v7618 = vunpack.c.l.b16 %v7259
      %v7619 = vpack.c.b16 %v7618, %v7617
      %7620 = vrot.lane.b32.xlu0 %v7619, 112
      %v7621 = vpop.permute.xlu0 %7620
      %v7623 = vsel %vm810, %v7619, 0
      %v7626 = vsel %vm810, %v7621, 0
      %7628 = vmatpush.bf16.xpose.msra.mxu0 0
      %7629 = vmatpush.bf16.xpose.msra.mxu0 0
      %7630 = vmatpush.bf16.xpose.msra.mxu0 0
      %7631 = vmatpush.bf16.xpose.msra.mxu0 0
      %7632 = vmatpush.bf16.xpose.msra.mxu0 0
      %7633 = vmatpush.bf16.xpose.msra.mxu0 0
      %7634 = vmatpush.bf16.xpose.msra.mxu0 0
      %7635 = vmatpush.bf16.xpose.msra.mxu0 %v7626
      %7636 = vmatmul.bf16.gmra.mxu0 %v7623
      %v7637 = vpop.f32.mrf.mxu0
      %v7638 = vadd.f32 0.0, %v7637
      %v7639 = vpop.f32.mrf.mxu0
      %v7640 = vadd.f32 0.0, %v7639
      %7641 = vdwg.mxu0
      %v7644 = vunpack.c.l.b16 %v7260
      %v7645 = vunpack.c.l.b16 %v7261
      %v7646 = vpack.c.b16 %v7645, %v7644
      %7647 = vrot.lane.b32.xlu0 %v7646, 112
      %v7648 = vpop.permute.xlu0 %7647
      %v7650 = vsel %vm810, %v7646, 0
      %v7653 = vsel %vm810, %v7648, 0
      %7655 = vmatpush.bf16.xpose.msra.mxu0 0
      %7656 = vmatpush.bf16.xpose.msra.mxu0 0
      %7657 = vmatpush.bf16.xpose.msra.mxu0 0
      %7658 = vmatpush.bf16.xpose.msra.mxu0 0
      %7659 = vmatpush.bf16.xpose.msra.mxu0 0
      %7660 = vmatpush.bf16.xpose.msra.mxu0 0
      %7661 = vmatpush.bf16.xpose.msra.mxu0 0
      %7662 = vmatpush.bf16.xpose.msra.mxu0 %v7653
      %7663 = vmatmul.bf16.gmra.mxu0 %v7650
      %v7664 = vpop.f32.mrf.mxu0
      %v7665 = vadd.f32 0.0, %v7664
      %v7666 = vpop.f32.mrf.mxu0
      %v7667 = vadd.f32 0.0, %v7666
      %7668 = vdwg.mxu0
      %v7671 = vunpack.c.l.b16 %v7262
      %v7672 = vunpack.c.l.b16 %v7263
      %v7673 = vpack.c.b16 %v7672, %v7671
      %7674 = vrot.lane.b32.xlu0 %v7673, 112
      %v7675 = vpop.permute.xlu0 %7674
      %v7677 = vsel %vm810, %v7673, 0
      %v7680 = vsel %vm810, %v7675, 0
      %7682 = vmatpush.bf16.xpose.msra.mxu0 0
      %7683 = vmatpush.bf16.xpose.msra.mxu0 0
      %7684 = vmatpush.bf16.xpose.msra.mxu0 0
      %7685 = vmatpush.bf16.xpose.msra.mxu0 0
      %7686 = vmatpush.bf16.xpose.msra.mxu0 0
      %7687 = vmatpush.bf16.xpose.msra.mxu0 0
      %7688 = vmatpush.bf16.xpose.msra.mxu0 0
      %7689 = vmatpush.bf16.xpose.msra.mxu0 %v7680
      %7690 = vmatmul.bf16.gmra.mxu0 %v7677
      %v7691 = vpop.f32.mrf.mxu0
      %v7692 = vadd.f32 0.0, %v7691
      %v7693 = vpop.f32.mrf.mxu0
      %v7694 = vadd.f32 0.0, %v7693
      %7695 = vdwg.mxu0
      %v7696 = vmul.f32 %v7287, 0.35355338
      %v7697 = vmul.f32 %v7289, 0.35355338
      %v7698 = vmul.f32 %v7314, 0.35355338
      %v7699 = vmul.f32 %v7316, 0.35355338
      %v7700 = vmul.f32 %v7341, 0.35355338
      %v7701 = vmul.f32 %v7343, 0.35355338
      %v7702 = vmul.f32 %v7368, 0.35355338
      %v7703 = vmul.f32 %v7370, 0.35355338
      %v7704 = vmul.f32 %v7395, 0.35355338
      %v7705 = vmul.f32 %v7397, 0.35355338
      %v7706 = vmul.f32 %v7422, 0.35355338
      %v7707 = vmul.f32 %v7424, 0.35355338
      %v7708 = vmul.f32 %v7449, 0.35355338
      %v7709 = vmul.f32 %v7451, 0.35355338
      %v7710 = vmul.f32 %v7476, 0.35355338
      %v7711 = vmul.f32 %v7478, 0.35355338
      %v7712 = vmul.f32 %v7503, 0.35355338
      %v7713 = vmul.f32 %v7505, 0.35355338
      %v7714 = vmul.f32 %v7530, 0.35355338
      %v7715 = vmul.f32 %v7532, 0.35355338
      %v7716 = vmul.f32 %v7557, 0.35355338
      %v7717 = vmul.f32 %v7559, 0.35355338
      %v7718 = vmul.f32 %v7584, 0.35355338
      %v7719 = vmul.f32 %v7586, 0.35355338
      %v7720 = vmul.f32 %v7611, 0.35355338
      %v7721 = vmul.f32 %v7613, 0.35355338
      %v7722 = vmul.f32 %v7638, 0.35355338
      %v7723 = vmul.f32 %v7640, 0.35355338
      %v7724 = vmul.f32 %v7665, 0.35355338
      %v7725 = vmul.f32 %v7667, 0.35355338
      %v7726 = vmul.f32 %v7692, 0.35355338
      %v7727 = vmul.f32 %v7694, 0.35355338
      %v7728 = vsel %vm994, %v7696, -inf
      %7729 = vmax.xlane.f32.xlu0 %v7728
      %v7730 = vpop.xlane.xlu0 %7729
      %v7731 = vsel %vm994, %v7697, -inf
      %7732 = vmax.xlane.f32.xlu0 %v7731
      %v7733 = vpop.xlane.xlu0 %7732
      %v7734 = vsel %vm994, %v7698, -inf
      %7735 = vmax.xlane.f32.xlu0 %v7734
      %v7736 = vpop.xlane.xlu0 %7735
      %v7737 = vsel %vm994, %v7699, -inf
      %7738 = vmax.xlane.f32.xlu0 %v7737
      %v7739 = vpop.xlane.xlu0 %7738
      %v7740 = vsel %vm994, %v7700, -inf
      %7741 = vmax.xlane.f32.xlu0 %v7740
      %v7742 = vpop.xlane.xlu0 %7741
      %v7743 = vsel %vm994, %v7701, -inf
      %7744 = vmax.xlane.f32.xlu0 %v7743
      %v7745 = vpop.xlane.xlu0 %7744
      %v7746 = vsel %vm994, %v7702, -inf
      %7747 = vmax.xlane.f32.xlu0 %v7746
      %v7748 = vpop.xlane.xlu0 %7747
      %v7749 = vsel %vm994, %v7703, -inf
      %7750 = vmax.xlane.f32.xlu0 %v7749
      %v7751 = vpop.xlane.xlu0 %7750
      %v7752 = vsel %vm994, %v7704, -inf
      %7753 = vmax.xlane.f32.xlu0 %v7752
      %v7754 = vpop.xlane.xlu0 %7753
      %v7755 = vsel %vm994, %v7705, -inf
      %7756 = vmax.xlane.f32.xlu0 %v7755
      %v7757 = vpop.xlane.xlu0 %7756
      %v7758 = vsel %vm994, %v7706, -inf
      %7759 = vmax.xlane.f32.xlu0 %v7758
      %v7760 = vpop.xlane.xlu0 %7759
      %v7761 = vsel %vm994, %v7707, -inf
      %7762 = vmax.xlane.f32.xlu0 %v7761
      %v7763 = vpop.xlane.xlu0 %7762
      %v7764 = vsel %vm994, %v7708, -inf
      %7765 = vmax.xlane.f32.xlu0 %v7764
      %v7766 = vpop.xlane.xlu0 %7765
      %v7767 = vsel %vm994, %v7709, -inf
      %7768 = vmax.xlane.f32.xlu0 %v7767
      %v7769 = vpop.xlane.xlu0 %7768
      %v7770 = vsel %vm994, %v7710, -inf
      %7771 = vmax.xlane.f32.xlu0 %v7770
      %v7772 = vpop.xlane.xlu0 %7771
      %v7773 = vsel %vm994, %v7711, -inf
      %7774 = vmax.xlane.f32.xlu0 %v7773
      %v7775 = vpop.xlane.xlu0 %7774
      %v7776 = vsel %vm994, %v7712, -inf
      %7777 = vmax.xlane.f32.xlu0 %v7776
      %v7778 = vpop.xlane.xlu0 %7777
      %v7779 = vsel %vm994, %v7713, -inf
      %7780 = vmax.xlane.f32.xlu0 %v7779
      %v7781 = vpop.xlane.xlu0 %7780
      %v7782 = vsel %vm994, %v7714, -inf
      %7783 = vmax.xlane.f32.xlu0 %v7782
      %v7784 = vpop.xlane.xlu0 %7783
      %v7785 = vsel %vm994, %v7715, -inf
      %7786 = vmax.xlane.f32.xlu0 %v7785
      %v7787 = vpop.xlane.xlu0 %7786
      %v7788 = vsel %vm994, %v7716, -inf
      %7789 = vmax.xlane.f32.xlu0 %v7788
      %v7790 = vpop.xlane.xlu0 %7789
      %v7791 = vsel %vm994, %v7717, -inf
      %7792 = vmax.xlane.f32.xlu0 %v7791
      %v7793 = vpop.xlane.xlu0 %7792
      %v7794 = vsel %vm994, %v7718, -inf
      %7795 = vmax.xlane.f32.xlu0 %v7794
      %v7796 = vpop.xlane.xlu0 %7795
      %v7797 = vsel %vm994, %v7719, -inf
      %7798 = vmax.xlane.f32.xlu0 %v7797
      %v7799 = vpop.xlane.xlu0 %7798
      %v7800 = vsel %vm994, %v7720, -inf
      %7801 = vmax.xlane.f32.xlu0 %v7800
      %v7802 = vpop.xlane.xlu0 %7801
      %v7803 = vsel %vm994, %v7721, -inf
      %7804 = vmax.xlane.f32.xlu0 %v7803
      %v7805 = vpop.xlane.xlu0 %7804
      %v7806 = vsel %vm994, %v7722, -inf
      %7807 = vmax.xlane.f32.xlu0 %v7806
      %v7808 = vpop.xlane.xlu0 %7807
      %v7809 = vsel %vm994, %v7723, -inf
      %7810 = vmax.xlane.f32.xlu0 %v7809
      %v7811 = vpop.xlane.xlu0 %7810
      %v7812 = vsel %vm994, %v7724, -inf
      %7813 = vmax.xlane.f32.xlu0 %v7812
      %v7814 = vpop.xlane.xlu0 %7813
      %v7815 = vsel %vm994, %v7725, -inf
      %7816 = vmax.xlane.f32.xlu0 %v7815
      %v7817 = vpop.xlane.xlu0 %7816
      %v7818 = vsel %vm994, %v7726, -inf
      %7819 = vmax.xlane.f32.xlu0 %v7818
      %v7820 = vpop.xlane.xlu0 %7819
      %v7821 = vsel %vm994, %v7727, -inf
      %7822 = vmax.xlane.f32.xlu0 %v7821
      %v7823 = vpop.xlane.xlu0 %7822
      %v7824 = vsub.f32 %v7696, %v7730
      %v7825 = vsub.f32 %v7697, %v7733
      %v7826 = vsub.f32 %v7698, %v7736
      %v7827 = vsub.f32 %v7699, %v7739
      %v7828 = vsub.f32 %v7700, %v7742
      %v7829 = vsub.f32 %v7701, %v7745
      %v7830 = vsub.f32 %v7702, %v7748
      %v7831 = vsub.f32 %v7703, %v7751
      %v7832 = vsub.f32 %v7704, %v7754
      %v7833 = vsub.f32 %v7705, %v7757
      %v7834 = vsub.f32 %v7706, %v7760
      %v7835 = vsub.f32 %v7707, %v7763
      %v7836 = vsub.f32 %v7708, %v7766
      %v7837 = vsub.f32 %v7709, %v7769
      %v7838 = vsub.f32 %v7710, %v7772
      %v7839 = vsub.f32 %v7711, %v7775
      %v7840 = vsub.f32 %v7712, %v7778
      %v7841 = vsub.f32 %v7713, %v7781
      %v7842 = vsub.f32 %v7714, %v7784
      %v7843 = vsub.f32 %v7715, %v7787
      %v7844 = vsub.f32 %v7716, %v7790
      %v7845 = vsub.f32 %v7717, %v7793
      %v7846 = vsub.f32 %v7718, %v7796
      %v7847 = vsub.f32 %v7719, %v7799
      %v7848 = vsub.f32 %v7720, %v7802
      %v7849 = vsub.f32 %v7721, %v7805
      %v7850 = vsub.f32 %v7722, %v7808
      %v7851 = vsub.f32 %v7723, %v7811
      %v7852 = vsub.f32 %v7724, %v7814
      %v7853 = vsub.f32 %v7725, %v7817
      %v7854 = vsub.f32 %v7726, %v7820
      %v7855 = vsub.f32 %v7727, %v7823
      %v7856 = vmul.f32 %v7824, 1.442695
      %v7857 = vpow.pop %v7856
      %v7858 = vmul.f32 %v7825, 1.442695
      %v7859 = vpow.pop %v7858
      %v7860 = vmul.f32 %v7826, 1.442695
      %v7861 = vpow.pop %v7860
      %v7862 = vmul.f32 %v7827, 1.442695
      %v7863 = vpow.pop %v7862
      %v7864 = vmul.f32 %v7828, 1.442695
      %v7865 = vpow.pop %v7864
      %v7866 = vmul.f32 %v7829, 1.442695
      %v7867 = vpow.pop %v7866
      %v7868 = vmul.f32 %v7830, 1.442695
      %v7869 = vpow.pop %v7868
      %v7870 = vmul.f32 %v7831, 1.442695
      %v7871 = vpow.pop %v7870
      %v7872 = vmul.f32 %v7832, 1.442695
      %v7873 = vpow.pop %v7872
      %v7874 = vmul.f32 %v7833, 1.442695
      %v7875 = vpow.pop %v7874
      %v7876 = vmul.f32 %v7834, 1.442695
      %v7877 = vpow.pop %v7876
      %v7878 = vmul.f32 %v7835, 1.442695
      %v7879 = vpow.pop %v7878
      %v7880 = vmul.f32 %v7836, 1.442695
      %v7881 = vpow.pop %v7880
      %v7882 = vmul.f32 %v7837, 1.442695
      %v7883 = vpow.pop %v7882
      %v7884 = vmul.f32 %v7838, 1.442695
      %v7885 = vpow.pop %v7884
      %v7886 = vmul.f32 %v7839, 1.442695
      %v7887 = vpow.pop %v7886
      %v7888 = vmul.f32 %v7840, 1.442695
      %v7889 = vpow.pop %v7888
      %v7890 = vmul.f32 %v7841, 1.442695
      %v7891 = vpow.pop %v7890
      %v7892 = vmul.f32 %v7842, 1.442695
      %v7893 = vpow.pop %v7892
      %v7894 = vmul.f32 %v7843, 1.442695
      %v7895 = vpow.pop %v7894
      %v7896 = vmul.f32 %v7844, 1.442695
      %v7897 = vpow.pop %v7896
      %v7898 = vmul.f32 %v7845, 1.442695
      %v7899 = vpow.pop %v7898
      %v7900 = vmul.f32 %v7846, 1.442695
      %v7901 = vpow.pop %v7900
      %v7902 = vmul.f32 %v7847, 1.442695
      %v7903 = vpow.pop %v7902
      %v7904 = vmul.f32 %v7848, 1.442695
      %v7905 = vpow.pop %v7904
      %v7906 = vmul.f32 %v7849, 1.442695
      %v7907 = vpow.pop %v7906
      %v7908 = vmul.f32 %v7850, 1.442695
      %v7909 = vpow.pop %v7908
      %v7910 = vmul.f32 %v7851, 1.442695
      %v7911 = vpow.pop %v7910
      %v7912 = vmul.f32 %v7852, 1.442695
      %v7913 = vpow.pop %v7912
      %v7914 = vmul.f32 %v7853, 1.442695
      %v7915 = vpow.pop %v7914
      %v7916 = vmul.f32 %v7854, 1.442695
      %v7917 = vpow.pop %v7916
      %v7918 = vmul.f32 %v7855, 1.442695
      %v7919 = vpow.pop %v7918
      %v7920 = vsel %vm994, %v7857, 0.0
      %7921 = vadd.xlane.f32.xlu0 %v7920
      %v7922 = vpop.xlane.xlu0 %7921
      %v7923 = vsel %vm994, %v7859, 0.0
      %7924 = vadd.xlane.f32.xlu0 %v7923
      %v7925 = vpop.xlane.xlu0 %7924
      %v7926 = vsel %vm994, %v7861, 0.0
      %7927 = vadd.xlane.f32.xlu0 %v7926
      %v7928 = vpop.xlane.xlu0 %7927
      %v7929 = vsel %vm994, %v7863, 0.0
      %7930 = vadd.xlane.f32.xlu0 %v7929
      %v7931 = vpop.xlane.xlu0 %7930
      %v7932 = vsel %vm994, %v7865, 0.0
      %7933 = vadd.xlane.f32.xlu0 %v7932
      %v7934 = vpop.xlane.xlu0 %7933
      %v7935 = vsel %vm994, %v7867, 0.0
      %7936 = vadd.xlane.f32.xlu0 %v7935
      %v7937 = vpop.xlane.xlu0 %7936
      %v7938 = vsel %vm994, %v7869, 0.0
      %7939 = vadd.xlane.f32.xlu0 %v7938
      %v7940 = vpop.xlane.xlu0 %7939
      %v7941 = vsel %vm994, %v7871, 0.0
      %7942 = vadd.xlane.f32.xlu0 %v7941
      %v7943 = vpop.xlane.xlu0 %7942
      %v7944 = vsel %vm994, %v7873, 0.0
      %7945 = vadd.xlane.f32.xlu0 %v7944
      %v7946 = vpop.xlane.xlu0 %7945
      %v7947 = vsel %vm994, %v7875, 0.0
      %7948 = vadd.xlane.f32.xlu0 %v7947
      %v7949 = vpop.xlane.xlu0 %7948
      %v7950 = vsel %vm994, %v7877, 0.0
      %7951 = vadd.xlane.f32.xlu0 %v7950
      %v7952 = vpop.xlane.xlu0 %7951
      %v7953 = vsel %vm994, %v7879, 0.0
      %7954 = vadd.xlane.f32.xlu0 %v7953
      %v7955 = vpop.xlane.xlu0 %7954
      %v7956 = vsel %vm994, %v7881, 0.0
      %7957 = vadd.xlane.f32.xlu0 %v7956
      %v7958 = vpop.xlane.xlu0 %7957
      %v7959 = vsel %vm994, %v7883, 0.0
      %7960 = vadd.xlane.f32.xlu0 %v7959
      %v7961 = vpop.xlane.xlu0 %7960
      %v7962 = vsel %vm994, %v7885, 0.0
      %7963 = vadd.xlane.f32.xlu0 %v7962
      %v7964 = vpop.xlane.xlu0 %7963
      %v7965 = vsel %vm994, %v7887, 0.0
      %7966 = vadd.xlane.f32.xlu0 %v7965
      %v7967 = vpop.xlane.xlu0 %7966
      %v7968 = vsel %vm994, %v7889, 0.0
      %7969 = vadd.xlane.f32.xlu0 %v7968
      %v7970 = vpop.xlane.xlu0 %7969
      %v7971 = vsel %vm994, %v7891, 0.0
      %7972 = vadd.xlane.f32.xlu0 %v7971
      %v7973 = vpop.xlane.xlu0 %7972
      %v7974 = vsel %vm994, %v7893, 0.0
      %7975 = vadd.xlane.f32.xlu0 %v7974
      %v7976 = vpop.xlane.xlu0 %7975
      %v7977 = vsel %vm994, %v7895, 0.0
      %7978 = vadd.xlane.f32.xlu0 %v7977
      %v7979 = vpop.xlane.xlu0 %7978
      %v7980 = vsel %vm994, %v7897, 0.0
      %7981 = vadd.xlane.f32.xlu0 %v7980
      %v7982 = vpop.xlane.xlu0 %7981
      %v7983 = vsel %vm994, %v7899, 0.0
      %7984 = vadd.xlane.f32.xlu0 %v7983
      %v7985 = vpop.xlane.xlu0 %7984
      %v7986 = vsel %vm994, %v7901, 0.0
      %7987 = vadd.xlane.f32.xlu0 %v7986
      %v7988 = vpop.xlane.xlu0 %7987
      %v7989 = vsel %vm994, %v7903, 0.0
      %7990 = vadd.xlane.f32.xlu0 %v7989
      %v7991 = vpop.xlane.xlu0 %7990
      %v7992 = vsel %vm994, %v7905, 0.0
      %7993 = vadd.xlane.f32.xlu0 %v7992
      %v7994 = vpop.xlane.xlu0 %7993
      %v7995 = vsel %vm994, %v7907, 0.0
      %7996 = vadd.xlane.f32.xlu0 %v7995
      %v7997 = vpop.xlane.xlu0 %7996
      %v7998 = vsel %vm994, %v7909, 0.0
      %7999 = vadd.xlane.f32.xlu0 %v7998
      %v8000 = vpop.xlane.xlu0 %7999
      %v8001 = vsel %vm994, %v7911, 0.0
      %8002 = vadd.xlane.f32.xlu0 %v8001
      %v8003 = vpop.xlane.xlu0 %8002
      %v8004 = vsel %vm994, %v7913, 0.0
      %8005 = vadd.xlane.f32.xlu0 %v8004
      %v8006 = vpop.xlane.xlu0 %8005
      %v8007 = vsel %vm994, %v7915, 0.0
      %8008 = vadd.xlane.f32.xlu0 %v8007
      %v8009 = vpop.xlane.xlu0 %8008
      %v8010 = vsel %vm994, %v7917, 0.0
      %8011 = vadd.xlane.f32.xlu0 %v8010
      %v8012 = vpop.xlane.xlu0 %8011
      %v8013 = vsel %vm994, %v7919, 0.0
      %8014 = vadd.xlane.f32.xlu0 %v8013
      %v8015 = vpop.xlane.xlu0 %8014
      %v8016 = vrcp.pop %v7922
      %v8017 = vrcp.pop %v7925
      %v8018 = vrcp.pop %v7928
      %v8019 = vrcp.pop %v7931
      %v8020 = vrcp.pop %v7934
      %v8021 = vrcp.pop %v7937
      %v8022 = vrcp.pop %v7940
      %v8023 = vrcp.pop %v7943
      %v8024 = vrcp.pop %v7946
      %v8025 = vrcp.pop %v7949
      %v8026 = vrcp.pop %v7952
      %v8027 = vrcp.pop %v7955
      %v8028 = vrcp.pop %v7958
      %v8029 = vrcp.pop %v7961
      %v8030 = vrcp.pop %v7964
      %v8031 = vrcp.pop %v7967
      %v8032 = vrcp.pop %v7970
      %v8033 = vrcp.pop %v7973
      %v8034 = vrcp.pop %v7976
      %v8035 = vrcp.pop %v7979
      %v8036 = vrcp.pop %v7982
      %v8037 = vrcp.pop %v7985
      %v8038 = vrcp.pop %v7988
      %v8039 = vrcp.pop %v7991
      %v8040 = vrcp.pop %v7994
      %v8041 = vrcp.pop %v7997
      %v8042 = vrcp.pop %v8000
      %v8043 = vrcp.pop %v8003
      %v8044 = vrcp.pop %v8006
      %v8045 = vrcp.pop %v8009
      %v8046 = vrcp.pop %v8012
      %v8047 = vrcp.pop %v8015
      %v8048 = vpack.c.bf16 %v7857, %v7857
      %v8049 = vpack.c.bf16 %v7859, %v7859
      %v8050 = vpack.c.bf16 %v7861, %v7861
      %v8051 = vpack.c.bf16 %v7863, %v7863
      %v8052 = vpack.c.bf16 %v7865, %v7865
      %v8053 = vpack.c.bf16 %v7867, %v7867
      %v8054 = vpack.c.bf16 %v7869, %v7869
      %v8055 = vpack.c.bf16 %v7871, %v7871
      %v8056 = vpack.c.bf16 %v7873, %v7873
      %v8057 = vpack.c.bf16 %v7875, %v7875
      %v8058 = vpack.c.bf16 %v7877, %v7877
      %v8059 = vpack.c.bf16 %v7879, %v7879
      %v8060 = vpack.c.bf16 %v7881, %v7881
      %v8061 = vpack.c.bf16 %v7883, %v7883
      %v8062 = vpack.c.bf16 %v7885, %v7885
      %v8063 = vpack.c.bf16 %v7887, %v7887
      %v8064 = vpack.c.bf16 %v7889, %v7889
      %v8065 = vpack.c.bf16 %v7891, %v7891
      %v8066 = vpack.c.bf16 %v7893, %v7893
      %v8067 = vpack.c.bf16 %v7895, %v7895
      %v8068 = vpack.c.bf16 %v7897, %v7897
      %v8069 = vpack.c.bf16 %v7899, %v7899
      %v8070 = vpack.c.bf16 %v7901, %v7901
      %v8071 = vpack.c.bf16 %v7903, %v7903
      %v8072 = vpack.c.bf16 %v7905, %v7905
      %v8073 = vpack.c.bf16 %v7907, %v7907
      %v8074 = vpack.c.bf16 %v7909, %v7909
      %v8075 = vpack.c.bf16 %v7911, %v7911
      %v8076 = vpack.c.bf16 %v7913, %v7913
      %v8077 = vpack.c.bf16 %v7915, %v7915
      %v8078 = vpack.c.bf16 %v7917, %v7917
      %v8079 = vpack.c.bf16 %v7919, %v7919
      %v8082 = vunpack.c.l.b16 %v8048
      %v8083 = vunpack.c.l.b16 %v8049
      %v8084 = vpack.c.b16 %v8083, %v8082
      %8085 = vrot.lane.b32.xlu0 %v7268, 96
      %v8086 = vpop.permute.xlu0 %8085
      %v8089 = vsel %vm994, %v8084, 0
      %8091 = vmatpush.bf16.msra.mxu0 0
      %8092 = vmatpush.bf16.msra.mxu0 0
      %8093 = vmatpush.bf16.msra.mxu0 0
      %8094 = vmatpush.bf16.msra.mxu0 0
      %8095 = vmatpush.bf16.msra.mxu0 0
      %8096 = vmatpush.bf16.msra.mxu0 0
      %8097 = vmatpush.bf16.msra.mxu0 0
      %8098 = vmatpush.bf16.msra.mxu0 %v8086
      %8099 = vmatmul.bf16.gmra.mxu0 %v8089
      %v8100 = vpop.f32.mrf.mxu0
      %v8101 = vadd.f32 0.0, %v8100
      %v8102 = vpop.f32.mrf.mxu0
      %v8103 = vadd.f32 0.0, %v8102
      %8104 = vdwg.mxu0
      %v8107 = vunpack.c.l.b16 %v8050
      %v8108 = vunpack.c.l.b16 %v8051
      %v8109 = vpack.c.b16 %v8108, %v8107
      %8110 = vrot.lane.b32.xlu0 %v7295, 96
      %v8111 = vpop.permute.xlu0 %8110
      %v8114 = vsel %vm994, %v8109, 0
      %8116 = vmatpush.bf16.msra.mxu0 0
      %8117 = vmatpush.bf16.msra.mxu0 0
      %8118 = vmatpush.bf16.msra.mxu0 0
      %8119 = vmatpush.bf16.msra.mxu0 0
      %8120 = vmatpush.bf16.msra.mxu0 0
      %8121 = vmatpush.bf16.msra.mxu0 0
      %8122 = vmatpush.bf16.msra.mxu0 0
      %8123 = vmatpush.bf16.msra.mxu0 %v8111
      %8124 = vmatmul.bf16.gmra.mxu0 %v8114
      %v8125 = vpop.f32.mrf.mxu0
      %v8126 = vadd.f32 0.0, %v8125
      %v8127 = vpop.f32.mrf.mxu0
      %v8128 = vadd.f32 0.0, %v8127
      %8129 = vdwg.mxu0
      %v8132 = vunpack.c.l.b16 %v8052
      %v8133 = vunpack.c.l.b16 %v8053
      %v8134 = vpack.c.b16 %v8133, %v8132
      %8135 = vrot.lane.b32.xlu0 %v7322, 96
      %v8136 = vpop.permute.xlu0 %8135
      %v8139 = vsel %vm994, %v8134, 0
      %8141 = vmatpush.bf16.msra.mxu0 0
      %8142 = vmatpush.bf16.msra.mxu0 0
      %8143 = vmatpush.bf16.msra.mxu0 0
      %8144 = vmatpush.bf16.msra.mxu0 0
      %8145 = vmatpush.bf16.msra.mxu0 0
      %8146 = vmatpush.bf16.msra.mxu0 0
      %8147 = vmatpush.bf16.msra.mxu0 0
      %8148 = vmatpush.bf16.msra.mxu0 %v8136
      %8149 = vmatmul.bf16.gmra.mxu0 %v8139
      %v8150 = vpop.f32.mrf.mxu0
      %v8151 = vadd.f32 0.0, %v8150
      %v8152 = vpop.f32.mrf.mxu0
      %v8153 = vadd.f32 0.0, %v8152
      %8154 = vdwg.mxu0
      %v8157 = vunpack.c.l.b16 %v8054
      %v8158 = vunpack.c.l.b16 %v8055
      %v8159 = vpack.c.b16 %v8158, %v8157
      %8160 = vrot.lane.b32.xlu0 %v7349, 96
      %v8161 = vpop.permute.xlu0 %8160
      %v8164 = vsel %vm994, %v8159, 0
      %8166 = vmatpush.bf16.msra.mxu0 0
      %8167 = vmatpush.bf16.msra.mxu0 0
      %8168 = vmatpush.bf16.msra.mxu0 0
      %8169 = vmatpush.bf16.msra.mxu0 0
      %8170 = vmatpush.bf16.msra.mxu0 0
      %8171 = vmatpush.bf16.msra.mxu0 0
      %8172 = vmatpush.bf16.msra.mxu0 0
      %8173 = vmatpush.bf16.msra.mxu0 %v8161
      %8174 = vmatmul.bf16.gmra.mxu0 %v8164
      %v8175 = vpop.f32.mrf.mxu0
      %v8176 = vadd.f32 0.0, %v8175
      %v8177 = vpop.f32.mrf.mxu0
      %v8178 = vadd.f32 0.0, %v8177
      %8179 = vdwg.mxu0
      %v8182 = vunpack.c.l.b16 %v8056
      %v8183 = vunpack.c.l.b16 %v8057
      %v8184 = vpack.c.b16 %v8183, %v8182
      %8185 = vrot.lane.b32.xlu0 %v7376, 96
      %v8186 = vpop.permute.xlu0 %8185
      %v8189 = vsel %vm994, %v8184, 0
      %8191 = vmatpush.bf16.msra.mxu0 0
      %8192 = vmatpush.bf16.msra.mxu0 0
      %8193 = vmatpush.bf16.msra.mxu0 0
      %8194 = vmatpush.bf16.msra.mxu0 0
      %8195 = vmatpush.bf16.msra.mxu0 0
      %8196 = vmatpush.bf16.msra.mxu0 0
      %8197 = vmatpush.bf16.msra.mxu0 0
      %8198 = vmatpush.bf16.msra.mxu0 %v8186
      %8199 = vmatmul.bf16.gmra.mxu0 %v8189
      %v8200 = vpop.f32.mrf.mxu0
      %v8201 = vadd.f32 0.0, %v8200
      %v8202 = vpop.f32.mrf.mxu0
      %v8203 = vadd.f32 0.0, %v8202
      %8204 = vdwg.mxu0
      %v8207 = vunpack.c.l.b16 %v8058
      %v8208 = vunpack.c.l.b16 %v8059
      %v8209 = vpack.c.b16 %v8208, %v8207
      %8210 = vrot.lane.b32.xlu0 %v7403, 96
      %v8211 = vpop.permute.xlu0 %8210
      %v8214 = vsel %vm994, %v8209, 0
      %8216 = vmatpush.bf16.msra.mxu0 0
      %8217 = vmatpush.bf16.msra.mxu0 0
      %8218 = vmatpush.bf16.msra.mxu0 0
      %8219 = vmatpush.bf16.msra.mxu0 0
      %8220 = vmatpush.bf16.msra.mxu0 0
      %8221 = vmatpush.bf16.msra.mxu0 0
      %8222 = vmatpush.bf16.msra.mxu0 0
      %8223 = vmatpush.bf16.msra.mxu0 %v8211
      %8224 = vmatmul.bf16.gmra.mxu0 %v8214
      %v8225 = vpop.f32.mrf.mxu0
      %v8226 = vadd.f32 0.0, %v8225
      %v8227 = vpop.f32.mrf.mxu0
      %v8228 = vadd.f32 0.0, %v8227
      %8229 = vdwg.mxu0
      %v8232 = vunpack.c.l.b16 %v8060
      %v8233 = vunpack.c.l.b16 %v8061
      %v8234 = vpack.c.b16 %v8233, %v8232
      %8235 = vrot.lane.b32.xlu0 %v7430, 96
      %v8236 = vpop.permute.xlu0 %8235
      %v8239 = vsel %vm994, %v8234, 0
      %8241 = vmatpush.bf16.msra.mxu0 0
      %8242 = vmatpush.bf16.msra.mxu0 0
      %8243 = vmatpush.bf16.msra.mxu0 0
      %8244 = vmatpush.bf16.msra.mxu0 0
      %8245 = vmatpush.bf16.msra.mxu0 0
      %8246 = vmatpush.bf16.msra.mxu0 0
      %8247 = vmatpush.bf16.msra.mxu0 0
      %8248 = vmatpush.bf16.msra.mxu0 %v8236
      %8249 = vmatmul.bf16.gmra.mxu0 %v8239
      %v8250 = vpop.f32.mrf.mxu0
      %v8251 = vadd.f32 0.0, %v8250
      %v8252 = vpop.f32.mrf.mxu0
      %v8253 = vadd.f32 0.0, %v8252
      %8254 = vdwg.mxu0
      %v8257 = vunpack.c.l.b16 %v8062
      %v8258 = vunpack.c.l.b16 %v8063
      %v8259 = vpack.c.b16 %v8258, %v8257
      %8260 = vrot.lane.b32.xlu0 %v7457, 96
      %v8261 = vpop.permute.xlu0 %8260
      %v8264 = vsel %vm994, %v8259, 0
      %8266 = vmatpush.bf16.msra.mxu0 0
      %8267 = vmatpush.bf16.msra.mxu0 0
      %8268 = vmatpush.bf16.msra.mxu0 0
      %8269 = vmatpush.bf16.msra.mxu0 0
      %8270 = vmatpush.bf16.msra.mxu0 0
      %8271 = vmatpush.bf16.msra.mxu0 0
      %8272 = vmatpush.bf16.msra.mxu0 0
      %8273 = vmatpush.bf16.msra.mxu0 %v8261
      %8274 = vmatmul.bf16.gmra.mxu0 %v8264
      %v8275 = vpop.f32.mrf.mxu0
      %v8276 = vadd.f32 0.0, %v8275
      %v8277 = vpop.f32.mrf.mxu0
      %v8278 = vadd.f32 0.0, %v8277
      %8279 = vdwg.mxu0
      %v8282 = vunpack.c.l.b16 %v8064
      %v8283 = vunpack.c.l.b16 %v8065
      %v8284 = vpack.c.b16 %v8283, %v8282
      %8285 = vrot.lane.b32.xlu0 %v7484, 96
      %v8286 = vpop.permute.xlu0 %8285
      %v8289 = vsel %vm994, %v8284, 0
      %8291 = vmatpush.bf16.msra.mxu0 0
      %8292 = vmatpush.bf16.msra.mxu0 0
      %8293 = vmatpush.bf16.msra.mxu0 0
      %8294 = vmatpush.bf16.msra.mxu0 0
      %8295 = vmatpush.bf16.msra.mxu0 0
      %8296 = vmatpush.bf16.msra.mxu0 0
      %8297 = vmatpush.bf16.msra.mxu0 0
      %8298 = vmatpush.bf16.msra.mxu0 %v8286
      %8299 = vmatmul.bf16.gmra.mxu0 %v8289
      %v8300 = vpop.f32.mrf.mxu0
      %v8301 = vadd.f32 0.0, %v8300
      %v8302 = vpop.f32.mrf.mxu0
      %v8303 = vadd.f32 0.0, %v8302
      %8304 = vdwg.mxu0
      %v8307 = vunpack.c.l.b16 %v8066
      %v8308 = vunpack.c.l.b16 %v8067
      %v8309 = vpack.c.b16 %v8308, %v8307
      %8310 = vrot.lane.b32.xlu0 %v7511, 96
      %v8311 = vpop.permute.xlu0 %8310
      %v8314 = vsel %vm994, %v8309, 0
      %8316 = vmatpush.bf16.msra.mxu0 0
      %8317 = vmatpush.bf16.msra.mxu0 0
      %8318 = vmatpush.bf16.msra.mxu0 0
      %8319 = vmatpush.bf16.msra.mxu0 0
      %8320 = vmatpush.bf16.msra.mxu0 0
      %8321 = vmatpush.bf16.msra.mxu0 0
      %8322 = vmatpush.bf16.msra.mxu0 0
      %8323 = vmatpush.bf16.msra.mxu0 %v8311
      %8324 = vmatmul.bf16.gmra.mxu0 %v8314
      %v8325 = vpop.f32.mrf.mxu0
      %v8326 = vadd.f32 0.0, %v8325
      %v8327 = vpop.f32.mrf.mxu0
      %v8328 = vadd.f32 0.0, %v8327
      %8329 = vdwg.mxu0
      %v8332 = vunpack.c.l.b16 %v8068
      %v8333 = vunpack.c.l.b16 %v8069
      %v8334 = vpack.c.b16 %v8333, %v8332
      %8335 = vrot.lane.b32.xlu0 %v7538, 96
      %v8336 = vpop.permute.xlu0 %8335
      %v8339 = vsel %vm994, %v8334, 0
      %8341 = vmatpush.bf16.msra.mxu0 0
      %8342 = vmatpush.bf16.msra.mxu0 0
      %8343 = vmatpush.bf16.msra.mxu0 0
      %8344 = vmatpush.bf16.msra.mxu0 0
      %8345 = vmatpush.bf16.msra.mxu0 0
      %8346 = vmatpush.bf16.msra.mxu0 0
      %8347 = vmatpush.bf16.msra.mxu0 0
      %8348 = vmatpush.bf16.msra.mxu0 %v8336
      %8349 = vmatmul.bf16.gmra.mxu0 %v8339
      %v8350 = vpop.f32.mrf.mxu0
      %v8351 = vadd.f32 0.0, %v8350
      %v8352 = vpop.f32.mrf.mxu0
      %v8353 = vadd.f32 0.0, %v8352
      %8354 = vdwg.mxu0
      %v8357 = vunpack.c.l.b16 %v8070
      %v8358 = vunpack.c.l.b16 %v8071
      %v8359 = vpack.c.b16 %v8358, %v8357
      %8360 = vrot.lane.b32.xlu0 %v7565, 96
      %v8361 = vpop.permute.xlu0 %8360
      %v8364 = vsel %vm994, %v8359, 0
      %8366 = vmatpush.bf16.msra.mxu0 0
      %8367 = vmatpush.bf16.msra.mxu0 0
      %8368 = vmatpush.bf16.msra.mxu0 0
      %8369 = vmatpush.bf16.msra.mxu0 0
      %8370 = vmatpush.bf16.msra.mxu0 0
      %8371 = vmatpush.bf16.msra.mxu0 0
      %8372 = vmatpush.bf16.msra.mxu0 0
      %8373 = vmatpush.bf16.msra.mxu0 %v8361
      %8374 = vmatmul.bf16.gmra.mxu0 %v8364
      %v8375 = vpop.f32.mrf.mxu0
      %v8376 = vadd.f32 0.0, %v8375
      %v8377 = vpop.f32.mrf.mxu0
      %v8378 = vadd.f32 0.0, %v8377
      %8379 = vdwg.mxu0
      %v8382 = vunpack.c.l.b16 %v8072
      %v8383 = vunpack.c.l.b16 %v8073
      %v8384 = vpack.c.b16 %v8383, %v8382
      %8385 = vrot.lane.b32.xlu0 %v7592, 96
      %v8386 = vpop.permute.xlu0 %8385
      %v8389 = vsel %vm994, %v8384, 0
      %8391 = vmatpush.bf16.msra.mxu0 0
      %8392 = vmatpush.bf16.msra.mxu0 0
      %8393 = vmatpush.bf16.msra.mxu0 0
      %8394 = vmatpush.bf16.msra.mxu0 0
      %8395 = vmatpush.bf16.msra.mxu0 0
      %8396 = vmatpush.bf16.msra.mxu0 0
      %8397 = vmatpush.bf16.msra.mxu0 0
      %8398 = vmatpush.bf16.msra.mxu0 %v8386
      %8399 = vmatmul.bf16.gmra.mxu0 %v8389
      %v8400 = vpop.f32.mrf.mxu0
      %v8401 = vadd.f32 0.0, %v8400
      %v8402 = vpop.f32.mrf.mxu0
      %v8403 = vadd.f32 0.0, %v8402
      %8404 = vdwg.mxu0
      %v8407 = vunpack.c.l.b16 %v8074
      %v8408 = vunpack.c.l.b16 %v8075
      %v8409 = vpack.c.b16 %v8408, %v8407
      %8410 = vrot.lane.b32.xlu0 %v7619, 96
      %v8411 = vpop.permute.xlu0 %8410
      %v8414 = vsel %vm994, %v8409, 0
      %8416 = vmatpush.bf16.msra.mxu0 0
      %8417 = vmatpush.bf16.msra.mxu0 0
      %8418 = vmatpush.bf16.msra.mxu0 0
      %8419 = vmatpush.bf16.msra.mxu0 0
      %8420 = vmatpush.bf16.msra.mxu0 0
      %8421 = vmatpush.bf16.msra.mxu0 0
      %8422 = vmatpush.bf16.msra.mxu0 0
      %8423 = vmatpush.bf16.msra.mxu0 %v8411
      %8424 = vmatmul.bf16.gmra.mxu0 %v8414
      %v8425 = vpop.f32.mrf.mxu0
      %v8426 = vadd.f32 0.0, %v8425
      %v8427 = vpop.f32.mrf.mxu0
      %v8428 = vadd.f32 0.0, %v8427
      %8429 = vdwg.mxu0
      %v8432 = vunpack.c.l.b16 %v8076
      %v8433 = vunpack.c.l.b16 %v8077
      %v8434 = vpack.c.b16 %v8433, %v8432
      %8435 = vrot.lane.b32.xlu0 %v7646, 96
      %v8436 = vpop.permute.xlu0 %8435
      %v8439 = vsel %vm994, %v8434, 0
      %8441 = vmatpush.bf16.msra.mxu0 0
      %8442 = vmatpush.bf16.msra.mxu0 0
      %8443 = vmatpush.bf16.msra.mxu0 0
      %8444 = vmatpush.bf16.msra.mxu0 0
      %8445 = vmatpush.bf16.msra.mxu0 0
      %8446 = vmatpush.bf16.msra.mxu0 0
      %8447 = vmatpush.bf16.msra.mxu0 0
      %8448 = vmatpush.bf16.msra.mxu0 %v8436
      %8449 = vmatmul.bf16.gmra.mxu0 %v8439
      %v8450 = vpop.f32.mrf.mxu0
      %v8451 = vadd.f32 0.0, %v8450
      %v8452 = vpop.f32.mrf.mxu0
      %v8453 = vadd.f32 0.0, %v8452
      %8454 = vdwg.mxu0
      %v8457 = vunpack.c.l.b16 %v8078
      %v8458 = vunpack.c.l.b16 %v8079
      %v8459 = vpack.c.b16 %v8458, %v8457
      %8460 = vrot.lane.b32.xlu0 %v7673, 96
      %v8461 = vpop.permute.xlu0 %8460
      %v8464 = vsel %vm994, %v8459, 0
      %8466 = vmatpush.bf16.msra.mxu0 0
      %8467 = vmatpush.bf16.msra.mxu0 0
      %8468 = vmatpush.bf16.msra.mxu0 0
      %8469 = vmatpush.bf16.msra.mxu0 0
      %8470 = vmatpush.bf16.msra.mxu0 0
      %8471 = vmatpush.bf16.msra.mxu0 0
      %8472 = vmatpush.bf16.msra.mxu0 0
      %8473 = vmatpush.bf16.msra.mxu0 %v8461
      %8474 = vmatmul.bf16.gmra.mxu0 %v8464
      %v8475 = vpop.f32.mrf.mxu0
      %v8476 = vadd.f32 0.0, %v8475
      %v8477 = vpop.f32.mrf.mxu0
      %v8478 = vadd.f32 0.0, %v8477
      %8479 = vdwg.mxu0
      %v8480 = vmul.f32 %v8101, %v8016
      %v8481 = vmul.f32 %v8103, %v8017
      %v8482 = vmul.f32 %v8126, %v8018
      %v8483 = vmul.f32 %v8128, %v8019
      %v8484 = vmul.f32 %v8151, %v8020
      %v8485 = vmul.f32 %v8153, %v8021
      %v8486 = vmul.f32 %v8176, %v8022
      %v8487 = vmul.f32 %v8178, %v8023
      %v8488 = vmul.f32 %v8201, %v8024
      %v8489 = vmul.f32 %v8203, %v8025
      %v8490 = vmul.f32 %v8226, %v8026
      %v8491 = vmul.f32 %v8228, %v8027
      %v8492 = vmul.f32 %v8251, %v8028
      %v8493 = vmul.f32 %v8253, %v8029
      %v8494 = vmul.f32 %v8276, %v8030
      %v8495 = vmul.f32 %v8278, %v8031
      %v8496 = vmul.f32 %v8301, %v8032
      %v8497 = vmul.f32 %v8303, %v8033
      %v8498 = vmul.f32 %v8326, %v8034
      %v8499 = vmul.f32 %v8328, %v8035
      %v8500 = vmul.f32 %v8351, %v8036
      %v8501 = vmul.f32 %v8353, %v8037
      %v8502 = vmul.f32 %v8376, %v8038
      %v8503 = vmul.f32 %v8378, %v8039
      %v8504 = vmul.f32 %v8401, %v8040
      %v8505 = vmul.f32 %v8403, %v8041
      %v8506 = vmul.f32 %v8426, %v8042
      %v8507 = vmul.f32 %v8428, %v8043
      %v8508 = vmul.f32 %v8451, %v8044
      %v8509 = vmul.f32 %v8453, %v8045
      %v8510 = vmul.f32 %v8476, %v8046
      %v8511 = vmul.f32 %v8478, %v8047
      %v8512 = vpack.c.bf16 %v8481, %v8480
      %v8513 = vpack.c.bf16 %v8483, %v8482
      %v8514 = vpack.c.bf16 %v8485, %v8484
      %v8515 = vpack.c.bf16 %v8487, %v8486
      %v8516 = vpack.c.bf16 %v8489, %v8488
      %v8517 = vpack.c.bf16 %v8491, %v8490
      %v8518 = vpack.c.bf16 %v8493, %v8492
      %v8519 = vpack.c.bf16 %v8495, %v8494
      %v8520 = vpack.c.bf16 %v8497, %v8496
      %v8521 = vpack.c.bf16 %v8499, %v8498
      %v8522 = vpack.c.bf16 %v8501, %v8500
      %v8523 = vpack.c.bf16 %v8503, %v8502
      %v8524 = vpack.c.bf16 %v8505, %v8504
      %v8525 = vpack.c.bf16 %v8507, %v8506
      %v8526 = vpack.c.bf16 %v8509, %v8508
      %v8527 = vpack.c.bf16 %v8511, %v8510
      %8528 = vrot.lane.b32.xlu0 %v7268, 120
      %v8529 = vpop.permute.xlu0 %8528
      %8530 = vrot.lane.b32.xlu0 %v7268, 104
      %v8531 = vpop.permute.xlu0 %8530
      %v8533 = vsel %vm810, %v8529, 0
      %v8536 = vsel %vm810, %v8531, 0
      %8538 = vmatpush.bf16.xpose.msra.mxu0 0
      %8539 = vmatpush.bf16.xpose.msra.mxu0 0
      %8540 = vmatpush.bf16.xpose.msra.mxu0 0
      %8541 = vmatpush.bf16.xpose.msra.mxu0 0
      %8542 = vmatpush.bf16.xpose.msra.mxu0 0
      %8543 = vmatpush.bf16.xpose.msra.mxu0 0
      %8544 = vmatpush.bf16.xpose.msra.mxu0 0
      %8545 = vmatpush.bf16.xpose.msra.mxu0 %v8536
      %8546 = vmatmul.bf16.gmra.mxu0 %v8533
      %v8547 = vpop.f32.mrf.mxu0
      %v8548 = vadd.f32 0.0, %v8547
      %v8549 = vpop.f32.mrf.mxu0
      %v8550 = vadd.f32 0.0, %v8549
      %8551 = vdwg.mxu0
      %8552 = vrot.lane.b32.xlu0 %v7295, 120
      %v8553 = vpop.permute.xlu0 %8552
      %8554 = vrot.lane.b32.xlu0 %v7295, 104
      %v8555 = vpop.permute.xlu0 %8554
      %v8557 = vsel %vm810, %v8553, 0
      %v8560 = vsel %vm810, %v8555, 0
      %8562 = vmatpush.bf16.xpose.msra.mxu0 0
      %8563 = vmatpush.bf16.xpose.msra.mxu0 0
      %8564 = vmatpush.bf16.xpose.msra.mxu0 0
      %8565 = vmatpush.bf16.xpose.msra.mxu0 0
      %8566 = vmatpush.bf16.xpose.msra.mxu0 0
      %8567 = vmatpush.bf16.xpose.msra.mxu0 0
      %8568 = vmatpush.bf16.xpose.msra.mxu0 0
      %8569 = vmatpush.bf16.xpose.msra.mxu0 %v8560
      %8570 = vmatmul.bf16.gmra.mxu0 %v8557
      %v8571 = vpop.f32.mrf.mxu0
      %v8572 = vadd.f32 0.0, %v8571
      %v8573 = vpop.f32.mrf.mxu0
      %v8574 = vadd.f32 0.0, %v8573
      %8575 = vdwg.mxu0
      %8576 = vrot.lane.b32.xlu0 %v7322, 120
      %v8577 = vpop.permute.xlu0 %8576
      %8578 = vrot.lane.b32.xlu0 %v7322, 104
      %v8579 = vpop.permute.xlu0 %8578
      %v8581 = vsel %vm810, %v8577, 0
      %v8584 = vsel %vm810, %v8579, 0
      %8586 = vmatpush.bf16.xpose.msra.mxu0 0
      %8587 = vmatpush.bf16.xpose.msra.mxu0 0
      %8588 = vmatpush.bf16.xpose.msra.mxu0 0
      %8589 = vmatpush.bf16.xpose.msra.mxu0 0
      %8590 = vmatpush.bf16.xpose.msra.mxu0 0
      %8591 = vmatpush.bf16.xpose.msra.mxu0 0
      %8592 = vmatpush.bf16.xpose.msra.mxu0 0
      %8593 = vmatpush.bf16.xpose.msra.mxu0 %v8584
      %8594 = vmatmul.bf16.gmra.mxu0 %v8581
      %v8595 = vpop.f32.mrf.mxu0
      %v8596 = vadd.f32 0.0, %v8595
      %v8597 = vpop.f32.mrf.mxu0
      %v8598 = vadd.f32 0.0, %v8597
      %8599 = vdwg.mxu0
      %8600 = vrot.lane.b32.xlu0 %v7349, 120
      %v8601 = vpop.permute.xlu0 %8600
      %8602 = vrot.lane.b32.xlu0 %v7349, 104
      %v8603 = vpop.permute.xlu0 %8602
      %v8605 = vsel %vm810, %v8601, 0
      %v8608 = vsel %vm810, %v8603, 0
      %8610 = vmatpush.bf16.xpose.msra.mxu0 0
      %8611 = vmatpush.bf16.xpose.msra.mxu0 0
      %8612 = vmatpush.bf16.xpose.msra.mxu0 0
      %8613 = vmatpush.bf16.xpose.msra.mxu0 0
      %8614 = vmatpush.bf16.xpose.msra.mxu0 0
      %8615 = vmatpush.bf16.xpose.msra.mxu0 0
      %8616 = vmatpush.bf16.xpose.msra.mxu0 0
      %8617 = vmatpush.bf16.xpose.msra.mxu0 %v8608
      %8618 = vmatmul.bf16.gmra.mxu0 %v8605
      %v8619 = vpop.f32.mrf.mxu0
      %v8620 = vadd.f32 0.0, %v8619
      %v8621 = vpop.f32.mrf.mxu0
      %v8622 = vadd.f32 0.0, %v8621
      %8623 = vdwg.mxu0
      %8624 = vrot.lane.b32.xlu0 %v7376, 120
      %v8625 = vpop.permute.xlu0 %8624
      %8626 = vrot.lane.b32.xlu0 %v7376, 104
      %v8627 = vpop.permute.xlu0 %8626
      %v8629 = vsel %vm810, %v8625, 0
      %v8632 = vsel %vm810, %v8627, 0
      %8634 = vmatpush.bf16.xpose.msra.mxu0 0
      %8635 = vmatpush.bf16.xpose.msra.mxu0 0
      %8636 = vmatpush.bf16.xpose.msra.mxu0 0
      %8637 = vmatpush.bf16.xpose.msra.mxu0 0
      %8638 = vmatpush.bf16.xpose.msra.mxu0 0
      %8639 = vmatpush.bf16.xpose.msra.mxu0 0
      %8640 = vmatpush.bf16.xpose.msra.mxu0 0
      %8641 = vmatpush.bf16.xpose.msra.mxu0 %v8632
      %8642 = vmatmul.bf16.gmra.mxu0 %v8629
      %v8643 = vpop.f32.mrf.mxu0
      %v8644 = vadd.f32 0.0, %v8643
      %v8645 = vpop.f32.mrf.mxu0
      %v8646 = vadd.f32 0.0, %v8645
      %8647 = vdwg.mxu0
      %8648 = vrot.lane.b32.xlu0 %v7403, 120
      %v8649 = vpop.permute.xlu0 %8648
      %8650 = vrot.lane.b32.xlu0 %v7403, 104
      %v8651 = vpop.permute.xlu0 %8650
      %v8653 = vsel %vm810, %v8649, 0
      %v8656 = vsel %vm810, %v8651, 0
      %8658 = vmatpush.bf16.xpose.msra.mxu0 0
      %8659 = vmatpush.bf16.xpose.msra.mxu0 0
      %8660 = vmatpush.bf16.xpose.msra.mxu0 0
      %8661 = vmatpush.bf16.xpose.msra.mxu0 0
      %8662 = vmatpush.bf16.xpose.msra.mxu0 0
      %8663 = vmatpush.bf16.xpose.msra.mxu0 0
      %8664 = vmatpush.bf16.xpose.msra.mxu0 0
      %8665 = vmatpush.bf16.xpose.msra.mxu0 %v8656
      %8666 = vmatmul.bf16.gmra.mxu0 %v8653
      %v8667 = vpop.f32.mrf.mxu0
      %v8668 = vadd.f32 0.0, %v8667
      %v8669 = vpop.f32.mrf.mxu0
      %v8670 = vadd.f32 0.0, %v8669
      %8671 = vdwg.mxu0
      %8672 = vrot.lane.b32.xlu0 %v7430, 120
      %v8673 = vpop.permute.xlu0 %8672
      %8674 = vrot.lane.b32.xlu0 %v7430, 104
      %v8675 = vpop.permute.xlu0 %8674
      %v8677 = vsel %vm810, %v8673, 0
      %v8680 = vsel %vm810, %v8675, 0
      %8682 = vmatpush.bf16.xpose.msra.mxu0 0
      %8683 = vmatpush.bf16.xpose.msra.mxu0 0
      %8684 = vmatpush.bf16.xpose.msra.mxu0 0
      %8685 = vmatpush.bf16.xpose.msra.mxu0 0
      %8686 = vmatpush.bf16.xpose.msra.mxu0 0
      %8687 = vmatpush.bf16.xpose.msra.mxu0 0
      %8688 = vmatpush.bf16.xpose.msra.mxu0 0
      %8689 = vmatpush.bf16.xpose.msra.mxu0 %v8680
      %8690 = vmatmul.bf16.gmra.mxu0 %v8677
      %v8691 = vpop.f32.mrf.mxu0
      %v8692 = vadd.f32 0.0, %v8691
      %v8693 = vpop.f32.mrf.mxu0
      %v8694 = vadd.f32 0.0, %v8693
      %8695 = vdwg.mxu0
      %8696 = vrot.lane.b32.xlu0 %v7457, 120
      %v8697 = vpop.permute.xlu0 %8696
      %8698 = vrot.lane.b32.xlu0 %v7457, 104
      %v8699 = vpop.permute.xlu0 %8698
      %v8701 = vsel %vm810, %v8697, 0
      %v8704 = vsel %vm810, %v8699, 0
      %8706 = vmatpush.bf16.xpose.msra.mxu0 0
      %8707 = vmatpush.bf16.xpose.msra.mxu0 0
      %8708 = vmatpush.bf16.xpose.msra.mxu0 0
      %8709 = vmatpush.bf16.xpose.msra.mxu0 0
      %8710 = vmatpush.bf16.xpose.msra.mxu0 0
      %8711 = vmatpush.bf16.xpose.msra.mxu0 0
      %8712 = vmatpush.bf16.xpose.msra.mxu0 0
      %8713 = vmatpush.bf16.xpose.msra.mxu0 %v8704
      %8714 = vmatmul.bf16.gmra.mxu0 %v8701
      %v8715 = vpop.f32.mrf.mxu0
      %v8716 = vadd.f32 0.0, %v8715
      %v8717 = vpop.f32.mrf.mxu0
      %v8718 = vadd.f32 0.0, %v8717
      %8719 = vdwg.mxu0
      %8720 = vrot.lane.b32.xlu0 %v7484, 120
      %v8721 = vpop.permute.xlu0 %8720
      %8722 = vrot.lane.b32.xlu0 %v7484, 104
      %v8723 = vpop.permute.xlu0 %8722
      %v8725 = vsel %vm810, %v8721, 0
      %v8728 = vsel %vm810, %v8723, 0
      %8730 = vmatpush.bf16.xpose.msra.mxu0 0
      %8731 = vmatpush.bf16.xpose.msra.mxu0 0
      %8732 = vmatpush.bf16.xpose.msra.mxu0 0
      %8733 = vmatpush.bf16.xpose.msra.mxu0 0
      %8734 = vmatpush.bf16.xpose.msra.mxu0 0
      %8735 = vmatpush.bf16.xpose.msra.mxu0 0
      %8736 = vmatpush.bf16.xpose.msra.mxu0 0
      %8737 = vmatpush.bf16.xpose.msra.mxu0 %v8728
      %8738 = vmatmul.bf16.gmra.mxu0 %v8725
      %v8739 = vpop.f32.mrf.mxu0
      %v8740 = vadd.f32 0.0, %v8739
      %v8741 = vpop.f32.mrf.mxu0
      %v8742 = vadd.f32 0.0, %v8741
      %8743 = vdwg.mxu0
      %8744 = vrot.lane.b32.xlu0 %v7511, 120
      %v8745 = vpop.permute.xlu0 %8744
      %8746 = vrot.lane.b32.xlu0 %v7511, 104
      %v8747 = vpop.permute.xlu0 %8746
      %v8749 = vsel %vm810, %v8745, 0
      %v8752 = vsel %vm810, %v8747, 0
      %8754 = vmatpush.bf16.xpose.msra.mxu0 0
      %8755 = vmatpush.bf16.xpose.msra.mxu0 0
      %8756 = vmatpush.bf16.xpose.msra.mxu0 0
      %8757 = vmatpush.bf16.xpose.msra.mxu0 0
      %8758 = vmatpush.bf16.xpose.msra.mxu0 0
      %8759 = vmatpush.bf16.xpose.msra.mxu0 0
      %8760 = vmatpush.bf16.xpose.msra.mxu0 0
      %8761 = vmatpush.bf16.xpose.msra.mxu0 %v8752
      %8762 = vmatmul.bf16.gmra.mxu0 %v8749
      %v8763 = vpop.f32.mrf.mxu0
      %v8764 = vadd.f32 0.0, %v8763
      %v8765 = vpop.f32.mrf.mxu0
      %v8766 = vadd.f32 0.0, %v8765
      %8767 = vdwg.mxu0
      %8768 = vrot.lane.b32.xlu0 %v7538, 120
      %v8769 = vpop.permute.xlu0 %8768
      %8770 = vrot.lane.b32.xlu0 %v7538, 104
      %v8771 = vpop.permute.xlu0 %8770
      %v8773 = vsel %vm810, %v8769, 0
      %v8776 = vsel %vm810, %v8771, 0
      %8778 = vmatpush.bf16.xpose.msra.mxu0 0
      %8779 = vmatpush.bf16.xpose.msra.mxu0 0
      %8780 = vmatpush.bf16.xpose.msra.mxu0 0
      %8781 = vmatpush.bf16.xpose.msra.mxu0 0
      %8782 = vmatpush.bf16.xpose.msra.mxu0 0
      %8783 = vmatpush.bf16.xpose.msra.mxu0 0
      %8784 = vmatpush.bf16.xpose.msra.mxu0 0
      %8785 = vmatpush.bf16.xpose.msra.mxu0 %v8776
      %8786 = vmatmul.bf16.gmra.mxu0 %v8773
      %v8787 = vpop.f32.mrf.mxu0
      %v8788 = vadd.f32 0.0, %v8787
      %v8789 = vpop.f32.mrf.mxu0
      %v8790 = vadd.f32 0.0, %v8789
      %8791 = vdwg.mxu0
      %8792 = vrot.lane.b32.xlu0 %v7565, 120
      %v8793 = vpop.permute.xlu0 %8792
      %8794 = vrot.lane.b32.xlu0 %v7565, 104
      %v8795 = vpop.permute.xlu0 %8794
      %v8797 = vsel %vm810, %v8793, 0
      %v8800 = vsel %vm810, %v8795, 0
      %8802 = vmatpush.bf16.xpose.msra.mxu0 0
      %8803 = vmatpush.bf16.xpose.msra.mxu0 0
      %8804 = vmatpush.bf16.xpose.msra.mxu0 0
      %8805 = vmatpush.bf16.xpose.msra.mxu0 0
      %8806 = vmatpush.bf16.xpose.msra.mxu0 0
      %8807 = vmatpush.bf16.xpose.msra.mxu0 0
      %8808 = vmatpush.bf16.xpose.msra.mxu0 0
      %8809 = vmatpush.bf16.xpose.msra.mxu0 %v8800
      %8810 = vmatmul.bf16.gmra.mxu0 %v8797
      %v8811 = vpop.f32.mrf.mxu0
      %v8812 = vadd.f32 0.0, %v8811
      %v8813 = vpop.f32.mrf.mxu0
      %v8814 = vadd.f32 0.0, %v8813
      %8815 = vdwg.mxu0
      %8816 = vrot.lane.b32.xlu0 %v7592, 120
      %v8817 = vpop.permute.xlu0 %8816
      %8818 = vrot.lane.b32.xlu0 %v7592, 104
      %v8819 = vpop.permute.xlu0 %8818
      %v8821 = vsel %vm810, %v8817, 0
      %v8824 = vsel %vm810, %v8819, 0
      %8826 = vmatpush.bf16.xpose.msra.mxu0 0
      %8827 = vmatpush.bf16.xpose.msra.mxu0 0
      %8828 = vmatpush.bf16.xpose.msra.mxu0 0
      %8829 = vmatpush.bf16.xpose.msra.mxu0 0
      %8830 = vmatpush.bf16.xpose.msra.mxu0 0
      %8831 = vmatpush.bf16.xpose.msra.mxu0 0
      %8832 = vmatpush.bf16.xpose.msra.mxu0 0
      %8833 = vmatpush.bf16.xpose.msra.mxu0 %v8824
      %8834 = vmatmul.bf16.gmra.mxu0 %v8821
      %v8835 = vpop.f32.mrf.mxu0
      %v8836 = vadd.f32 0.0, %v8835
      %v8837 = vpop.f32.mrf.mxu0
      %v8838 = vadd.f32 0.0, %v8837
      %8839 = vdwg.mxu0
      %8840 = vrot.lane.b32.xlu0 %v7619, 120
      %v8841 = vpop.permute.xlu0 %8840
      %8842 = vrot.lane.b32.xlu0 %v7619, 104
      %v8843 = vpop.permute.xlu0 %8842
      %v8845 = vsel %vm810, %v8841, 0
      %v8848 = vsel %vm810, %v8843, 0
      %8850 = vmatpush.bf16.xpose.msra.mxu0 0
      %8851 = vmatpush.bf16.xpose.msra.mxu0 0
      %8852 = vmatpush.bf16.xpose.msra.mxu0 0
      %8853 = vmatpush.bf16.xpose.msra.mxu0 0
      %8854 = vmatpush.bf16.xpose.msra.mxu0 0
      %8855 = vmatpush.bf16.xpose.msra.mxu0 0
      %8856 = vmatpush.bf16.xpose.msra.mxu0 0
      %8857 = vmatpush.bf16.xpose.msra.mxu0 %v8848
      %8858 = vmatmul.bf16.gmra.mxu0 %v8845
      %v8859 = vpop.f32.mrf.mxu0
      %v8860 = vadd.f32 0.0, %v8859
      %v8861 = vpop.f32.mrf.mxu0
      %v8862 = vadd.f32 0.0, %v8861
      %8863 = vdwg.mxu0
      %8864 = vrot.lane.b32.xlu0 %v7646, 120
      %v8865 = vpop.permute.xlu0 %8864
      %8866 = vrot.lane.b32.xlu0 %v7646, 104
      %v8867 = vpop.permute.xlu0 %8866
      %v8869 = vsel %vm810, %v8865, 0
      %v8872 = vsel %vm810, %v8867, 0
      %8874 = vmatpush.bf16.xpose.msra.mxu0 0
      %8875 = vmatpush.bf16.xpose.msra.mxu0 0
      %8876 = vmatpush.bf16.xpose.msra.mxu0 0
      %8877 = vmatpush.bf16.xpose.msra.mxu0 0
      %8878 = vmatpush.bf16.xpose.msra.mxu0 0
      %8879 = vmatpush.bf16.xpose.msra.mxu0 0
      %8880 = vmatpush.bf16.xpose.msra.mxu0 0
      %8881 = vmatpush.bf16.xpose.msra.mxu0 %v8872
      %8882 = vmatmul.bf16.gmra.mxu0 %v8869
      %v8883 = vpop.f32.mrf.mxu0
      %v8884 = vadd.f32 0.0, %v8883
      %v8885 = vpop.f32.mrf.mxu0
      %v8886 = vadd.f32 0.0, %v8885
      %8887 = vdwg.mxu0
      %8888 = vrot.lane.b32.xlu0 %v7673, 120
      %v8889 = vpop.permute.xlu0 %8888
      %8890 = vrot.lane.b32.xlu0 %v7673, 104
      %v8891 = vpop.permute.xlu0 %8890
      %v8893 = vsel %vm810, %v8889, 0
      %v8896 = vsel %vm810, %v8891, 0
      %8898 = vmatpush.bf16.xpose.msra.mxu0 0
      %8899 = vmatpush.bf16.xpose.msra.mxu0 0
      %8900 = vmatpush.bf16.xpose.msra.mxu0 0
      %8901 = vmatpush.bf16.xpose.msra.mxu0 0
      %8902 = vmatpush.bf16.xpose.msra.mxu0 0
      %8903 = vmatpush.bf16.xpose.msra.mxu0 0
      %8904 = vmatpush.bf16.xpose.msra.mxu0 0
      %8905 = vmatpush.bf16.xpose.msra.mxu0 %v8896
      %8906 = vmatmul.bf16.gmra.mxu0 %v8893
      %v8907 = vpop.f32.mrf.mxu0
      %v8908 = vadd.f32 0.0, %v8907
      %v8909 = vpop.f32.mrf.mxu0
      %v8910 = vadd.f32 0.0, %v8909
      %8911 = vdwg.mxu0
      %v8912 = vmul.f32 %v8548, 0.35355338
      %v8913 = vmul.f32 %v8550, 0.35355338
      %v8914 = vmul.f32 %v8572, 0.35355338
      %v8915 = vmul.f32 %v8574, 0.35355338
      %v8916 = vmul.f32 %v8596, 0.35355338
      %v8917 = vmul.f32 %v8598, 0.35355338
      %v8918 = vmul.f32 %v8620, 0.35355338
      %v8919 = vmul.f32 %v8622, 0.35355338
      %v8920 = vmul.f32 %v8644, 0.35355338
      %v8921 = vmul.f32 %v8646, 0.35355338
      %v8922 = vmul.f32 %v8668, 0.35355338
      %v8923 = vmul.f32 %v8670, 0.35355338
      %v8924 = vmul.f32 %v8692, 0.35355338
      %v8925 = vmul.f32 %v8694, 0.35355338
      %v8926 = vmul.f32 %v8716, 0.35355338
      %v8927 = vmul.f32 %v8718, 0.35355338
      %v8928 = vmul.f32 %v8740, 0.35355338
      %v8929 = vmul.f32 %v8742, 0.35355338
      %v8930 = vmul.f32 %v8764, 0.35355338
      %v8931 = vmul.f32 %v8766, 0.35355338
      %v8932 = vmul.f32 %v8788, 0.35355338
      %v8933 = vmul.f32 %v8790, 0.35355338
      %v8934 = vmul.f32 %v8812, 0.35355338
      %v8935 = vmul.f32 %v8814, 0.35355338
      %v8936 = vmul.f32 %v8836, 0.35355338
      %v8937 = vmul.f32 %v8838, 0.35355338
      %v8938 = vmul.f32 %v8860, 0.35355338
      %v8939 = vmul.f32 %v8862, 0.35355338
      %v8940 = vmul.f32 %v8884, 0.35355338
      %v8941 = vmul.f32 %v8886, 0.35355338
      %v8942 = vmul.f32 %v8908, 0.35355338
      %v8943 = vmul.f32 %v8910, 0.35355338
      %v8944 = vsel %vm994, %v8912, -inf
      %8945 = vmax.xlane.f32.xlu0 %v8944
      %v8946 = vpop.xlane.xlu0 %8945
      %v8947 = vsel %vm994, %v8913, -inf
      %8948 = vmax.xlane.f32.xlu0 %v8947
      %v8949 = vpop.xlane.xlu0 %8948
      %v8950 = vsel %vm994, %v8914, -inf
      %8951 = vmax.xlane.f32.xlu0 %v8950
      %v8952 = vpop.xlane.xlu0 %8951
      %v8953 = vsel %vm994, %v8915, -inf
      %8954 = vmax.xlane.f32.xlu0 %v8953
      %v8955 = vpop.xlane.xlu0 %8954
      %v8956 = vsel %vm994, %v8916, -inf
      %8957 = vmax.xlane.f32.xlu0 %v8956
      %v8958 = vpop.xlane.xlu0 %8957
      %v8959 = vsel %vm994, %v8917, -inf
      %8960 = vmax.xlane.f32.xlu0 %v8959
      %v8961 = vpop.xlane.xlu0 %8960
      %v8962 = vsel %vm994, %v8918, -inf
      %8963 = vmax.xlane.f32.xlu0 %v8962
      %v8964 = vpop.xlane.xlu0 %8963
      %v8965 = vsel %vm994, %v8919, -inf
      %8966 = vmax.xlane.f32.xlu0 %v8965
      %v8967 = vpop.xlane.xlu0 %8966
      %v8968 = vsel %vm994, %v8920, -inf
      %8969 = vmax.xlane.f32.xlu0 %v8968
      %v8970 = vpop.xlane.xlu0 %8969
      %v8971 = vsel %vm994, %v8921, -inf
      %8972 = vmax.xlane.f32.xlu0 %v8971
      %v8973 = vpop.xlane.xlu0 %8972
      %v8974 = vsel %vm994, %v8922, -inf
      %8975 = vmax.xlane.f32.xlu0 %v8974
      %v8976 = vpop.xlane.xlu0 %8975
      %v8977 = vsel %vm994, %v8923, -inf
      %8978 = vmax.xlane.f32.xlu0 %v8977
      %v8979 = vpop.xlane.xlu0 %8978
      %v8980 = vsel %vm994, %v8924, -inf
      %8981 = vmax.xlane.f32.xlu0 %v8980
      %v8982 = vpop.xlane.xlu0 %8981
      %v8983 = vsel %vm994, %v8925, -inf
      %8984 = vmax.xlane.f32.xlu0 %v8983
      %v8985 = vpop.xlane.xlu0 %8984
      %v8986 = vsel %vm994, %v8926, -inf
      %8987 = vmax.xlane.f32.xlu0 %v8986
      %v8988 = vpop.xlane.xlu0 %8987
      %v8989 = vsel %vm994, %v8927, -inf
      %8990 = vmax.xlane.f32.xlu0 %v8989
      %v8991 = vpop.xlane.xlu0 %8990
      %v8992 = vsel %vm994, %v8928, -inf
      %8993 = vmax.xlane.f32.xlu0 %v8992
      %v8994 = vpop.xlane.xlu0 %8993
      %v8995 = vsel %vm994, %v8929, -inf
      %8996 = vmax.xlane.f32.xlu0 %v8995
      %v8997 = vpop.xlane.xlu0 %8996
      %v8998 = vsel %vm994, %v8930, -inf
      %8999 = vmax.xlane.f32.xlu0 %v8998
      %v9000 = vpop.xlane.xlu0 %8999
      %v9001 = vsel %vm994, %v8931, -inf
      %9002 = vmax.xlane.f32.xlu0 %v9001
      %v9003 = vpop.xlane.xlu0 %9002
      %v9004 = vsel %vm994, %v8932, -inf
      %9005 = vmax.xlane.f32.xlu0 %v9004
      %v9006 = vpop.xlane.xlu0 %9005
      %v9007 = vsel %vm994, %v8933, -inf
      %9008 = vmax.xlane.f32.xlu0 %v9007
      %v9009 = vpop.xlane.xlu0 %9008
      %v9010 = vsel %vm994, %v8934, -inf
      %9011 = vmax.xlane.f32.xlu0 %v9010
      %v9012 = vpop.xlane.xlu0 %9011
      %v9013 = vsel %vm994, %v8935, -inf
      %9014 = vmax.xlane.f32.xlu0 %v9013
      %v9015 = vpop.xlane.xlu0 %9014
      %v9016 = vsel %vm994, %v8936, -inf
      %9017 = vmax.xlane.f32.xlu0 %v9016
      %v9018 = vpop.xlane.xlu0 %9017
      %v9019 = vsel %vm994, %v8937, -inf
      %9020 = vmax.xlane.f32.xlu0 %v9019
      %v9021 = vpop.xlane.xlu0 %9020
      %v9022 = vsel %vm994, %v8938, -inf
      %9023 = vmax.xlane.f32.xlu0 %v9022
      %v9024 = vpop.xlane.xlu0 %9023
      %v9025 = vsel %vm994, %v8939, -inf
      %9026 = vmax.xlane.f32.xlu0 %v9025
      %v9027 = vpop.xlane.xlu0 %9026
      %v9028 = vsel %vm994, %v8940, -inf
      %9029 = vmax.xlane.f32.xlu0 %v9028
      %v9030 = vpop.xlane.xlu0 %9029
      %v9031 = vsel %vm994, %v8941, -inf
      %9032 = vmax.xlane.f32.xlu0 %v9031
      %v9033 = vpop.xlane.xlu0 %9032
      %v9034 = vsel %vm994, %v8942, -inf
      %9035 = vmax.xlane.f32.xlu0 %v9034
      %v9036 = vpop.xlane.xlu0 %9035
      %v9037 = vsel %vm994, %v8943, -inf
      %9038 = vmax.xlane.f32.xlu0 %v9037
      %v9039 = vpop.xlane.xlu0 %9038
      %v9040 = vsub.f32 %v8912, %v8946
      %v9041 = vsub.f32 %v8913, %v8949
      %v9042 = vsub.f32 %v8914, %v8952
      %v9043 = vsub.f32 %v8915, %v8955
      %v9044 = vsub.f32 %v8916, %v8958
      %v9045 = vsub.f32 %v8917, %v8961
      %v9046 = vsub.f32 %v8918, %v8964
      %v9047 = vsub.f32 %v8919, %v8967
      %v9048 = vsub.f32 %v8920, %v8970
      %v9049 = vsub.f32 %v8921, %v8973
      %v9050 = vsub.f32 %v8922, %v8976
      %v9051 = vsub.f32 %v8923, %v8979
      %v9052 = vsub.f32 %v8924, %v8982
      %v9053 = vsub.f32 %v8925, %v8985
      %v9054 = vsub.f32 %v8926, %v8988
      %v9055 = vsub.f32 %v8927, %v8991
      %v9056 = vsub.f32 %v8928, %v8994
      %v9057 = vsub.f32 %v8929, %v8997
      %v9058 = vsub.f32 %v8930, %v9000
      %v9059 = vsub.f32 %v8931, %v9003
      %v9060 = vsub.f32 %v8932, %v9006
      %v9061 = vsub.f32 %v8933, %v9009
      %v9062 = vsub.f32 %v8934, %v9012
      %v9063 = vsub.f32 %v8935, %v9015
      %v9064 = vsub.f32 %v8936, %v9018
      %v9065 = vsub.f32 %v8937, %v9021
      %v9066 = vsub.f32 %v8938, %v9024
      %v9067 = vsub.f32 %v8939, %v9027
      %v9068 = vsub.f32 %v8940, %v9030
      %v9069 = vsub.f32 %v8941, %v9033
      %v9070 = vsub.f32 %v8942, %v9036
      %v9071 = vsub.f32 %v8943, %v9039
      %v9072 = vmul.f32 %v9040, 1.442695
      %v9073 = vpow.pop %v9072
      %v9074 = vmul.f32 %v9041, 1.442695
      %v9075 = vpow.pop %v9074
      %v9076 = vmul.f32 %v9042, 1.442695
      %v9077 = vpow.pop %v9076
      %v9078 = vmul.f32 %v9043, 1.442695
      %v9079 = vpow.pop %v9078
      %v9080 = vmul.f32 %v9044, 1.442695
      %v9081 = vpow.pop %v9080
      %v9082 = vmul.f32 %v9045, 1.442695
      %v9083 = vpow.pop %v9082
      %v9084 = vmul.f32 %v9046, 1.442695
      %v9085 = vpow.pop %v9084
      %v9086 = vmul.f32 %v9047, 1.442695
      %v9087 = vpow.pop %v9086
      %v9088 = vmul.f32 %v9048, 1.442695
      %v9089 = vpow.pop %v9088
      %v9090 = vmul.f32 %v9049, 1.442695
      %v9091 = vpow.pop %v9090
      %v9092 = vmul.f32 %v9050, 1.442695
      %v9093 = vpow.pop %v9092
      %v9094 = vmul.f32 %v9051, 1.442695
      %v9095 = vpow.pop %v9094
      %v9096 = vmul.f32 %v9052, 1.442695
      %v9097 = vpow.pop %v9096
      %v9098 = vmul.f32 %v9053, 1.442695
      %v9099 = vpow.pop %v9098
      %v9100 = vmul.f32 %v9054, 1.442695
      %v9101 = vpow.pop %v9100
      %v9102 = vmul.f32 %v9055, 1.442695
      %v9103 = vpow.pop %v9102
      %v9104 = vmul.f32 %v9056, 1.442695
      %v9105 = vpow.pop %v9104
      %v9106 = vmul.f32 %v9057, 1.442695
      %v9107 = vpow.pop %v9106
      %v9108 = vmul.f32 %v9058, 1.442695
      %v9109 = vpow.pop %v9108
      %v9110 = vmul.f32 %v9059, 1.442695
      %v9111 = vpow.pop %v9110
      %v9112 = vmul.f32 %v9060, 1.442695
      %v9113 = vpow.pop %v9112
      %v9114 = vmul.f32 %v9061, 1.442695
      %v9115 = vpow.pop %v9114
      %v9116 = vmul.f32 %v9062, 1.442695
      %v9117 = vpow.pop %v9116
      %v9118 = vmul.f32 %v9063, 1.442695
      %v9119 = vpow.pop %v9118
      %v9120 = vmul.f32 %v9064, 1.442695
      %v9121 = vpow.pop %v9120
      %v9122 = vmul.f32 %v9065, 1.442695
      %v9123 = vpow.pop %v9122
      %v9124 = vmul.f32 %v9066, 1.442695
      %v9125 = vpow.pop %v9124
      %v9126 = vmul.f32 %v9067, 1.442695
      %v9127 = vpow.pop %v9126
      %v9128 = vmul.f32 %v9068, 1.442695
      %v9129 = vpow.pop %v9128
      %v9130 = vmul.f32 %v9069, 1.442695
      %v9131 = vpow.pop %v9130
      %v9132 = vmul.f32 %v9070, 1.442695
      %v9133 = vpow.pop %v9132
      %v9134 = vmul.f32 %v9071, 1.442695
      %v9135 = vpow.pop %v9134
      %v9136 = vsel %vm994, %v9073, 0.0
      %9137 = vadd.xlane.f32.xlu0 %v9136
      %v9138 = vpop.xlane.xlu0 %9137
      %v9139 = vsel %vm994, %v9075, 0.0
      %9140 = vadd.xlane.f32.xlu0 %v9139
      %v9141 = vpop.xlane.xlu0 %9140
      %v9142 = vsel %vm994, %v9077, 0.0
      %9143 = vadd.xlane.f32.xlu0 %v9142
      %v9144 = vpop.xlane.xlu0 %9143
      %v9145 = vsel %vm994, %v9079, 0.0
      %9146 = vadd.xlane.f32.xlu0 %v9145
      %v9147 = vpop.xlane.xlu0 %9146
      %v9148 = vsel %vm994, %v9081, 0.0
      %9149 = vadd.xlane.f32.xlu0 %v9148
      %v9150 = vpop.xlane.xlu0 %9149
      %v9151 = vsel %vm994, %v9083, 0.0
      %9152 = vadd.xlane.f32.xlu0 %v9151
      %v9153 = vpop.xlane.xlu0 %9152
      %v9154 = vsel %vm994, %v9085, 0.0
      %9155 = vadd.xlane.f32.xlu0 %v9154
      %v9156 = vpop.xlane.xlu0 %9155
      %v9157 = vsel %vm994, %v9087, 0.0
      %9158 = vadd.xlane.f32.xlu0 %v9157
      %v9159 = vpop.xlane.xlu0 %9158
      %v9160 = vsel %vm994, %v9089, 0.0
      %9161 = vadd.xlane.f32.xlu0 %v9160
      %v9162 = vpop.xlane.xlu0 %9161
      %v9163 = vsel %vm994, %v9091, 0.0
      %9164 = vadd.xlane.f32.xlu0 %v9163
      %v9165 = vpop.xlane.xlu0 %9164
      %v9166 = vsel %vm994, %v9093, 0.0
      %9167 = vadd.xlane.f32.xlu0 %v9166
      %v9168 = vpop.xlane.xlu0 %9167
      %v9169 = vsel %vm994, %v9095, 0.0
      %9170 = vadd.xlane.f32.xlu0 %v9169
      %v9171 = vpop.xlane.xlu0 %9170
      %v9172 = vsel %vm994, %v9097, 0.0
      %9173 = vadd.xlane.f32.xlu0 %v9172
      %v9174 = vpop.xlane.xlu0 %9173
      %v9175 = vsel %vm994, %v9099, 0.0
      %9176 = vadd.xlane.f32.xlu0 %v9175
      %v9177 = vpop.xlane.xlu0 %9176
      %v9178 = vsel %vm994, %v9101, 0.0
      %9179 = vadd.xlane.f32.xlu0 %v9178
      %v9180 = vpop.xlane.xlu0 %9179
      %v9181 = vsel %vm994, %v9103, 0.0
      %9182 = vadd.xlane.f32.xlu0 %v9181
      %v9183 = vpop.xlane.xlu0 %9182
      %v9184 = vsel %vm994, %v9105, 0.0
      %9185 = vadd.xlane.f32.xlu0 %v9184
      %v9186 = vpop.xlane.xlu0 %9185
      %v9187 = vsel %vm994, %v9107, 0.0
      %9188 = vadd.xlane.f32.xlu0 %v9187
      %v9189 = vpop.xlane.xlu0 %9188
      %v9190 = vsel %vm994, %v9109, 0.0
      %9191 = vadd.xlane.f32.xlu0 %v9190
      %v9192 = vpop.xlane.xlu0 %9191
      %v9193 = vsel %vm994, %v9111, 0.0
      %9194 = vadd.xlane.f32.xlu0 %v9193
      %v9195 = vpop.xlane.xlu0 %9194
      %v9196 = vsel %vm994, %v9113, 0.0
      %9197 = vadd.xlane.f32.xlu0 %v9196
      %v9198 = vpop.xlane.xlu0 %9197
      %v9199 = vsel %vm994, %v9115, 0.0
      %9200 = vadd.xlane.f32.xlu0 %v9199
      %v9201 = vpop.xlane.xlu0 %9200
      %v9202 = vsel %vm994, %v9117, 0.0
      %9203 = vadd.xlane.f32.xlu0 %v9202
      %v9204 = vpop.xlane.xlu0 %9203
      %v9205 = vsel %vm994, %v9119, 0.0
      %9206 = vadd.xlane.f32.xlu0 %v9205
      %v9207 = vpop.xlane.xlu0 %9206
      %v9208 = vsel %vm994, %v9121, 0.0
      %9209 = vadd.xlane.f32.xlu0 %v9208
      %v9210 = vpop.xlane.xlu0 %9209
      %v9211 = vsel %vm994, %v9123, 0.0
      %9212 = vadd.xlane.f32.xlu0 %v9211
      %v9213 = vpop.xlane.xlu0 %9212
      %v9214 = vsel %vm994, %v9125, 0.0
      %9215 = vadd.xlane.f32.xlu0 %v9214
      %v9216 = vpop.xlane.xlu0 %9215
      %v9217 = vsel %vm994, %v9127, 0.0
      %9218 = vadd.xlane.f32.xlu0 %v9217
      %v9219 = vpop.xlane.xlu0 %9218
      %v9220 = vsel %vm994, %v9129, 0.0
      %9221 = vadd.xlane.f32.xlu0 %v9220
      %v9222 = vpop.xlane.xlu0 %9221
      %v9223 = vsel %vm994, %v9131, 0.0
      %9224 = vadd.xlane.f32.xlu0 %v9223
      %v9225 = vpop.xlane.xlu0 %9224
      %v9226 = vsel %vm994, %v9133, 0.0
      %9227 = vadd.xlane.f32.xlu0 %v9226
      %v9228 = vpop.xlane.xlu0 %9227
      %v9229 = vsel %vm994, %v9135, 0.0
      %9230 = vadd.xlane.f32.xlu0 %v9229
      %v9231 = vpop.xlane.xlu0 %9230
      %v9232 = vrcp.pop %v9138
      %v9233 = vrcp.pop %v9141
      %v9234 = vrcp.pop %v9144
      %v9235 = vrcp.pop %v9147
      %v9236 = vrcp.pop %v9150
      %v9237 = vrcp.pop %v9153
      %v9238 = vrcp.pop %v9156
      %v9239 = vrcp.pop %v9159
      %v9240 = vrcp.pop %v9162
      %v9241 = vrcp.pop %v9165
      %v9242 = vrcp.pop %v9168
      %v9243 = vrcp.pop %v9171
      %v9244 = vrcp.pop %v9174
      %v9245 = vrcp.pop %v9177
      %v9246 = vrcp.pop %v9180
      %v9247 = vrcp.pop %v9183
      %v9248 = vrcp.pop %v9186
      %v9249 = vrcp.pop %v9189
      %v9250 = vrcp.pop %v9192
      %v9251 = vrcp.pop %v9195
      %v9252 = vrcp.pop %v9198
      %v9253 = vrcp.pop %v9201
      %v9254 = vrcp.pop %v9204
      %v9255 = vrcp.pop %v9207
      %v9256 = vrcp.pop %v9210
      %v9257 = vrcp.pop %v9213
      %v9258 = vrcp.pop %v9216
      %v9259 = vrcp.pop %v9219
      %v9260 = vrcp.pop %v9222
      %v9261 = vrcp.pop %v9225
      %v9262 = vrcp.pop %v9228
      %v9263 = vrcp.pop %v9231
      %v9264 = vpack.c.bf16 %v9073, %v9073
      %v9265 = vpack.c.bf16 %v9075, %v9075
      %v9266 = vpack.c.bf16 %v9077, %v9077
      %v9267 = vpack.c.bf16 %v9079, %v9079
      %v9268 = vpack.c.bf16 %v9081, %v9081
      %v9269 = vpack.c.bf16 %v9083, %v9083
      %v9270 = vpack.c.bf16 %v9085, %v9085
      %v9271 = vpack.c.bf16 %v9087, %v9087
      %v9272 = vpack.c.bf16 %v9089, %v9089
      %v9273 = vpack.c.bf16 %v9091, %v9091
      %v9274 = vpack.c.bf16 %v9093, %v9093
      %v9275 = vpack.c.bf16 %v9095, %v9095
      %v9276 = vpack.c.bf16 %v9097, %v9097
      %v9277 = vpack.c.bf16 %v9099, %v9099
      %v9278 = vpack.c.bf16 %v9101, %v9101
      %v9279 = vpack.c.bf16 %v9103, %v9103
      %v9280 = vpack.c.bf16 %v9105, %v9105
      %v9281 = vpack.c.bf16 %v9107, %v9107
      %v9282 = vpack.c.bf16 %v9109, %v9109
      %v9283 = vpack.c.bf16 %v9111, %v9111
      %v9284 = vpack.c.bf16 %v9113, %v9113
      %v9285 = vpack.c.bf16 %v9115, %v9115
      %v9286 = vpack.c.bf16 %v9117, %v9117
      %v9287 = vpack.c.bf16 %v9119, %v9119
      %v9288 = vpack.c.bf16 %v9121, %v9121
      %v9289 = vpack.c.bf16 %v9123, %v9123
      %v9290 = vpack.c.bf16 %v9125, %v9125
      %v9291 = vpack.c.bf16 %v9127, %v9127
      %v9292 = vpack.c.bf16 %v9129, %v9129
      %v9293 = vpack.c.bf16 %v9131, %v9131
      %v9294 = vpack.c.bf16 %v9133, %v9133
      %v9295 = vpack.c.bf16 %v9135, %v9135
      %v9298 = vunpack.c.l.b16 %v9264
      %v9299 = vunpack.c.l.b16 %v9265
      %v9300 = vpack.c.b16 %v9299, %v9298
      %9301 = vrot.lane.b32.xlu0 %v7268, 88
      %v9302 = vpop.permute.xlu0 %9301
      %v9305 = vsel %vm994, %v9300, 0
      %9307 = vmatpush.bf16.msra.mxu0 0
      %9308 = vmatpush.bf16.msra.mxu0 0
      %9309 = vmatpush.bf16.msra.mxu0 0
      %9310 = vmatpush.bf16.msra.mxu0 0
      %9311 = vmatpush.bf16.msra.mxu0 0
      %9312 = vmatpush.bf16.msra.mxu0 0
      %9313 = vmatpush.bf16.msra.mxu0 0
      %9314 = vmatpush.bf16.msra.mxu0 %v9302
      %9315 = vmatmul.bf16.gmra.mxu0 %v9305
      %v9316 = vpop.f32.mrf.mxu0
      %v9317 = vadd.f32 0.0, %v9316
      %v9318 = vpop.f32.mrf.mxu0
      %v9319 = vadd.f32 0.0, %v9318
      %9320 = vdwg.mxu0
      %v9323 = vunpack.c.l.b16 %v9266
      %v9324 = vunpack.c.l.b16 %v9267
      %v9325 = vpack.c.b16 %v9324, %v9323
      %9326 = vrot.lane.b32.xlu0 %v7295, 88
      %v9327 = vpop.permute.xlu0 %9326
      %v9330 = vsel %vm994, %v9325, 0
      %9332 = vmatpush.bf16.msra.mxu0 0
      %9333 = vmatpush.bf16.msra.mxu0 0
      %9334 = vmatpush.bf16.msra.mxu0 0
      %9335 = vmatpush.bf16.msra.mxu0 0
      %9336 = vmatpush.bf16.msra.mxu0 0
      %9337 = vmatpush.bf16.msra.mxu0 0
      %9338 = vmatpush.bf16.msra.mxu0 0
      %9339 = vmatpush.bf16.msra.mxu0 %v9327
      %9340 = vmatmul.bf16.gmra.mxu0 %v9330
      %v9341 = vpop.f32.mrf.mxu0
      %v9342 = vadd.f32 0.0, %v9341
      %v9343 = vpop.f32.mrf.mxu0
      %v9344 = vadd.f32 0.0, %v9343
      %9345 = vdwg.mxu0
      %v9348 = vunpack.c.l.b16 %v9268
      %v9349 = vunpack.c.l.b16 %v9269
      %v9350 = vpack.c.b16 %v9349, %v9348
      %9351 = vrot.lane.b32.xlu0 %v7322, 88
      %v9352 = vpop.permute.xlu0 %9351
      %v9355 = vsel %vm994, %v9350, 0
      %9357 = vmatpush.bf16.msra.mxu0 0
      %9358 = vmatpush.bf16.msra.mxu0 0
      %9359 = vmatpush.bf16.msra.mxu0 0
      %9360 = vmatpush.bf16.msra.mxu0 0
      %9361 = vmatpush.bf16.msra.mxu0 0
      %9362 = vmatpush.bf16.msra.mxu0 0
      %9363 = vmatpush.bf16.msra.mxu0 0
      %9364 = vmatpush.bf16.msra.mxu0 %v9352
      %9365 = vmatmul.bf16.gmra.mxu0 %v9355
      %v9366 = vpop.f32.mrf.mxu0
      %v9367 = vadd.f32 0.0, %v9366
      %v9368 = vpop.f32.mrf.mxu0
      %v9369 = vadd.f32 0.0, %v9368
      %9370 = vdwg.mxu0
      %v9373 = vunpack.c.l.b16 %v9270
      %v9374 = vunpack.c.l.b16 %v9271
      %v9375 = vpack.c.b16 %v9374, %v9373
      %9376 = vrot.lane.b32.xlu0 %v7349, 88
      %v9377 = vpop.permute.xlu0 %9376
      %v9380 = vsel %vm994, %v9375, 0
      %9382 = vmatpush.bf16.msra.mxu0 0
      %9383 = vmatpush.bf16.msra.mxu0 0
      %9384 = vmatpush.bf16.msra.mxu0 0
      %9385 = vmatpush.bf16.msra.mxu0 0
      %9386 = vmatpush.bf16.msra.mxu0 0
      %9387 = vmatpush.bf16.msra.mxu0 0
      %9388 = vmatpush.bf16.msra.mxu0 0
      %9389 = vmatpush.bf16.msra.mxu0 %v9377
      %9390 = vmatmul.bf16.gmra.mxu0 %v9380
      %v9391 = vpop.f32.mrf.mxu0
      %v9392 = vadd.f32 0.0, %v9391
      %v9393 = vpop.f32.mrf.mxu0
      %v9394 = vadd.f32 0.0, %v9393
      %9395 = vdwg.mxu0
      %v9398 = vunpack.c.l.b16 %v9272
      %v9399 = vunpack.c.l.b16 %v9273
      %v9400 = vpack.c.b16 %v9399, %v9398
      %9401 = vrot.lane.b32.xlu0 %v7376, 88
      %v9402 = vpop.permute.xlu0 %9401
      %v9405 = vsel %vm994, %v9400, 0
      %9407 = vmatpush.bf16.msra.mxu0 0
      %9408 = vmatpush.bf16.msra.mxu0 0
      %9409 = vmatpush.bf16.msra.mxu0 0
      %9410 = vmatpush.bf16.msra.mxu0 0
      %9411 = vmatpush.bf16.msra.mxu0 0
      %9412 = vmatpush.bf16.msra.mxu0 0
      %9413 = vmatpush.bf16.msra.mxu0 0
      %9414 = vmatpush.bf16.msra.mxu0 %v9402
      %9415 = vmatmul.bf16.gmra.mxu0 %v9405
      %v9416 = vpop.f32.mrf.mxu0
      %v9417 = vadd.f32 0.0, %v9416
      %v9418 = vpop.f32.mrf.mxu0
      %v9419 = vadd.f32 0.0, %v9418
      %9420 = vdwg.mxu0
      %v9423 = vunpack.c.l.b16 %v9274
      %v9424 = vunpack.c.l.b16 %v9275
      %v9425 = vpack.c.b16 %v9424, %v9423
      %9426 = vrot.lane.b32.xlu0 %v7403, 88
      %v9427 = vpop.permute.xlu0 %9426
      %v9430 = vsel %vm994, %v9425, 0
      %9432 = vmatpush.bf16.msra.mxu0 0
      %9433 = vmatpush.bf16.msra.mxu0 0
      %9434 = vmatpush.bf16.msra.mxu0 0
      %9435 = vmatpush.bf16.msra.mxu0 0
      %9436 = vmatpush.bf16.msra.mxu0 0
      %9437 = vmatpush.bf16.msra.mxu0 0
      %9438 = vmatpush.bf16.msra.mxu0 0
      %9439 = vmatpush.bf16.msra.mxu0 %v9427
      %9440 = vmatmul.bf16.gmra.mxu0 %v9430
      %v9441 = vpop.f32.mrf.mxu0
      %v9442 = vadd.f32 0.0, %v9441
      %v9443 = vpop.f32.mrf.mxu0
      %v9444 = vadd.f32 0.0, %v9443
      %9445 = vdwg.mxu0
      %v9448 = vunpack.c.l.b16 %v9276
      %v9449 = vunpack.c.l.b16 %v9277
      %v9450 = vpack.c.b16 %v9449, %v9448
      %9451 = vrot.lane.b32.xlu0 %v7430, 88
      %v9452 = vpop.permute.xlu0 %9451
      %v9455 = vsel %vm994, %v9450, 0
      %9457 = vmatpush.bf16.msra.mxu0 0
      %9458 = vmatpush.bf16.msra.mxu0 0
      %9459 = vmatpush.bf16.msra.mxu0 0
      %9460 = vmatpush.bf16.msra.mxu0 0
      %9461 = vmatpush.bf16.msra.mxu0 0
      %9462 = vmatpush.bf16.msra.mxu0 0
      %9463 = vmatpush.bf16.msra.mxu0 0
      %9464 = vmatpush.bf16.msra.mxu0 %v9452
      %9465 = vmatmul.bf16.gmra.mxu0 %v9455
      %v9466 = vpop.f32.mrf.mxu0
      %v9467 = vadd.f32 0.0, %v9466
      %v9468 = vpop.f32.mrf.mxu0
      %v9469 = vadd.f32 0.0, %v9468
      %9470 = vdwg.mxu0
      %v9473 = vunpack.c.l.b16 %v9278
      %v9474 = vunpack.c.l.b16 %v9279
      %v9475 = vpack.c.b16 %v9474, %v9473
      %9476 = vrot.lane.b32.xlu0 %v7457, 88
      %v9477 = vpop.permute.xlu0 %9476
      %v9480 = vsel %vm994, %v9475, 0
      %9482 = vmatpush.bf16.msra.mxu0 0
      %9483 = vmatpush.bf16.msra.mxu0 0
      %9484 = vmatpush.bf16.msra.mxu0 0
      %9485 = vmatpush.bf16.msra.mxu0 0
      %9486 = vmatpush.bf16.msra.mxu0 0
      %9487 = vmatpush.bf16.msra.mxu0 0
      %9488 = vmatpush.bf16.msra.mxu0 0
      %9489 = vmatpush.bf16.msra.mxu0 %v9477
      %9490 = vmatmul.bf16.gmra.mxu0 %v9480
      %v9491 = vpop.f32.mrf.mxu0
      %v9492 = vadd.f32 0.0, %v9491
      %v9493 = vpop.f32.mrf.mxu0
      %v9494 = vadd.f32 0.0, %v9493
      %9495 = vdwg.mxu0
      %v9498 = vunpack.c.l.b16 %v9280
      %v9499 = vunpack.c.l.b16 %v9281
      %v9500 = vpack.c.b16 %v9499, %v9498
      %9501 = vrot.lane.b32.xlu0 %v7484, 88
      %v9502 = vpop.permute.xlu0 %9501
      %v9505 = vsel %vm994, %v9500, 0
      %9507 = vmatpush.bf16.msra.mxu0 0
      %9508 = vmatpush.bf16.msra.mxu0 0
      %9509 = vmatpush.bf16.msra.mxu0 0
      %9510 = vmatpush.bf16.msra.mxu0 0
      %9511 = vmatpush.bf16.msra.mxu0 0
      %9512 = vmatpush.bf16.msra.mxu0 0
      %9513 = vmatpush.bf16.msra.mxu0 0
      %9514 = vmatpush.bf16.msra.mxu0 %v9502
      %9515 = vmatmul.bf16.gmra.mxu0 %v9505
      %v9516 = vpop.f32.mrf.mxu0
      %v9517 = vadd.f32 0.0, %v9516
      %v9518 = vpop.f32.mrf.mxu0
      %v9519 = vadd.f32 0.0, %v9518
      %9520 = vdwg.mxu0
      %v9523 = vunpack.c.l.b16 %v9282
      %v9524 = vunpack.c.l.b16 %v9283
      %v9525 = vpack.c.b16 %v9524, %v9523
      %9526 = vrot.lane.b32.xlu0 %v7511, 88
      %v9527 = vpop.permute.xlu0 %9526
      %v9530 = vsel %vm994, %v9525, 0
      %9532 = vmatpush.bf16.msra.mxu0 0
      %9533 = vmatpush.bf16.msra.mxu0 0
      %9534 = vmatpush.bf16.msra.mxu0 0
      %9535 = vmatpush.bf16.msra.mxu0 0
      %9536 = vmatpush.bf16.msra.mxu0 0
      %9537 = vmatpush.bf16.msra.mxu0 0
      %9538 = vmatpush.bf16.msra.mxu0 0
      %9539 = vmatpush.bf16.msra.mxu0 %v9527
      %9540 = vmatmul.bf16.gmra.mxu0 %v9530
      %v9541 = vpop.f32.mrf.mxu0
      %v9542 = vadd.f32 0.0, %v9541
      %v9543 = vpop.f32.mrf.mxu0
      %v9544 = vadd.f32 0.0, %v9543
      %9545 = vdwg.mxu0
      %v9548 = vunpack.c.l.b16 %v9284
      %v9549 = vunpack.c.l.b16 %v9285
      %v9550 = vpack.c.b16 %v9549, %v9548
      %9551 = vrot.lane.b32.xlu0 %v7538, 88
      %v9552 = vpop.permute.xlu0 %9551
      %v9555 = vsel %vm994, %v9550, 0
      %9557 = vmatpush.bf16.msra.mxu0 0
      %9558 = vmatpush.bf16.msra.mxu0 0
      %9559 = vmatpush.bf16.msra.mxu0 0
      %9560 = vmatpush.bf16.msra.mxu0 0
      %9561 = vmatpush.bf16.msra.mxu0 0
      %9562 = vmatpush.bf16.msra.mxu0 0
      %9563 = vmatpush.bf16.msra.mxu0 0
      %9564 = vmatpush.bf16.msra.mxu0 %v9552
      %9565 = vmatmul.bf16.gmra.mxu0 %v9555
      %v9566 = vpop.f32.mrf.mxu0
      %v9567 = vadd.f32 0.0, %v9566
      %v9568 = vpop.f32.mrf.mxu0
      %v9569 = vadd.f32 0.0, %v9568
      %9570 = vdwg.mxu0
      %v9573 = vunpack.c.l.b16 %v9286
      %v9574 = vunpack.c.l.b16 %v9287
      %v9575 = vpack.c.b16 %v9574, %v9573
      %9576 = vrot.lane.b32.xlu0 %v7565, 88
      %v9577 = vpop.permute.xlu0 %9576
      %v9580 = vsel %vm994, %v9575, 0
      %9582 = vmatpush.bf16.msra.mxu0 0
      %9583 = vmatpush.bf16.msra.mxu0 0
      %9584 = vmatpush.bf16.msra.mxu0 0
      %9585 = vmatpush.bf16.msra.mxu0 0
      %9586 = vmatpush.bf16.msra.mxu0 0
      %9587 = vmatpush.bf16.msra.mxu0 0
      %9588 = vmatpush.bf16.msra.mxu0 0
      %9589 = vmatpush.bf16.msra.mxu0 %v9577
      %9590 = vmatmul.bf16.gmra.mxu0 %v9580
      %v9591 = vpop.f32.mrf.mxu0
      %v9592 = vadd.f32 0.0, %v9591
      %v9593 = vpop.f32.mrf.mxu0
      %v9594 = vadd.f32 0.0, %v9593
      %9595 = vdwg.mxu0
      %v9598 = vunpack.c.l.b16 %v9288
      %v9599 = vunpack.c.l.b16 %v9289
      %v9600 = vpack.c.b16 %v9599, %v9598
      %9601 = vrot.lane.b32.xlu0 %v7592, 88
      %v9602 = vpop.permute.xlu0 %9601
      %v9605 = vsel %vm994, %v9600, 0
      %9607 = vmatpush.bf16.msra.mxu0 0
      %9608 = vmatpush.bf16.msra.mxu0 0
      %9609 = vmatpush.bf16.msra.mxu0 0
      %9610 = vmatpush.bf16.msra.mxu0 0
      %9611 = vmatpush.bf16.msra.mxu0 0
      %9612 = vmatpush.bf16.msra.mxu0 0
      %9613 = vmatpush.bf16.msra.mxu0 0
      %9614 = vmatpush.bf16.msra.mxu0 %v9602
      %9615 = vmatmul.bf16.gmra.mxu0 %v9605
      %v9616 = vpop.f32.mrf.mxu0
      %v9617 = vadd.f32 0.0, %v9616
      %v9618 = vpop.f32.mrf.mxu0
      %v9619 = vadd.f32 0.0, %v9618
      %9620 = vdwg.mxu0
      %v9623 = vunpack.c.l.b16 %v9290
      %v9624 = vunpack.c.l.b16 %v9291
      %v9625 = vpack.c.b16 %v9624, %v9623
      %9626 = vrot.lane.b32.xlu0 %v7619, 88
      %v9627 = vpop.permute.xlu0 %9626
      %v9630 = vsel %vm994, %v9625, 0
      %9632 = vmatpush.bf16.msra.mxu0 0
      %9633 = vmatpush.bf16.msra.mxu0 0
      %9634 = vmatpush.bf16.msra.mxu0 0
      %9635 = vmatpush.bf16.msra.mxu0 0
      %9636 = vmatpush.bf16.msra.mxu0 0
      %9637 = vmatpush.bf16.msra.mxu0 0
      %9638 = vmatpush.bf16.msra.mxu0 0
      %9639 = vmatpush.bf16.msra.mxu0 %v9627
      %9640 = vmatmul.bf16.gmra.mxu0 %v9630
      %v9641 = vpop.f32.mrf.mxu0
      %v9642 = vadd.f32 0.0, %v9641
      %v9643 = vpop.f32.mrf.mxu0
      %v9644 = vadd.f32 0.0, %v9643
      %9645 = vdwg.mxu0
      %v9648 = vunpack.c.l.b16 %v9292
      %v9649 = vunpack.c.l.b16 %v9293
      %v9650 = vpack.c.b16 %v9649, %v9648
      %9651 = vrot.lane.b32.xlu0 %v7646, 88
      %v9652 = vpop.permute.xlu0 %9651
      %v9655 = vsel %vm994, %v9650, 0
      %9657 = vmatpush.bf16.msra.mxu0 0
      %9658 = vmatpush.bf16.msra.mxu0 0
      %9659 = vmatpush.bf16.msra.mxu0 0
      %9660 = vmatpush.bf16.msra.mxu0 0
      %9661 = vmatpush.bf16.msra.mxu0 0
      %9662 = vmatpush.bf16.msra.mxu0 0
      %9663 = vmatpush.bf16.msra.mxu0 0
      %9664 = vmatpush.bf16.msra.mxu0 %v9652
      %9665 = vmatmul.bf16.gmra.mxu0 %v9655
      %v9666 = vpop.f32.mrf.mxu0
      %v9667 = vadd.f32 0.0, %v9666
      %v9668 = vpop.f32.mrf.mxu0
      %v9669 = vadd.f32 0.0, %v9668
      %9670 = vdwg.mxu0
      %v9673 = vunpack.c.l.b16 %v9294
      %v9674 = vunpack.c.l.b16 %v9295
      %v9675 = vpack.c.b16 %v9674, %v9673
      %9676 = vrot.lane.b32.xlu0 %v7673, 88
      %v9677 = vpop.permute.xlu0 %9676
      %v9680 = vsel %vm994, %v9675, 0
      %9682 = vmatpush.bf16.msra.mxu0 0
      %9683 = vmatpush.bf16.msra.mxu0 0
      %9684 = vmatpush.bf16.msra.mxu0 0
      %9685 = vmatpush.bf16.msra.mxu0 0
      %9686 = vmatpush.bf16.msra.mxu0 0
      %9687 = vmatpush.bf16.msra.mxu0 0
      %9688 = vmatpush.bf16.msra.mxu0 0
      %9689 = vmatpush.bf16.msra.mxu0 %v9677
      %9690 = vmatmul.bf16.gmra.mxu0 %v9680
      %v9691 = vpop.f32.mrf.mxu0
      %v9692 = vadd.f32 0.0, %v9691
      %v9693 = vpop.f32.mrf.mxu0
      %v9694 = vadd.f32 0.0, %v9693
      %9695 = vdwg.mxu0
      %v9696 = vmul.f32 %v9317, %v9232
      %v9697 = vmul.f32 %v9319, %v9233
      %v9698 = vmul.f32 %v9342, %v9234
      %v9699 = vmul.f32 %v9344, %v9235
      %v9700 = vmul.f32 %v9367, %v9236
      %v9701 = vmul.f32 %v9369, %v9237
      %v9702 = vmul.f32 %v9392, %v9238
      %v9703 = vmul.f32 %v9394, %v9239
      %v9704 = vmul.f32 %v9417, %v9240
      %v9705 = vmul.f32 %v9419, %v9241
      %v9706 = vmul.f32 %v9442, %v9242
      %v9707 = vmul.f32 %v9444, %v9243
      %v9708 = vmul.f32 %v9467, %v9244
      %v9709 = vmul.f32 %v9469, %v9245
      %v9710 = vmul.f32 %v9492, %v9246
      %v9711 = vmul.f32 %v9494, %v9247
      %v9712 = vmul.f32 %v9517, %v9248
      %v9713 = vmul.f32 %v9519, %v9249
      %v9714 = vmul.f32 %v9542, %v9250
      %v9715 = vmul.f32 %v9544, %v9251
      %v9716 = vmul.f32 %v9567, %v9252
      %v9717 = vmul.f32 %v9569, %v9253
      %v9718 = vmul.f32 %v9592, %v9254
      %v9719 = vmul.f32 %v9594, %v9255
      %v9720 = vmul.f32 %v9617, %v9256
      %v9721 = vmul.f32 %v9619, %v9257
      %v9722 = vmul.f32 %v9642, %v9258
      %v9723 = vmul.f32 %v9644, %v9259
      %v9724 = vmul.f32 %v9667, %v9260
      %v9725 = vmul.f32 %v9669, %v9261
      %v9726 = vmul.f32 %v9692, %v9262
      %v9727 = vmul.f32 %v9694, %v9263
      %v9728 = vpack.c.bf16 %v9697, %v9696
      %v9729 = vpack.c.bf16 %v9699, %v9698
      %v9730 = vpack.c.bf16 %v9701, %v9700
      %v9731 = vpack.c.bf16 %v9703, %v9702
      %v9732 = vpack.c.bf16 %v9705, %v9704
      %v9733 = vpack.c.bf16 %v9707, %v9706
      %v9734 = vpack.c.bf16 %v9709, %v9708
      %v9735 = vpack.c.bf16 %v9711, %v9710
      %v9736 = vpack.c.bf16 %v9713, %v9712
      %v9737 = vpack.c.bf16 %v9715, %v9714
      %v9738 = vpack.c.bf16 %v9717, %v9716
      %v9739 = vpack.c.bf16 %v9719, %v9718
      %v9740 = vpack.c.bf16 %v9721, %v9720
      %v9741 = vpack.c.bf16 %v9723, %v9722
      %v9742 = vpack.c.bf16 %v9725, %v9724
      %v9743 = vpack.c.bf16 %v9727, %v9726
      %v9745 = vsel %vm810, %v9728, 0
      %v9748 = vsel %vm810, %v9729, 0
      %v9751 = vsel %vm810, %v9730, 0
      %v9754 = vsel %vm810, %v9731, 0
      %v9757 = vsel %vm810, %v9732, 0
      %v9760 = vsel %vm810, %v9733, 0
      %v9763 = vsel %vm810, %v9734, 0
      %v9766 = vsel %vm810, %v9735, 0
      %v9769 = vsel %vm810, %v9736, 0
      %v9772 = vsel %vm810, %v9737, 0
      %v9775 = vsel %vm810, %v9738, 0
      %v9778 = vsel %vm810, %v9739, 0
      %v9781 = vsel %vm810, %v9740, 0
      %v9784 = vsel %vm810, %v9741, 0
      %v9787 = vsel %vm810, %v9742, 0
      %v9790 = vsel %vm810, %v9743, 0
      %v9793 = vsel %vm859, %v6289, 0
      %9795 = vmatpush.bf16.msra.mxu0 0
      %9796 = vmatpush.bf16.msra.mxu0 0
      %9797 = vmatpush.bf16.msra.mxu0 0
      %9798 = vmatpush.bf16.msra.mxu0 0
      %9799 = vmatpush.bf16.msra.mxu0 0
      %9800 = vmatpush.bf16.msra.mxu0 0
      %9801 = vmatpush.bf16.msra.mxu0 0
      %9802 = vmatpush.bf16.msra.mxu0 %v9793
      %9803 = vmatmul.bf16.gmra.mxu0 %v9745
      %v9804 = vpop.f32.mrf.mxu0
      %v9805 = vadd.f32 0.0, %v9804
      %v9806 = vpop.f32.mrf.mxu0
      %v9807 = vadd.f32 0.0, %v9806
      %9808 = vmatmul.bf16.gmra.mxu0 %v9748
      %v9809 = vpop.f32.mrf.mxu0
      %v9810 = vadd.f32 0.0, %v9809
      %v9811 = vpop.f32.mrf.mxu0
      %v9812 = vadd.f32 0.0, %v9811
      %9813 = vmatmul.bf16.gmra.mxu0 %v9751
      %v9814 = vpop.f32.mrf.mxu0
      %v9815 = vadd.f32 0.0, %v9814
      %v9816 = vpop.f32.mrf.mxu0
      %v9817 = vadd.f32 0.0, %v9816
      %9818 = vmatmul.bf16.gmra.mxu0 %v9754
      %v9819 = vpop.f32.mrf.mxu0
      %v9820 = vadd.f32 0.0, %v9819
      %v9821 = vpop.f32.mrf.mxu0
      %v9822 = vadd.f32 0.0, %v9821
      %9823 = vmatmul.bf16.gmra.mxu0 %v9757
      %v9824 = vpop.f32.mrf.mxu0
      %v9825 = vadd.f32 0.0, %v9824
      %v9826 = vpop.f32.mrf.mxu0
      %v9827 = vadd.f32 0.0, %v9826
      %9828 = vmatmul.bf16.gmra.mxu0 %v9760
      %v9829 = vpop.f32.mrf.mxu0
      %v9830 = vadd.f32 0.0, %v9829
      %v9831 = vpop.f32.mrf.mxu0
      %v9832 = vadd.f32 0.0, %v9831
      %9833 = vmatmul.bf16.gmra.mxu0 %v9763
      %v9834 = vpop.f32.mrf.mxu0
      %v9835 = vadd.f32 0.0, %v9834
      %v9836 = vpop.f32.mrf.mxu0
      %v9837 = vadd.f32 0.0, %v9836
      %9838 = vmatmul.bf16.gmra.mxu0 %v9766
      %v9839 = vpop.f32.mrf.mxu0
      %v9840 = vadd.f32 0.0, %v9839
      %v9841 = vpop.f32.mrf.mxu0
      %v9842 = vadd.f32 0.0, %v9841
      %9843 = vmatmul.bf16.gmra.mxu0 %v9769
      %v9844 = vpop.f32.mrf.mxu0
      %v9845 = vadd.f32 0.0, %v9844
      %v9846 = vpop.f32.mrf.mxu0
      %v9847 = vadd.f32 0.0, %v9846
      %9848 = vmatmul.bf16.gmra.mxu0 %v9772
      %v9849 = vpop.f32.mrf.mxu0
      %v9850 = vadd.f32 0.0, %v9849
      %v9851 = vpop.f32.mrf.mxu0
      %v9852 = vadd.f32 0.0, %v9851
      %9853 = vmatmul.bf16.gmra.mxu0 %v9775
      %v9854 = vpop.f32.mrf.mxu0
      %v9855 = vadd.f32 0.0, %v9854
      %v9856 = vpop.f32.mrf.mxu0
      %v9857 = vadd.f32 0.0, %v9856
      %9858 = vmatmul.bf16.gmra.mxu0 %v9778
      %v9859 = vpop.f32.mrf.mxu0
      %v9860 = vadd.f32 0.0, %v9859
      %v9861 = vpop.f32.mrf.mxu0
      %v9862 = vadd.f32 0.0, %v9861
      %9863 = vmatmul.bf16.gmra.mxu0 %v9781
      %v9864 = vpop.f32.mrf.mxu0
      %v9865 = vadd.f32 0.0, %v9864
      %v9866 = vpop.f32.mrf.mxu0
      %v9867 = vadd.f32 0.0, %v9866
      %9868 = vmatmul.bf16.gmra.mxu0 %v9784
      %v9869 = vpop.f32.mrf.mxu0
      %v9870 = vadd.f32 0.0, %v9869
      %v9871 = vpop.f32.mrf.mxu0
      %v9872 = vadd.f32 0.0, %v9871
      %9873 = vmatmul.bf16.gmra.mxu0 %v9787
      %v9874 = vpop.f32.mrf.mxu0
      %v9875 = vadd.f32 0.0, %v9874
      %v9876 = vpop.f32.mrf.mxu0
      %v9877 = vadd.f32 0.0, %v9876
      %9878 = vmatmul.bf16.gmra.mxu0 %v9790
      %v9879 = vpop.f32.mrf.mxu0
      %v9880 = vadd.f32 0.0, %v9879
      %v9881 = vpop.f32.mrf.mxu0
      %v9882 = vadd.f32 0.0, %v9881
      %9883 = vdwg.mxu0
      %v9885 = vsel %vm810, %v8512, 0
      %v9888 = vsel %vm810, %v8513, 0
      %v9891 = vsel %vm810, %v8514, 0
      %v9894 = vsel %vm810, %v8515, 0
      %v9897 = vsel %vm810, %v8516, 0
      %v9900 = vsel %vm810, %v8517, 0
      %v9903 = vsel %vm810, %v8518, 0
      %v9906 = vsel %vm810, %v8519, 0
      %v9909 = vsel %vm810, %v8520, 0
      %v9912 = vsel %vm810, %v8521, 0
      %v9915 = vsel %vm810, %v8522, 0
      %v9918 = vsel %vm810, %v8523, 0
      %v9921 = vsel %vm810, %v8524, 0
      %v9924 = vsel %vm810, %v8525, 0
      %v9927 = vsel %vm810, %v8526, 0
      %v9930 = vsel %vm810, %v8527, 0
      %v9933 = vsel %vm859, %v6288, 0
      %9935 = vmatpush.bf16.msra.mxu0 0
      %9936 = vmatpush.bf16.msra.mxu0 0
      %9937 = vmatpush.bf16.msra.mxu0 0
      %9938 = vmatpush.bf16.msra.mxu0 0
      %9939 = vmatpush.bf16.msra.mxu0 0
      %9940 = vmatpush.bf16.msra.mxu0 0
      %9941 = vmatpush.bf16.msra.mxu0 0
      %9942 = vmatpush.bf16.msra.mxu0 %v9933
      %9943 = vmatmul.bf16.gmra.mxu0 %v9885
      %v9944 = vpop.f32.mrf.mxu0
      %v9945 = vadd.f32 %v9805, %v9944
      %v9946 = vpop.f32.mrf.mxu0
      %v9947 = vadd.f32 %v9807, %v9946
      %9948 = vmatmul.bf16.gmra.mxu0 %v9888
      %v9949 = vpop.f32.mrf.mxu0
      %v9950 = vadd.f32 %v9810, %v9949
      %v9951 = vpop.f32.mrf.mxu0
      %v9952 = vadd.f32 %v9812, %v9951
      %9953 = vmatmul.bf16.gmra.mxu0 %v9891
      %v9954 = vpop.f32.mrf.mxu0
      %v9955 = vadd.f32 %v9815, %v9954
      %v9956 = vpop.f32.mrf.mxu0
      %v9957 = vadd.f32 %v9817, %v9956
      %9958 = vmatmul.bf16.gmra.mxu0 %v9894
      %v9959 = vpop.f32.mrf.mxu0
      %v9960 = vadd.f32 %v9820, %v9959
      %v9961 = vpop.f32.mrf.mxu0
      %v9962 = vadd.f32 %v9822, %v9961
      %9963 = vmatmul.bf16.gmra.mxu0 %v9897
      %v9964 = vpop.f32.mrf.mxu0
      %v9965 = vadd.f32 %v9825, %v9964
      %v9966 = vpop.f32.mrf.mxu0
      %v9967 = vadd.f32 %v9827, %v9966
      %9968 = vmatmul.bf16.gmra.mxu0 %v9900
      %v9969 = vpop.f32.mrf.mxu0
      %v9970 = vadd.f32 %v9830, %v9969
      %v9971 = vpop.f32.mrf.mxu0
      %v9972 = vadd.f32 %v9832, %v9971
      %9973 = vmatmul.bf16.gmra.mxu0 %v9903
      %v9974 = vpop.f32.mrf.mxu0
      %v9975 = vadd.f32 %v9835, %v9974
      %v9976 = vpop.f32.mrf.mxu0
      %v9977 = vadd.f32 %v9837, %v9976
      %9978 = vmatmul.bf16.gmra.mxu0 %v9906
      %v9979 = vpop.f32.mrf.mxu0
      %v9980 = vadd.f32 %v9840, %v9979
      %v9981 = vpop.f32.mrf.mxu0
      %v9982 = vadd.f32 %v9842, %v9981
      %9983 = vmatmul.bf16.gmra.mxu0 %v9909
      %v9984 = vpop.f32.mrf.mxu0
      %v9985 = vadd.f32 %v9845, %v9984
      %v9986 = vpop.f32.mrf.mxu0
      %v9987 = vadd.f32 %v9847, %v9986
      %9988 = vmatmul.bf16.gmra.mxu0 %v9912
      %v9989 = vpop.f32.mrf.mxu0
      %v9990 = vadd.f32 %v9850, %v9989
      %v9991 = vpop.f32.mrf.mxu0
      %v9992 = vadd.f32 %v9852, %v9991
      %9993 = vmatmul.bf16.gmra.mxu0 %v9915
      %v9994 = vpop.f32.mrf.mxu0
      %v9995 = vadd.f32 %v9855, %v9994
      %v9996 = vpop.f32.mrf.mxu0
      %v9997 = vadd.f32 %v9857, %v9996
      %9998 = vmatmul.bf16.gmra.mxu0 %v9918
      %v9999 = vpop.f32.mrf.mxu0
      %v10000 = vadd.f32 %v9860, %v9999
      %v10001 = vpop.f32.mrf.mxu0
      %v10002 = vadd.f32 %v9862, %v10001
      %10003 = vmatmul.bf16.gmra.mxu0 %v9921
      %v10004 = vpop.f32.mrf.mxu0
      %v10005 = vadd.f32 %v9865, %v10004
      %v10006 = vpop.f32.mrf.mxu0
      %v10007 = vadd.f32 %v9867, %v10006
      %10008 = vmatmul.bf16.gmra.mxu0 %v9924
      %v10009 = vpop.f32.mrf.mxu0
      %v10010 = vadd.f32 %v9870, %v10009
      %v10011 = vpop.f32.mrf.mxu0
      %v10012 = vadd.f32 %v9872, %v10011
      %10013 = vmatmul.bf16.gmra.mxu0 %v9927
      %v10014 = vpop.f32.mrf.mxu0
      %v10015 = vadd.f32 %v9875, %v10014
      %v10016 = vpop.f32.mrf.mxu0
      %v10017 = vadd.f32 %v9877, %v10016
      %10018 = vmatmul.bf16.gmra.mxu0 %v9930
      %v10019 = vpop.f32.mrf.mxu0
      %v10020 = vadd.f32 %v9880, %v10019
      %v10021 = vpop.f32.mrf.mxu0
      %v10022 = vadd.f32 %v9882, %v10021
      %10023 = vdwg.mxu0
      %v10024 = vadd.f32 %v6250, %v9945
      %v10025 = vadd.f32 %v6251, %v9947
      %v10026 = vadd.f32 %v6252, %v9950
      %v10027 = vadd.f32 %v6253, %v9952
      %v10028 = vadd.f32 %v6254, %v9955
      %v10029 = vadd.f32 %v6255, %v9957
      %v10030 = vadd.f32 %v6256, %v9960
      %v10031 = vadd.f32 %v6257, %v9962
      %v10032 = vadd.f32 %v6258, %v9965
      %v10033 = vadd.f32 %v6259, %v9967
      %v10034 = vadd.f32 %v6260, %v9970
      %v10035 = vadd.f32 %v6261, %v9972
      %v10036 = vadd.f32 %v6262, %v9975
      %v10037 = vadd.f32 %v6263, %v9977
      %v10038 = vadd.f32 %v6264, %v9980
      %v10039 = vadd.f32 %v6265, %v9982
      %v10040 = vadd.f32 %v6266, %v9985
      %v10041 = vadd.f32 %v6267, %v9987
      %v10042 = vadd.f32 %v6268, %v9990
      %v10043 = vadd.f32 %v6269, %v9992
      %v10044 = vadd.f32 %v6270, %v9995
      %v10045 = vadd.f32 %v6271, %v9997
      %v10046 = vadd.f32 %v6272, %v10000
      %v10047 = vadd.f32 %v6273, %v10002
      %v10048 = vadd.f32 %v6274, %v10005
      %v10049 = vadd.f32 %v6275, %v10007
      %v10050 = vadd.f32 %v6276, %v10010
      %v10051 = vadd.f32 %v6277, %v10012
      %v10052 = vadd.f32 %v6278, %v10015
      %v10053 = vadd.f32 %v6279, %v10017
      %v10054 = vadd.f32 %v6280, %v10020
      %v10055 = vadd.f32 %v6281, %v10022
      %v10057 = vperm.slane %v6291, 0
      %v10059 = vadd.f32 %v10024, %v10057
      %v10060 = vadd.f32 %v10025, %v10057
      %v10061 = vadd.f32 %v10026, %v10057
      %v10062 = vadd.f32 %v10027, %v10057
      %v10063 = vadd.f32 %v10028, %v10057
      %v10064 = vadd.f32 %v10029, %v10057
      %v10065 = vadd.f32 %v10030, %v10057
      %v10066 = vadd.f32 %v10031, %v10057
      %v10067 = vadd.f32 %v10032, %v10057
      %v10068 = vadd.f32 %v10033, %v10057
      %v10069 = vadd.f32 %v10034, %v10057
      %v10070 = vadd.f32 %v10035, %v10057
      %v10071 = vadd.f32 %v10036, %v10057
      %v10072 = vadd.f32 %v10037, %v10057
      %v10073 = vadd.f32 %v10038, %v10057
      %v10074 = vadd.f32 %v10039, %v10057
      %v10075 = vadd.f32 %v10040, %v10057
      %v10076 = vadd.f32 %v10041, %v10057
      %v10077 = vadd.f32 %v10042, %v10057
      %v10078 = vadd.f32 %v10043, %v10057
      %v10079 = vadd.f32 %v10044, %v10057
      %v10080 = vadd.f32 %v10045, %v10057
      %v10081 = vadd.f32 %v10046, %v10057
      %v10082 = vadd.f32 %v10047, %v10057
      %v10083 = vadd.f32 %v10048, %v10057
      %v10084 = vadd.f32 %v10049, %v10057
      %v10085 = vadd.f32 %v10050, %v10057
      %v10086 = vadd.f32 %v10051, %v10057
      %v10087 = vadd.f32 %v10052, %v10057
      %v10088 = vadd.f32 %v10053, %v10057
      %v10089 = vadd.f32 %v10054, %v10057
      %v10090 = vadd.f32 %v10055, %v10057
      %v10091 = vsel %vm994, %v10059, 0.0
      %10092 = vadd.xlane.f32.xlu0 %v10091
      %v10093 = vpop.xlane.xlu0 %10092
      %v10094 = vsel %vm994, %v10060, 0.0
      %10095 = vadd.xlane.f32.xlu0 %v10094
      %v10096 = vpop.xlane.xlu0 %10095
      %v10097 = vsel %vm994, %v10061, 0.0
      %10098 = vadd.xlane.f32.xlu0 %v10097
      %v10099 = vpop.xlane.xlu0 %10098
      %v10100 = vsel %vm994, %v10062, 0.0
      %10101 = vadd.xlane.f32.xlu0 %v10100
      %v10102 = vpop.xlane.xlu0 %10101
      %v10103 = vsel %vm994, %v10063, 0.0
      %10104 = vadd.xlane.f32.xlu0 %v10103
      %v10105 = vpop.xlane.xlu0 %10104
      %v10106 = vsel %vm994, %v10064, 0.0
      %10107 = vadd.xlane.f32.xlu0 %v10106
      %v10108 = vpop.xlane.xlu0 %10107
      %v10109 = vsel %vm994, %v10065, 0.0
      %10110 = vadd.xlane.f32.xlu0 %v10109
      %v10111 = vpop.xlane.xlu0 %10110
      %v10112 = vsel %vm994, %v10066, 0.0
      %10113 = vadd.xlane.f32.xlu0 %v10112
      %v10114 = vpop.xlane.xlu0 %10113
      %v10115 = vsel %vm994, %v10067, 0.0
      %10116 = vadd.xlane.f32.xlu0 %v10115
      %v10117 = vpop.xlane.xlu0 %10116
      %v10118 = vsel %vm994, %v10068, 0.0
      %10119 = vadd.xlane.f32.xlu0 %v10118
      %v10120 = vpop.xlane.xlu0 %10119
      %v10121 = vsel %vm994, %v10069, 0.0
      %10122 = vadd.xlane.f32.xlu0 %v10121
      %v10123 = vpop.xlane.xlu0 %10122
      %v10124 = vsel %vm994, %v10070, 0.0
      %10125 = vadd.xlane.f32.xlu0 %v10124
      %v10126 = vpop.xlane.xlu0 %10125
      %v10127 = vsel %vm994, %v10071, 0.0
      %10128 = vadd.xlane.f32.xlu0 %v10127
      %v10129 = vpop.xlane.xlu0 %10128
      %v10130 = vsel %vm994, %v10072, 0.0
      %10131 = vadd.xlane.f32.xlu0 %v10130
      %v10132 = vpop.xlane.xlu0 %10131
      %v10133 = vsel %vm994, %v10073, 0.0
      %10134 = vadd.xlane.f32.xlu0 %v10133
      %v10135 = vpop.xlane.xlu0 %10134
      %v10136 = vsel %vm994, %v10074, 0.0
      %10137 = vadd.xlane.f32.xlu0 %v10136
      %v10138 = vpop.xlane.xlu0 %10137
      %v10139 = vsel %vm994, %v10075, 0.0
      %10140 = vadd.xlane.f32.xlu0 %v10139
      %v10141 = vpop.xlane.xlu0 %10140
      %v10142 = vsel %vm994, %v10076, 0.0
      %10143 = vadd.xlane.f32.xlu0 %v10142
      %v10144 = vpop.xlane.xlu0 %10143
      %v10145 = vsel %vm994, %v10077, 0.0
      %10146 = vadd.xlane.f32.xlu0 %v10145
      %v10147 = vpop.xlane.xlu0 %10146
      %v10148 = vsel %vm994, %v10078, 0.0
      %10149 = vadd.xlane.f32.xlu0 %v10148
      %v10150 = vpop.xlane.xlu0 %10149
      %v10151 = vsel %vm994, %v10079, 0.0
      %10152 = vadd.xlane.f32.xlu0 %v10151
      %v10153 = vpop.xlane.xlu0 %10152
      %v10154 = vsel %vm994, %v10080, 0.0
      %10155 = vadd.xlane.f32.xlu0 %v10154
      %v10156 = vpop.xlane.xlu0 %10155
      %v10157 = vsel %vm994, %v10081, 0.0
      %10158 = vadd.xlane.f32.xlu0 %v10157
      %v10159 = vpop.xlane.xlu0 %10158
      %v10160 = vsel %vm994, %v10082, 0.0
      %10161 = vadd.xlane.f32.xlu0 %v10160
      %v10162 = vpop.xlane.xlu0 %10161
      %v10163 = vsel %vm994, %v10083, 0.0
      %10164 = vadd.xlane.f32.xlu0 %v10163
      %v10165 = vpop.xlane.xlu0 %10164
      %v10166 = vsel %vm994, %v10084, 0.0
      %10167 = vadd.xlane.f32.xlu0 %v10166
      %v10168 = vpop.xlane.xlu0 %10167
      %v10169 = vsel %vm994, %v10085, 0.0
      %10170 = vadd.xlane.f32.xlu0 %v10169
      %v10171 = vpop.xlane.xlu0 %10170
      %v10172 = vsel %vm994, %v10086, 0.0
      %10173 = vadd.xlane.f32.xlu0 %v10172
      %v10174 = vpop.xlane.xlu0 %10173
      %v10175 = vsel %vm994, %v10087, 0.0
      %10176 = vadd.xlane.f32.xlu0 %v10175
      %v10177 = vpop.xlane.xlu0 %10176
      %v10178 = vsel %vm994, %v10088, 0.0
      %10179 = vadd.xlane.f32.xlu0 %v10178
      %v10180 = vpop.xlane.xlu0 %10179
      %v10181 = vsel %vm994, %v10089, 0.0
      %10182 = vadd.xlane.f32.xlu0 %v10181
      %v10183 = vpop.xlane.xlu0 %10182
      %v10184 = vsel %vm994, %v10090, 0.0
      %10185 = vadd.xlane.f32.xlu0 %v10184
      %v10186 = vpop.xlane.xlu0 %10185
      %v10187 = vmul.f32 %v10093, %v1097
      %v10188 = vmul.f32 %v10096, %v1097
      %v10189 = vmul.f32 %v10099, %v1097
      %v10190 = vmul.f32 %v10102, %v1097
      %v10191 = vmul.f32 %v10105, %v1097
      %v10192 = vmul.f32 %v10108, %v1097
      %v10193 = vmul.f32 %v10111, %v1097
      %v10194 = vmul.f32 %v10114, %v1097
      %v10195 = vmul.f32 %v10117, %v1097
      %v10196 = vmul.f32 %v10120, %v1097
      %v10197 = vmul.f32 %v10123, %v1097
      %v10198 = vmul.f32 %v10126, %v1097
      %v10199 = vmul.f32 %v10129, %v1097
      %v10200 = vmul.f32 %v10132, %v1097
      %v10201 = vmul.f32 %v10135, %v1097
      %v10202 = vmul.f32 %v10138, %v1097
      %v10203 = vmul.f32 %v10141, %v1097
      %v10204 = vmul.f32 %v10144, %v1097
      %v10205 = vmul.f32 %v10147, %v1097
      %v10206 = vmul.f32 %v10150, %v1097
      %v10207 = vmul.f32 %v10153, %v1097
      %v10208 = vmul.f32 %v10156, %v1097
      %v10209 = vmul.f32 %v10159, %v1097
      %v10210 = vmul.f32 %v10162, %v1097
      %v10211 = vmul.f32 %v10165, %v1097
      %v10212 = vmul.f32 %v10168, %v1097
      %v10213 = vmul.f32 %v10171, %v1097
      %v10214 = vmul.f32 %v10174, %v1097
      %v10215 = vmul.f32 %v10177, %v1097
      %v10216 = vmul.f32 %v10180, %v1097
      %v10217 = vmul.f32 %v10183, %v1097
      %v10218 = vmul.f32 %v10186, %v1097
      %v10219 = vsub.f32 %v10059, %v10187
      %v10220 = vsub.f32 %v10060, %v10188
      %v10221 = vsub.f32 %v10061, %v10189
      %v10222 = vsub.f32 %v10062, %v10190
      %v10223 = vsub.f32 %v10063, %v10191
      %v10224 = vsub.f32 %v10064, %v10192
      %v10225 = vsub.f32 %v10065, %v10193
      %v10226 = vsub.f32 %v10066, %v10194
      %v10227 = vsub.f32 %v10067, %v10195
      %v10228 = vsub.f32 %v10068, %v10196
      %v10229 = vsub.f32 %v10069, %v10197
      %v10230 = vsub.f32 %v10070, %v10198
      %v10231 = vsub.f32 %v10071, %v10199
      %v10232 = vsub.f32 %v10072, %v10200
      %v10233 = vsub.f32 %v10073, %v10201
      %v10234 = vsub.f32 %v10074, %v10202
      %v10235 = vsub.f32 %v10075, %v10203
      %v10236 = vsub.f32 %v10076, %v10204
      %v10237 = vsub.f32 %v10077, %v10205
      %v10238 = vsub.f32 %v10078, %v10206
      %v10239 = vsub.f32 %v10079, %v10207
      %v10240 = vsub.f32 %v10080, %v10208
      %v10241 = vsub.f32 %v10081, %v10209
      %v10242 = vsub.f32 %v10082, %v10210
      %v10243 = vsub.f32 %v10083, %v10211
      %v10244 = vsub.f32 %v10084, %v10212
      %v10245 = vsub.f32 %v10085, %v10213
      %v10246 = vsub.f32 %v10086, %v10214
      %v10247 = vsub.f32 %v10087, %v10215
      %v10248 = vsub.f32 %v10088, %v10216
      %v10249 = vsub.f32 %v10089, %v10217
      %v10250 = vsub.f32 %v10090, %v10218
      %v10251 = vmul.f32 %v10219, %v10219
      %v10252 = vmul.f32 %v10220, %v10220
      %v10253 = vmul.f32 %v10221, %v10221
      %v10254 = vmul.f32 %v10222, %v10222
      %v10255 = vmul.f32 %v10223, %v10223
      %v10256 = vmul.f32 %v10224, %v10224
      %v10257 = vmul.f32 %v10225, %v10225
      %v10258 = vmul.f32 %v10226, %v10226
      %v10259 = vmul.f32 %v10227, %v10227
      %v10260 = vmul.f32 %v10228, %v10228
      %v10261 = vmul.f32 %v10229, %v10229
      %v10262 = vmul.f32 %v10230, %v10230
      %v10263 = vmul.f32 %v10231, %v10231
      %v10264 = vmul.f32 %v10232, %v10232
      %v10265 = vmul.f32 %v10233, %v10233
      %v10266 = vmul.f32 %v10234, %v10234
      %v10267 = vmul.f32 %v10235, %v10235
      %v10268 = vmul.f32 %v10236, %v10236
      %v10269 = vmul.f32 %v10237, %v10237
      %v10270 = vmul.f32 %v10238, %v10238
      %v10271 = vmul.f32 %v10239, %v10239
      %v10272 = vmul.f32 %v10240, %v10240
      %v10273 = vmul.f32 %v10241, %v10241
      %v10274 = vmul.f32 %v10242, %v10242
      %v10275 = vmul.f32 %v10243, %v10243
      %v10276 = vmul.f32 %v10244, %v10244
      %v10277 = vmul.f32 %v10245, %v10245
      %v10278 = vmul.f32 %v10246, %v10246
      %v10279 = vmul.f32 %v10247, %v10247
      %v10280 = vmul.f32 %v10248, %v10248
      %v10281 = vmul.f32 %v10249, %v10249
      %v10282 = vmul.f32 %v10250, %v10250
      %v10283 = vsel %vm994, %v10251, 0.0
      %10284 = vadd.xlane.f32.xlu0 %v10283
      %v10285 = vpop.xlane.xlu0 %10284
      %v10286 = vsel %vm994, %v10252, 0.0
      %10287 = vadd.xlane.f32.xlu0 %v10286
      %v10288 = vpop.xlane.xlu0 %10287
      %v10289 = vsel %vm994, %v10253, 0.0
      %10290 = vadd.xlane.f32.xlu0 %v10289
      %v10291 = vpop.xlane.xlu0 %10290
      %v10292 = vsel %vm994, %v10254, 0.0
      %10293 = vadd.xlane.f32.xlu0 %v10292
      %v10294 = vpop.xlane.xlu0 %10293
      %v10295 = vsel %vm994, %v10255, 0.0
      %10296 = vadd.xlane.f32.xlu0 %v10295
      %v10297 = vpop.xlane.xlu0 %10296
      %v10298 = vsel %vm994, %v10256, 0.0
      %10299 = vadd.xlane.f32.xlu0 %v10298
      %v10300 = vpop.xlane.xlu0 %10299
      %v10301 = vsel %vm994, %v10257, 0.0
      %10302 = vadd.xlane.f32.xlu0 %v10301
      %v10303 = vpop.xlane.xlu0 %10302
      %v10304 = vsel %vm994, %v10258, 0.0
      %10305 = vadd.xlane.f32.xlu0 %v10304
      %v10306 = vpop.xlane.xlu0 %10305
      %v10307 = vsel %vm994, %v10259, 0.0
      %10308 = vadd.xlane.f32.xlu0 %v10307
      %v10309 = vpop.xlane.xlu0 %10308
      %v10310 = vsel %vm994, %v10260, 0.0
      %10311 = vadd.xlane.f32.xlu0 %v10310
      %v10312 = vpop.xlane.xlu0 %10311
      %v10313 = vsel %vm994, %v10261, 0.0
      %10314 = vadd.xlane.f32.xlu0 %v10313
      %v10315 = vpop.xlane.xlu0 %10314
      %v10316 = vsel %vm994, %v10262, 0.0
      %10317 = vadd.xlane.f32.xlu0 %v10316
      %v10318 = vpop.xlane.xlu0 %10317
      %v10319 = vsel %vm994, %v10263, 0.0
      %10320 = vadd.xlane.f32.xlu0 %v10319
      %v10321 = vpop.xlane.xlu0 %10320
      %v10322 = vsel %vm994, %v10264, 0.0
      %10323 = vadd.xlane.f32.xlu0 %v10322
      %v10324 = vpop.xlane.xlu0 %10323
      %v10325 = vsel %vm994, %v10265, 0.0
      %10326 = vadd.xlane.f32.xlu0 %v10325
      %v10327 = vpop.xlane.xlu0 %10326
      %v10328 = vsel %vm994, %v10266, 0.0
      %10329 = vadd.xlane.f32.xlu0 %v10328
      %v10330 = vpop.xlane.xlu0 %10329
      %v10331 = vsel %vm994, %v10267, 0.0
      %10332 = vadd.xlane.f32.xlu0 %v10331
      %v10333 = vpop.xlane.xlu0 %10332
      %v10334 = vsel %vm994, %v10268, 0.0
      %10335 = vadd.xlane.f32.xlu0 %v10334
      %v10336 = vpop.xlane.xlu0 %10335
      %v10337 = vsel %vm994, %v10269, 0.0
      %10338 = vadd.xlane.f32.xlu0 %v10337
      %v10339 = vpop.xlane.xlu0 %10338
      %v10340 = vsel %vm994, %v10270, 0.0
      %10341 = vadd.xlane.f32.xlu0 %v10340
      %v10342 = vpop.xlane.xlu0 %10341
      %v10343 = vsel %vm994, %v10271, 0.0
      %10344 = vadd.xlane.f32.xlu0 %v10343
      %v10345 = vpop.xlane.xlu0 %10344
      %v10346 = vsel %vm994, %v10272, 0.0
      %10347 = vadd.xlane.f32.xlu0 %v10346
      %v10348 = vpop.xlane.xlu0 %10347
      %v10349 = vsel %vm994, %v10273, 0.0
      %10350 = vadd.xlane.f32.xlu0 %v10349
      %v10351 = vpop.xlane.xlu0 %10350
      %v10352 = vsel %vm994, %v10274, 0.0
      %10353 = vadd.xlane.f32.xlu0 %v10352
      %v10354 = vpop.xlane.xlu0 %10353
      %v10355 = vsel %vm994, %v10275, 0.0
      %10356 = vadd.xlane.f32.xlu0 %v10355
      %v10357 = vpop.xlane.xlu0 %10356
      %v10358 = vsel %vm994, %v10276, 0.0
      %10359 = vadd.xlane.f32.xlu0 %v10358
      %v10360 = vpop.xlane.xlu0 %10359
      %v10361 = vsel %vm994, %v10277, 0.0
      %10362 = vadd.xlane.f32.xlu0 %v10361
      %v10363 = vpop.xlane.xlu0 %10362
      %v10364 = vsel %vm994, %v10278, 0.0
      %10365 = vadd.xlane.f32.xlu0 %v10364
      %v10366 = vpop.xlane.xlu0 %10365
      %v10367 = vsel %vm994, %v10279, 0.0
      %10368 = vadd.xlane.f32.xlu0 %v10367
      %v10369 = vpop.xlane.xlu0 %10368
      %v10370 = vsel %vm994, %v10280, 0.0
      %10371 = vadd.xlane.f32.xlu0 %v10370
      %v10372 = vpop.xlane.xlu0 %10371
      %v10373 = vsel %vm994, %v10281, 0.0
      %10374 = vadd.xlane.f32.xlu0 %v10373
      %v10375 = vpop.xlane.xlu0 %10374
      %v10376 = vsel %vm994, %v10282, 0.0
      %10377 = vadd.xlane.f32.xlu0 %v10376
      %v10378 = vpop.xlane.xlu0 %10377
      %v10379 = vmul.f32 %v10285, %v1097
      %v10380 = vmul.f32 %v10288, %v1097
      %v10381 = vmul.f32 %v10291, %v1097
      %v10382 = vmul.f32 %v10294, %v1097
      %v10383 = vmul.f32 %v10297, %v1097
      %v10384 = vmul.f32 %v10300, %v1097
      %v10385 = vmul.f32 %v10303, %v1097
      %v10386 = vmul.f32 %v10306, %v1097
      %v10387 = vmul.f32 %v10309, %v1097
      %v10388 = vmul.f32 %v10312, %v1097
      %v10389 = vmul.f32 %v10315, %v1097
      %v10390 = vmul.f32 %v10318, %v1097
      %v10391 = vmul.f32 %v10321, %v1097
      %v10392 = vmul.f32 %v10324, %v1097
      %v10393 = vmul.f32 %v10327, %v1097
      %v10394 = vmul.f32 %v10330, %v1097
      %v10395 = vmul.f32 %v10333, %v1097
      %v10396 = vmul.f32 %v10336, %v1097
      %v10397 = vmul.f32 %v10339, %v1097
      %v10398 = vmul.f32 %v10342, %v1097
      %v10399 = vmul.f32 %v10345, %v1097
      %v10400 = vmul.f32 %v10348, %v1097
      %v10401 = vmul.f32 %v10351, %v1097
      %v10402 = vmul.f32 %v10354, %v1097
      %v10403 = vmul.f32 %v10357, %v1097
      %v10404 = vmul.f32 %v10360, %v1097
      %v10405 = vmul.f32 %v10363, %v1097
      %v10406 = vmul.f32 %v10366, %v1097
      %v10407 = vmul.f32 %v10369, %v1097
      %v10408 = vmul.f32 %v10372, %v1097
      %v10409 = vmul.f32 %v10375, %v1097
      %v10410 = vmul.f32 %v10378, %v1097
      %v10411 = vadd.f32 %v10379, 1e-05
      %v10412 = vadd.f32 %v10380, 1e-05
      %v10413 = vadd.f32 %v10381, 1e-05
      %v10414 = vadd.f32 %v10382, 1e-05
      %v10415 = vadd.f32 %v10383, 1e-05
      %v10416 = vadd.f32 %v10384, 1e-05
      %v10417 = vadd.f32 %v10385, 1e-05
      %v10418 = vadd.f32 %v10386, 1e-05
      %v10419 = vadd.f32 %v10387, 1e-05
      %v10420 = vadd.f32 %v10388, 1e-05
      %v10421 = vadd.f32 %v10389, 1e-05
      %v10422 = vadd.f32 %v10390, 1e-05
      %v10423 = vadd.f32 %v10391, 1e-05
      %v10424 = vadd.f32 %v10392, 1e-05
      %v10425 = vadd.f32 %v10393, 1e-05
      %v10426 = vadd.f32 %v10394, 1e-05
      %v10427 = vadd.f32 %v10395, 1e-05
      %v10428 = vadd.f32 %v10396, 1e-05
      %v10429 = vadd.f32 %v10397, 1e-05
      %v10430 = vadd.f32 %v10398, 1e-05
      %v10431 = vadd.f32 %v10399, 1e-05
      %v10432 = vadd.f32 %v10400, 1e-05
      %v10433 = vadd.f32 %v10401, 1e-05
      %v10434 = vadd.f32 %v10402, 1e-05
      %v10435 = vadd.f32 %v10403, 1e-05
      %v10436 = vadd.f32 %v10404, 1e-05
      %v10437 = vadd.f32 %v10405, 1e-05
      %v10438 = vadd.f32 %v10406, 1e-05
      %v10439 = vadd.f32 %v10407, 1e-05
      %v10440 = vadd.f32 %v10408, 1e-05
      %v10441 = vadd.f32 %v10409, 1e-05
      %v10442 = vadd.f32 %v10410, 1e-05
      %v10443 = vrsqrt.pop %v10411
      %v10444 = vmul.f32 %v10443, %v10411
      %v10445 = vmul.f32 %v10444, %v10443
      %v10446 = vmul.f32 0.5, %v10445
      %v10447 = vsub.f32 1.5, %v10446
      %v10448 = vmul.f32 %v10443, %v10447
      %vm10449 = vweird.f32 %v10411
      %vm10450 = vweird.f32 %v10443
      %vm10451 = vmor %vm10449, %vm10450
      %v10452 = vsel %vm10451, %v10443, %v10448
      %v10453 = vrsqrt.pop %v10412
      %v10454 = vmul.f32 %v10453, %v10412
      %v10455 = vmul.f32 %v10454, %v10453
      %v10456 = vmul.f32 0.5, %v10455
      %v10457 = vsub.f32 1.5, %v10456
      %v10458 = vmul.f32 %v10453, %v10457
      %vm10459 = vweird.f32 %v10412
      %vm10460 = vweird.f32 %v10453
      %vm10461 = vmor %vm10459, %vm10460
      %v10462 = vsel %vm10461, %v10453, %v10458
      %v10463 = vrsqrt.pop %v10413
      %v10464 = vmul.f32 %v10463, %v10413
      %v10465 = vmul.f32 %v10464, %v10463
      %v10466 = vmul.f32 0.5, %v10465
      %v10467 = vsub.f32 1.5, %v10466
      %v10468 = vmul.f32 %v10463, %v10467
      %vm10469 = vweird.f32 %v10413
      %vm10470 = vweird.f32 %v10463
      %vm10471 = vmor %vm10469, %vm10470
      %v10472 = vsel %vm10471, %v10463, %v10468
      %v10473 = vrsqrt.pop %v10414
      %v10474 = vmul.f32 %v10473, %v10414
      %v10475 = vmul.f32 %v10474, %v10473
      %v10476 = vmul.f32 0.5, %v10475
      %v10477 = vsub.f32 1.5, %v10476
      %v10478 = vmul.f32 %v10473, %v10477
      %vm10479 = vweird.f32 %v10414
      %vm10480 = vweird.f32 %v10473
      %vm10481 = vmor %vm10479, %vm10480
      %v10482 = vsel %vm10481, %v10473, %v10478
      %v10483 = vrsqrt.pop %v10415
      %v10484 = vmul.f32 %v10483, %v10415
      %v10485 = vmul.f32 %v10484, %v10483
      %v10486 = vmul.f32 0.5, %v10485
      %v10487 = vsub.f32 1.5, %v10486
      %v10488 = vmul.f32 %v10483, %v10487
      %vm10489 = vweird.f32 %v10415
      %vm10490 = vweird.f32 %v10483
      %vm10491 = vmor %vm10489, %vm10490
      %v10492 = vsel %vm10491, %v10483, %v10488
      %v10493 = vrsqrt.pop %v10416
      %v10494 = vmul.f32 %v10493, %v10416
      %v10495 = vmul.f32 %v10494, %v10493
      %v10496 = vmul.f32 0.5, %v10495
      %v10497 = vsub.f32 1.5, %v10496
      %v10498 = vmul.f32 %v10493, %v10497
      %vm10499 = vweird.f32 %v10416
      %vm10500 = vweird.f32 %v10493
      %vm10501 = vmor %vm10499, %vm10500
      %v10502 = vsel %vm10501, %v10493, %v10498
      %v10503 = vrsqrt.pop %v10417
      %v10504 = vmul.f32 %v10503, %v10417
      %v10505 = vmul.f32 %v10504, %v10503
      %v10506 = vmul.f32 0.5, %v10505
      %v10507 = vsub.f32 1.5, %v10506
      %v10508 = vmul.f32 %v10503, %v10507
      %vm10509 = vweird.f32 %v10417
      %vm10510 = vweird.f32 %v10503
      %vm10511 = vmor %vm10509, %vm10510
      %v10512 = vsel %vm10511, %v10503, %v10508
      %v10513 = vrsqrt.pop %v10418
      %v10514 = vmul.f32 %v10513, %v10418
      %v10515 = vmul.f32 %v10514, %v10513
      %v10516 = vmul.f32 0.5, %v10515
      %v10517 = vsub.f32 1.5, %v10516
      %v10518 = vmul.f32 %v10513, %v10517
      %vm10519 = vweird.f32 %v10418
      %vm10520 = vweird.f32 %v10513
      %vm10521 = vmor %vm10519, %vm10520
      %v10522 = vsel %vm10521, %v10513, %v10518
      %v10523 = vrsqrt.pop %v10419
      %v10524 = vmul.f32 %v10523, %v10419
      %v10525 = vmul.f32 %v10524, %v10523
      %v10526 = vmul.f32 0.5, %v10525
      %v10527 = vsub.f32 1.5, %v10526
      %v10528 = vmul.f32 %v10523, %v10527
      %vm10529 = vweird.f32 %v10419
      %vm10530 = vweird.f32 %v10523
      %vm10531 = vmor %vm10529, %vm10530
      %v10532 = vsel %vm10531, %v10523, %v10528
      %v10533 = vrsqrt.pop %v10420
      %v10534 = vmul.f32 %v10533, %v10420
      %v10535 = vmul.f32 %v10534, %v10533
      %v10536 = vmul.f32 0.5, %v10535
      %v10537 = vsub.f32 1.5, %v10536
      %v10538 = vmul.f32 %v10533, %v10537
      %vm10539 = vweird.f32 %v10420
      %vm10540 = vweird.f32 %v10533
      %vm10541 = vmor %vm10539, %vm10540
      %v10542 = vsel %vm10541, %v10533, %v10538
      %v10543 = vrsqrt.pop %v10421
      %v10544 = vmul.f32 %v10543, %v10421
      %v10545 = vmul.f32 %v10544, %v10543
      %v10546 = vmul.f32 0.5, %v10545
      %v10547 = vsub.f32 1.5, %v10546
      %v10548 = vmul.f32 %v10543, %v10547
      %vm10549 = vweird.f32 %v10421
      %vm10550 = vweird.f32 %v10543
      %vm10551 = vmor %vm10549, %vm10550
      %v10552 = vsel %vm10551, %v10543, %v10548
      %v10553 = vrsqrt.pop %v10422
      %v10554 = vmul.f32 %v10553, %v10422
      %v10555 = vmul.f32 %v10554, %v10553
      %v10556 = vmul.f32 0.5, %v10555
      %v10557 = vsub.f32 1.5, %v10556
      %v10558 = vmul.f32 %v10553, %v10557
      %vm10559 = vweird.f32 %v10422
      %vm10560 = vweird.f32 %v10553
      %vm10561 = vmor %vm10559, %vm10560
      %v10562 = vsel %vm10561, %v10553, %v10558
      %v10563 = vrsqrt.pop %v10423
      %v10564 = vmul.f32 %v10563, %v10423
      %v10565 = vmul.f32 %v10564, %v10563
      %v10566 = vmul.f32 0.5, %v10565
      %v10567 = vsub.f32 1.5, %v10566
      %v10568 = vmul.f32 %v10563, %v10567
      %vm10569 = vweird.f32 %v10423
      %vm10570 = vweird.f32 %v10563
      %vm10571 = vmor %vm10569, %vm10570
      %v10572 = vsel %vm10571, %v10563, %v10568
      %v10573 = vrsqrt.pop %v10424
      %v10574 = vmul.f32 %v10573, %v10424
      %v10575 = vmul.f32 %v10574, %v10573
      %v10576 = vmul.f32 0.5, %v10575
      %v10577 = vsub.f32 1.5, %v10576
      %v10578 = vmul.f32 %v10573, %v10577
      %vm10579 = vweird.f32 %v10424
      %vm10580 = vweird.f32 %v10573
      %vm10581 = vmor %vm10579, %vm10580
      %v10582 = vsel %vm10581, %v10573, %v10578
      %v10583 = vrsqrt.pop %v10425
      %v10584 = vmul.f32 %v10583, %v10425
      %v10585 = vmul.f32 %v10584, %v10583
      %v10586 = vmul.f32 0.5, %v10585
      %v10587 = vsub.f32 1.5, %v10586
      %v10588 = vmul.f32 %v10583, %v10587
      %vm10589 = vweird.f32 %v10425
      %vm10590 = vweird.f32 %v10583
      %vm10591 = vmor %vm10589, %vm10590
      %v10592 = vsel %vm10591, %v10583, %v10588
      %v10593 = vrsqrt.pop %v10426
      %v10594 = vmul.f32 %v10593, %v10426
      %v10595 = vmul.f32 %v10594, %v10593
      %v10596 = vmul.f32 0.5, %v10595
      %v10597 = vsub.f32 1.5, %v10596
      %v10598 = vmul.f32 %v10593, %v10597
      %vm10599 = vweird.f32 %v10426
      %vm10600 = vweird.f32 %v10593
      %vm10601 = vmor %vm10599, %vm10600
      %v10602 = vsel %vm10601, %v10593, %v10598
      %v10603 = vrsqrt.pop %v10427
      %v10604 = vmul.f32 %v10603, %v10427
      %v10605 = vmul.f32 %v10604, %v10603
      %v10606 = vmul.f32 0.5, %v10605
      %v10607 = vsub.f32 1.5, %v10606
      %v10608 = vmul.f32 %v10603, %v10607
      %vm10609 = vweird.f32 %v10427
      %vm10610 = vweird.f32 %v10603
      %vm10611 = vmor %vm10609, %vm10610
      %v10612 = vsel %vm10611, %v10603, %v10608
      %v10613 = vrsqrt.pop %v10428
      %v10614 = vmul.f32 %v10613, %v10428
      %v10615 = vmul.f32 %v10614, %v10613
      %v10616 = vmul.f32 0.5, %v10615
      %v10617 = vsub.f32 1.5, %v10616
      %v10618 = vmul.f32 %v10613, %v10617
      %vm10619 = vweird.f32 %v10428
      %vm10620 = vweird.f32 %v10613
      %vm10621 = vmor %vm10619, %vm10620
      %v10622 = vsel %vm10621, %v10613, %v10618
      %v10623 = vrsqrt.pop %v10429
      %v10624 = vmul.f32 %v10623, %v10429
      %v10625 = vmul.f32 %v10624, %v10623
      %v10626 = vmul.f32 0.5, %v10625
      %v10627 = vsub.f32 1.5, %v10626
      %v10628 = vmul.f32 %v10623, %v10627
      %vm10629 = vweird.f32 %v10429
      %vm10630 = vweird.f32 %v10623
      %vm10631 = vmor %vm10629, %vm10630
      %v10632 = vsel %vm10631, %v10623, %v10628
      %v10633 = vrsqrt.pop %v10430
      %v10634 = vmul.f32 %v10633, %v10430
      %v10635 = vmul.f32 %v10634, %v10633
      %v10636 = vmul.f32 0.5, %v10635
      %v10637 = vsub.f32 1.5, %v10636
      %v10638 = vmul.f32 %v10633, %v10637
      %vm10639 = vweird.f32 %v10430
      %vm10640 = vweird.f32 %v10633
      %vm10641 = vmor %vm10639, %vm10640
      %v10642 = vsel %vm10641, %v10633, %v10638
      %v10643 = vrsqrt.pop %v10431
      %v10644 = vmul.f32 %v10643, %v10431
      %v10645 = vmul.f32 %v10644, %v10643
      %v10646 = vmul.f32 0.5, %v10645
      %v10647 = vsub.f32 1.5, %v10646
      %v10648 = vmul.f32 %v10643, %v10647
      %vm10649 = vweird.f32 %v10431
      %vm10650 = vweird.f32 %v10643
      %vm10651 = vmor %vm10649, %vm10650
      %v10652 = vsel %vm10651, %v10643, %v10648
      %v10653 = vrsqrt.pop %v10432
      %v10654 = vmul.f32 %v10653, %v10432
      %v10655 = vmul.f32 %v10654, %v10653
      %v10656 = vmul.f32 0.5, %v10655
      %v10657 = vsub.f32 1.5, %v10656
      %v10658 = vmul.f32 %v10653, %v10657
      %vm10659 = vweird.f32 %v10432
      %vm10660 = vweird.f32 %v10653
      %vm10661 = vmor %vm10659, %vm10660
      %v10662 = vsel %vm10661, %v10653, %v10658
      %v10663 = vrsqrt.pop %v10433
      %v10664 = vmul.f32 %v10663, %v10433
      %v10665 = vmul.f32 %v10664, %v10663
      %v10666 = vmul.f32 0.5, %v10665
      %v10667 = vsub.f32 1.5, %v10666
      %v10668 = vmul.f32 %v10663, %v10667
      %vm10669 = vweird.f32 %v10433
      %vm10670 = vweird.f32 %v10663
      %vm10671 = vmor %vm10669, %vm10670
      %v10672 = vsel %vm10671, %v10663, %v10668
      %v10673 = vrsqrt.pop %v10434
      %v10674 = vmul.f32 %v10673, %v10434
      %v10675 = vmul.f32 %v10674, %v10673
      %v10676 = vmul.f32 0.5, %v10675
      %v10677 = vsub.f32 1.5, %v10676
      %v10678 = vmul.f32 %v10673, %v10677
      %vm10679 = vweird.f32 %v10434
      %vm10680 = vweird.f32 %v10673
      %vm10681 = vmor %vm10679, %vm10680
      %v10682 = vsel %vm10681, %v10673, %v10678
      %v10683 = vrsqrt.pop %v10435
      %v10684 = vmul.f32 %v10683, %v10435
      %v10685 = vmul.f32 %v10684, %v10683
      %v10686 = vmul.f32 0.5, %v10685
      %v10687 = vsub.f32 1.5, %v10686
      %v10688 = vmul.f32 %v10683, %v10687
      %vm10689 = vweird.f32 %v10435
      %vm10690 = vweird.f32 %v10683
      %vm10691 = vmor %vm10689, %vm10690
      %v10692 = vsel %vm10691, %v10683, %v10688
      %v10693 = vrsqrt.pop %v10436
      %v10694 = vmul.f32 %v10693, %v10436
      %v10695 = vmul.f32 %v10694, %v10693
      %v10696 = vmul.f32 0.5, %v10695
      %v10697 = vsub.f32 1.5, %v10696
      %v10698 = vmul.f32 %v10693, %v10697
      %vm10699 = vweird.f32 %v10436
      %vm10700 = vweird.f32 %v10693
      %vm10701 = vmor %vm10699, %vm10700
      %v10702 = vsel %vm10701, %v10693, %v10698
      %v10703 = vrsqrt.pop %v10437
      %v10704 = vmul.f32 %v10703, %v10437
      %v10705 = vmul.f32 %v10704, %v10703
      %v10706 = vmul.f32 0.5, %v10705
      %v10707 = vsub.f32 1.5, %v10706
      %v10708 = vmul.f32 %v10703, %v10707
      %vm10709 = vweird.f32 %v10437
      %vm10710 = vweird.f32 %v10703
      %vm10711 = vmor %vm10709, %vm10710
      %v10712 = vsel %vm10711, %v10703, %v10708
      %v10713 = vrsqrt.pop %v10438
      %v10714 = vmul.f32 %v10713, %v10438
      %v10715 = vmul.f32 %v10714, %v10713
      %v10716 = vmul.f32 0.5, %v10715
      %v10717 = vsub.f32 1.5, %v10716
      %v10718 = vmul.f32 %v10713, %v10717
      %vm10719 = vweird.f32 %v10438
      %vm10720 = vweird.f32 %v10713
      %vm10721 = vmor %vm10719, %vm10720
      %v10722 = vsel %vm10721, %v10713, %v10718
      %v10723 = vrsqrt.pop %v10439
      %v10724 = vmul.f32 %v10723, %v10439
      %v10725 = vmul.f32 %v10724, %v10723
      %v10726 = vmul.f32 0.5, %v10725
      %v10727 = vsub.f32 1.5, %v10726
      %v10728 = vmul.f32 %v10723, %v10727
      %vm10729 = vweird.f32 %v10439
      %vm10730 = vweird.f32 %v10723
      %vm10731 = vmor %vm10729, %vm10730
      %v10732 = vsel %vm10731, %v10723, %v10728
      %v10733 = vrsqrt.pop %v10440
      %v10734 = vmul.f32 %v10733, %v10440
      %v10735 = vmul.f32 %v10734, %v10733
      %v10736 = vmul.f32 0.5, %v10735
      %v10737 = vsub.f32 1.5, %v10736
      %v10738 = vmul.f32 %v10733, %v10737
      %vm10739 = vweird.f32 %v10440
      %vm10740 = vweird.f32 %v10733
      %vm10741 = vmor %vm10739, %vm10740
      %v10742 = vsel %vm10741, %v10733, %v10738
      %v10743 = vrsqrt.pop %v10441
      %v10744 = vmul.f32 %v10743, %v10441
      %v10745 = vmul.f32 %v10744, %v10743
      %v10746 = vmul.f32 0.5, %v10745
      %v10747 = vsub.f32 1.5, %v10746
      %v10748 = vmul.f32 %v10743, %v10747
      %vm10749 = vweird.f32 %v10441
      %vm10750 = vweird.f32 %v10743
      %vm10751 = vmor %vm10749, %vm10750
      %v10752 = vsel %vm10751, %v10743, %v10748
      %v10753 = vrsqrt.pop %v10442
      %v10754 = vmul.f32 %v10753, %v10442
      %v10755 = vmul.f32 %v10754, %v10753
      %v10756 = vmul.f32 0.5, %v10755
      %v10757 = vsub.f32 1.5, %v10756
      %v10758 = vmul.f32 %v10753, %v10757
      %vm10759 = vweird.f32 %v10442
      %vm10760 = vweird.f32 %v10753
      %vm10761 = vmor %vm10759, %vm10760
      %v10762 = vsel %vm10761, %v10753, %v10758
      %v10763 = vmul.f32 %v10219, %v10452
      %v10764 = vmul.f32 %v10220, %v10462
      %v10765 = vmul.f32 %v10221, %v10472
      %v10766 = vmul.f32 %v10222, %v10482
      %v10767 = vmul.f32 %v10223, %v10492
      %v10768 = vmul.f32 %v10224, %v10502
      %v10769 = vmul.f32 %v10225, %v10512
      %v10770 = vmul.f32 %v10226, %v10522
      %v10771 = vmul.f32 %v10227, %v10532
      %v10772 = vmul.f32 %v10228, %v10542
      %v10773 = vmul.f32 %v10229, %v10552
      %v10774 = vmul.f32 %v10230, %v10562
      %v10775 = vmul.f32 %v10231, %v10572
      %v10776 = vmul.f32 %v10232, %v10582
      %v10777 = vmul.f32 %v10233, %v10592
      %v10778 = vmul.f32 %v10234, %v10602
      %v10779 = vmul.f32 %v10235, %v10612
      %v10780 = vmul.f32 %v10236, %v10622
      %v10781 = vmul.f32 %v10237, %v10632
      %v10782 = vmul.f32 %v10238, %v10642
      %v10783 = vmul.f32 %v10239, %v10652
      %v10784 = vmul.f32 %v10240, %v10662
      %v10785 = vmul.f32 %v10241, %v10672
      %v10786 = vmul.f32 %v10242, %v10682
      %v10787 = vmul.f32 %v10243, %v10692
      %v10788 = vmul.f32 %v10244, %v10702
      %v10789 = vmul.f32 %v10245, %v10712
      %v10790 = vmul.f32 %v10246, %v10722
      %v10791 = vmul.f32 %v10247, %v10732
      %v10792 = vmul.f32 %v10248, %v10742
      %v10793 = vmul.f32 %v10249, %v10752
      %v10794 = vmul.f32 %v10250, %v10762
      %s10795 = scalar_lea.vmem %s11, 1
      %v10796 = vld [vmem:[%s10795] sm:$0x1]
      %v10798 = vperm.slane %v10796, 0
      %v10800 = vmul.f32 %v10763, %v10798
      %v10801 = vmul.f32 %v10764, %v10798
      %v10802 = vmul.f32 %v10765, %v10798
      %v10803 = vmul.f32 %v10766, %v10798
      %v10804 = vmul.f32 %v10767, %v10798
      %v10805 = vmul.f32 %v10768, %v10798
      %v10806 = vmul.f32 %v10769, %v10798
      %v10807 = vmul.f32 %v10770, %v10798
      %v10808 = vmul.f32 %v10771, %v10798
      %v10809 = vmul.f32 %v10772, %v10798
      %v10810 = vmul.f32 %v10773, %v10798
      %v10811 = vmul.f32 %v10774, %v10798
      %v10812 = vmul.f32 %v10775, %v10798
      %v10813 = vmul.f32 %v10776, %v10798
      %v10814 = vmul.f32 %v10777, %v10798
      %v10815 = vmul.f32 %v10778, %v10798
      %v10816 = vmul.f32 %v10779, %v10798
      %v10817 = vmul.f32 %v10780, %v10798
      %v10818 = vmul.f32 %v10781, %v10798
      %v10819 = vmul.f32 %v10782, %v10798
      %v10820 = vmul.f32 %v10783, %v10798
      %v10821 = vmul.f32 %v10784, %v10798
      %v10822 = vmul.f32 %v10785, %v10798
      %v10823 = vmul.f32 %v10786, %v10798
      %v10824 = vmul.f32 %v10787, %v10798
      %v10825 = vmul.f32 %v10788, %v10798
      %v10826 = vmul.f32 %v10789, %v10798
      %v10827 = vmul.f32 %v10790, %v10798
      %v10828 = vmul.f32 %v10791, %v10798
      %v10829 = vmul.f32 %v10792, %v10798
      %v10830 = vmul.f32 %v10793, %v10798
      %v10831 = vmul.f32 %v10794, %v10798
      %s10832 = scalar_lea.vmem %s12, 1
      %v10833 = vld [vmem:[%s10832] sm:$0x1]
      %v10835 = vperm.slane %v10833, 0
      %v10837 = vadd.f32 %v10800, %v10835
      %v10838 = vadd.f32 %v10801, %v10835
      %v10839 = vadd.f32 %v10802, %v10835
      %v10840 = vadd.f32 %v10803, %v10835
      %v10841 = vadd.f32 %v10804, %v10835
      %v10842 = vadd.f32 %v10805, %v10835
      %v10843 = vadd.f32 %v10806, %v10835
      %v10844 = vadd.f32 %v10807, %v10835
      %v10845 = vadd.f32 %v10808, %v10835
      %v10846 = vadd.f32 %v10809, %v10835
      %v10847 = vadd.f32 %v10810, %v10835
      %v10848 = vadd.f32 %v10811, %v10835
      %v10849 = vadd.f32 %v10812, %v10835
      %v10850 = vadd.f32 %v10813, %v10835
      %v10851 = vadd.f32 %v10814, %v10835
      %v10852 = vadd.f32 %v10815, %v10835
      %v10853 = vadd.f32 %v10816, %v10835
      %v10854 = vadd.f32 %v10817, %v10835
      %v10855 = vadd.f32 %v10818, %v10835
      %v10856 = vadd.f32 %v10819, %v10835
      %v10857 = vadd.f32 %v10820, %v10835
      %v10858 = vadd.f32 %v10821, %v10835
      %v10859 = vadd.f32 %v10822, %v10835
      %v10860 = vadd.f32 %v10823, %v10835
      %v10861 = vadd.f32 %v10824, %v10835
      %v10862 = vadd.f32 %v10825, %v10835
      %v10863 = vadd.f32 %v10826, %v10835
      %v10864 = vadd.f32 %v10827, %v10835
      %v10865 = vadd.f32 %v10828, %v10835
      %v10866 = vadd.f32 %v10829, %v10835
      %v10867 = vadd.f32 %v10830, %v10835
      %v10868 = vadd.f32 %v10831, %v10835
      %v10869 = vpack.c.bf16 %v10838, %v10837
      %v10870 = vpack.c.bf16 %v10840, %v10839
      %v10871 = vpack.c.bf16 %v10842, %v10841
      %v10872 = vpack.c.bf16 %v10844, %v10843
      %v10873 = vpack.c.bf16 %v10846, %v10845
      %v10874 = vpack.c.bf16 %v10848, %v10847
      %v10875 = vpack.c.bf16 %v10850, %v10849
      %v10876 = vpack.c.bf16 %v10852, %v10851
      %v10877 = vpack.c.bf16 %v10854, %v10853
      %v10878 = vpack.c.bf16 %v10856, %v10855
      %v10879 = vpack.c.bf16 %v10858, %v10857
      %v10880 = vpack.c.bf16 %v10860, %v10859
      %v10881 = vpack.c.bf16 %v10862, %v10861
      %v10882 = vpack.c.bf16 %v10864, %v10863
      %v10883 = vpack.c.bf16 %v10866, %v10865
      %v10884 = vpack.c.bf16 %v10868, %v10867
      %s10885 = scalar_lea.vmem %s13, 8
      %v10886 = vld [vmem:[%s10885] sm:$0xf]
      %v10887 = vld [vmem:[%s10885 + $0x4] sm:$0xf]
      %s10888 = scalar_lea.vmem %s14, 1
      %v10889 = vld [vmem:[%s10888] sm:$0x1]
      %v10891 = vperm.slane %v10889, 0
      %v10895 = vunpack.c.l.b16 %v10886
      %v10896 = vunpack.c.l.b16 %v10887
      %v10897 = vpack.c.b16 %v10896, %v10895
      %v10900 = vsel %vm994, %v10869, 0
      %v10903 = vsel %vm994, %v10870, 0
      %v10906 = vsel %vm994, %v10871, 0
      %v10909 = vsel %vm994, %v10872, 0
      %v10912 = vsel %vm994, %v10873, 0
      %v10915 = vsel %vm994, %v10874, 0
      %v10918 = vsel %vm994, %v10875, 0
      %v10921 = vsel %vm994, %v10876, 0
      %v10924 = vsel %vm994, %v10877, 0
      %v10927 = vsel %vm994, %v10878, 0
      %v10930 = vsel %vm994, %v10879, 0
      %v10933 = vsel %vm994, %v10880, 0
      %v10936 = vsel %vm994, %v10881, 0
      %v10939 = vsel %vm994, %v10882, 0
      %v10942 = vsel %vm994, %v10883, 0
      %v10945 = vsel %vm994, %v10884, 0
      %10947 = vmatpush.bf16.msra.mxu0 0
      %10948 = vmatpush.bf16.msra.mxu0 0
      %10949 = vmatpush.bf16.msra.mxu0 0
      %10950 = vmatpush.bf16.msra.mxu0 0
      %10951 = vmatpush.bf16.msra.mxu0 0
      %10952 = vmatpush.bf16.msra.mxu0 0
      %10953 = vmatpush.bf16.msra.mxu0 0
      %10954 = vmatpush.bf16.msra.mxu0 %v10897
      %10955 = vmatmul.bf16.gmra.mxu0 %v10900
      %v10956 = vpop.f32.mrf.mxu0
      %v10957 = vadd.f32 %v10891, %v10956
      %v10958 = vpop.f32.mrf.mxu0
      %v10959 = vadd.f32 %v10891, %v10958
      %10960 = vmatmul.bf16.gmra.mxu0 %v10903
      %v10961 = vpop.f32.mrf.mxu0
      %v10962 = vadd.f32 %v10891, %v10961
      %v10963 = vpop.f32.mrf.mxu0
      %v10964 = vadd.f32 %v10891, %v10963
      %10965 = vmatmul.bf16.gmra.mxu0 %v10906
      %v10966 = vpop.f32.mrf.mxu0
      %v10967 = vadd.f32 %v10891, %v10966
      %v10968 = vpop.f32.mrf.mxu0
      %v10969 = vadd.f32 %v10891, %v10968
      %10970 = vmatmul.bf16.gmra.mxu0 %v10909
      %v10971 = vpop.f32.mrf.mxu0
      %v10972 = vadd.f32 %v10891, %v10971
      %v10973 = vpop.f32.mrf.mxu0
      %v10974 = vadd.f32 %v10891, %v10973
      %10975 = vmatmul.bf16.gmra.mxu0 %v10912
      %v10976 = vpop.f32.mrf.mxu0
      %v10977 = vadd.f32 %v10891, %v10976
      %v10978 = vpop.f32.mrf.mxu0
      %v10979 = vadd.f32 %v10891, %v10978
      %10980 = vmatmul.bf16.gmra.mxu0 %v10915
      %v10981 = vpop.f32.mrf.mxu0
      %v10982 = vadd.f32 %v10891, %v10981
      %v10983 = vpop.f32.mrf.mxu0
      %v10984 = vadd.f32 %v10891, %v10983
      %10985 = vmatmul.bf16.gmra.mxu0 %v10918
      %v10986 = vpop.f32.mrf.mxu0
      %v10987 = vadd.f32 %v10891, %v10986
      %v10988 = vpop.f32.mrf.mxu0
      %v10989 = vadd.f32 %v10891, %v10988
      %10990 = vmatmul.bf16.gmra.mxu0 %v10921
      %v10991 = vpop.f32.mrf.mxu0
      %v10992 = vadd.f32 %v10891, %v10991
      %v10993 = vpop.f32.mrf.mxu0
      %v10994 = vadd.f32 %v10891, %v10993
      %10995 = vmatmul.bf16.gmra.mxu0 %v10924
      %v10996 = vpop.f32.mrf.mxu0
      %v10997 = vadd.f32 %v10891, %v10996
      %v10998 = vpop.f32.mrf.mxu0
      %v10999 = vadd.f32 %v10891, %v10998
      %11000 = vmatmul.bf16.gmra.mxu0 %v10927
      %v11001 = vpop.f32.mrf.mxu0
      %v11002 = vadd.f32 %v10891, %v11001
      %v11003 = vpop.f32.mrf.mxu0
      %v11004 = vadd.f32 %v10891, %v11003
      %11005 = vmatmul.bf16.gmra.mxu0 %v10930
      %v11006 = vpop.f32.mrf.mxu0
      %v11007 = vadd.f32 %v10891, %v11006
      %v11008 = vpop.f32.mrf.mxu0
      %v11009 = vadd.f32 %v10891, %v11008
      %11010 = vmatmul.bf16.gmra.mxu0 %v10933
      %v11011 = vpop.f32.mrf.mxu0
      %v11012 = vadd.f32 %v10891, %v11011
      %v11013 = vpop.f32.mrf.mxu0
      %v11014 = vadd.f32 %v10891, %v11013
      %11015 = vmatmul.bf16.gmra.mxu0 %v10936
      %v11016 = vpop.f32.mrf.mxu0
      %v11017 = vadd.f32 %v10891, %v11016
      %v11018 = vpop.f32.mrf.mxu0
      %v11019 = vadd.f32 %v10891, %v11018
      %11020 = vmatmul.bf16.gmra.mxu0 %v10939
      %v11021 = vpop.f32.mrf.mxu0
      %v11022 = vadd.f32 %v10891, %v11021
      %v11023 = vpop.f32.mrf.mxu0
      %v11024 = vadd.f32 %v10891, %v11023
      %11025 = vmatmul.bf16.gmra.mxu0 %v10942
      %v11026 = vpop.f32.mrf.mxu0
      %v11027 = vadd.f32 %v10891, %v11026
      %v11028 = vpop.f32.mrf.mxu0
      %v11029 = vadd.f32 %v10891, %v11028
      %11030 = vmatmul.bf16.gmra.mxu0 %v10945
      %v11031 = vpop.f32.mrf.mxu0
      %v11032 = vadd.f32 %v10891, %v11031
      %v11033 = vpop.f32.mrf.mxu0
      %v11034 = vadd.f32 %v10891, %v11033
      %11035 = vdwg.mxu0
      %v11036 = vmul.f32 %v10957, %v10957
      %v11037 = vmul.f32 %v10959, %v10959
      %v11038 = vmul.f32 %v10962, %v10962
      %v11039 = vmul.f32 %v10964, %v10964
      %v11040 = vmul.f32 %v10967, %v10967
      %v11041 = vmul.f32 %v10969, %v10969
      %v11042 = vmul.f32 %v10972, %v10972
      %v11043 = vmul.f32 %v10974, %v10974
      %v11044 = vmul.f32 %v10977, %v10977
      %v11045 = vmul.f32 %v10979, %v10979
      %v11046 = vmul.f32 %v10982, %v10982
      %v11047 = vmul.f32 %v10984, %v10984
      %v11048 = vmul.f32 %v10987, %v10987
      %v11049 = vmul.f32 %v10989, %v10989
      %v11050 = vmul.f32 %v10992, %v10992
      %v11051 = vmul.f32 %v10994, %v10994
      %v11052 = vmul.f32 %v10997, %v10997
      %v11053 = vmul.f32 %v10999, %v10999
      %v11054 = vmul.f32 %v11002, %v11002
      %v11055 = vmul.f32 %v11004, %v11004
      %v11056 = vmul.f32 %v11007, %v11007
      %v11057 = vmul.f32 %v11009, %v11009
      %v11058 = vmul.f32 %v11012, %v11012
      %v11059 = vmul.f32 %v11014, %v11014
      %v11060 = vmul.f32 %v11017, %v11017
      %v11061 = vmul.f32 %v11019, %v11019
      %v11062 = vmul.f32 %v11022, %v11022
      %v11063 = vmul.f32 %v11024, %v11024
      %v11064 = vmul.f32 %v11027, %v11027
      %v11065 = vmul.f32 %v11029, %v11029
      %v11066 = vmul.f32 %v11032, %v11032
      %v11067 = vmul.f32 %v11034, %v11034
      %v11068 = vmul.f32 %v10957, %v11036
      %v11069 = vmul.f32 %v10959, %v11037
      %v11070 = vmul.f32 %v10962, %v11038
      %v11071 = vmul.f32 %v10964, %v11039
      %v11072 = vmul.f32 %v10967, %v11040
      %v11073 = vmul.f32 %v10969, %v11041
      %v11074 = vmul.f32 %v10972, %v11042
      %v11075 = vmul.f32 %v10974, %v11043
      %v11076 = vmul.f32 %v10977, %v11044
      %v11077 = vmul.f32 %v10979, %v11045
      %v11078 = vmul.f32 %v10982, %v11046
      %v11079 = vmul.f32 %v10984, %v11047
      %v11080 = vmul.f32 %v10987, %v11048
      %v11081 = vmul.f32 %v10989, %v11049
      %v11082 = vmul.f32 %v10992, %v11050
      %v11083 = vmul.f32 %v10994, %v11051
      %v11084 = vmul.f32 %v10997, %v11052
      %v11085 = vmul.f32 %v10999, %v11053
      %v11086 = vmul.f32 %v11002, %v11054
      %v11087 = vmul.f32 %v11004, %v11055
      %v11088 = vmul.f32 %v11007, %v11056
      %v11089 = vmul.f32 %v11009, %v11057
      %v11090 = vmul.f32 %v11012, %v11058
      %v11091 = vmul.f32 %v11014, %v11059
      %v11092 = vmul.f32 %v11017, %v11060
      %v11093 = vmul.f32 %v11019, %v11061
      %v11094 = vmul.f32 %v11022, %v11062
      %v11095 = vmul.f32 %v11024, %v11063
      %v11096 = vmul.f32 %v11027, %v11064
      %v11097 = vmul.f32 %v11029, %v11065
      %v11098 = vmul.f32 %v11032, %v11066
      %v11099 = vmul.f32 %v11034, %v11067
      %v11100 = vmul.f32 %v11068, 0.044715
      %v11101 = vmul.f32 %v11069, 0.044715
      %v11102 = vmul.f32 %v11070, 0.044715
      %v11103 = vmul.f32 %v11071, 0.044715
      %v11104 = vmul.f32 %v11072, 0.044715
      %v11105 = vmul.f32 %v11073, 0.044715
      %v11106 = vmul.f32 %v11074, 0.044715
      %v11107 = vmul.f32 %v11075, 0.044715
      %v11108 = vmul.f32 %v11076, 0.044715
      %v11109 = vmul.f32 %v11077, 0.044715
      %v11110 = vmul.f32 %v11078, 0.044715
      %v11111 = vmul.f32 %v11079, 0.044715
      %v11112 = vmul.f32 %v11080, 0.044715
      %v11113 = vmul.f32 %v11081, 0.044715
      %v11114 = vmul.f32 %v11082, 0.044715
      %v11115 = vmul.f32 %v11083, 0.044715
      %v11116 = vmul.f32 %v11084, 0.044715
      %v11117 = vmul.f32 %v11085, 0.044715
      %v11118 = vmul.f32 %v11086, 0.044715
      %v11119 = vmul.f32 %v11087, 0.044715
      %v11120 = vmul.f32 %v11088, 0.044715
      %v11121 = vmul.f32 %v11089, 0.044715
      %v11122 = vmul.f32 %v11090, 0.044715
      %v11123 = vmul.f32 %v11091, 0.044715
      %v11124 = vmul.f32 %v11092, 0.044715
      %v11125 = vmul.f32 %v11093, 0.044715
      %v11126 = vmul.f32 %v11094, 0.044715
      %v11127 = vmul.f32 %v11095, 0.044715
      %v11128 = vmul.f32 %v11096, 0.044715
      %v11129 = vmul.f32 %v11097, 0.044715
      %v11130 = vmul.f32 %v11098, 0.044715
      %v11131 = vmul.f32 %v11099, 0.044715
      %v11132 = vadd.f32 %v10957, %v11100
      %v11133 = vadd.f32 %v10959, %v11101
      %v11134 = vadd.f32 %v10962, %v11102
      %v11135 = vadd.f32 %v10964, %v11103
      %v11136 = vadd.f32 %v10967, %v11104
      %v11137 = vadd.f32 %v10969, %v11105
      %v11138 = vadd.f32 %v10972, %v11106
      %v11139 = vadd.f32 %v10974, %v11107
      %v11140 = vadd.f32 %v10977, %v11108
      %v11141 = vadd.f32 %v10979, %v11109
      %v11142 = vadd.f32 %v10982, %v11110
      %v11143 = vadd.f32 %v10984, %v11111
      %v11144 = vadd.f32 %v10987, %v11112
      %v11145 = vadd.f32 %v10989, %v11113
      %v11146 = vadd.f32 %v10992, %v11114
      %v11147 = vadd.f32 %v10994, %v11115
      %v11148 = vadd.f32 %v10997, %v11116
      %v11149 = vadd.f32 %v10999, %v11117
      %v11150 = vadd.f32 %v11002, %v11118
      %v11151 = vadd.f32 %v11004, %v11119
      %v11152 = vadd.f32 %v11007, %v11120
      %v11153 = vadd.f32 %v11009, %v11121
      %v11154 = vadd.f32 %v11012, %v11122
      %v11155 = vadd.f32 %v11014, %v11123
      %v11156 = vadd.f32 %v11017, %v11124
      %v11157 = vadd.f32 %v11019, %v11125
      %v11158 = vadd.f32 %v11022, %v11126
      %v11159 = vadd.f32 %v11024, %v11127
      %v11160 = vadd.f32 %v11027, %v11128
      %v11161 = vadd.f32 %v11029, %v11129
      %v11162 = vadd.f32 %v11032, %v11130
      %v11163 = vadd.f32 %v11034, %v11131
      %v11164 = vmul.f32 %v11132, 0.7978846
      %v11165 = vmul.f32 %v11133, 0.7978846
      %v11166 = vmul.f32 %v11134, 0.7978846
      %v11167 = vmul.f32 %v11135, 0.7978846
      %v11168 = vmul.f32 %v11136, 0.7978846
      %v11169 = vmul.f32 %v11137, 0.7978846
      %v11170 = vmul.f32 %v11138, 0.7978846
      %v11171 = vmul.f32 %v11139, 0.7978846
      %v11172 = vmul.f32 %v11140, 0.7978846
      %v11173 = vmul.f32 %v11141, 0.7978846
      %v11174 = vmul.f32 %v11142, 0.7978846
      %v11175 = vmul.f32 %v11143, 0.7978846
      %v11176 = vmul.f32 %v11144, 0.7978846
      %v11177 = vmul.f32 %v11145, 0.7978846
      %v11178 = vmul.f32 %v11146, 0.7978846
      %v11179 = vmul.f32 %v11147, 0.7978846
      %v11180 = vmul.f32 %v11148, 0.7978846
      %v11181 = vmul.f32 %v11149, 0.7978846
      %v11182 = vmul.f32 %v11150, 0.7978846
      %v11183 = vmul.f32 %v11151, 0.7978846
      %v11184 = vmul.f32 %v11152, 0.7978846
      %v11185 = vmul.f32 %v11153, 0.7978846
      %v11186 = vmul.f32 %v11154, 0.7978846
      %v11187 = vmul.f32 %v11155, 0.7978846
      %v11188 = vmul.f32 %v11156, 0.7978846
      %v11189 = vmul.f32 %v11157, 0.7978846
      %v11190 = vmul.f32 %v11158, 0.7978846
      %v11191 = vmul.f32 %v11159, 0.7978846
      %v11192 = vmul.f32 %v11160, 0.7978846
      %v11193 = vmul.f32 %v11161, 0.7978846
      %v11194 = vmul.f32 %v11162, 0.7978846
      %v11195 = vmul.f32 %v11163, 0.7978846
      %v11196 = vtanh.pop %v11164
      %v11197 = vtanh.pop %v11165
      %v11198 = vtanh.pop %v11166
      %v11199 = vtanh.pop %v11167
      %v11200 = vtanh.pop %v11168
      %v11201 = vtanh.pop %v11169
      %v11202 = vtanh.pop %v11170
      %v11203 = vtanh.pop %v11171
      %v11204 = vtanh.pop %v11172
      %v11205 = vtanh.pop %v11173
      %v11206 = vtanh.pop %v11174
      %v11207 = vtanh.pop %v11175
      %v11208 = vtanh.pop %v11176
      %v11209 = vtanh.pop %v11177
      %v11210 = vtanh.pop %v11178
      %v11211 = vtanh.pop %v11179
      %v11212 = vtanh.pop %v11180
      %v11213 = vtanh.pop %v11181
      %v11214 = vtanh.pop %v11182
      %v11215 = vtanh.pop %v11183
      %v11216 = vtanh.pop %v11184
      %v11217 = vtanh.pop %v11185
      %v11218 = vtanh.pop %v11186
      %v11219 = vtanh.pop %v11187
      %v11220 = vtanh.pop %v11188
      %v11221 = vtanh.pop %v11189
      %v11222 = vtanh.pop %v11190
      %v11223 = vtanh.pop %v11191
      %v11224 = vtanh.pop %v11192
      %v11225 = vtanh.pop %v11193
      %v11226 = vtanh.pop %v11194
      %v11227 = vtanh.pop %v11195
      %v11228 = vadd.f32 %v11196, 1.0
      %v11229 = vadd.f32 %v11197, 1.0
      %v11230 = vadd.f32 %v11198, 1.0
      %v11231 = vadd.f32 %v11199, 1.0
      %v11232 = vadd.f32 %v11200, 1.0
      %v11233 = vadd.f32 %v11201, 1.0
      %v11234 = vadd.f32 %v11202, 1.0
      %v11235 = vadd.f32 %v11203, 1.0
      %v11236 = vadd.f32 %v11204, 1.0
      %v11237 = vadd.f32 %v11205, 1.0
      %v11238 = vadd.f32 %v11206, 1.0
      %v11239 = vadd.f32 %v11207, 1.0
      %v11240 = vadd.f32 %v11208, 1.0
      %v11241 = vadd.f32 %v11209, 1.0
      %v11242 = vadd.f32 %v11210, 1.0
      %v11243 = vadd.f32 %v11211, 1.0
      %v11244 = vadd.f32 %v11212, 1.0
      %v11245 = vadd.f32 %v11213, 1.0
      %v11246 = vadd.f32 %v11214, 1.0
      %v11247 = vadd.f32 %v11215, 1.0
      %v11248 = vadd.f32 %v11216, 1.0
      %v11249 = vadd.f32 %v11217, 1.0
      %v11250 = vadd.f32 %v11218, 1.0
      %v11251 = vadd.f32 %v11219, 1.0
      %v11252 = vadd.f32 %v11220, 1.0
      %v11253 = vadd.f32 %v11221, 1.0
      %v11254 = vadd.f32 %v11222, 1.0
      %v11255 = vadd.f32 %v11223, 1.0
      %v11256 = vadd.f32 %v11224, 1.0
      %v11257 = vadd.f32 %v11225, 1.0
      %v11258 = vadd.f32 %v11226, 1.0
      %v11259 = vadd.f32 %v11227, 1.0
      %v11260 = vmul.f32 %v11228, 0.5
      %v11261 = vmul.f32 %v11229, 0.5
      %v11262 = vmul.f32 %v11230, 0.5
      %v11263 = vmul.f32 %v11231, 0.5
      %v11264 = vmul.f32 %v11232, 0.5
      %v11265 = vmul.f32 %v11233, 0.5
      %v11266 = vmul.f32 %v11234, 0.5
      %v11267 = vmul.f32 %v11235, 0.5
      %v11268 = vmul.f32 %v11236, 0.5
      %v11269 = vmul.f32 %v11237, 0.5
      %v11270 = vmul.f32 %v11238, 0.5
      %v11271 = vmul.f32 %v11239, 0.5
      %v11272 = vmul.f32 %v11240, 0.5
      %v11273 = vmul.f32 %v11241, 0.5
      %v11274 = vmul.f32 %v11242, 0.5
      %v11275 = vmul.f32 %v11243, 0.5
      %v11276 = vmul.f32 %v11244, 0.5
      %v11277 = vmul.f32 %v11245, 0.5
      %v11278 = vmul.f32 %v11246, 0.5
      %v11279 = vmul.f32 %v11247, 0.5
      %v11280 = vmul.f32 %v11248, 0.5
      %v11281 = vmul.f32 %v11249, 0.5
      %v11282 = vmul.f32 %v11250, 0.5
      %v11283 = vmul.f32 %v11251, 0.5
      %v11284 = vmul.f32 %v11252, 0.5
      %v11285 = vmul.f32 %v11253, 0.5
      %v11286 = vmul.f32 %v11254, 0.5
      %v11287 = vmul.f32 %v11255, 0.5
      %v11288 = vmul.f32 %v11256, 0.5
      %v11289 = vmul.f32 %v11257, 0.5
      %v11290 = vmul.f32 %v11258, 0.5
      %v11291 = vmul.f32 %v11259, 0.5
      %v11292 = vmul.f32 %v10957, %v11260
      %v11293 = vmul.f32 %v10959, %v11261
      %v11294 = vmul.f32 %v10962, %v11262
      %v11295 = vmul.f32 %v10964, %v11263
      %v11296 = vmul.f32 %v10967, %v11264
      %v11297 = vmul.f32 %v10969, %v11265
      %v11298 = vmul.f32 %v10972, %v11266
      %v11299 = vmul.f32 %v10974, %v11267
      %v11300 = vmul.f32 %v10977, %v11268
      %v11301 = vmul.f32 %v10979, %v11269
      %v11302 = vmul.f32 %v10982, %v11270
      %v11303 = vmul.f32 %v10984, %v11271
      %v11304 = vmul.f32 %v10987, %v11272
      %v11305 = vmul.f32 %v10989, %v11273
      %v11306 = vmul.f32 %v10992, %v11274
      %v11307 = vmul.f32 %v10994, %v11275
      %v11308 = vmul.f32 %v10997, %v11276
      %v11309 = vmul.f32 %v10999, %v11277
      %v11310 = vmul.f32 %v11002, %v11278
      %v11311 = vmul.f32 %v11004, %v11279
      %v11312 = vmul.f32 %v11007, %v11280
      %v11313 = vmul.f32 %v11009, %v11281
      %v11314 = vmul.f32 %v11012, %v11282
      %v11315 = vmul.f32 %v11014, %v11283
      %v11316 = vmul.f32 %v11017, %v11284
      %v11317 = vmul.f32 %v11019, %v11285
      %v11318 = vmul.f32 %v11022, %v11286
      %v11319 = vmul.f32 %v11024, %v11287
      %v11320 = vmul.f32 %v11027, %v11288
      %v11321 = vmul.f32 %v11029, %v11289
      %v11322 = vmul.f32 %v11032, %v11290
      %v11323 = vmul.f32 %v11034, %v11291
      %v11324 = vpack.c.bf16 %v11293, %v11292
      %v11325 = vpack.c.bf16 %v11295, %v11294
      %v11326 = vpack.c.bf16 %v11297, %v11296
      %v11327 = vpack.c.bf16 %v11299, %v11298
      %v11328 = vpack.c.bf16 %v11301, %v11300
      %v11329 = vpack.c.bf16 %v11303, %v11302
      %v11330 = vpack.c.bf16 %v11305, %v11304
      %v11331 = vpack.c.bf16 %v11307, %v11306
      %v11332 = vpack.c.bf16 %v11309, %v11308
      %v11333 = vpack.c.bf16 %v11311, %v11310
      %v11334 = vpack.c.bf16 %v11313, %v11312
      %v11335 = vpack.c.bf16 %v11315, %v11314
      %v11336 = vpack.c.bf16 %v11317, %v11316
      %v11337 = vpack.c.bf16 %v11319, %v11318
      %v11338 = vpack.c.bf16 %v11321, %v11320
      %v11339 = vpack.c.bf16 %v11323, %v11322
      %s11340 = scalar_lea.vmem %s15, 32
      %v11341 = vld [vmem:[%s11340] sm:$0xf]
      %v11342 = vld [vmem:[%s11340 + $0x4] sm:$0xf]
      %v11343 = vld [vmem:[%s11340 + $0x8] sm:$0xf]
      %v11344 = vld [vmem:[%s11340 + $0xc] sm:$0xf]
      %v11345 = vld [vmem:[%s11340 + $0x10] sm:$0xf]
      %v11346 = vld [vmem:[%s11340 + $0x14] sm:$0xf]
      %v11347 = vld [vmem:[%s11340 + $0x18] sm:$0xf]
      %v11348 = vld [vmem:[%s11340 + $0x1c] sm:$0xf]
      %v11357 = vunpack.c.l.b16 %v11341
      %v11358 = vunpack.c.l.b16 %v11342
      %v11359 = vunpack.c.l.b16 %v11343
      %v11360 = vunpack.c.l.b16 %v11344
      %v11361 = vunpack.c.l.b16 %v11345
      %v11362 = vunpack.c.l.b16 %v11346
      %v11363 = vunpack.c.l.b16 %v11347
      %v11364 = vunpack.c.l.b16 %v11348
      %v11365 = vpack.c.b16 %v11358, %v11357
      %v11366 = vpack.c.b16 %v11360, %v11359
      %v11367 = vpack.c.b16 %v11362, %v11361
      %v11368 = vpack.c.b16 %v11364, %v11363
      %v11374 = vsel %vm6076, %v11324, 0
      %v11377 = vsel %vm6076, %v11325, 0
      %v11380 = vsel %vm6076, %v11326, 0
      %v11383 = vsel %vm6076, %v11327, 0
      %v11386 = vsel %vm6076, %v11328, 0
      %v11389 = vsel %vm6076, %v11329, 0
      %v11392 = vsel %vm6076, %v11330, 0
      %v11395 = vsel %vm6076, %v11331, 0
      %v11398 = vsel %vm6076, %v11332, 0
      %v11401 = vsel %vm6076, %v11333, 0
      %v11404 = vsel %vm6076, %v11334, 0
      %v11407 = vsel %vm6076, %v11335, 0
      %v11410 = vsel %vm6076, %v11336, 0
      %v11413 = vsel %vm6076, %v11337, 0
      %v11416 = vsel %vm6076, %v11338, 0
      %v11419 = vsel %vm6076, %v11339, 0
      %11421 = vmatpush.bf16.msra.mxu0 0
      %11422 = vmatpush.bf16.msra.mxu0 0
      %11423 = vmatpush.bf16.msra.mxu0 0
      %11424 = vmatpush.bf16.msra.mxu0 0
      %11425 = vmatpush.bf16.msra.mxu0 %v11368
      %11426 = vmatpush.bf16.msra.mxu0 %v11367
      %11427 = vmatpush.bf16.msra.mxu0 %v11366
      %11428 = vmatpush.bf16.msra.mxu0 %v11365
      %11429 = vmatmul.bf16.gmra.mxu0 %v11374
      %v11430 = vpop.f32.mrf.mxu0
      %v11431 = vadd.f32 0.0, %v11430
      %v11432 = vpop.f32.mrf.mxu0
      %v11433 = vadd.f32 0.0, %v11432
      %11434 = vmatmul.bf16.gmra.mxu0 %v11377
      %v11435 = vpop.f32.mrf.mxu0
      %v11436 = vadd.f32 0.0, %v11435
      %v11437 = vpop.f32.mrf.mxu0
      %v11438 = vadd.f32 0.0, %v11437
      %11439 = vmatmul.bf16.gmra.mxu0 %v11380
      %v11440 = vpop.f32.mrf.mxu0
      %v11441 = vadd.f32 0.0, %v11440
      %v11442 = vpop.f32.mrf.mxu0
      %v11443 = vadd.f32 0.0, %v11442
      %11444 = vmatmul.bf16.gmra.mxu0 %v11383
      %v11445 = vpop.f32.mrf.mxu0
      %v11446 = vadd.f32 0.0, %v11445
      %v11447 = vpop.f32.mrf.mxu0
      %v11448 = vadd.f32 0.0, %v11447
      %11449 = vmatmul.bf16.gmra.mxu0 %v11386
      %v11450 = vpop.f32.mrf.mxu0
      %v11451 = vadd.f32 0.0, %v11450
      %v11452 = vpop.f32.mrf.mxu0
      %v11453 = vadd.f32 0.0, %v11452
      %11454 = vmatmul.bf16.gmra.mxu0 %v11389
      %v11455 = vpop.f32.mrf.mxu0
      %v11456 = vadd.f32 0.0, %v11455
      %v11457 = vpop.f32.mrf.mxu0
      %v11458 = vadd.f32 0.0, %v11457
      %11459 = vmatmul.bf16.gmra.mxu0 %v11392
      %v11460 = vpop.f32.mrf.mxu0
      %v11461 = vadd.f32 0.0, %v11460
      %v11462 = vpop.f32.mrf.mxu0
      %v11463 = vadd.f32 0.0, %v11462
      %11464 = vmatmul.bf16.gmra.mxu0 %v11395
      %v11465 = vpop.f32.mrf.mxu0
      %v11466 = vadd.f32 0.0, %v11465
      %v11467 = vpop.f32.mrf.mxu0
      %v11468 = vadd.f32 0.0, %v11467
      %11469 = vmatmul.bf16.gmra.mxu0 %v11398
      %v11470 = vpop.f32.mrf.mxu0
      %v11471 = vadd.f32 0.0, %v11470
      %v11472 = vpop.f32.mrf.mxu0
      %v11473 = vadd.f32 0.0, %v11472
      %11474 = vmatmul.bf16.gmra.mxu0 %v11401
      %v11475 = vpop.f32.mrf.mxu0
      %v11476 = vadd.f32 0.0, %v11475
      %v11477 = vpop.f32.mrf.mxu0
      %v11478 = vadd.f32 0.0, %v11477
      %11479 = vmatmul.bf16.gmra.mxu0 %v11404
      %v11480 = vpop.f32.mrf.mxu0
      %v11481 = vadd.f32 0.0, %v11480
      %v11482 = vpop.f32.mrf.mxu0
      %v11483 = vadd.f32 0.0, %v11482
      %11484 = vmatmul.bf16.gmra.mxu0 %v11407
      %v11485 = vpop.f32.mrf.mxu0
      %v11486 = vadd.f32 0.0, %v11485
      %v11487 = vpop.f32.mrf.mxu0
      %v11488 = vadd.f32 0.0, %v11487
      %11489 = vmatmul.bf16.gmra.mxu0 %v11410
      %v11490 = vpop.f32.mrf.mxu0
      %v11491 = vadd.f32 0.0, %v11490
      %v11492 = vpop.f32.mrf.mxu0
      %v11493 = vadd.f32 0.0, %v11492
      %11494 = vmatmul.bf16.gmra.mxu0 %v11413
      %v11495 = vpop.f32.mrf.mxu0
      %v11496 = vadd.f32 0.0, %v11495
      %v11497 = vpop.f32.mrf.mxu0
      %v11498 = vadd.f32 0.0, %v11497
      %11499 = vmatmul.bf16.gmra.mxu0 %v11416
      %v11500 = vpop.f32.mrf.mxu0
      %v11501 = vadd.f32 0.0, %v11500
      %v11502 = vpop.f32.mrf.mxu0
      %v11503 = vadd.f32 0.0, %v11502
      %11504 = vmatmul.bf16.gmra.mxu0 %v11419
      %v11505 = vpop.f32.mrf.mxu0
      %v11506 = vadd.f32 0.0, %v11505
      %v11507 = vpop.f32.mrf.mxu0
      %v11508 = vadd.f32 0.0, %v11507
      %11509 = vdwg.mxu0
      %v11510 = vadd.f32 %v10059, %v11431
      %v11511 = vadd.f32 %v10060, %v11433
      %v11512 = vadd.f32 %v10061, %v11436
      %v11513 = vadd.f32 %v10062, %v11438
      %v11514 = vadd.f32 %v10063, %v11441
      %v11515 = vadd.f32 %v10064, %v11443
      %v11516 = vadd.f32 %v10065, %v11446
      %v11517 = vadd.f32 %v10066, %v11448
      %v11518 = vadd.f32 %v10067, %v11451
      %v11519 = vadd.f32 %v10068, %v11453
      %v11520 = vadd.f32 %v10069, %v11456
      %v11521 = vadd.f32 %v10070, %v11458
      %v11522 = vadd.f32 %v10071, %v11461
      %v11523 = vadd.f32 %v10072, %v11463
      %v11524 = vadd.f32 %v10073, %v11466
      %v11525 = vadd.f32 %v10074, %v11468
      %v11526 = vadd.f32 %v10075, %v11471
      %v11527 = vadd.f32 %v10076, %v11473
      %v11528 = vadd.f32 %v10077, %v11476
      %v11529 = vadd.f32 %v10078, %v11478
      %v11530 = vadd.f32 %v10079, %v11481
      %v11531 = vadd.f32 %v10080, %v11483
      %v11532 = vadd.f32 %v10081, %v11486
      %v11533 = vadd.f32 %v10082, %v11488
      %v11534 = vadd.f32 %v10083, %v11491
      %v11535 = vadd.f32 %v10084, %v11493
      %v11536 = vadd.f32 %v10085, %v11496
      %v11537 = vadd.f32 %v10086, %v11498
      %v11538 = vadd.f32 %v10087, %v11501
      %v11539 = vadd.f32 %v10088, %v11503
      %v11540 = vadd.f32 %v10089, %v11506
      %v11541 = vadd.f32 %v10090, %v11508
      %s11542 = scalar_lea.vmem %s16, 1
      %v11543 = vld [vmem:[%s11542] sm:$0x1]
      %v11545 = vperm.slane %v11543, 0
      %v11547 = vadd.f32 %v11510, %v11545
      %v11548 = vadd.f32 %v11511, %v11545
      %v11549 = vadd.f32 %v11512, %v11545
      %v11550 = vadd.f32 %v11513, %v11545
      %v11551 = vadd.f32 %v11514, %v11545
      %v11552 = vadd.f32 %v11515, %v11545
      %v11553 = vadd.f32 %v11516, %v11545
      %v11554 = vadd.f32 %v11517, %v11545
      %v11555 = vadd.f32 %v11518, %v11545
      %v11556 = vadd.f32 %v11519, %v11545
      %v11557 = vadd.f32 %v11520, %v11545
      %v11558 = vadd.f32 %v11521, %v11545
      %v11559 = vadd.f32 %v11522, %v11545
      %v11560 = vadd.f32 %v11523, %v11545
      %v11561 = vadd.f32 %v11524, %v11545
      %v11562 = vadd.f32 %v11525, %v11545
      %v11563 = vadd.f32 %v11526, %v11545
      %v11564 = vadd.f32 %v11527, %v11545
      %v11565 = vadd.f32 %v11528, %v11545
      %v11566 = vadd.f32 %v11529, %v11545
      %v11567 = vadd.f32 %v11530, %v11545
      %v11568 = vadd.f32 %v11531, %v11545
      %v11569 = vadd.f32 %v11532, %v11545
      %v11570 = vadd.f32 %v11533, %v11545
      %v11571 = vadd.f32 %v11534, %v11545
      %v11572 = vadd.f32 %v11535, %v11545
      %v11573 = vadd.f32 %v11536, %v11545
      %v11574 = vadd.f32 %v11537, %v11545
      %v11575 = vadd.f32 %v11538, %v11545
      %v11576 = vadd.f32 %v11539, %v11545
      %v11577 = vadd.f32 %v11540, %v11545
      %v11578 = vadd.f32 %v11541, %v11545
      %11579 = vst.msk [vmem:[%s568] sm:$0xff] %vm994, %v11547
      %11580 = vst.msk [vmem:[%s568 + $0x8] sm:$0xff] %vm994, %v11548
      %11581 = vst.msk [vmem:[%s568 + $0x10] sm:$0xff] %vm994, %v11549
      %11582 = vst.msk [vmem:[%s568 + $0x18] sm:$0xff] %vm994, %v11550
      %11583 = vst.msk [vmem:[%s568 + $0x20] sm:$0xff] %vm994, %v11551
      %11584 = vst.msk [vmem:[%s568 + $0x28] sm:$0xff] %vm994, %v11552
      %11585 = vst.msk [vmem:[%s568 + $0x30] sm:$0xff] %vm994, %v11553
      %11586 = vst.msk [vmem:[%s568 + $0x38] sm:$0xff] %vm994, %v11554
      %11587 = vst.msk [vmem:[%s568 + $0x40] sm:$0xff] %vm994, %v11555
      %11588 = vst.msk [vmem:[%s568 + $0x48] sm:$0xff] %vm994, %v11556
      %11589 = vst.msk [vmem:[%s568 + $0x50] sm:$0xff] %vm994, %v11557
      %11590 = vst.msk [vmem:[%s568 + $0x58] sm:$0xff] %vm994, %v11558
      %11591 = vst.msk [vmem:[%s568 + $0x60] sm:$0xff] %vm994, %v11559
      %11592 = vst.msk [vmem:[%s568 + $0x68] sm:$0xff] %vm994, %v11560
      %11593 = vst.msk [vmem:[%s568 + $0x70] sm:$0xff] %vm994, %v11561
      %11594 = vst.msk [vmem:[%s568 + $0x78] sm:$0xff] %vm994, %v11562
      %11595 = vst.msk [vmem:[%s568 + $0x80] sm:$0xff] %vm994, %v11563
      %11596 = vst.msk [vmem:[%s568 + $0x88] sm:$0xff] %vm994, %v11564
      %11597 = vst.msk [vmem:[%s568 + $0x90] sm:$0xff] %vm994, %v11565
      %11598 = vst.msk [vmem:[%s568 + $0x98] sm:$0xff] %vm994, %v11566
      %11599 = vst.msk [vmem:[%s568 + $0xa0] sm:$0xff] %vm994, %v11567
      %11600 = vst.msk [vmem:[%s568 + $0xa8] sm:$0xff] %vm994, %v11568
      %11601 = vst.msk [vmem:[%s568 + $0xb0] sm:$0xff] %vm994, %v11569
      %11602 = vst.msk [vmem:[%s568 + $0xb8] sm:$0xff] %vm994, %v11570
      %11603 = vst.msk [vmem:[%s568 + $0xc0] sm:$0xff] %vm994, %v11571
      %11604 = vst.msk [vmem:[%s568 + $0xc8] sm:$0xff] %vm994, %v11572
      %11605 = vst.msk [vmem:[%s568 + $0xd0] sm:$0xff] %vm994, %v11573
      %11606 = vst.msk [vmem:[%s568 + $0xd8] sm:$0xff] %vm994, %v11574
      %11607 = vst.msk [vmem:[%s568 + $0xe0] sm:$0xff] %vm994, %v11575
      %11608 = vst.msk [vmem:[%s568 + $0xe8] sm:$0xff] %vm994, %v11576
      %11609 = vst.msk [vmem:[%s568 + $0xf0] sm:$0xff] %vm994, %v11577
      %11610 = vst.msk [vmem:[%s568 + $0xf8] sm:$0xff] %vm994, %v11578
      %p11611 = scmp.lt.s32.totalorder %s28, 1
      %s11612 = scalar_select %p11611, %s28, 1
      %s11613 = smul.addr %s11612, 32
      %s11614 = smul.addr %s11613, 8
      %s11615 = scalar_lea.vmem %s17, %s11614
      // Predicated region
      $region89: #{decoder_stage_forward.1} parent=87 // pred_check
        %p11616 = pneg %p413
      $region90: #{decoder_stage_forward.1} parent=87 // pred_check_branch
        %11618 = sbr.rel (%p11616) target = $region92
      $region91: #{decoder_stage_forward.1} parent=87 // pred_region
        _
      $region92: #{decoder_stage_forward.1} parent=87 // pred_fallthru
        _
    $region88: #{decoder_stage_forward.1} parent=5 // pred_fallthru
      _
    %p11619 = scmp.le.s32.totalorder 2, %s23
    // Predicated region
    $region93: #{decoder_stage_forward.1} parent=5 // pred_check
      %p11620 = pneg %p11619
    $region94: #{decoder_stage_forward.1} parent=5 // pred_check_branch
      %11622 = sbr.rel (%p11620) target = $region96
    $region95: #{decoder_stage_forward.1} parent=5 // pred_region
      %s11623 = ssub.s32 %s23, 2
      // Predicated region
      $region97: #{decoder_stage_forward.1} parent=95 // pred_check
        %p11624 = pneg %p419
      $region98: #{decoder_stage_forward.1} parent=95 // pred_check_branch
        %11626 = sbr.rel (%p11624) target = $region100
      $region99: #{decoder_stage_forward.1} parent=95 // pred_region
        %p11627 = scmp.lt.s32.totalorder %s29, 1
        %s11628 = scalar_select %p11627, %s29, 1
        %s11629 = smul.addr %s11628, 32
        %s11630 = smul.addr %s11629, 8
        %s11631 = scalar_lea.vmem %s17, %s11630
      $region100: #{decoder_stage_forward.1} parent=95 // pred_fallthru
        _
    $region96: #{decoder_stage_forward.1} parent=5 // pred_fallthru
      _
  $region6: #{decoder_stage_forward.1} parent=0 // loop_footer
    %s27 = sadd.s32 1, %s23
  $region7: #{decoder_stage_forward.1} parent=0 // loop_footer_branch
    %22 = sbr.rel target = $region3
  $region8: #{decoder_stage_forward.1} parent=0 // loop_exit
    _

</llo_original>
